<compile_context>
chip_gen: v6e
topology: v6e:2x2x1
jax: 0.10.0
libtpu: 0.0.40
codegen_flags: <defaults>
</compile_context>

<pallas_src>
import jax
import jax.numpy as jnp
from jax.experimental import pallas as pl
from jax.experimental.pallas import tpu as pltpu


def _round_up(x, m):
    return (x + m - 1) // m * m


def glove_mean_kernel(ids_ref, mask_ref, emb_hbm, out_ref,
                      buf_ref, acc_ref, sem_ref):
    bi = pl.program_id(0)
    TILE_B, L_pad = mask_ref.shape
    _, n_rows, D_pad = buf_ref.shape
    TOK_CHUNK = n_rows // TILE_B          # tokens gathered per chunk
    n_chunks = L_pad // TOK_CHUNK
    row_base = bi * TILE_B

    def issue_chunk(c, slot):
        # Start TILE_B * TOK_CHUNK row DMAs, token-major flattening:
        # buffer row i = t*TILE_B + r holds token (c*TOK_CHUNK + t) of batch
        # row r of this tile.
        for t in range(TOK_CHUNK):
            for r in range(TILE_B):
                i = t * TILE_B + r
                tok = ids_ref[row_base + r, c * TOK_CHUNK + t]   # SMEM scalar
                pltpu.make_async_copy(
                    emb_hbm.at[pl.ds(tok, 1), :],
                    buf_ref.at[slot, pl.ds(i, 1), :],
                    sem_ref.at[slot],
                ).start()

    def wait_chunk(slot):
        # One wait per issued copy on the shared per-slot semaphore; after all
        # of them complete, every row of the slot has landed.
        for i in range(n_rows):
            pltpu.make_async_copy(
                emb_hbm.at[pl.ds(0, 1), :],   # dummy src: only dst size + sem matter
                buf_ref.at[slot, pl.ds(i, 1), :],
                sem_ref.at[slot],
            ).wait()

    acc_ref[...] = jnp.zeros_like(acc_ref)
    issue_chunk(0, 0)                         # prologue (intra-step only)

    @pl.loop(0, n_chunks)
    def _(c):
        slot = c % 2

        @pl.when(c + 1 < n_chunks)
        def _():
            issue_chunk(c + 1, 1 - slot)      # overlap next chunk's gather

        wait_chunk(slot)
        rows = buf_ref[slot].astype(jnp.float32)     # (TOK_CHUNK*TILE_B, D_pad)
        part = rows[0:TILE_B, :]
        for t in range(1, TOK_CHUNK):                # static, 8-aligned slices
            part = part + rows[t * TILE_B:(t + 1) * TILE_B, :]
        acc_ref[...] += part

    x_num = jnp.sum(mask_ref[...], axis=1, keepdims=True)   # (TILE_B, 1)
    inv = pl.reciprocal(x_num + 1e-20, approx=False)        # exact recip-multiply
    out_ref[...] = (acc_ref[...] * inv).astype(out_ref.dtype)


def glove_mean(ids, mask, emb, *, tile_b=8, tok_chunk=8, use_bf16_emb=False):
    B, L = ids.shape
    V, D = emb.shape

    D_pad = _round_up(D, 128)                                   # lane-dense output
    TILE_B = _round_up(max(8, min(tile_b, _round_up(B, 8))), 8)
    B_pad = _round_up(B, TILE_B)
    TOK_CHUNK = max(1, int(tok_chunk))
    L_pad = _round_up(L, TOK_CHUNK)
    nb = B_pad // TILE_B                                        # parallel batch tiles

    emb_dtype = jnp.bfloat16 if use_bf16_emb else jnp.float32
    sentinel = V    # extra all-zero row gathered by padded token / batch slots
    emb_p = jnp.zeros((V + 1, D_pad), emb_dtype).at[:V, :D].set(
        emb.astype(emb_dtype))
    ids_p = jnp.full((B_pad, L_pad), sentinel, jnp.int32).at[:B, :L].set(
        jnp.clip(ids.astype(jnp.int32), 0, V - 1))
    mask_p = jnp.zeros((B_pad, L_pad), jnp.float32).at[:B, :L].set(
        mask.astype(jnp.float32))

    n_rows = TILE_B * TOK_CHUNK
    ebytes = jnp.dtype(emb_dtype).itemsize

    # VMEM is a small constant (independent of V and L): double-buffered gather
    # buffers + accumulator + double-buffered out/mask blocks.  Clamp the limit
    # to 3/4 of the device VMEM so it works on v7x (64 MiB) and v5e/v6e (128).
    vmem_bytes = (2 * n_rows * D_pad * ebytes
                  + TILE_B * D_pad * 4
                  + 2 * TILE_B * D_pad * 4
                  + 2 * TILE_B * L_pad * 4)
    try:
        vmem_cap = int(getattr(pltpu.get_tpu_info(), "vmem_capacity_bytes",
                               64 << 20))
    except Exception:
        vmem_cap = 64 << 20
    vmem_limit = int(min(max(4 * vmem_bytes, 32 << 20), (3 * vmem_cap) // 4))

    out_p = pl.pallas_call(
        glove_mean_kernel,
        out_shape=jax.ShapeDtypeStruct((B_pad, D_pad), jnp.float32),
        grid_spec=pltpu.PrefetchScalarGridSpec(
            num_scalar_prefetch=1,                               # ids -> SMEM
            grid=(nb,),
            in_specs=[
                pl.BlockSpec((TILE_B, L_pad), lambda bi, ids: (bi, 0)),   # mask
                pl.BlockSpec(memory_space=pl.ANY),                        # emb in HBM
            ],
            out_specs=pl.BlockSpec((TILE_B, D_pad), lambda bi, ids: (bi, 0)),
            scratch_shapes=[
                pltpu.VMEM((2, n_rows, D_pad), emb_dtype),   # gather double-buffer
                pltpu.VMEM((TILE_B, D_pad), jnp.float32),    # per-tile accumulator
                pltpu.SemaphoreType.DMA((2,)),               # one sem per slot
            ],
        ),
        compiler_params=pltpu.CompilerParams(
            dimension_semantics=("parallel",),   # v7x megacore over batch tiles
            vmem_limit_bytes=vmem_limit,
        ),
    )(ids_p, mask_p, emb_p)

    return out_p[:B, :D]


def glove_mean_ref(ids, mask, emb):
    # Pure-JAX reference mirroring the PyTorch forward exactly.
    x = emb[ids]                                          # (B, L, D)
    x_sum = jnp.sum(x, axis=1)                            # (B, D)
    x_num = jnp.sum(mask.astype(jnp.float32), axis=1, keepdims=True)
    return x_sum / (x_num + 1e-20)


if __name__ == "__main__":
    key = jax.random.PRNGKey(0)
    k_emb, k_ids = jax.random.split(key)

    B, L = 2, 8          # batch, sequence length
    V, D = 32, 32        # vocab size, embedding size

    # Deterministic "pretrained_weight"; row 0 is the padding embedding -> zero
    # (typical GloVe setup; the kernel does not rely on it).
    emb = jax.random.normal(k_emb, (V, D), dtype=jnp.float32)
    emb = emb.at[0].set(0.0)

    # Token ids with some padding (id 0) at the tail of each sequence.
    ids = jax.random.randint(k_ids, (B, L), minval=1, maxval=V, dtype=jnp.int32)
    ids = ids.at[0, 6:].set(0)
    ids = ids.at[1, 4:].set(0)
    mask = (ids != 0).astype(jnp.float32)

    out = jax.block_until_ready(glove_mean(ids, mask, emb))
    ref = glove_mean_ref(ids, mask, emb)

    assert out.shape == (B, D)
    assert jnp.allclose(out, ref, atol=1e-5, rtol=1e-5), float(
        jnp.max(jnp.abs(out - ref)))

    print("KERNEL_OK")
</pallas_src>

<mosaic_0001>
module attributes {stable_mosaic.version = 11 : i64} {
  func.func @glove_mean_kernel(%arg0: i32, %arg1: memref<8x8xi32, #tpu.memory_space<smem>>, %arg2: memref<8x8xf32, #tpu.memory_space<vmem>>, %arg3: memref<33x128xf32, #tpu.memory_space<any>>, %arg4: memref<8x128xf32, #tpu.memory_space<vmem>>, %arg5: memref<2x64x128xf32, #tpu.memory_space<vmem>>, %arg6: memref<8x128xf32, #tpu.memory_space<vmem>>, %arg7: memref<2x!tpu.dma_semaphore, #tpu.memory_space<semaphore_mem>>) attributes {dimension_semantics = [#tpu.dimension_semantics<parallel>], iteration_bounds = array<i64: 1>, scalar_prefetch = 1 : i64, scratch_operands = 3 : i64, tpu.core_type = #tpu.core_type<tc>, window_params = [{transform_indices = @transform_0, window_bounds = array<i64: 8, 8>}, {}, {transform_indices = @transform_2, window_bounds = array<i64: 8, 128>}]} {
    %c8_i32 = arith.constant 8 : i32
    %0 = arith.muli %arg0, %c8_i32 : i32
    %cst = arith.constant 0.000000e+00 : f32
    %1 = vector.broadcast %cst : f32 to vector<8x128xf32>
    %c0 = arith.constant 0 : index
    %c0_0 = arith.constant 0 : index
    %2 = vector.load %arg6[%c0, %c0_0] : memref<8x128xf32, #tpu.memory_space<vmem>>, vector<8x128xf32>
    tpu.vector_store %arg6[%c0, %c0_0], %1 {strides = array<i32>} : memref<8x128xf32, #tpu.memory_space<vmem>>, vector<8x128xf32>,
    %c0_i32 = arith.constant 0 : i32
    %3 = arith.addi %0, %c0_i32 : i32
    %4 = arith.index_cast %3 : i32 to index
    %c0_1 = arith.constant 0 : index
    %5 = memref.load %arg1[%4, %c0_1] : memref<8x8xi32, #tpu.memory_space<smem>>
    %c0_i32_2 = arith.constant 0 : i32
    %c0_i32_3 = arith.constant 0 : i32
    %c0_i32_4 = arith.constant 0 : i32
    %6 = tpu.memref_slice %arg3[%5, %c0_i32_4] : memref<33x128xf32, #tpu.memory_space<any>> -> memref<1x128xf32, #tpu.memory_space<any>>
    %c0_i32_5 = arith.constant 0 : i32
    %c0_i32_6 = arith.constant 0 : i32
    %7 = tpu.memref_slice %arg5[%c0_i32_2, %c0_i32_5, %c0_i32_6] : memref<2x64x128xf32, #tpu.memory_space<vmem>> -> memref<1x1x128xf32, #tpu.memory_space<vmem>>
    %8 = tpu.memref_squeeze %7 : memref<1x1x128xf32, #tpu.memory_space<vmem>> -> memref<1x128xf32, #tpu.memory_space<vmem>>
    %9 = tpu.memref_slice %arg7[%c0_i32_3] : memref<2x!tpu.dma_semaphore, #tpu.memory_space<semaphore_mem>> -> memref<1x!tpu.dma_semaphore, #tpu.memory_space<semaphore_mem>>
    %10 = tpu.memref_squeeze %9 : memref<1x!tpu.dma_semaphore, #tpu.memory_space<semaphore_mem>> -> memref<!tpu.dma_semaphore, #tpu.memory_space<semaphore_mem>>
    tpu.enqueue_dma source(%6 : memref<1x128xf32, #tpu.memory_space<any>>) target(%8 : memref<1x128xf32, #tpu.memory_space<vmem>>) target_semaphore(%10 : memref<!tpu.dma_semaphore, #tpu.memory_space<semaphore_mem>>)
    %c1_i32 = arith.constant 1 : i32
    %11 = arith.addi %0, %c1_i32 : i32
    %12 = arith.index_cast %11 : i32 to index
    %c0_7 = arith.constant 0 : index
    %13 = memref.load %arg1[%12, %c0_7] : memref<8x8xi32, #tpu.memory_space<smem>>
    %c0_i32_8 = arith.constant 0 : i32
    %c0_i32_9 = arith.constant 0 : i32
    %c0_i32_10 = arith.constant 0 : i32
    %14 = tpu.memref_slice %arg3[%13, %c0_i32_10] : memref<33x128xf32, #tpu.memory_space<any>> -> memref<1x128xf32, #tpu.memory_space<any>>
    %c1_i32_11 = arith.constant 1 : i32
    %c0_i32_12 = arith.constant 0 : i32
    %15 = tpu.memref_slice %arg5[%c0_i32_8, %c1_i32_11, %c0_i32_12] : memref<2x64x128xf32, #tpu.memory_space<vmem>> -> memref<1x1x128xf32, #tpu.memory_space<vmem>>
    %16 = tpu.memref_squeeze %15 : memref<1x1x128xf32, #tpu.memory_space<vmem>> -> memref<1x128xf32, #tpu.memory_space<vmem>>
    %17 = tpu.memref_slice %arg7[%c0_i32_9] : memref<2x!tpu.dma_semaphore, #tpu.memory_space<semaphore_mem>> -> memref<1x!tpu.dma_semaphore, #tpu.memory_space<semaphore_mem>>
    %18 = tpu.memref_squeeze %17 : memref<1x!tpu.dma_semaphore, #tpu.memory_space<semaphore_mem>> -> memref<!tpu.dma_semaphore, #tpu.memory_space<semaphore_mem>>
    tpu.enqueue_dma source(%14 : memref<1x128xf32, #tpu.memory_space<any>>) target(%16 : memref<1x128xf32, #tpu.memory_space<vmem>>) target_semaphore(%18 : memref<!tpu.dma_semaphore, #tpu.memory_space<semaphore_mem>>)
    %c2_i32 = arith.constant 2 : i32
    %19 = arith.addi %0, %c2_i32 : i32
    %20 = arith.index_cast %19 : i32 to index
    %c0_13 = arith.constant 0 : index
    %21 = memref.load %arg1[%20, %c0_13] : memref<8x8xi32, #tpu.memory_space<smem>>
    %c0_i32_14 = arith.constant 0 : i32
    %c0_i32_15 = arith.constant 0 : i32
    %c0_i32_16 = arith.constant 0 : i32
    %22 = tpu.memref_slice %arg3[%21, %c0_i32_16] : memref<33x128xf32, #tpu.memory_space<any>> -> memref<1x128xf32, #tpu.memory_space<any>>
    %c2_i32_17 = arith.constant 2 : i32
    %c0_i32_18 = arith.constant 0 : i32
    %23 = tpu.memref_slice %arg5[%c0_i32_14, %c2_i32_17, %c0_i32_18] : memref<2x64x128xf32, #tpu.memory_space<vmem>> -> memref<1x1x128xf32, #tpu.memory_space<vmem>>
    %24 = tpu.memref_squeeze %23 : memref<1x1x128xf32, #tpu.memory_space<vmem>> -> memref<1x128xf32, #tpu.memory_space<vmem>>
    %25 = tpu.memref_slice %arg7[%c0_i32_15] : memref<2x!tpu.dma_semaphore, #tpu.memory_space<semaphore_mem>> -> memref<1x!tpu.dma_semaphore, #tpu.memory_space<semaphore_mem>>
    %26 = tpu.memref_squeeze %25 : memref<1x!tpu.dma_semaphore, #tpu.memory_space<semaphore_mem>> -> memref<!tpu.dma_semaphore, #tpu.memory_space<semaphore_mem>>
    tpu.enqueue_dma source(%22 : memref<1x128xf32, #tpu.memory_space<any>>) target(%24 : memref<1x128xf32, #tpu.memory_space<vmem>>) target_semaphore(%26 : memref<!tpu.dma_semaphore, #tpu.memory_space<semaphore_mem>>)
    %c3_i32 = arith.constant 3 : i32
    %27 = arith.addi %0, %c3_i32 : i32
    %28 = arith.index_cast %27 : i32 to index
    %c0_19 = arith.constant 0 : index
    %29 = memref.load %arg1[%28, %c0_19] : memref<8x8xi32, #tpu.memory_space<smem>>
    %c0_i32_20 = arith.constant 0 : i32
    %c0_i32_21 = arith.constant 0 : i32
    %c0_i32_22 = arith.constant 0 : i32
    %30 = tpu.memref_slice %arg3[%29, %c0_i32_22] : memref<33x128xf32, #tpu.memory_space<any>> -> memref<1x128xf32, #tpu.memory_space<any>>
    %c3_i32_23 = arith.constant 3 : i32
    %c0_i32_24 = arith.constant 0 : i32
    %31 = tpu.memref_slice %arg5[%c0_i32_20, %c3_i32_23, %c0_i32_24] : memref<2x64x128xf32, #tpu.memory_space<vmem>> -> memref<1x1x128xf32, #tpu.memory_space<vmem>>
    %32 = tpu.memref_squeeze %31 : memref<1x1x128xf32, #tpu.memory_space<vmem>> -> memref<1x128xf32, #tpu.memory_space<vmem>>
    %33 = tpu.memref_slice %arg7[%c0_i32_21] : memref<2x!tpu.dma_semaphore, #tpu.memory_space<semaphore_mem>> -> memref<1x!tpu.dma_semaphore, #tpu.memory_space<semaphore_mem>>
    %34 = tpu.memref_squeeze %33 : memref<1x!tpu.dma_semaphore, #tpu.memory_space<semaphore_mem>> -> memref<!tpu.dma_semaphore, #tpu.memory_space<semaphore_mem>>
    tpu.enqueue_dma source(%30 : memref<1x128xf32, #tpu.memory_space<any>>) target(%32 : memref<1x128xf32, #tpu.memory_space<vmem>>) target_semaphore(%34 : memref<!tpu.dma_semaphore, #tpu.memory_space<semaphore_mem>>)
    %c4_i32 = arith.constant 4 : i32
    %35 = arith.addi %0, %c4_i32 : i32
    %36 = arith.index_cast %35 : i32 to index
    %c0_25 = arith.constant 0 : index
    %37 = memref.load %arg1[%36, %c0_25] : memref<8x8xi32, #tpu.memory_space<smem>>
    %c0_i32_26 = arith.constant 0 : i32
    %c0_i32_27 = arith.constant 0 : i32
    %c0_i32_28 = arith.constant 0 : i32
    %38 = tpu.memref_slice %arg3[%37, %c0_i32_28] : memref<33x128xf32, #tpu.memory_space<any>> -> memref<1x128xf32, #tpu.memory_space<any>>
    %c4_i32_29 = arith.constant 4 : i32
    %c0_i32_30 = arith.constant 0 : i32
    %39 = tpu.memref_slice %arg5[%c0_i32_26, %c4_i32_29, %c0_i32_30] : memref<2x64x128xf32, #tpu.memory_space<vmem>> -> memref<1x1x128xf32, #tpu.memory_space<vmem>>
    %40 = tpu.memref_squeeze %39 : memref<1x1x128xf32, #tpu.memory_space<vmem>> -> memref<1x128xf32, #tpu.memory_space<vmem>>
    %41 = tpu.memref_slice %arg7[%c0_i32_27] : memref<2x!tpu.dma_semaphore, #tpu.memory_space<semaphore_mem>> -> memref<1x!tpu.dma_semaphore, #tpu.memory_space<semaphore_mem>>
    %42 = tpu.memref_squeeze %41 : memref<1x!tpu.dma_semaphore, #tpu.memory_space<semaphore_mem>> -> memref<!tpu.dma_semaphore, #tpu.memory_space<semaphore_mem>>
    tpu.enqueue_dma source(%38 : memref<1x128xf32, #tpu.memory_space<any>>) target(%40 : memref<1x128xf32, #tpu.memory_space<vmem>>) target_semaphore(%42 : memref<!tpu.dma_semaphore, #tpu.memory_space<semaphore_mem>>)
    %c5_i32 = arith.constant 5 : i32
    %43 = arith.addi %0, %c5_i32 : i32
    %44 = arith.index_cast %43 : i32 to index
    %c0_31 = arith.constant 0 : index
    %45 = memref.load %arg1[%44, %c0_31] : memref<8x8xi32, #tpu.memory_space<smem>>
    %c0_i32_32 = arith.constant 0 : i32
    %c0_i32_33 = arith.constant 0 : i32
    %c0_i32_34 = arith.constant 0 : i32
    %46 = tpu.memref_slice %arg3[%45, %c0_i32_34] : memref<33x128xf32, #tpu.memory_space<any>> -> memref<1x128xf32, #tpu.memory_space<any>>
    %c5_i32_35 = arith.constant 5 : i32
    %c0_i32_36 = arith.constant 0 : i32
    %47 = tpu.memref_slice %arg5[%c0_i32_32, %c5_i32_35, %c0_i32_36] : memref<2x64x128xf32, #tpu.memory_space<vmem>> -> memref<1x1x128xf32, #tpu.memory_space<vmem>>
    %48 = tpu.memref_squeeze %47 : memref<1x1x128xf32, #tpu.memory_space<vmem>> -> memref<1x128xf32, #tpu.memory_space<vmem>>
    %49 = tpu.memref_slice %arg7[%c0_i32_33] : memref<2x!tpu.dma_semaphore, #tpu.memory_space<semaphore_mem>> -> memref<1x!tpu.dma_semaphore, #tpu.memory_space<semaphore_mem>>
    %50 = tpu.memref_squeeze %49 : memref<1x!tpu.dma_semaphore, #tpu.memory_space<semaphore_mem>> -> memref<!tpu.dma_semaphore, #tpu.memory_space<semaphore_mem>>
    tpu.enqueue_dma source(%46 : memref<1x128xf32, #tpu.memory_space<any>>) target(%48 : memref<1x128xf32, #tpu.memory_space<vmem>>) target_semaphore(%50 : memref<!tpu.dma_semaphore, #tpu.memory_space<semaphore_mem>>)
    %c6_i32 = arith.constant 6 : i32
    %51 = arith.addi %0, %c6_i32 : i32
    %52 = arith.index_cast %51 : i32 to index
    %c0_37 = arith.constant 0 : index
    %53 = memref.load %arg1[%52, %c0_37] : memref<8x8xi32, #tpu.memory_space<smem>>
    %c0_i32_38 = arith.constant 0 : i32
    %c0_i32_39 = arith.constant 0 : i32
    %c0_i32_40 = arith.constant 0 : i32
    %54 = tpu.memref_slice %arg3[%53, %c0_i32_40] : memref<33x128xf32, #tpu.memory_space<any>> -> memref<1x128xf32, #tpu.memory_space<any>>
    %c6_i32_41 = arith.constant 6 : i32
    %c0_i32_42 = arith.constant 0 : i32
    %55 = tpu.memref_slice %arg5[%c0_i32_38, %c6_i32_41, %c0_i32_42] : memref<2x64x128xf32, #tpu.memory_space<vmem>> -> memref<1x1x128xf32, #tpu.memory_space<vmem>>
    %56 = tpu.memref_squeeze %55 : memref<1x1x128xf32, #tpu.memory_space<vmem>> -> memref<1x128xf32, #tpu.memory_space<vmem>>
    %57 = tpu.memref_slice %arg7[%c0_i32_39] : memref<2x!tpu.dma_semaphore, #tpu.memory_space<semaphore_mem>> -> memref<1x!tpu.dma_semaphore, #tpu.memory_space<semaphore_mem>>
    %58 = tpu.memref_squeeze %57 : memref<1x!tpu.dma_semaphore, #tpu.memory_space<semaphore_mem>> -> memref<!tpu.dma_semaphore, #tpu.memory_space<semaphore_mem>>
    tpu.enqueue_dma source(%54 : memref<1x128xf32, #tpu.memory_space<any>>) target(%56 : memref<1x128xf32, #tpu.memory_space<vmem>>) target_semaphore(%58 : memref<!tpu.dma_semaphore, #tpu.memory_space<semaphore_mem>>)
    %c7_i32 = arith.constant 7 : i32
    %59 = arith.addi %0, %c7_i32 : i32
    %60 = arith.index_cast %59 : i32 to index
    %c0_43 = arith.constant 0 : index
    %61 = memref.load %arg1[%60, %c0_43] : memref<8x8xi32, #tpu.memory_space<smem>>
    %c0_i32_44 = arith.constant 0 : i32
    %c0_i32_45 = arith.constant 0 : i32
    %c0_i32_46 = arith.constant 0 : i32
    %62 = tpu.memref_slice %arg3[%61, %c0_i32_46] : memref<33x128xf32, #tpu.memory_space<any>> -> memref<1x128xf32, #tpu.memory_space<any>>
    %c7_i32_47 = arith.constant 7 : i32
    %c0_i32_48 = arith.constant 0 : i32
    %63 = tpu.memref_slice %arg5[%c0_i32_44, %c7_i32_47, %c0_i32_48] : memref<2x64x128xf32, #tpu.memory_space<vmem>> -> memref<1x1x128xf32, #tpu.memory_space<vmem>>
    %64 = tpu.memref_squeeze %63 : memref<1x1x128xf32, #tpu.memory_space<vmem>> -> memref<1x128xf32, #tpu.memory_space<vmem>>
    %65 = tpu.memref_slice %arg7[%c0_i32_45] : memref<2x!tpu.dma_semaphore, #tpu.memory_space<semaphore_mem>> -> memref<1x!tpu.dma_semaphore, #tpu.memory_space<semaphore_mem>>
    %66 = tpu.memref_squeeze %65 : memref<1x!tpu.dma_semaphore, #tpu.memory_space<semaphore_mem>> -> memref<!tpu.dma_semaphore, #tpu.memory_space<semaphore_mem>>
    tpu.enqueue_dma source(%62 : memref<1x128xf32, #tpu.memory_space<any>>) target(%64 : memref<1x128xf32, #tpu.memory_space<vmem>>) target_semaphore(%66 : memref<!tpu.dma_semaphore, #tpu.memory_space<semaphore_mem>>)
    %c0_i32_49 = arith.constant 0 : i32
    %67 = arith.addi %0, %c0_i32_49 : i32
    %68 = arith.index_cast %67 : i32 to index
    %c1 = arith.constant 1 : index
    %69 = memref.load %arg1[%68, %c1] : memref<8x8xi32, #tpu.memory_space<smem>>
    %c0_i32_50 = arith.constant 0 : i32
    %c0_i32_51 = arith.constant 0 : i32
    %c0_i32_52 = arith.constant 0 : i32
    %70 = tpu.memref_slice %arg3[%69, %c0_i32_52] : memref<33x128xf32, #tpu.memory_space<any>> -> memref<1x128xf32, #tpu.memory_space<any>>
    %c8_i32_53 = arith.constant 8 : i32
    %c0_i32_54 = arith.constant 0 : i32
    %71 = tpu.memref_slice %arg5[%c0_i32_50, %c8_i32_53, %c0_i32_54] : memref<2x64x128xf32, #tpu.memory_space<vmem>> -> memref<1x1x128xf32, #tpu.memory_space<vmem>>
    %72 = tpu.memref_squeeze %71 : memref<1x1x128xf32, #tpu.memory_space<vmem>> -> memref<1x128xf32, #tpu.memory_space<vmem>>
    %73 = tpu.memref_slice %arg7[%c0_i32_51] : memref<2x!tpu.dma_semaphore, #tpu.memory_space<semaphore_mem>> -> memref<1x!tpu.dma_semaphore, #tpu.memory_space<semaphore_mem>>
    %74 = tpu.memref_squeeze %73 : memref<1x!tpu.dma_semaphore, #tpu.memory_space<semaphore_mem>> -> memref<!tpu.dma_semaphore, #tpu.memory_space<semaphore_mem>>
    tpu.enqueue_dma source(%70 : memref<1x128xf32, #tpu.memory_space<any>>) target(%72 : memref<1x128xf32, #tpu.memory_space<vmem>>) target_semaphore(%74 : memref<!tpu.dma_semaphore, #tpu.memory_space<semaphore_mem>>)
    %c1_i32_55 = arith.constant 1 : i32
    %75 = arith.addi %0, %c1_i32_55 : i32
    %76 = arith.index_cast %75 : i32 to index
    %c1_56 = arith.constant 1 : index
    %77 = memref.load %arg1[%76, %c1_56] : memref<8x8xi32, #tpu.memory_space<smem>>
    %c0_i32_57 = arith.constant 0 : i32
    %c0_i32_58 = arith.constant 0 : i32
    %c0_i32_59 = arith.constant 0 : i32
    %78 = tpu.memref_slice %arg3[%77, %c0_i32_59] : memref<33x128xf32, #tpu.memory_space<any>> -> memref<1x128xf32, #tpu.memory_space<any>>
    %c9_i32 = arith.constant 9 : i32
    %c0_i32_60 = arith.constant 0 : i32
    %79 = tpu.memref_slice %arg5[%c0_i32_57, %c9_i32, %c0_i32_60] : memref<2x64x128xf32, #tpu.memory_space<vmem>> -> memref<1x1x128xf32, #tpu.memory_space<vmem>>
    %80 = tpu.memref_squeeze %79 : memref<1x1x128xf32, #tpu.memory_space<vmem>> -> memref<1x128xf32, #tpu.memory_space<vmem>>
    %81 = tpu.memref_slice %arg7[%c0_i32_58] : memref<2x!tpu.dma_semaphore, #tpu.memory_space<semaphore_mem>> -> memref<1x!tpu.dma_semaphore, #tpu.memory_space<semaphore_mem>>
    %82 = tpu.memref_squeeze %81 : memref<1x!tpu.dma_semaphore, #tpu.memory_space<semaphore_mem>> -> memref<!tpu.dma_semaphore, #tpu.memory_space<semaphore_mem>>
    tpu.enqueue_dma source(%78 : memref<1x128xf32, #tpu.memory_space<any>>) target(%80 : memref<1x128xf32, #tpu.memory_space<vmem>>) target_semaphore(%82 : memref<!tpu.dma_semaphore, #tpu.memory_space<semaphore_mem>>)
    %c2_i32_61 = arith.constant 2 : i32
    %83 = arith.addi %0, %c2_i32_61 : i32
    %84 = arith.index_cast %83 : i32 to index
    %c1_62 = arith.constant 1 : index
    %85 = memref.load %arg1[%84, %c1_62] : memref<8x8xi32, #tpu.memory_space<smem>>
    %c0_i32_63 = arith.constant 0 : i32
    %c0_i32_64 = arith.constant 0 : i32
    %c0_i32_65 = arith.constant 0 : i32
    %86 = tpu.memref_slice %arg3[%85, %c0_i32_65] : memref<33x128xf32, #tpu.memory_space<any>> -> memref<1x128xf32, #tpu.memory_space<any>>
    %c10_i32 = arith.constant 10 : i32
    %c0_i32_66 = arith.constant 0 : i32
    %87 = tpu.memref_slice %arg5[%c0_i32_63, %c10_i32, %c0_i32_66] : memref<2x64x128xf32, #tpu.memory_space<vmem>> -> memref<1x1x128xf32, #tpu.memory_space<vmem>>
    %88 = tpu.memref_squeeze %87 : memref<1x1x128xf32, #tpu.memory_space<vmem>> -> memref<1x128xf32, #tpu.memory_space<vmem>>
    %89 = tpu.memref_slice %arg7[%c0_i32_64] : memref<2x!tpu.dma_semaphore, #tpu.memory_space<semaphore_mem>> -> memref<1x!tpu.dma_semaphore, #tpu.memory_space<semaphore_mem>>
    %90 = tpu.memref_squeeze %89 : memref<1x!tpu.dma_semaphore, #tpu.memory_space<semaphore_mem>> -> memref<!tpu.dma_semaphore, #tpu.memory_space<semaphore_mem>>
    tpu.enqueue_dma source(%86 : memref<1x128xf32, #tpu.memory_space<any>>) target(%88 : memref<1x128xf32, #tpu.memory_space<vmem>>) target_semaphore(%90 : memref<!tpu.dma_semaphore, #tpu.memory_space<semaphore_mem>>)
    %c3_i32_67 = arith.constant 3 : i32
    %91 = arith.addi %0, %c3_i32_67 : i32
    %92 = arith.index_cast %91 : i32 to index
    %c1_68 = arith.constant 1 : index
    %93 = memref.load %arg1[%92, %c1_68] : memref<8x8xi32, #tpu.memory_space<smem>>
    %c0_i32_69 = arith.constant 0 : i32
    %c0_i32_70 = arith.constant 0 : i32
    %c0_i32_71 = arith.constant 0 : i32
    %94 = tpu.memref_slice %arg3[%93, %c0_i32_71] : memref<33x128xf32, #tpu.memory_space<any>> -> memref<1x128xf32, #tpu.memory_space<any>>
    %c11_i32 = arith.constant 11 : i32
    %c0_i32_72 = arith.constant 0 : i32
    %95 = tpu.memref_slice %arg5[%c0_i32_69, %c11_i32, %c0_i32_72] : memref<2x64x128xf32, #tpu.memory_space<vmem>> -> memref<1x1x128xf32, #tpu.memory_space<vmem>>
    %96 = tpu.memref_squeeze %95 : memref<1x1x128xf32, #tpu.memory_space<vmem>> -> memref<1x128xf32, #tpu.memory_space<vmem>>
    %97 = tpu.memref_slice %arg7[%c0_i32_70] : memref<2x!tpu.dma_semaphore, #tpu.memory_space<semaphore_mem>> -> memref<1x!tpu.dma_semaphore, #tpu.memory_space<semaphore_mem>>
    %98 = tpu.memref_squeeze %97 : memref<1x!tpu.dma_semaphore, #tpu.memory_space<semaphore_mem>> -> memref<!tpu.dma_semaphore, #tpu.memory_space<semaphore_mem>>
    tpu.enqueue_dma source(%94 : memref<1x128xf32, #tpu.memory_space<any>>) target(%96 : memref<1x128xf32, #tpu.memory_space<vmem>>) target_semaphore(%98 : memref<!tpu.dma_semaphore, #tpu.memory_space<semaphore_mem>>)
    %c4_i32_73 = arith.constant 4 : i32
    %99 = arith.addi %0, %c4_i32_73 : i32
    %100 = arith.index_cast %99 : i32 to index
    %c1_74 = arith.constant 1 : index
    %101 = memref.load %arg1[%100, %c1_74] : memref<8x8xi32, #tpu.memory_space<smem>>
    %c0_i32_75 = arith.constant 0 : i32
    %c0_i32_76 = arith.constant 0 : i32
    %c0_i32_77 = arith.constant 0 : i32
    %102 = tpu.memref_slice %arg3[%101, %c0_i32_77] : memref<33x128xf32, #tpu.memory_space<any>> -> memref<1x128xf32, #tpu.memory_space<any>>
    %c12_i32 = arith.constant 12 : i32
    %c0_i32_78 = arith.constant 0 : i32
    %103 = tpu.memref_slice %arg5[%c0_i32_75, %c12_i32, %c0_i32_78] : memref<2x64x128xf32, #tpu.memory_space<vmem>> -> memref<1x1x128xf32, #tpu.memory_space<vmem>>
    %104 = tpu.memref_squeeze %103 : memref<1x1x128xf32, #tpu.memory_space<vmem>> -> memref<1x128xf32, #tpu.memory_space<vmem>>
    %105 = tpu.memref_slice %arg7[%c0_i32_76] : memref<2x!tpu.dma_semaphore, #tpu.memory_space<semaphore_mem>> -> memref<1x!tpu.dma_semaphore, #tpu.memory_space<semaphore_mem>>
    %106 = tpu.memref_squeeze %105 : memref<1x!tpu.dma_semaphore, #tpu.memory_space<semaphore_mem>> -> memref<!tpu.dma_semaphore, #tpu.memory_space<semaphore_mem>>
    tpu.enqueue_dma source(%102 : memref<1x128xf32, #tpu.memory_space<any>>) target(%104 : memref<1x128xf32, #tpu.memory_space<vmem>>) target_semaphore(%106 : memref<!tpu.dma_semaphore, #tpu.memory_space<semaphore_mem>>)
    %c5_i32_79 = arith.constant 5 : i32
    %107 = arith.addi %0, %c5_i32_79 : i32
    %108 = arith.index_cast %107 : i32 to index
    %c1_80 = arith.constant 1 : index
    %109 = memref.load %arg1[%108, %c1_80] : memref<8x8xi32, #tpu.memory_space<smem>>
    %c0_i32_81 = arith.constant 0 : i32
    %c0_i32_82 = arith.constant 0 : i32
    %c0_i32_83 = arith.constant 0 : i32
    %110 = tpu.memref_slice %arg3[%109, %c0_i32_83] : memref<33x128xf32, #tpu.memory_space<any>> -> memref<1x128xf32, #tpu.memory_space<any>>
    %c13_i32 = arith.constant 13 : i32
    %c0_i32_84 = arith.constant 0 : i32
    %111 = tpu.memref_slice %arg5[%c0_i32_81, %c13_i32, %c0_i32_84] : memref<2x64x128xf32, #tpu.memory_space<vmem>> -> memref<1x1x128xf32, #tpu.memory_space<vmem>>
    %112 = tpu.memref_squeeze %111 : memref<1x1x128xf32, #tpu.memory_space<vmem>> -> memref<1x128xf32, #tpu.memory_space<vmem>>
    %113 = tpu.memref_slice %arg7[%c0_i32_82] : memref<2x!tpu.dma_semaphore, #tpu.memory_space<semaphore_mem>> -> memref<1x!tpu.dma_semaphore, #tpu.memory_space<semaphore_mem>>
    %114 = tpu.memref_squeeze %113 : memref<1x!tpu.dma_semaphore, #tpu.memory_space<semaphore_mem>> -> memref<!tpu.dma_semaphore, #tpu.memory_space<semaphore_mem>>
    tpu.enqueue_dma source(%110 : memref<1x128xf32, #tpu.memory_space<any>>) target(%112 : memref<1x128xf32, #tpu.memory_space<vmem>>) target_semaphore(%114 : memref<!tpu.dma_semaphore, #tpu.memory_space<semaphore_mem>>)
    %c6_i32_85 = arith.constant 6 : i32
    %115 = arith.addi %0, %c6_i32_85 : i32
    %116 = arith.index_cast %115 : i32 to index
    %c1_86 = arith.constant 1 : index
    %117 = memref.load %arg1[%116, %c1_86] : memref<8x8xi32, #tpu.memory_space<smem>>
    %c0_i32_87 = arith.constant 0 : i32
    %c0_i32_88 = arith.constant 0 : i32
    %c0_i32_89 = arith.constant 0 : i32
    %118 = tpu.memref_slice %arg3[%117, %c0_i32_89] : memref<33x128xf32, #tpu.memory_space<any>> -> memref<1x128xf32, #tpu.memory_space<any>>
    %c14_i32 = arith.constant 14 : i32
    %c0_i32_90 = arith.constant 0 : i32
    %119 = tpu.memref_slice %arg5[%c0_i32_87, %c14_i32, %c0_i32_90] : memref<2x64x128xf32, #tpu.memory_space<vmem>> -> memref<1x1x128xf32, #tpu.memory_space<vmem>>
    %120 = tpu.memref_squeeze %119 : memref<1x1x128xf32, #tpu.memory_space<vmem>> -> memref<1x128xf32, #tpu.memory_space<vmem>>
    %121 = tpu.memref_slice %arg7[%c0_i32_88] : memref<2x!tpu.dma_semaphore, #tpu.memory_space<semaphore_mem>> -> memref<1x!tpu.dma_semaphore, #tpu.memory_space<semaphore_mem>>
    %122 = tpu.memref_squeeze %121 : memref<1x!tpu.dma_semaphore, #tpu.memory_space<semaphore_mem>> -> memref<!tpu.dma_semaphore, #tpu.memory_space<semaphore_mem>>
    tpu.enqueue_dma source(%118 : memref<1x128xf32, #tpu.memory_space<any>>) target(%120 : memref<1x128xf32, #tpu.memory_space<vmem>>) target_semaphore(%122 : memref<!tpu.dma_semaphore, #tpu.memory_space<semaphore_mem>>)
    %c7_i32_91 = arith.constant 7 : i32
    %123 = arith.addi %0, %c7_i32_91 : i32
    %124 = arith.index_cast %123 : i32 to index
    %c1_92 = arith.constant 1 : index
    %125 = memref.load %arg1[%124, %c1_92] : memref<8x8xi32, #tpu.memory_space<smem>>
    %c0_i32_93 = arith.constant 0 : i32
    %c0_i32_94 = arith.constant 0 : i32
    %c0_i32_95 = arith.constant 0 : i32
    %126 = tpu.memref_slice %arg3[%125, %c0_i32_95] : memref<33x128xf32, #tpu.memory_space<any>> -> memref<1x128xf32, #tpu.memory_space<any>>
    %c15_i32 = arith.constant 15 : i32
    %c0_i32_96 = arith.constant 0 : i32
    %127 = tpu.memref_slice %arg5[%c0_i32_93, %c15_i32, %c0_i32_96] : memref<2x64x128xf32, #tpu.memory_space<vmem>> -> memref<1x1x128xf32, #tpu.memory_space<vmem>>
    %128 = tpu.memref_squeeze %127 : memref<1x1x128xf32, #tpu.memory_space<vmem>> -> memref<1x128xf32, #tpu.memory_space<vmem>>
    %129 = tpu.memref_slice %arg7[%c0_i32_94] : memref<2x!tpu.dma_semaphore, #tpu.memory_space<semaphore_mem>> -> memref<1x!tpu.dma_semaphore, #tpu.memory_space<semaphore_mem>>
    %130 = tpu.memref_squeeze %129 : memref<1x!tpu.dma_semaphore, #tpu.memory_space<semaphore_mem>> -> memref<!tpu.dma_semaphore, #tpu.memory_space<semaphore_mem>>
    tpu.enqueue_dma source(%126 : memref<1x128xf32, #tpu.memory_space<any>>) target(%128 : memref<1x128xf32, #tpu.memory_space<vmem>>) target_semaphore(%130 : memref<!tpu.dma_semaphore, #tpu.memory_space<semaphore_mem>>)
    %c0_i32_97 = arith.constant 0 : i32
    %131 = arith.addi %0, %c0_i32_97 : i32
    %132 = arith.index_cast %131 : i32 to index
    %c2 = arith.constant 2 : index
    %133 = memref.load %arg1[%132, %c2] : memref<8x8xi32, #tpu.memory_space<smem>>
    %c0_i32_98 = arith.constant 0 : i32
    %c0_i32_99 = arith.constant 0 : i32
    %c0_i32_100 = arith.constant 0 : i32
    %134 = tpu.memref_slice %arg3[%133, %c0_i32_100] : memref<33x128xf32, #tpu.memory_space<any>> -> memref<1x128xf32, #tpu.memory_space<any>>
    %c16_i32 = arith.constant 16 : i32
    %c0_i32_101 = arith.constant 0 : i32
    %135 = tpu.memref_slice %arg5[%c0_i32_98, %c16_i32, %c0_i32_101] : memref<2x64x128xf32, #tpu.memory_space<vmem>> -> memref<1x1x128xf32, #tpu.memory_space<vmem>>
    %136 = tpu.memref_squeeze %135 : memref<1x1x128xf32, #tpu.memory_space<vmem>> -> memref<1x128xf32, #tpu.memory_space<vmem>>
    %137 = tpu.memref_slice %arg7[%c0_i32_99] : memref<2x!tpu.dma_semaphore, #tpu.memory_space<semaphore_mem>> -> memref<1x!tpu.dma_semaphore, #tpu.memory_space<semaphore_mem>>
    %138 = tpu.memref_squeeze %137 : memref<1x!tpu.dma_semaphore, #tpu.memory_space<semaphore_mem>> -> memref<!tpu.dma_semaphore, #tpu.memory_space<semaphore_mem>>
    tpu.enqueue_dma source(%134 : memref<1x128xf32, #tpu.memory_space<any>>) target(%136 : memref<1x128xf32, #tpu.memory_space<vmem>>) target_semaphore(%138 : memref<!tpu.dma_semaphore, #tpu.memory_space<semaphore_mem>>)
    %c1_i32_102 = arith.constant 1 : i32
    %139 = arith.addi %0, %c1_i32_102 : i32
    %140 = arith.index_cast %139 : i32 to index
    %c2_103 = arith.constant 2 : index
    %141 = memref.load %arg1[%140, %c2_103] : memref<8x8xi32, #tpu.memory_space<smem>>
    %c0_i32_104 = arith.constant 0 : i32
    %c0_i32_105 = arith.constant 0 : i32
    %c0_i32_106 = arith.constant 0 : i32
    %142 = tpu.memref_slice %arg3[%141, %c0_i32_106] : memref<33x128xf32, #tpu.memory_space<any>> -> memref<1x128xf32, #tpu.memory_space<any>>
    %c17_i32 = arith.constant 17 : i32
    %c0_i32_107 = arith.constant 0 : i32
    %143 = tpu.memref_slice %arg5[%c0_i32_104, %c17_i32, %c0_i32_107] : memref<2x64x128xf32, #tpu.memory_space<vmem>> -> memref<1x1x128xf32, #tpu.memory_space<vmem>>
    %144 = tpu.memref_squeeze %143 : memref<1x1x128xf32, #tpu.memory_space<vmem>> -> memref<1x128xf32, #tpu.memory_space<vmem>>
    %145 = tpu.memref_slice %arg7[%c0_i32_105] : memref<2x!tpu.dma_semaphore, #tpu.memory_space<semaphore_mem>> -> memref<1x!tpu.dma_semaphore, #tpu.memory_space<semaphore_mem>>
    %146 = tpu.memref_squeeze %145 : memref<1x!tpu.dma_semaphore, #tpu.memory_space<semaphore_mem>> -> memref<!tpu.dma_semaphore, #tpu.memory_space<semaphore_mem>>
    tpu.enqueue_dma source(%142 : memref<1x128xf32, #tpu.memory_space<any>>) target(%144 : memref<1x128xf32, #tpu.memory_space<vmem>>) target_semaphore(%146 : memref<!tpu.dma_semaphore, #tpu.memory_space<semaphore_mem>>)
    %c2_i32_108 = arith.constant 2 : i32
    %147 = arith.addi %0, %c2_i32_108 : i32
    %148 = arith.index_cast %147 : i32 to index
    %c2_109 = arith.constant 2 : index
    %149 = memref.load %arg1[%148, %c2_109] : memref<8x8xi32, #tpu.memory_space<smem>>
    %c0_i32_110 = arith.constant 0 : i32
    %c0_i32_111 = arith.constant 0 : i32
    %c0_i32_112 = arith.constant 0 : i32
    %150 = tpu.memref_slice %arg3[%149, %c0_i32_112] : memref<33x128xf32, #tpu.memory_space<any>> -> memref<1x128xf32, #tpu.memory_space<any>>
    %c18_i32 = arith.constant 18 : i32
    %c0_i32_113 = arith.constant 0 : i32
    %151 = tpu.memref_slice %arg5[%c0_i32_110, %c18_i32, %c0_i32_113] : memref<2x64x128xf32, #tpu.memory_space<vmem>> -> memref<1x1x128xf32, #tpu.memory_space<vmem>>
    %152 = tpu.memref_squeeze %151 : memref<1x1x128xf32, #tpu.memory_space<vmem>> -> memref<1x128xf32, #tpu.memory_space<vmem>>
    %153 = tpu.memref_slice %arg7[%c0_i32_111] : memref<2x!tpu.dma_semaphore, #tpu.memory_space<semaphore_mem>> -> memref<1x!tpu.dma_semaphore, #tpu.memory_space<semaphore_mem>>
    %154 = tpu.memref_squeeze %153 : memref<1x!tpu.dma_semaphore, #tpu.memory_space<semaphore_mem>> -> memref<!tpu.dma_semaphore, #tpu.memory_space<semaphore_mem>>
    tpu.enqueue_dma source(%150 : memref<1x128xf32, #tpu.memory_space<any>>) target(%152 : memref<1x128xf32, #tpu.memory_space<vmem>>) target_semaphore(%154 : memref<!tpu.dma_semaphore, #tpu.memory_space<semaphore_mem>>)
    %c3_i32_114 = arith.constant 3 : i32
    %155 = arith.addi %0, %c3_i32_114 : i32
    %156 = arith.index_cast %155 : i32 to index
    %c2_115 = arith.constant 2 : index
    %157 = memref.load %arg1[%156, %c2_115] : memref<8x8xi32, #tpu.memory_space<smem>>
    %c0_i32_116 = arith.constant 0 : i32
    %c0_i32_117 = arith.constant 0 : i32
    %c0_i32_118 = arith.constant 0 : i32
    %158 = tpu.memref_slice %arg3[%157, %c0_i32_118] : memref<33x128xf32, #tpu.memory_space<any>> -> memref<1x128xf32, #tpu.memory_space<any>>
    %c19_i32 = arith.constant 19 : i32
    %c0_i32_119 = arith.constant 0 : i32
    %159 = tpu.memref_slice %arg5[%c0_i32_116, %c19_i32, %c0_i32_119] : memref<2x64x128xf32, #tpu.memory_space<vmem>> -> memref<1x1x128xf32, #tpu.memory_space<vmem>>
    %160 = tpu.memref_squeeze %159 : memref<1x1x128xf32, #tpu.memory_space<vmem>> -> memref<1x128xf32, #tpu.memory_space<vmem>>
    %161 = tpu.memref_slice %arg7[%c0_i32_117] : memref<2x!tpu.dma_semaphore, #tpu.memory_space<semaphore_mem>> -> memref<1x!tpu.dma_semaphore, #tpu.memory_space<semaphore_mem>>
    %162 = tpu.memref_squeeze %161 : memref<1x!tpu.dma_semaphore, #tpu.memory_space<semaphore_mem>> -> memref<!tpu.dma_semaphore, #tpu.memory_space<semaphore_mem>>
    tpu.enqueue_dma source(%158 : memref<1x128xf32, #tpu.memory_space<any>>) target(%160 : memref<1x128xf32, #tpu.memory_space<vmem>>) target_semaphore(%162 : memref<!tpu.dma_semaphore, #tpu.memory_space<semaphore_mem>>)
    %c4_i32_120 = arith.constant 4 : i32
    %163 = arith.addi %0, %c4_i32_120 : i32
    %164 = arith.index_cast %163 : i32 to index
    %c2_121 = arith.constant 2 : index
    %165 = memref.load %arg1[%164, %c2_121] : memref<8x8xi32, #tpu.memory_space<smem>>
    %c0_i32_122 = arith.constant 0 : i32
    %c0_i32_123 = arith.constant 0 : i32
    %c0_i32_124 = arith.constant 0 : i32
    %166 = tpu.memref_slice %arg3[%165, %c0_i32_124] : memref<33x128xf32, #tpu.memory_space<any>> -> memref<1x128xf32, #tpu.memory_space<any>>
    %c20_i32 = arith.constant 20 : i32
    %c0_i32_125 = arith.constant 0 : i32
    %167 = tpu.memref_slice %arg5[%c0_i32_122, %c20_i32, %c0_i32_125] : memref<2x64x128xf32, #tpu.memory_space<vmem>> -> memref<1x1x128xf32, #tpu.memory_space<vmem>>
    %168 = tpu.memref_squeeze %167 : memref<1x1x128xf32, #tpu.memory_space<vmem>> -> memref<1x128xf32, #tpu.memory_space<vmem>>
    %169 = tpu.memref_slice %arg7[%c0_i32_123] : memref<2x!tpu.dma_semaphore, #tpu.memory_space<semaphore_mem>> -> memref<1x!tpu.dma_semaphore, #tpu.memory_space<semaphore_mem>>
    %170 = tpu.memref_squeeze %169 : memref<1x!tpu.dma_semaphore, #tpu.memory_space<semaphore_mem>> -> memref<!tpu.dma_semaphore, #tpu.memory_space<semaphore_mem>>
    tpu.enqueue_dma source(%166 : memref<1x128xf32, #tpu.memory_space<any>>) target(%168 : memref<1x128xf32, #tpu.memory_space<vmem>>) target_semaphore(%170 : memref<!tpu.dma_semaphore, #tpu.memory_space<semaphore_mem>>)
    %c5_i32_126 = arith.constant 5 : i32
    %171 = arith.addi %0, %c5_i32_126 : i32
    %172 = arith.index_cast %171 : i32 to index
    %c2_127 = arith.constant 2 : index
    %173 = memref.load %arg1[%172, %c2_127] : memref<8x8xi32, #tpu.memory_space<smem>>
    %c0_i32_128 = arith.constant 0 : i32
    %c0_i32_129 = arith.constant 0 : i32
    %c0_i32_130 = arith.constant 0 : i32
    %174 = tpu.memref_slice %arg3[%173, %c0_i32_130] : memref<33x128xf32, #tpu.memory_space<any>> -> memref<1x128xf32, #tpu.memory_space<any>>
    %c21_i32 = arith.constant 21 : i32
    %c0_i32_131 = arith.constant 0 : i32
    %175 = tpu.memref_slice %arg5[%c0_i32_128, %c21_i32, %c0_i32_131] : memref<2x64x128xf32, #tpu.memory_space<vmem>> -> memref<1x1x128xf32, #tpu.memory_space<vmem>>
    %176 = tpu.memref_squeeze %175 : memref<1x1x128xf32, #tpu.memory_space<vmem>> -> memref<1x128xf32, #tpu.memory_space<vmem>>
    %177 = tpu.memref_slice %arg7[%c0_i32_129] : memref<2x!tpu.dma_semaphore, #tpu.memory_space<semaphore_mem>> -> memref<1x!tpu.dma_semaphore, #tpu.memory_space<semaphore_mem>>
    %178 = tpu.memref_squeeze %177 : memref<1x!tpu.dma_semaphore, #tpu.memory_space<semaphore_mem>> -> memref<!tpu.dma_semaphore, #tpu.memory_space<semaphore_mem>>
    tpu.enqueue_dma source(%174 : memref<1x128xf32, #tpu.memory_space<any>>) target(%176 : memref<1x128xf32, #tpu.memory_space<vmem>>) target_semaphore(%178 : memref<!tpu.dma_semaphore, #tpu.memory_space<semaphore_mem>>)
    %c6_i32_132 = arith.constant 6 : i32
    %179 = arith.addi %0, %c6_i32_132 : i32
    %180 = arith.index_cast %179 : i32 to index
    %c2_133 = arith.constant 2 : index
    %181 = memref.load %arg1[%180, %c2_133] : memref<8x8xi32, #tpu.memory_space<smem>>
    %c0_i32_134 = arith.constant 0 : i32
    %c0_i32_135 = arith.constant 0 : i32
    %c0_i32_136 = arith.constant 0 : i32
    %182 = tpu.memref_slice %arg3[%181, %c0_i32_136] : memref<33x128xf32, #tpu.memory_space<any>> -> memref<1x128xf32, #tpu.memory_space<any>>
    %c22_i32 = arith.constant 22 : i32
    %c0_i32_137 = arith.constant 0 : i32
    %183 = tpu.memref_slice %arg5[%c0_i32_134, %c22_i32, %c0_i32_137] : memref<2x64x128xf32, #tpu.memory_space<vmem>> -> memref<1x1x128xf32, #tpu.memory_space<vmem>>
    %184 = tpu.memref_squeeze %183 : memref<1x1x128xf32, #tpu.memory_space<vmem>> -> memref<1x128xf32, #tpu.memory_space<vmem>>
    %185 = tpu.memref_slice %arg7[%c0_i32_135] : memref<2x!tpu.dma_semaphore, #tpu.memory_space<semaphore_mem>> -> memref<1x!tpu.dma_semaphore, #tpu.memory_space<semaphore_mem>>
    %186 = tpu.memref_squeeze %185 : memref<1x!tpu.dma_semaphore, #tpu.memory_space<semaphore_mem>> -> memref<!tpu.dma_semaphore, #tpu.memory_space<semaphore_mem>>
    tpu.enqueue_dma source(%182 : memref<1x128xf32, #tpu.memory_space<any>>) target(%184 : memref<1x128xf32, #tpu.memory_space<vmem>>) target_semaphore(%186 : memref<!tpu.dma_semaphore, #tpu.memory_space<semaphore_mem>>)
    %c7_i32_138 = arith.constant 7 : i32
    %187 = arith.addi %0, %c7_i32_138 : i32
    %188 = arith.index_cast %187 : i32 to index
    %c2_139 = arith.constant 2 : index
    %189 = memref.load %arg1[%188, %c2_139] : memref<8x8xi32, #tpu.memory_space<smem>>
    %c0_i32_140 = arith.constant 0 : i32
    %c0_i32_141 = arith.constant 0 : i32
    %c0_i32_142 = arith.constant 0 : i32
    %190 = tpu.memref_slice %arg3[%189, %c0_i32_142] : memref<33x128xf32, #tpu.memory_space<any>> -> memref<1x128xf32, #tpu.memory_space<any>>
    %c23_i32 = arith.constant 23 : i32
    %c0_i32_143 = arith.constant 0 : i32
    %191 = tpu.memref_slice %arg5[%c0_i32_140, %c23_i32, %c0_i32_143] : memref<2x64x128xf32, #tpu.memory_space<vmem>> -> memref<1x1x128xf32, #tpu.memory_space<vmem>>
    %192 = tpu.memref_squeeze %191 : memref<1x1x128xf32, #tpu.memory_space<vmem>> -> memref<1x128xf32, #tpu.memory_space<vmem>>
    %193 = tpu.memref_slice %arg7[%c0_i32_141] : memref<2x!tpu.dma_semaphore, #tpu.memory_space<semaphore_mem>> -> memref<1x!tpu.dma_semaphore, #tpu.memory_space<semaphore_mem>>
    %194 = tpu.memref_squeeze %193 : memref<1x!tpu.dma_semaphore, #tpu.memory_space<semaphore_mem>> -> memref<!tpu.dma_semaphore, #tpu.memory_space<semaphore_mem>>
    tpu.enqueue_dma source(%190 : memref<1x128xf32, #tpu.memory_space<any>>) target(%192 : memref<1x128xf32, #tpu.memory_space<vmem>>) target_semaphore(%194 : memref<!tpu.dma_semaphore, #tpu.memory_space<semaphore_mem>>)
    %c0_i32_144 = arith.constant 0 : i32
    %195 = arith.addi %0, %c0_i32_144 : i32
    %196 = arith.index_cast %195 : i32 to index
    %c3 = arith.constant 3 : index
    %197 = memref.load %arg1[%196, %c3] : memref<8x8xi32, #tpu.memory_space<smem>>
    %c0_i32_145 = arith.constant 0 : i32
    %c0_i32_146 = arith.constant 0 : i32
    %c0_i32_147 = arith.constant 0 : i32
    %198 = tpu.memref_slice %arg3[%197, %c0_i32_147] : memref<33x128xf32, #tpu.memory_space<any>> -> memref<1x128xf32, #tpu.memory_space<any>>
    %c24_i32 = arith.constant 24 : i32
    %c0_i32_148 = arith.constant 0 : i32
    %199 = tpu.memref_slice %arg5[%c0_i32_145, %c24_i32, %c0_i32_148] : memref<2x64x128xf32, #tpu.memory_space<vmem>> -> memref<1x1x128xf32, #tpu.memory_space<vmem>>
    %200 = tpu.memref_squeeze %199 : memref<1x1x128xf32, #tpu.memory_space<vmem>> -> memref<1x128xf32, #tpu.memory_space<vmem>>
    %201 = tpu.memref_slice %arg7[%c0_i32_146] : memref<2x!tpu.dma_semaphore, #tpu.memory_space<semaphore_mem>> -> memref<1x!tpu.dma_semaphore, #tpu.memory_space<semaphore_mem>>
    %202 = tpu.memref_squeeze %201 : memref<1x!tpu.dma_semaphore, #tpu.memory_space<semaphore_mem>> -> memref<!tpu.dma_semaphore, #tpu.memory_space<semaphore_mem>>
    tpu.enqueue_dma source(%198 : memref<1x128xf32, #tpu.memory_space<any>>) target(%200 : memref<1x128xf32, #tpu.memory_space<vmem>>) target_semaphore(%202 : memref<!tpu.dma_semaphore, #tpu.memory_space<semaphore_mem>>)
    %c1_i32_149 = arith.constant 1 : i32
    %203 = arith.addi %0, %c1_i32_149 : i32
    %204 = arith.index_cast %203 : i32 to index
    %c3_150 = arith.constant 3 : index
    %205 = memref.load %arg1[%204, %c3_150] : memref<8x8xi32, #tpu.memory_space<smem>>
    %c0_i32_151 = arith.constant 0 : i32
    %c0_i32_152 = arith.constant 0 : i32
    %c0_i32_153 = arith.constant 0 : i32
    %206 = tpu.memref_slice %arg3[%205, %c0_i32_153] : memref<33x128xf32, #tpu.memory_space<any>> -> memref<1x128xf32, #tpu.memory_space<any>>
    %c25_i32 = arith.constant 25 : i32
    %c0_i32_154 = arith.constant 0 : i32
    %207 = tpu.memref_slice %arg5[%c0_i32_151, %c25_i32, %c0_i32_154] : memref<2x64x128xf32, #tpu.memory_space<vmem>> -> memref<1x1x128xf32, #tpu.memory_space<vmem>>
    %208 = tpu.memref_squeeze %207 : memref<1x1x128xf32, #tpu.memory_space<vmem>> -> memref<1x128xf32, #tpu.memory_space<vmem>>
    %209 = tpu.memref_slice %arg7[%c0_i32_152] : memref<2x!tpu.dma_semaphore, #tpu.memory_space<semaphore_mem>> -> memref<1x!tpu.dma_semaphore, #tpu.memory_space<semaphore_mem>>
    %210 = tpu.memref_squeeze %209 : memref<1x!tpu.dma_semaphore, #tpu.memory_space<semaphore_mem>> -> memref<!tpu.dma_semaphore, #tpu.memory_space<semaphore_mem>>
    tpu.enqueue_dma source(%206 : memref<1x128xf32, #tpu.memory_space<any>>) target(%208 : memref<1x128xf32, #tpu.memory_space<vmem>>) target_semaphore(%210 : memref<!tpu.dma_semaphore, #tpu.memory_space<semaphore_mem>>)
    %c2_i32_155 = arith.constant 2 : i32
    %211 = arith.addi %0, %c2_i32_155 : i32
    %212 = arith.index_cast %211 : i32 to index
    %c3_156 = arith.constant 3 : index
    %213 = memref.load %arg1[%212, %c3_156] : memref<8x8xi32, #tpu.memory_space<smem>>
    %c0_i32_157 = arith.constant 0 : i32
    %c0_i32_158 = arith.constant 0 : i32
    %c0_i32_159 = arith.constant 0 : i32
    %214 = tpu.memref_slice %arg3[%213, %c0_i32_159] : memref<33x128xf32, #tpu.memory_space<any>> -> memref<1x128xf32, #tpu.memory_space<any>>
    %c26_i32 = arith.constant 26 : i32
    %c0_i32_160 = arith.constant 0 : i32
    %215 = tpu.memref_slice %arg5[%c0_i32_157, %c26_i32, %c0_i32_160] : memref<2x64x128xf32, #tpu.memory_space<vmem>> -> memref<1x1x128xf32, #tpu.memory_space<vmem>>
    %216 = tpu.memref_squeeze %215 : memref<1x1x128xf32, #tpu.memory_space<vmem>> -> memref<1x128xf32, #tpu.memory_space<vmem>>
    %217 = tpu.memref_slice %arg7[%c0_i32_158] : memref<2x!tpu.dma_semaphore, #tpu.memory_space<semaphore_mem>> -> memref<1x!tpu.dma_semaphore, #tpu.memory_space<semaphore_mem>>
    %218 = tpu.memref_squeeze %217 : memref<1x!tpu.dma_semaphore, #tpu.memory_space<semaphore_mem>> -> memref<!tpu.dma_semaphore, #tpu.memory_space<semaphore_mem>>
    tpu.enqueue_dma source(%214 : memref<1x128xf32, #tpu.memory_space<any>>) target(%216 : memref<1x128xf32, #tpu.memory_space<vmem>>) target_semaphore(%218 : memref<!tpu.dma_semaphore, #tpu.memory_space<semaphore_mem>>)
    %c3_i32_161 = arith.constant 3 : i32
    %219 = arith.addi %0, %c3_i32_161 : i32
    %220 = arith.index_cast %219 : i32 to index
    %c3_162 = arith.constant 3 : index
    %221 = memref.load %arg1[%220, %c3_162] : memref<8x8xi32, #tpu.memory_space<smem>>
    %c0_i32_163 = arith.constant 0 : i32
    %c0_i32_164 = arith.constant 0 : i32
    %c0_i32_165 = arith.constant 0 : i32
    %222 = tpu.memref_slice %arg3[%221, %c0_i32_165] : memref<33x128xf32, #tpu.memory_space<any>> -> memref<1x128xf32, #tpu.memory_space<any>>
    %c27_i32 = arith.constant 27 : i32
    %c0_i32_166 = arith.constant 0 : i32
    %223 = tpu.memref_slice %arg5[%c0_i32_163, %c27_i32, %c0_i32_166] : memref<2x64x128xf32, #tpu.memory_space<vmem>> -> memref<1x1x128xf32, #tpu.memory_space<vmem>>
    %224 = tpu.memref_squeeze %223 : memref<1x1x128xf32, #tpu.memory_space<vmem>> -> memref<1x128xf32, #tpu.memory_space<vmem>>
    %225 = tpu.memref_slice %arg7[%c0_i32_164] : memref<2x!tpu.dma_semaphore, #tpu.memory_space<semaphore_mem>> -> memref<1x!tpu.dma_semaphore, #tpu.memory_space<semaphore_mem>>
    %226 = tpu.memref_squeeze %225 : memref<1x!tpu.dma_semaphore, #tpu.memory_space<semaphore_mem>> -> memref<!tpu.dma_semaphore, #tpu.memory_space<semaphore_mem>>
    tpu.enqueue_dma source(%222 : memref<1x128xf32, #tpu.memory_space<any>>) target(%224 : memref<1x128xf32, #tpu.memory_space<vmem>>) target_semaphore(%226 : memref<!tpu.dma_semaphore, #tpu.memory_space<semaphore_mem>>)
    %c4_i32_167 = arith.constant 4 : i32
    %227 = arith.addi %0, %c4_i32_167 : i32
    %228 = arith.index_cast %227 : i32 to index
    %c3_168 = arith.constant 3 : index
    %229 = memref.load %arg1[%228, %c3_168] : memref<8x8xi32, #tpu.memory_space<smem>>
    %c0_i32_169 = arith.constant 0 : i32
    %c0_i32_170 = arith.constant 0 : i32
    %c0_i32_171 = arith.constant 0 : i32
    %230 = tpu.memref_slice %arg3[%229, %c0_i32_171] : memref<33x128xf32, #tpu.memory_space<any>> -> memref<1x128xf32, #tpu.memory_space<any>>
    %c28_i32 = arith.constant 28 : i32
    %c0_i32_172 = arith.constant 0 : i32
    %231 = tpu.memref_slice %arg5[%c0_i32_169, %c28_i32, %c0_i32_172] : memref<2x64x128xf32, #tpu.memory_space<vmem>> -> memref<1x1x128xf32, #tpu.memory_space<vmem>>
    %232 = tpu.memref_squeeze %231 : memref<1x1x128xf32, #tpu.memory_space<vmem>> -> memref<1x128xf32, #tpu.memory_space<vmem>>
    %233 = tpu.memref_slice %arg7[%c0_i32_170] : memref<2x!tpu.dma_semaphore, #tpu.memory_space<semaphore_mem>> -> memref<1x!tpu.dma_semaphore, #tpu.memory_space<semaphore_mem>>
    %234 = tpu.memref_squeeze %233 : memref<1x!tpu.dma_semaphore, #tpu.memory_space<semaphore_mem>> -> memref<!tpu.dma_semaphore, #tpu.memory_space<semaphore_mem>>
    tpu.enqueue_dma source(%230 : memref<1x128xf32, #tpu.memory_space<any>>) target(%232 : memref<1x128xf32, #tpu.memory_space<vmem>>) target_semaphore(%234 : memref<!tpu.dma_semaphore, #tpu.memory_space<semaphore_mem>>)
    %c5_i32_173 = arith.constant 5 : i32
    %235 = arith.addi %0, %c5_i32_173 : i32
    %236 = arith.index_cast %235 : i32 to index
    %c3_174 = arith.constant 3 : index
    %237 = memref.load %arg1[%236, %c3_174] : memref<8x8xi32, #tpu.memory_space<smem>>
    %c0_i32_175 = arith.constant 0 : i32
    %c0_i32_176 = arith.constant 0 : i32
    %c0_i32_177 = arith.constant 0 : i32
    %238 = tpu.memref_slice %arg3[%237, %c0_i32_177] : memref<33x128xf32, #tpu.memory_space<any>> -> memref<1x128xf32, #tpu.memory_space<any>>
    %c29_i32 = arith.constant 29 : i32
    %c0_i32_178 = arith.constant 0 : i32
    %239 = tpu.memref_slice %arg5[%c0_i32_175, %c29_i32, %c0_i32_178] : memref<2x64x128xf32, #tpu.memory_space<vmem>> -> memref<1x1x128xf32, #tpu.memory_space<vmem>>
    %240 = tpu.memref_squeeze %239 : memref<1x1x128xf32, #tpu.memory_space<vmem>> -> memref<1x128xf32, #tpu.memory_space<vmem>>
    %241 = tpu.memref_slice %arg7[%c0_i32_176] : memref<2x!tpu.dma_semaphore, #tpu.memory_space<semaphore_mem>> -> memref<1x!tpu.dma_semaphore, #tpu.memory_space<semaphore_mem>>
    %242 = tpu.memref_squeeze %241 : memref<1x!tpu.dma_semaphore, #tpu.memory_space<semaphore_mem>> -> memref<!tpu.dma_semaphore, #tpu.memory_space<semaphore_mem>>
    tpu.enqueue_dma source(%238 : memref<1x128xf32, #tpu.memory_space<any>>) target(%240 : memref<1x128xf32, #tpu.memory_space<vmem>>) target_semaphore(%242 : memref<!tpu.dma_semaphore, #tpu.memory_space<semaphore_mem>>)
    %c6_i32_179 = arith.constant 6 : i32
    %243 = arith.addi %0, %c6_i32_179 : i32
    %244 = arith.index_cast %243 : i32 to index
    %c3_180 = arith.constant 3 : index
    %245 = memref.load %arg1[%244, %c3_180] : memref<8x8xi32, #tpu.memory_space<smem>>
    %c0_i32_181 = arith.constant 0 : i32
    %c0_i32_182 = arith.constant 0 : i32
    %c0_i32_183 = arith.constant 0 : i32
    %246 = tpu.memref_slice %arg3[%245, %c0_i32_183] : memref<33x128xf32, #tpu.memory_space<any>> -> memref<1x128xf32, #tpu.memory_space<any>>
    %c30_i32 = arith.constant 30 : i32
    %c0_i32_184 = arith.constant 0 : i32
    %247 = tpu.memref_slice %arg5[%c0_i32_181, %c30_i32, %c0_i32_184] : memref<2x64x128xf32, #tpu.memory_space<vmem>> -> memref<1x1x128xf32, #tpu.memory_space<vmem>>
    %248 = tpu.memref_squeeze %247 : memref<1x1x128xf32, #tpu.memory_space<vmem>> -> memref<1x128xf32, #tpu.memory_space<vmem>>
    %249 = tpu.memref_slice %arg7[%c0_i32_182] : memref<2x!tpu.dma_semaphore, #tpu.memory_space<semaphore_mem>> -> memref<1x!tpu.dma_semaphore, #tpu.memory_space<semaphore_mem>>
    %250 = tpu.memref_squeeze %249 : memref<1x!tpu.dma_semaphore, #tpu.memory_space<semaphore_mem>> -> memref<!tpu.dma_semaphore, #tpu.memory_space<semaphore_mem>>
    tpu.enqueue_dma source(%246 : memref<1x128xf32, #tpu.memory_space<any>>) target(%248 : memref<1x128xf32, #tpu.memory_space<vmem>>) target_semaphore(%250 : memref<!tpu.dma_semaphore, #tpu.memory_space<semaphore_mem>>)
    %c7_i32_185 = arith.constant 7 : i32
    %251 = arith.addi %0, %c7_i32_185 : i32
    %252 = arith.index_cast %251 : i32 to index
    %c3_186 = arith.constant 3 : index
    %253 = memref.load %arg1[%252, %c3_186] : memref<8x8xi32, #tpu.memory_space<smem>>
    %c0_i32_187 = arith.constant 0 : i32
    %c0_i32_188 = arith.constant 0 : i32
    %c0_i32_189 = arith.constant 0 : i32
    %254 = tpu.memref_slice %arg3[%253, %c0_i32_189] : memref<33x128xf32, #tpu.memory_space<any>> -> memref<1x128xf32, #tpu.memory_space<any>>
    %c31_i32 = arith.constant 31 : i32
    %c0_i32_190 = arith.constant 0 : i32
    %255 = tpu.memref_slice %arg5[%c0_i32_187, %c31_i32, %c0_i32_190] : memref<2x64x128xf32, #tpu.memory_space<vmem>> -> memref<1x1x128xf32, #tpu.memory_space<vmem>>
    %256 = tpu.memref_squeeze %255 : memref<1x1x128xf32, #tpu.memory_space<vmem>> -> memref<1x128xf32, #tpu.memory_space<vmem>>
    %257 = tpu.memref_slice %arg7[%c0_i32_188] : memref<2x!tpu.dma_semaphore, #tpu.memory_space<semaphore_mem>> -> memref<1x!tpu.dma_semaphore, #tpu.memory_space<semaphore_mem>>
    %258 = tpu.memref_squeeze %257 : memref<1x!tpu.dma_semaphore, #tpu.memory_space<semaphore_mem>> -> memref<!tpu.dma_semaphore, #tpu.memory_space<semaphore_mem>>
    tpu.enqueue_dma source(%254 : memref<1x128xf32, #tpu.memory_space<any>>) target(%256 : memref<1x128xf32, #tpu.memory_space<vmem>>) target_semaphore(%258 : memref<!tpu.dma_semaphore, #tpu.memory_space<semaphore_mem>>)
    %c0_i32_191 = arith.constant 0 : i32
    %259 = arith.addi %0, %c0_i32_191 : i32
    %260 = arith.index_cast %259 : i32 to index
    %c4 = arith.constant 4 : index
    %261 = memref.load %arg1[%260, %c4] : memref<8x8xi32, #tpu.memory_space<smem>>
    %c0_i32_192 = arith.constant 0 : i32
    %c0_i32_193 = arith.constant 0 : i32
    %c0_i32_194 = arith.constant 0 : i32
    %262 = tpu.memref_slice %arg3[%261, %c0_i32_194] : memref<33x128xf32, #tpu.memory_space<any>> -> memref<1x128xf32, #tpu.memory_space<any>>
    %c32_i32 = arith.constant 32 : i32
    %c0_i32_195 = arith.constant 0 : i32
    %263 = tpu.memref_slice %arg5[%c0_i32_192, %c32_i32, %c0_i32_195] : memref<2x64x128xf32, #tpu.memory_space<vmem>> -> memref<1x1x128xf32, #tpu.memory_space<vmem>>
    %264 = tpu.memref_squeeze %263 : memref<1x1x128xf32, #tpu.memory_space<vmem>> -> memref<1x128xf32, #tpu.memory_space<vmem>>
    %265 = tpu.memref_slice %arg7[%c0_i32_193] : memref<2x!tpu.dma_semaphore, #tpu.memory_space<semaphore_mem>> -> memref<1x!tpu.dma_semaphore, #tpu.memory_space<semaphore_mem>>
    %266 = tpu.memref_squeeze %265 : memref<1x!tpu.dma_semaphore, #tpu.memory_space<semaphore_mem>> -> memref<!tpu.dma_semaphore, #tpu.memory_space<semaphore_mem>>
    tpu.enqueue_dma source(%262 : memref<1x128xf32, #tpu.memory_space<any>>) target(%264 : memref<1x128xf32, #tpu.memory_space<vmem>>) target_semaphore(%266 : memref<!tpu.dma_semaphore, #tpu.memory_space<semaphore_mem>>)
    %c1_i32_196 = arith.constant 1 : i32
    %267 = arith.addi %0, %c1_i32_196 : i32
    %268 = arith.index_cast %267 : i32 to index
    %c4_197 = arith.constant 4 : index
    %269 = memref.load %arg1[%268, %c4_197] : memref<8x8xi32, #tpu.memory_space<smem>>
    %c0_i32_198 = arith.constant 0 : i32
    %c0_i32_199 = arith.constant 0 : i32
    %c0_i32_200 = arith.constant 0 : i32
    %270 = tpu.memref_slice %arg3[%269, %c0_i32_200] : memref<33x128xf32, #tpu.memory_space<any>> -> memref<1x128xf32, #tpu.memory_space<any>>
    %c33_i32 = arith.constant 33 : i32
    %c0_i32_201 = arith.constant 0 : i32
    %271 = tpu.memref_slice %arg5[%c0_i32_198, %c33_i32, %c0_i32_201] : memref<2x64x128xf32, #tpu.memory_space<vmem>> -> memref<1x1x128xf32, #tpu.memory_space<vmem>>
    %272 = tpu.memref_squeeze %271 : memref<1x1x128xf32, #tpu.memory_space<vmem>> -> memref<1x128xf32, #tpu.memory_space<vmem>>
    %273 = tpu.memref_slice %arg7[%c0_i32_199] : memref<2x!tpu.dma_semaphore, #tpu.memory_space<semaphore_mem>> -> memref<1x!tpu.dma_semaphore, #tpu.memory_space<semaphore_mem>>
    %274 = tpu.memref_squeeze %273 : memref<1x!tpu.dma_semaphore, #tpu.memory_space<semaphore_mem>> -> memref<!tpu.dma_semaphore, #tpu.memory_space<semaphore_mem>>
    tpu.enqueue_dma source(%270 : memref<1x128xf32, #tpu.memory_space<any>>) target(%272 : memref<1x128xf32, #tpu.memory_space<vmem>>) target_semaphore(%274 : memref<!tpu.dma_semaphore, #tpu.memory_space<semaphore_mem>>)
    %c2_i32_202 = arith.constant 2 : i32
    %275 = arith.addi %0, %c2_i32_202 : i32
    %276 = arith.index_cast %275 : i32 to index
    %c4_203 = arith.constant 4 : index
    %277 = memref.load %arg1[%276, %c4_203] : memref<8x8xi32, #tpu.memory_space<smem>>
    %c0_i32_204 = arith.constant 0 : i32
    %c0_i32_205 = arith.constant 0 : i32
    %c0_i32_206 = arith.constant 0 : i32
    %278 = tpu.memref_slice %arg3[%277, %c0_i32_206] : memref<33x128xf32, #tpu.memory_space<any>> -> memref<1x128xf32, #tpu.memory_space<any>>
    %c34_i32 = arith.constant 34 : i32
    %c0_i32_207 = arith.constant 0 : i32
    %279 = tpu.memref_slice %arg5[%c0_i32_204, %c34_i32, %c0_i32_207] : memref<2x64x128xf32, #tpu.memory_space<vmem>> -> memref<1x1x128xf32, #tpu.memory_space<vmem>>
    %280 = tpu.memref_squeeze %279 : memref<1x1x128xf32, #tpu.memory_space<vmem>> -> memref<1x128xf32, #tpu.memory_space<vmem>>
    %281 = tpu.memref_slice %arg7[%c0_i32_205] : memref<2x!tpu.dma_semaphore, #tpu.memory_space<semaphore_mem>> -> memref<1x!tpu.dma_semaphore, #tpu.memory_space<semaphore_mem>>
    %282 = tpu.memref_squeeze %281 : memref<1x!tpu.dma_semaphore, #tpu.memory_space<semaphore_mem>> -> memref<!tpu.dma_semaphore, #tpu.memory_space<semaphore_mem>>
    tpu.enqueue_dma source(%278 : memref<1x128xf32, #tpu.memory_space<any>>) target(%280 : memref<1x128xf32, #tpu.memory_space<vmem>>) target_semaphore(%282 : memref<!tpu.dma_semaphore, #tpu.memory_space<semaphore_mem>>)
    %c3_i32_208 = arith.constant 3 : i32
    %283 = arith.addi %0, %c3_i32_208 : i32
    %284 = arith.index_cast %283 : i32 to index
    %c4_209 = arith.constant 4 : index
    %285 = memref.load %arg1[%284, %c4_209] : memref<8x8xi32, #tpu.memory_space<smem>>
    %c0_i32_210 = arith.constant 0 : i32
    %c0_i32_211 = arith.constant 0 : i32
    %c0_i32_212 = arith.constant 0 : i32
    %286 = tpu.memref_slice %arg3[%285, %c0_i32_212] : memref<33x128xf32, #tpu.memory_space<any>> -> memref<1x128xf32, #tpu.memory_space<any>>
    %c35_i32 = arith.constant 35 : i32
    %c0_i32_213 = arith.constant 0 : i32
    %287 = tpu.memref_slice %arg5[%c0_i32_210, %c35_i32, %c0_i32_213] : memref<2x64x128xf32, #tpu.memory_space<vmem>> -> memref<1x1x128xf32, #tpu.memory_space<vmem>>
    %288 = tpu.memref_squeeze %287 : memref<1x1x128xf32, #tpu.memory_space<vmem>> -> memref<1x128xf32, #tpu.memory_space<vmem>>
    %289 = tpu.memref_slice %arg7[%c0_i32_211] : memref<2x!tpu.dma_semaphore, #tpu.memory_space<semaphore_mem>> -> memref<1x!tpu.dma_semaphore, #tpu.memory_space<semaphore_mem>>
    %290 = tpu.memref_squeeze %289 : memref<1x!tpu.dma_semaphore, #tpu.memory_space<semaphore_mem>> -> memref<!tpu.dma_semaphore, #tpu.memory_space<semaphore_mem>>
    tpu.enqueue_dma source(%286 : memref<1x128xf32, #tpu.memory_space<any>>) target(%288 : memref<1x128xf32, #tpu.memory_space<vmem>>) target_semaphore(%290 : memref<!tpu.dma_semaphore, #tpu.memory_space<semaphore_mem>>)
    %c4_i32_214 = arith.constant 4 : i32
    %291 = arith.addi %0, %c4_i32_214 : i32
    %292 = arith.index_cast %291 : i32 to index
    %c4_215 = arith.constant 4 : index
    %293 = memref.load %arg1[%292, %c4_215] : memref<8x8xi32, #tpu.memory_space<smem>>
    %c0_i32_216 = arith.constant 0 : i32
    %c0_i32_217 = arith.constant 0 : i32
    %c0_i32_218 = arith.constant 0 : i32
    %294 = tpu.memref_slice %arg3[%293, %c0_i32_218] : memref<33x128xf32, #tpu.memory_space<any>> -> memref<1x128xf32, #tpu.memory_space<any>>
    %c36_i32 = arith.constant 36 : i32
    %c0_i32_219 = arith.constant 0 : i32
    %295 = tpu.memref_slice %arg5[%c0_i32_216, %c36_i32, %c0_i32_219] : memref<2x64x128xf32, #tpu.memory_space<vmem>> -> memref<1x1x128xf32, #tpu.memory_space<vmem>>
    %296 = tpu.memref_squeeze %295 : memref<1x1x128xf32, #tpu.memory_space<vmem>> -> memref<1x128xf32, #tpu.memory_space<vmem>>
    %297 = tpu.memref_slice %arg7[%c0_i32_217] : memref<2x!tpu.dma_semaphore, #tpu.memory_space<semaphore_mem>> -> memref<1x!tpu.dma_semaphore, #tpu.memory_space<semaphore_mem>>
    %298 = tpu.memref_squeeze %297 : memref<1x!tpu.dma_semaphore, #tpu.memory_space<semaphore_mem>> -> memref<!tpu.dma_semaphore, #tpu.memory_space<semaphore_mem>>
    tpu.enqueue_dma source(%294 : memref<1x128xf32, #tpu.memory_space<any>>) target(%296 : memref<1x128xf32, #tpu.memory_space<vmem>>) target_semaphore(%298 : memref<!tpu.dma_semaphore, #tpu.memory_space<semaphore_mem>>)
    %c5_i32_220 = arith.constant 5 : i32
    %299 = arith.addi %0, %c5_i32_220 : i32
    %300 = arith.index_cast %299 : i32 to index
    %c4_221 = arith.constant 4 : index
    %301 = memref.load %arg1[%300, %c4_221] : memref<8x8xi32, #tpu.memory_space<smem>>
    %c0_i32_222 = arith.constant 0 : i32
    %c0_i32_223 = arith.constant 0 : i32
    %c0_i32_224 = arith.constant 0 : i32
    %302 = tpu.memref_slice %arg3[%301, %c0_i32_224] : memref<33x128xf32, #tpu.memory_space<any>> -> memref<1x128xf32, #tpu.memory_space<any>>
    %c37_i32 = arith.constant 37 : i32
    %c0_i32_225 = arith.constant 0 : i32
    %303 = tpu.memref_slice %arg5[%c0_i32_222, %c37_i32, %c0_i32_225] : memref<2x64x128xf32, #tpu.memory_space<vmem>> -> memref<1x1x128xf32, #tpu.memory_space<vmem>>
    %304 = tpu.memref_squeeze %303 : memref<1x1x128xf32, #tpu.memory_space<vmem>> -> memref<1x128xf32, #tpu.memory_space<vmem>>
    %305 = tpu.memref_slice %arg7[%c0_i32_223] : memref<2x!tpu.dma_semaphore, #tpu.memory_space<semaphore_mem>> -> memref<1x!tpu.dma_semaphore, #tpu.memory_space<semaphore_mem>>
    %306 = tpu.memref_squeeze %305 : memref<1x!tpu.dma_semaphore, #tpu.memory_space<semaphore_mem>> -> memref<!tpu.dma_semaphore, #tpu.memory_space<semaphore_mem>>
    tpu.enqueue_dma source(%302 : memref<1x128xf32, #tpu.memory_space<any>>) target(%304 : memref<1x128xf32, #tpu.memory_space<vmem>>) target_semaphore(%306 : memref<!tpu.dma_semaphore, #tpu.memory_space<semaphore_mem>>)
    %c6_i32_226 = arith.constant 6 : i32
    %307 = arith.addi %0, %c6_i32_226 : i32
    %308 = arith.index_cast %307 : i32 to index
    %c4_227 = arith.constant 4 : index
    %309 = memref.load %arg1[%308, %c4_227] : memref<8x8xi32, #tpu.memory_space<smem>>
    %c0_i32_228 = arith.constant 0 : i32
    %c0_i32_229 = arith.constant 0 : i32
    %c0_i32_230 = arith.constant 0 : i32
    %310 = tpu.memref_slice %arg3[%309, %c0_i32_230] : memref<33x128xf32, #tpu.memory_space<any>> -> memref<1x128xf32, #tpu.memory_space<any>>
    %c38_i32 = arith.constant 38 : i32
    %c0_i32_231 = arith.constant 0 : i32
    %311 = tpu.memref_slice %arg5[%c0_i32_228, %c38_i32, %c0_i32_231] : memref<2x64x128xf32, #tpu.memory_space<vmem>> -> memref<1x1x128xf32, #tpu.memory_space<vmem>>
    %312 = tpu.memref_squeeze %311 : memref<1x1x128xf32, #tpu.memory_space<vmem>> -> memref<1x128xf32, #tpu.memory_space<vmem>>
    %313 = tpu.memref_slice %arg7[%c0_i32_229] : memref<2x!tpu.dma_semaphore, #tpu.memory_space<semaphore_mem>> -> memref<1x!tpu.dma_semaphore, #tpu.memory_space<semaphore_mem>>
    %314 = tpu.memref_squeeze %313 : memref<1x!tpu.dma_semaphore, #tpu.memory_space<semaphore_mem>> -> memref<!tpu.dma_semaphore, #tpu.memory_space<semaphore_mem>>
    tpu.enqueue_dma source(%310 : memref<1x128xf32, #tpu.memory_space<any>>) target(%312 : memref<1x128xf32, #tpu.memory_space<vmem>>) target_semaphore(%314 : memref<!tpu.dma_semaphore, #tpu.memory_space<semaphore_mem>>)
    %c7_i32_232 = arith.constant 7 : i32
    %315 = arith.addi %0, %c7_i32_232 : i32
    %316 = arith.index_cast %315 : i32 to index
    %c4_233 = arith.constant 4 : index
    %317 = memref.load %arg1[%316, %c4_233] : memref<8x8xi32, #tpu.memory_space<smem>>
    %c0_i32_234 = arith.constant 0 : i32
    %c0_i32_235 = arith.constant 0 : i32
    %c0_i32_236 = arith.constant 0 : i32
    %318 = tpu.memref_slice %arg3[%317, %c0_i32_236] : memref<33x128xf32, #tpu.memory_space<any>> -> memref<1x128xf32, #tpu.memory_space<any>>
    %c39_i32 = arith.constant 39 : i32
    %c0_i32_237 = arith.constant 0 : i32
    %319 = tpu.memref_slice %arg5[%c0_i32_234, %c39_i32, %c0_i32_237] : memref<2x64x128xf32, #tpu.memory_space<vmem>> -> memref<1x1x128xf32, #tpu.memory_space<vmem>>
    %320 = tpu.memref_squeeze %319 : memref<1x1x128xf32, #tpu.memory_space<vmem>> -> memref<1x128xf32, #tpu.memory_space<vmem>>
    %321 = tpu.memref_slice %arg7[%c0_i32_235] : memref<2x!tpu.dma_semaphore, #tpu.memory_space<semaphore_mem>> -> memref<1x!tpu.dma_semaphore, #tpu.memory_space<semaphore_mem>>
    %322 = tpu.memref_squeeze %321 : memref<1x!tpu.dma_semaphore, #tpu.memory_space<semaphore_mem>> -> memref<!tpu.dma_semaphore, #tpu.memory_space<semaphore_mem>>
    tpu.enqueue_dma source(%318 : memref<1x128xf32, #tpu.memory_space<any>>) target(%320 : memref<1x128xf32, #tpu.memory_space<vmem>>) target_semaphore(%322 : memref<!tpu.dma_semaphore, #tpu.memory_space<semaphore_mem>>)
    %c0_i32_238 = arith.constant 0 : i32
    %323 = arith.addi %0, %c0_i32_238 : i32
    %324 = arith.index_cast %323 : i32 to index
    %c5 = arith.constant 5 : index
    %325 = memref.load %arg1[%324, %c5] : memref<8x8xi32, #tpu.memory_space<smem>>
    %c0_i32_239 = arith.constant 0 : i32
    %c0_i32_240 = arith.constant 0 : i32
    %c0_i32_241 = arith.constant 0 : i32
    %326 = tpu.memref_slice %arg3[%325, %c0_i32_241] : memref<33x128xf32, #tpu.memory_space<any>> -> memref<1x128xf32, #tpu.memory_space<any>>
    %c40_i32 = arith.constant 40 : i32
    %c0_i32_242 = arith.constant 0 : i32
    %327 = tpu.memref_slice %arg5[%c0_i32_239, %c40_i32, %c0_i32_242] : memref<2x64x128xf32, #tpu.memory_space<vmem>> -> memref<1x1x128xf32, #tpu.memory_space<vmem>>
    %328 = tpu.memref_squeeze %327 : memref<1x1x128xf32, #tpu.memory_space<vmem>> -> memref<1x128xf32, #tpu.memory_space<vmem>>
    %329 = tpu.memref_slice %arg7[%c0_i32_240] : memref<2x!tpu.dma_semaphore, #tpu.memory_space<semaphore_mem>> -> memref<1x!tpu.dma_semaphore, #tpu.memory_space<semaphore_mem>>
    %330 = tpu.memref_squeeze %329 : memref<1x!tpu.dma_semaphore, #tpu.memory_space<semaphore_mem>> -> memref<!tpu.dma_semaphore, #tpu.memory_space<semaphore_mem>>
    tpu.enqueue_dma source(%326 : memref<1x128xf32, #tpu.memory_space<any>>) target(%328 : memref<1x128xf32, #tpu.memory_space<vmem>>) target_semaphore(%330 : memref<!tpu.dma_semaphore, #tpu.memory_space<semaphore_mem>>)
    %c1_i32_243 = arith.constant 1 : i32
    %331 = arith.addi %0, %c1_i32_243 : i32
    %332 = arith.index_cast %331 : i32 to index
    %c5_244 = arith.constant 5 : index
    %333 = memref.load %arg1[%332, %c5_244] : memref<8x8xi32, #tpu.memory_space<smem>>
    %c0_i32_245 = arith.constant 0 : i32
    %c0_i32_246 = arith.constant 0 : i32
    %c0_i32_247 = arith.constant 0 : i32
    %334 = tpu.memref_slice %arg3[%333, %c0_i32_247] : memref<33x128xf32, #tpu.memory_space<any>> -> memref<1x128xf32, #tpu.memory_space<any>>
    %c41_i32 = arith.constant 41 : i32
    %c0_i32_248 = arith.constant 0 : i32
    %335 = tpu.memref_slice %arg5[%c0_i32_245, %c41_i32, %c0_i32_248] : memref<2x64x128xf32, #tpu.memory_space<vmem>> -> memref<1x1x128xf32, #tpu.memory_space<vmem>>
    %336 = tpu.memref_squeeze %335 : memref<1x1x128xf32, #tpu.memory_space<vmem>> -> memref<1x128xf32, #tpu.memory_space<vmem>>
    %337 = tpu.memref_slice %arg7[%c0_i32_246] : memref<2x!tpu.dma_semaphore, #tpu.memory_space<semaphore_mem>> -> memref<1x!tpu.dma_semaphore, #tpu.memory_space<semaphore_mem>>
    %338 = tpu.memref_squeeze %337 : memref<1x!tpu.dma_semaphore, #tpu.memory_space<semaphore_mem>> -> memref<!tpu.dma_semaphore, #tpu.memory_space<semaphore_mem>>
    tpu.enqueue_dma source(%334 : memref<1x128xf32, #tpu.memory_space<any>>) target(%336 : memref<1x128xf32, #tpu.memory_space<vmem>>) target_semaphore(%338 : memref<!tpu.dma_semaphore, #tpu.memory_space<semaphore_mem>>)
    %c2_i32_249 = arith.constant 2 : i32
    %339 = arith.addi %0, %c2_i32_249 : i32
    %340 = arith.index_cast %339 : i32 to index
    %c5_250 = arith.constant 5 : index
    %341 = memref.load %arg1[%340, %c5_250] : memref<8x8xi32, #tpu.memory_space<smem>>
    %c0_i32_251 = arith.constant 0 : i32
    %c0_i32_252 = arith.constant 0 : i32
    %c0_i32_253 = arith.constant 0 : i32
    %342 = tpu.memref_slice %arg3[%341, %c0_i32_253] : memref<33x128xf32, #tpu.memory_space<any>> -> memref<1x128xf32, #tpu.memory_space<any>>
    %c42_i32 = arith.constant 42 : i32
    %c0_i32_254 = arith.constant 0 : i32
    %343 = tpu.memref_slice %arg5[%c0_i32_251, %c42_i32, %c0_i32_254] : memref<2x64x128xf32, #tpu.memory_space<vmem>> -> memref<1x1x128xf32, #tpu.memory_space<vmem>>
    %344 = tpu.memref_squeeze %343 : memref<1x1x128xf32, #tpu.memory_space<vmem>> -> memref<1x128xf32, #tpu.memory_space<vmem>>
    %345 = tpu.memref_slice %arg7[%c0_i32_252] : memref<2x!tpu.dma_semaphore, #tpu.memory_space<semaphore_mem>> -> memref<1x!tpu.dma_semaphore, #tpu.memory_space<semaphore_mem>>
    %346 = tpu.memref_squeeze %345 : memref<1x!tpu.dma_semaphore, #tpu.memory_space<semaphore_mem>> -> memref<!tpu.dma_semaphore, #tpu.memory_space<semaphore_mem>>
    tpu.enqueue_dma source(%342 : memref<1x128xf32, #tpu.memory_space<any>>) target(%344 : memref<1x128xf32, #tpu.memory_space<vmem>>) target_semaphore(%346 : memref<!tpu.dma_semaphore, #tpu.memory_space<semaphore_mem>>)
    %c3_i32_255 = arith.constant 3 : i32
    %347 = arith.addi %0, %c3_i32_255 : i32
    %348 = arith.index_cast %347 : i32 to index
    %c5_256 = arith.constant 5 : index
    %349 = memref.load %arg1[%348, %c5_256] : memref<8x8xi32, #tpu.memory_space<smem>>
    %c0_i32_257 = arith.constant 0 : i32
    %c0_i32_258 = arith.constant 0 : i32
    %c0_i32_259 = arith.constant 0 : i32
    %350 = tpu.memref_slice %arg3[%349, %c0_i32_259] : memref<33x128xf32, #tpu.memory_space<any>> -> memref<1x128xf32, #tpu.memory_space<any>>
    %c43_i32 = arith.constant 43 : i32
    %c0_i32_260 = arith.constant 0 : i32
    %351 = tpu.memref_slice %arg5[%c0_i32_257, %c43_i32, %c0_i32_260] : memref<2x64x128xf32, #tpu.memory_space<vmem>> -> memref<1x1x128xf32, #tpu.memory_space<vmem>>
    %352 = tpu.memref_squeeze %351 : memref<1x1x128xf32, #tpu.memory_space<vmem>> -> memref<1x128xf32, #tpu.memory_space<vmem>>
    %353 = tpu.memref_slice %arg7[%c0_i32_258] : memref<2x!tpu.dma_semaphore, #tpu.memory_space<semaphore_mem>> -> memref<1x!tpu.dma_semaphore, #tpu.memory_space<semaphore_mem>>
    %354 = tpu.memref_squeeze %353 : memref<1x!tpu.dma_semaphore, #tpu.memory_space<semaphore_mem>> -> memref<!tpu.dma_semaphore, #tpu.memory_space<semaphore_mem>>
    tpu.enqueue_dma source(%350 : memref<1x128xf32, #tpu.memory_space<any>>) target(%352 : memref<1x128xf32, #tpu.memory_space<vmem>>) target_semaphore(%354 : memref<!tpu.dma_semaphore, #tpu.memory_space<semaphore_mem>>)
    %c4_i32_261 = arith.constant 4 : i32
    %355 = arith.addi %0, %c4_i32_261 : i32
    %356 = arith.index_cast %355 : i32 to index
    %c5_262 = arith.constant 5 : index
    %357 = memref.load %arg1[%356, %c5_262] : memref<8x8xi32, #tpu.memory_space<smem>>
    %c0_i32_263 = arith.constant 0 : i32
    %c0_i32_264 = arith.constant 0 : i32
    %c0_i32_265 = arith.constant 0 : i32
    %358 = tpu.memref_slice %arg3[%357, %c0_i32_265] : memref<33x128xf32, #tpu.memory_space<any>> -> memref<1x128xf32, #tpu.memory_space<any>>
    %c44_i32 = arith.constant 44 : i32
    %c0_i32_266 = arith.constant 0 : i32
    %359 = tpu.memref_slice %arg5[%c0_i32_263, %c44_i32, %c0_i32_266] : memref<2x64x128xf32, #tpu.memory_space<vmem>> -> memref<1x1x128xf32, #tpu.memory_space<vmem>>
    %360 = tpu.memref_squeeze %359 : memref<1x1x128xf32, #tpu.memory_space<vmem>> -> memref<1x128xf32, #tpu.memory_space<vmem>>
    %361 = tpu.memref_slice %arg7[%c0_i32_264] : memref<2x!tpu.dma_semaphore, #tpu.memory_space<semaphore_mem>> -> memref<1x!tpu.dma_semaphore, #tpu.memory_space<semaphore_mem>>
    %362 = tpu.memref_squeeze %361 : memref<1x!tpu.dma_semaphore, #tpu.memory_space<semaphore_mem>> -> memref<!tpu.dma_semaphore, #tpu.memory_space<semaphore_mem>>
    tpu.enqueue_dma source(%358 : memref<1x128xf32, #tpu.memory_space<any>>) target(%360 : memref<1x128xf32, #tpu.memory_space<vmem>>) target_semaphore(%362 : memref<!tpu.dma_semaphore, #tpu.memory_space<semaphore_mem>>)
    %c5_i32_267 = arith.constant 5 : i32
    %363 = arith.addi %0, %c5_i32_267 : i32
    %364 = arith.index_cast %363 : i32 to index
    %c5_268 = arith.constant 5 : index
    %365 = memref.load %arg1[%364, %c5_268] : memref<8x8xi32, #tpu.memory_space<smem>>
    %c0_i32_269 = arith.constant 0 : i32
    %c0_i32_270 = arith.constant 0 : i32
    %c0_i32_271 = arith.constant 0 : i32
    %366 = tpu.memref_slice %arg3[%365, %c0_i32_271] : memref<33x128xf32, #tpu.memory_space<any>> -> memref<1x128xf32, #tpu.memory_space<any>>
    %c45_i32 = arith.constant 45 : i32
    %c0_i32_272 = arith.constant 0 : i32
    %367 = tpu.memref_slice %arg5[%c0_i32_269, %c45_i32, %c0_i32_272] : memref<2x64x128xf32, #tpu.memory_space<vmem>> -> memref<1x1x128xf32, #tpu.memory_space<vmem>>
    %368 = tpu.memref_squeeze %367 : memref<1x1x128xf32, #tpu.memory_space<vmem>> -> memref<1x128xf32, #tpu.memory_space<vmem>>
    %369 = tpu.memref_slice %arg7[%c0_i32_270] : memref<2x!tpu.dma_semaphore, #tpu.memory_space<semaphore_mem>> -> memref<1x!tpu.dma_semaphore, #tpu.memory_space<semaphore_mem>>
    %370 = tpu.memref_squeeze %369 : memref<1x!tpu.dma_semaphore, #tpu.memory_space<semaphore_mem>> -> memref<!tpu.dma_semaphore, #tpu.memory_space<semaphore_mem>>
    tpu.enqueue_dma source(%366 : memref<1x128xf32, #tpu.memory_space<any>>) target(%368 : memref<1x128xf32, #tpu.memory_space<vmem>>) target_semaphore(%370 : memref<!tpu.dma_semaphore, #tpu.memory_space<semaphore_mem>>)
    %c6_i32_273 = arith.constant 6 : i32
    %371 = arith.addi %0, %c6_i32_273 : i32
    %372 = arith.index_cast %371 : i32 to index
    %c5_274 = arith.constant 5 : index
    %373 = memref.load %arg1[%372, %c5_274] : memref<8x8xi32, #tpu.memory_space<smem>>
    %c0_i32_275 = arith.constant 0 : i32
    %c0_i32_276 = arith.constant 0 : i32
    %c0_i32_277 = arith.constant 0 : i32
    %374 = tpu.memref_slice %arg3[%373, %c0_i32_277] : memref<33x128xf32, #tpu.memory_space<any>> -> memref<1x128xf32, #tpu.memory_space<any>>
    %c46_i32 = arith.constant 46 : i32
    %c0_i32_278 = arith.constant 0 : i32
    %375 = tpu.memref_slice %arg5[%c0_i32_275, %c46_i32, %c0_i32_278] : memref<2x64x128xf32, #tpu.memory_space<vmem>> -> memref<1x1x128xf32, #tpu.memory_space<vmem>>
    %376 = tpu.memref_squeeze %375 : memref<1x1x128xf32, #tpu.memory_space<vmem>> -> memref<1x128xf32, #tpu.memory_space<vmem>>
    %377 = tpu.memref_slice %arg7[%c0_i32_276] : memref<2x!tpu.dma_semaphore, #tpu.memory_space<semaphore_mem>> -> memref<1x!tpu.dma_semaphore, #tpu.memory_space<semaphore_mem>>
    %378 = tpu.memref_squeeze %377 : memref<1x!tpu.dma_semaphore, #tpu.memory_space<semaphore_mem>> -> memref<!tpu.dma_semaphore, #tpu.memory_space<semaphore_mem>>
    tpu.enqueue_dma source(%374 : memref<1x128xf32, #tpu.memory_space<any>>) target(%376 : memref<1x128xf32, #tpu.memory_space<vmem>>) target_semaphore(%378 : memref<!tpu.dma_semaphore, #tpu.memory_space<semaphore_mem>>)
    %c7_i32_279 = arith.constant 7 : i32
    %379 = arith.addi %0, %c7_i32_279 : i32
    %380 = arith.index_cast %379 : i32 to index
    %c5_280 = arith.constant 5 : index
    %381 = memref.load %arg1[%380, %c5_280] : memref<8x8xi32, #tpu.memory_space<smem>>
    %c0_i32_281 = arith.constant 0 : i32
    %c0_i32_282 = arith.constant 0 : i32
    %c0_i32_283 = arith.constant 0 : i32
    %382 = tpu.memref_slice %arg3[%381, %c0_i32_283] : memref<33x128xf32, #tpu.memory_space<any>> -> memref<1x128xf32, #tpu.memory_space<any>>
    %c47_i32 = arith.constant 47 : i32
    %c0_i32_284 = arith.constant 0 : i32
    %383 = tpu.memref_slice %arg5[%c0_i32_281, %c47_i32, %c0_i32_284] : memref<2x64x128xf32, #tpu.memory_space<vmem>> -> memref<1x1x128xf32, #tpu.memory_space<vmem>>
    %384 = tpu.memref_squeeze %383 : memref<1x1x128xf32, #tpu.memory_space<vmem>> -> memref<1x128xf32, #tpu.memory_space<vmem>>
    %385 = tpu.memref_slice %arg7[%c0_i32_282] : memref<2x!tpu.dma_semaphore, #tpu.memory_space<semaphore_mem>> -> memref<1x!tpu.dma_semaphore, #tpu.memory_space<semaphore_mem>>
    %386 = tpu.memref_squeeze %385 : memref<1x!tpu.dma_semaphore, #tpu.memory_space<semaphore_mem>> -> memref<!tpu.dma_semaphore, #tpu.memory_space<semaphore_mem>>
    tpu.enqueue_dma source(%382 : memref<1x128xf32, #tpu.memory_space<any>>) target(%384 : memref<1x128xf32, #tpu.memory_space<vmem>>) target_semaphore(%386 : memref<!tpu.dma_semaphore, #tpu.memory_space<semaphore_mem>>)
    %c0_i32_285 = arith.constant 0 : i32
    %387 = arith.addi %0, %c0_i32_285 : i32
    %388 = arith.index_cast %387 : i32 to index
    %c6 = arith.constant 6 : index
    %389 = memref.load %arg1[%388, %c6] : memref<8x8xi32, #tpu.memory_space<smem>>
    %c0_i32_286 = arith.constant 0 : i32
    %c0_i32_287 = arith.constant 0 : i32
    %c0_i32_288 = arith.constant 0 : i32
    %390 = tpu.memref_slice %arg3[%389, %c0_i32_288] : memref<33x128xf32, #tpu.memory_space<any>> -> memref<1x128xf32, #tpu.memory_space<any>>
    %c48_i32 = arith.constant 48 : i32
    %c0_i32_289 = arith.constant 0 : i32
    %391 = tpu.memref_slice %arg5[%c0_i32_286, %c48_i32, %c0_i32_289] : memref<2x64x128xf32, #tpu.memory_space<vmem>> -> memref<1x1x128xf32, #tpu.memory_space<vmem>>
    %392 = tpu.memref_squeeze %391 : memref<1x1x128xf32, #tpu.memory_space<vmem>> -> memref<1x128xf32, #tpu.memory_space<vmem>>
    %393 = tpu.memref_slice %arg7[%c0_i32_287] : memref<2x!tpu.dma_semaphore, #tpu.memory_space<semaphore_mem>> -> memref<1x!tpu.dma_semaphore, #tpu.memory_space<semaphore_mem>>
    %394 = tpu.memref_squeeze %393 : memref<1x!tpu.dma_semaphore, #tpu.memory_space<semaphore_mem>> -> memref<!tpu.dma_semaphore, #tpu.memory_space<semaphore_mem>>
    tpu.enqueue_dma source(%390 : memref<1x128xf32, #tpu.memory_space<any>>) target(%392 : memref<1x128xf32, #tpu.memory_space<vmem>>) target_semaphore(%394 : memref<!tpu.dma_semaphore, #tpu.memory_space<semaphore_mem>>)
    %c1_i32_290 = arith.constant 1 : i32
    %395 = arith.addi %0, %c1_i32_290 : i32
    %396 = arith.index_cast %395 : i32 to index
    %c6_291 = arith.constant 6 : index
    %397 = memref.load %arg1[%396, %c6_291] : memref<8x8xi32, #tpu.memory_space<smem>>
    %c0_i32_292 = arith.constant 0 : i32
    %c0_i32_293 = arith.constant 0 : i32
    %c0_i32_294 = arith.constant 0 : i32
    %398 = tpu.memref_slice %arg3[%397, %c0_i32_294] : memref<33x128xf32, #tpu.memory_space<any>> -> memref<1x128xf32, #tpu.memory_space<any>>
    %c49_i32 = arith.constant 49 : i32
    %c0_i32_295 = arith.constant 0 : i32
    %399 = tpu.memref_slice %arg5[%c0_i32_292, %c49_i32, %c0_i32_295] : memref<2x64x128xf32, #tpu.memory_space<vmem>> -> memref<1x1x128xf32, #tpu.memory_space<vmem>>
    %400 = tpu.memref_squeeze %399 : memref<1x1x128xf32, #tpu.memory_space<vmem>> -> memref<1x128xf32, #tpu.memory_space<vmem>>
    %401 = tpu.memref_slice %arg7[%c0_i32_293] : memref<2x!tpu.dma_semaphore, #tpu.memory_space<semaphore_mem>> -> memref<1x!tpu.dma_semaphore, #tpu.memory_space<semaphore_mem>>
    %402 = tpu.memref_squeeze %401 : memref<1x!tpu.dma_semaphore, #tpu.memory_space<semaphore_mem>> -> memref<!tpu.dma_semaphore, #tpu.memory_space<semaphore_mem>>
    tpu.enqueue_dma source(%398 : memref<1x128xf32, #tpu.memory_space<any>>) target(%400 : memref<1x128xf32, #tpu.memory_space<vmem>>) target_semaphore(%402 : memref<!tpu.dma_semaphore, #tpu.memory_space<semaphore_mem>>)
    %c2_i32_296 = arith.constant 2 : i32
    %403 = arith.addi %0, %c2_i32_296 : i32
    %404 = arith.index_cast %403 : i32 to index
    %c6_297 = arith.constant 6 : index
    %405 = memref.load %arg1[%404, %c6_297] : memref<8x8xi32, #tpu.memory_space<smem>>
    %c0_i32_298 = arith.constant 0 : i32
    %c0_i32_299 = arith.constant 0 : i32
    %c0_i32_300 = arith.constant 0 : i32
    %406 = tpu.memref_slice %arg3[%405, %c0_i32_300] : memref<33x128xf32, #tpu.memory_space<any>> -> memref<1x128xf32, #tpu.memory_space<any>>
    %c50_i32 = arith.constant 50 : i32
    %c0_i32_301 = arith.constant 0 : i32
    %407 = tpu.memref_slice %arg5[%c0_i32_298, %c50_i32, %c0_i32_301] : memref<2x64x128xf32, #tpu.memory_space<vmem>> -> memref<1x1x128xf32, #tpu.memory_space<vmem>>
    %408 = tpu.memref_squeeze %407 : memref<1x1x128xf32, #tpu.memory_space<vmem>> -> memref<1x128xf32, #tpu.memory_space<vmem>>
    %409 = tpu.memref_slice %arg7[%c0_i32_299] : memref<2x!tpu.dma_semaphore, #tpu.memory_space<semaphore_mem>> -> memref<1x!tpu.dma_semaphore, #tpu.memory_space<semaphore_mem>>
    %410 = tpu.memref_squeeze %409 : memref<1x!tpu.dma_semaphore, #tpu.memory_space<semaphore_mem>> -> memref<!tpu.dma_semaphore, #tpu.memory_space<semaphore_mem>>
    tpu.enqueue_dma source(%406 : memref<1x128xf32, #tpu.memory_space<any>>) target(%408 : memref<1x128xf32, #tpu.memory_space<vmem>>) target_semaphore(%410 : memref<!tpu.dma_semaphore, #tpu.memory_space<semaphore_mem>>)
    %c3_i32_302 = arith.constant 3 : i32
    %411 = arith.addi %0, %c3_i32_302 : i32
    %412 = arith.index_cast %411 : i32 to index
    %c6_303 = arith.constant 6 : index
    %413 = memref.load %arg1[%412, %c6_303] : memref<8x8xi32, #tpu.memory_space<smem>>
    %c0_i32_304 = arith.constant 0 : i32
    %c0_i32_305 = arith.constant 0 : i32
    %c0_i32_306 = arith.constant 0 : i32
    %414 = tpu.memref_slice %arg3[%413, %c0_i32_306] : memref<33x128xf32, #tpu.memory_space<any>> -> memref<1x128xf32, #tpu.memory_space<any>>
    %c51_i32 = arith.constant 51 : i32
    %c0_i32_307 = arith.constant 0 : i32
    %415 = tpu.memref_slice %arg5[%c0_i32_304, %c51_i32, %c0_i32_307] : memref<2x64x128xf32, #tpu.memory_space<vmem>> -> memref<1x1x128xf32, #tpu.memory_space<vmem>>
    %416 = tpu.memref_squeeze %415 : memref<1x1x128xf32, #tpu.memory_space<vmem>> -> memref<1x128xf32, #tpu.memory_space<vmem>>
    %417 = tpu.memref_slice %arg7[%c0_i32_305] : memref<2x!tpu.dma_semaphore, #tpu.memory_space<semaphore_mem>> -> memref<1x!tpu.dma_semaphore, #tpu.memory_space<semaphore_mem>>
    %418 = tpu.memref_squeeze %417 : memref<1x!tpu.dma_semaphore, #tpu.memory_space<semaphore_mem>> -> memref<!tpu.dma_semaphore, #tpu.memory_space<semaphore_mem>>
    tpu.enqueue_dma source(%414 : memref<1x128xf32, #tpu.memory_space<any>>) target(%416 : memref<1x128xf32, #tpu.memory_space<vmem>>) target_semaphore(%418 : memref<!tpu.dma_semaphore, #tpu.memory_space<semaphore_mem>>)
    %c4_i32_308 = arith.constant 4 : i32
    %419 = arith.addi %0, %c4_i32_308 : i32
    %420 = arith.index_cast %419 : i32 to index
    %c6_309 = arith.constant 6 : index
    %421 = memref.load %arg1[%420, %c6_309] : memref<8x8xi32, #tpu.memory_space<smem>>
    %c0_i32_310 = arith.constant 0 : i32
    %c0_i32_311 = arith.constant 0 : i32
    %c0_i32_312 = arith.constant 0 : i32
    %422 = tpu.memref_slice %arg3[%421, %c0_i32_312] : memref<33x128xf32, #tpu.memory_space<any>> -> memref<1x128xf32, #tpu.memory_space<any>>
    %c52_i32 = arith.constant 52 : i32
    %c0_i32_313 = arith.constant 0 : i32
    %423 = tpu.memref_slice %arg5[%c0_i32_310, %c52_i32, %c0_i32_313] : memref<2x64x128xf32, #tpu.memory_space<vmem>> -> memref<1x1x128xf32, #tpu.memory_space<vmem>>
    %424 = tpu.memref_squeeze %423 : memref<1x1x128xf32, #tpu.memory_space<vmem>> -> memref<1x128xf32, #tpu.memory_space<vmem>>
    %425 = tpu.memref_slice %arg7[%c0_i32_311] : memref<2x!tpu.dma_semaphore, #tpu.memory_space<semaphore_mem>> -> memref<1x!tpu.dma_semaphore, #tpu.memory_space<semaphore_mem>>
    %426 = tpu.memref_squeeze %425 : memref<1x!tpu.dma_semaphore, #tpu.memory_space<semaphore_mem>> -> memref<!tpu.dma_semaphore, #tpu.memory_space<semaphore_mem>>
    tpu.enqueue_dma source(%422 : memref<1x128xf32, #tpu.memory_space<any>>) target(%424 : memref<1x128xf32, #tpu.memory_space<vmem>>) target_semaphore(%426 : memref<!tpu.dma_semaphore, #tpu.memory_space<semaphore_mem>>)
    %c5_i32_314 = arith.constant 5 : i32
    %427 = arith.addi %0, %c5_i32_314 : i32
    %428 = arith.index_cast %427 : i32 to index
    %c6_315 = arith.constant 6 : index
    %429 = memref.load %arg1[%428, %c6_315] : memref<8x8xi32, #tpu.memory_space<smem>>
    %c0_i32_316 = arith.constant 0 : i32
    %c0_i32_317 = arith.constant 0 : i32
    %c0_i32_318 = arith.constant 0 : i32
    %430 = tpu.memref_slice %arg3[%429, %c0_i32_318] : memref<33x128xf32, #tpu.memory_space<any>> -> memref<1x128xf32, #tpu.memory_space<any>>
    %c53_i32 = arith.constant 53 : i32
    %c0_i32_319 = arith.constant 0 : i32
    %431 = tpu.memref_slice %arg5[%c0_i32_316, %c53_i32, %c0_i32_319] : memref<2x64x128xf32, #tpu.memory_space<vmem>> -> memref<1x1x128xf32, #tpu.memory_space<vmem>>
    %432 = tpu.memref_squeeze %431 : memref<1x1x128xf32, #tpu.memory_space<vmem>> -> memref<1x128xf32, #tpu.memory_space<vmem>>
    %433 = tpu.memref_slice %arg7[%c0_i32_317] : memref<2x!tpu.dma_semaphore, #tpu.memory_space<semaphore_mem>> -> memref<1x!tpu.dma_semaphore, #tpu.memory_space<semaphore_mem>>
    %434 = tpu.memref_squeeze %433 : memref<1x!tpu.dma_semaphore, #tpu.memory_space<semaphore_mem>> -> memref<!tpu.dma_semaphore, #tpu.memory_space<semaphore_mem>>
    tpu.enqueue_dma source(%430 : memref<1x128xf32, #tpu.memory_space<any>>) target(%432 : memref<1x128xf32, #tpu.memory_space<vmem>>) target_semaphore(%434 : memref<!tpu.dma_semaphore, #tpu.memory_space<semaphore_mem>>)
    %c6_i32_320 = arith.constant 6 : i32
    %435 = arith.addi %0, %c6_i32_320 : i32
    %436 = arith.index_cast %435 : i32 to index
    %c6_321 = arith.constant 6 : index
    %437 = memref.load %arg1[%436, %c6_321] : memref<8x8xi32, #tpu.memory_space<smem>>
    %c0_i32_322 = arith.constant 0 : i32
    %c0_i32_323 = arith.constant 0 : i32
    %c0_i32_324 = arith.constant 0 : i32
    %438 = tpu.memref_slice %arg3[%437, %c0_i32_324] : memref<33x128xf32, #tpu.memory_space<any>> -> memref<1x128xf32, #tpu.memory_space<any>>
    %c54_i32 = arith.constant 54 : i32
    %c0_i32_325 = arith.constant 0 : i32
    %439 = tpu.memref_slice %arg5[%c0_i32_322, %c54_i32, %c0_i32_325] : memref<2x64x128xf32, #tpu.memory_space<vmem>> -> memref<1x1x128xf32, #tpu.memory_space<vmem>>
    %440 = tpu.memref_squeeze %439 : memref<1x1x128xf32, #tpu.memory_space<vmem>> -> memref<1x128xf32, #tpu.memory_space<vmem>>
    %441 = tpu.memref_slice %arg7[%c0_i32_323] : memref<2x!tpu.dma_semaphore, #tpu.memory_space<semaphore_mem>> -> memref<1x!tpu.dma_semaphore, #tpu.memory_space<semaphore_mem>>
    %442 = tpu.memref_squeeze %441 : memref<1x!tpu.dma_semaphore, #tpu.memory_space<semaphore_mem>> -> memref<!tpu.dma_semaphore, #tpu.memory_space<semaphore_mem>>
    tpu.enqueue_dma source(%438 : memref<1x128xf32, #tpu.memory_space<any>>) target(%440 : memref<1x128xf32, #tpu.memory_space<vmem>>) target_semaphore(%442 : memref<!tpu.dma_semaphore, #tpu.memory_space<semaphore_mem>>)
    %c7_i32_326 = arith.constant 7 : i32
    %443 = arith.addi %0, %c7_i32_326 : i32
    %444 = arith.index_cast %443 : i32 to index
    %c6_327 = arith.constant 6 : index
    %445 = memref.load %arg1[%444, %c6_327] : memref<8x8xi32, #tpu.memory_space<smem>>
    %c0_i32_328 = arith.constant 0 : i32
    %c0_i32_329 = arith.constant 0 : i32
    %c0_i32_330 = arith.constant 0 : i32
    %446 = tpu.memref_slice %arg3[%445, %c0_i32_330] : memref<33x128xf32, #tpu.memory_space<any>> -> memref<1x128xf32, #tpu.memory_space<any>>
    %c55_i32 = arith.constant 55 : i32
    %c0_i32_331 = arith.constant 0 : i32
    %447 = tpu.memref_slice %arg5[%c0_i32_328, %c55_i32, %c0_i32_331] : memref<2x64x128xf32, #tpu.memory_space<vmem>> -> memref<1x1x128xf32, #tpu.memory_space<vmem>>
    %448 = tpu.memref_squeeze %447 : memref<1x1x128xf32, #tpu.memory_space<vmem>> -> memref<1x128xf32, #tpu.memory_space<vmem>>
    %449 = tpu.memref_slice %arg7[%c0_i32_329] : memref<2x!tpu.dma_semaphore, #tpu.memory_space<semaphore_mem>> -> memref<1x!tpu.dma_semaphore, #tpu.memory_space<semaphore_mem>>
    %450 = tpu.memref_squeeze %449 : memref<1x!tpu.dma_semaphore, #tpu.memory_space<semaphore_mem>> -> memref<!tpu.dma_semaphore, #tpu.memory_space<semaphore_mem>>
    tpu.enqueue_dma source(%446 : memref<1x128xf32, #tpu.memory_space<any>>) target(%448 : memref<1x128xf32, #tpu.memory_space<vmem>>) target_semaphore(%450 : memref<!tpu.dma_semaphore, #tpu.memory_space<semaphore_mem>>)
    %c0_i32_332 = arith.constant 0 : i32
    %451 = arith.addi %0, %c0_i32_332 : i32
    %452 = arith.index_cast %451 : i32 to index
    %c7 = arith.constant 7 : index
    %453 = memref.load %arg1[%452, %c7] : memref<8x8xi32, #tpu.memory_space<smem>>
    %c0_i32_333 = arith.constant 0 : i32
    %c0_i32_334 = arith.constant 0 : i32
    %c0_i32_335 = arith.constant 0 : i32
    %454 = tpu.memref_slice %arg3[%453, %c0_i32_335] : memref<33x128xf32, #tpu.memory_space<any>> -> memref<1x128xf32, #tpu.memory_space<any>>
    %c56_i32 = arith.constant 56 : i32
    %c0_i32_336 = arith.constant 0 : i32
    %455 = tpu.memref_slice %arg5[%c0_i32_333, %c56_i32, %c0_i32_336] : memref<2x64x128xf32, #tpu.memory_space<vmem>> -> memref<1x1x128xf32, #tpu.memory_space<vmem>>
    %456 = tpu.memref_squeeze %455 : memref<1x1x128xf32, #tpu.memory_space<vmem>> -> memref<1x128xf32, #tpu.memory_space<vmem>>
    %457 = tpu.memref_slice %arg7[%c0_i32_334] : memref<2x!tpu.dma_semaphore, #tpu.memory_space<semaphore_mem>> -> memref<1x!tpu.dma_semaphore, #tpu.memory_space<semaphore_mem>>
    %458 = tpu.memref_squeeze %457 : memref<1x!tpu.dma_semaphore, #tpu.memory_space<semaphore_mem>> -> memref<!tpu.dma_semaphore, #tpu.memory_space<semaphore_mem>>
    tpu.enqueue_dma source(%454 : memref<1x128xf32, #tpu.memory_space<any>>) target(%456 : memref<1x128xf32, #tpu.memory_space<vmem>>) target_semaphore(%458 : memref<!tpu.dma_semaphore, #tpu.memory_space<semaphore_mem>>)
    %c1_i32_337 = arith.constant 1 : i32
    %459 = arith.addi %0, %c1_i32_337 : i32
    %460 = arith.index_cast %459 : i32 to index
    %c7_338 = arith.constant 7 : index
    %461 = memref.load %arg1[%460, %c7_338] : memref<8x8xi32, #tpu.memory_space<smem>>
    %c0_i32_339 = arith.constant 0 : i32
    %c0_i32_340 = arith.constant 0 : i32
    %c0_i32_341 = arith.constant 0 : i32
    %462 = tpu.memref_slice %arg3[%461, %c0_i32_341] : memref<33x128xf32, #tpu.memory_space<any>> -> memref<1x128xf32, #tpu.memory_space<any>>
    %c57_i32 = arith.constant 57 : i32
    %c0_i32_342 = arith.constant 0 : i32
    %463 = tpu.memref_slice %arg5[%c0_i32_339, %c57_i32, %c0_i32_342] : memref<2x64x128xf32, #tpu.memory_space<vmem>> -> memref<1x1x128xf32, #tpu.memory_space<vmem>>
    %464 = tpu.memref_squeeze %463 : memref<1x1x128xf32, #tpu.memory_space<vmem>> -> memref<1x128xf32, #tpu.memory_space<vmem>>
    %465 = tpu.memref_slice %arg7[%c0_i32_340] : memref<2x!tpu.dma_semaphore, #tpu.memory_space<semaphore_mem>> -> memref<1x!tpu.dma_semaphore, #tpu.memory_space<semaphore_mem>>
    %466 = tpu.memref_squeeze %465 : memref<1x!tpu.dma_semaphore, #tpu.memory_space<semaphore_mem>> -> memref<!tpu.dma_semaphore, #tpu.memory_space<semaphore_mem>>
    tpu.enqueue_dma source(%462 : memref<1x128xf32, #tpu.memory_space<any>>) target(%464 : memref<1x128xf32, #tpu.memory_space<vmem>>) target_semaphore(%466 : memref<!tpu.dma_semaphore, #tpu.memory_space<semaphore_mem>>)
    %c2_i32_343 = arith.constant 2 : i32
    %467 = arith.addi %0, %c2_i32_343 : i32
    %468 = arith.index_cast %467 : i32 to index
    %c7_344 = arith.constant 7 : index
    %469 = memref.load %arg1[%468, %c7_344] : memref<8x8xi32, #tpu.memory_space<smem>>
    %c0_i32_345 = arith.constant 0 : i32
    %c0_i32_346 = arith.constant 0 : i32
    %c0_i32_347 = arith.constant 0 : i32
    %470 = tpu.memref_slice %arg3[%469, %c0_i32_347] : memref<33x128xf32, #tpu.memory_space<any>> -> memref<1x128xf32, #tpu.memory_space<any>>
    %c58_i32 = arith.constant 58 : i32
    %c0_i32_348 = arith.constant 0 : i32
    %471 = tpu.memref_slice %arg5[%c0_i32_345, %c58_i32, %c0_i32_348] : memref<2x64x128xf32, #tpu.memory_space<vmem>> -> memref<1x1x128xf32, #tpu.memory_space<vmem>>
    %472 = tpu.memref_squeeze %471 : memref<1x1x128xf32, #tpu.memory_space<vmem>> -> memref<1x128xf32, #tpu.memory_space<vmem>>
    %473 = tpu.memref_slice %arg7[%c0_i32_346] : memref<2x!tpu.dma_semaphore, #tpu.memory_space<semaphore_mem>> -> memref<1x!tpu.dma_semaphore, #tpu.memory_space<semaphore_mem>>
    %474 = tpu.memref_squeeze %473 : memref<1x!tpu.dma_semaphore, #tpu.memory_space<semaphore_mem>> -> memref<!tpu.dma_semaphore, #tpu.memory_space<semaphore_mem>>
    tpu.enqueue_dma source(%470 : memref<1x128xf32, #tpu.memory_space<any>>) target(%472 : memref<1x128xf32, #tpu.memory_space<vmem>>) target_semaphore(%474 : memref<!tpu.dma_semaphore, #tpu.memory_space<semaphore_mem>>)
    %c3_i32_349 = arith.constant 3 : i32
    %475 = arith.addi %0, %c3_i32_349 : i32
    %476 = arith.index_cast %475 : i32 to index
    %c7_350 = arith.constant 7 : index
    %477 = memref.load %arg1[%476, %c7_350] : memref<8x8xi32, #tpu.memory_space<smem>>
    %c0_i32_351 = arith.constant 0 : i32
    %c0_i32_352 = arith.constant 0 : i32
    %c0_i32_353 = arith.constant 0 : i32
    %478 = tpu.memref_slice %arg3[%477, %c0_i32_353] : memref<33x128xf32, #tpu.memory_space<any>> -> memref<1x128xf32, #tpu.memory_space<any>>
    %c59_i32 = arith.constant 59 : i32
    %c0_i32_354 = arith.constant 0 : i32
    %479 = tpu.memref_slice %arg5[%c0_i32_351, %c59_i32, %c0_i32_354] : memref<2x64x128xf32, #tpu.memory_space<vmem>> -> memref<1x1x128xf32, #tpu.memory_space<vmem>>
    %480 = tpu.memref_squeeze %479 : memref<1x1x128xf32, #tpu.memory_space<vmem>> -> memref<1x128xf32, #tpu.memory_space<vmem>>
    %481 = tpu.memref_slice %arg7[%c0_i32_352] : memref<2x!tpu.dma_semaphore, #tpu.memory_space<semaphore_mem>> -> memref<1x!tpu.dma_semaphore, #tpu.memory_space<semaphore_mem>>
    %482 = tpu.memref_squeeze %481 : memref<1x!tpu.dma_semaphore, #tpu.memory_space<semaphore_mem>> -> memref<!tpu.dma_semaphore, #tpu.memory_space<semaphore_mem>>
    tpu.enqueue_dma source(%478 : memref<1x128xf32, #tpu.memory_space<any>>) target(%480 : memref<1x128xf32, #tpu.memory_space<vmem>>) target_semaphore(%482 : memref<!tpu.dma_semaphore, #tpu.memory_space<semaphore_mem>>)
    %c4_i32_355 = arith.constant 4 : i32
    %483 = arith.addi %0, %c4_i32_355 : i32
    %484 = arith.index_cast %483 : i32 to index
    %c7_356 = arith.constant 7 : index
    %485 = memref.load %arg1[%484, %c7_356] : memref<8x8xi32, #tpu.memory_space<smem>>
    %c0_i32_357 = arith.constant 0 : i32
    %c0_i32_358 = arith.constant 0 : i32
    %c0_i32_359 = arith.constant 0 : i32
    %486 = tpu.memref_slice %arg3[%485, %c0_i32_359] : memref<33x128xf32, #tpu.memory_space<any>> -> memref<1x128xf32, #tpu.memory_space<any>>
    %c60_i32 = arith.constant 60 : i32
    %c0_i32_360 = arith.constant 0 : i32
    %487 = tpu.memref_slice %arg5[%c0_i32_357, %c60_i32, %c0_i32_360] : memref<2x64x128xf32, #tpu.memory_space<vmem>> -> memref<1x1x128xf32, #tpu.memory_space<vmem>>
    %488 = tpu.memref_squeeze %487 : memref<1x1x128xf32, #tpu.memory_space<vmem>> -> memref<1x128xf32, #tpu.memory_space<vmem>>
    %489 = tpu.memref_slice %arg7[%c0_i32_358] : memref<2x!tpu.dma_semaphore, #tpu.memory_space<semaphore_mem>> -> memref<1x!tpu.dma_semaphore, #tpu.memory_space<semaphore_mem>>
    %490 = tpu.memref_squeeze %489 : memref<1x!tpu.dma_semaphore, #tpu.memory_space<semaphore_mem>> -> memref<!tpu.dma_semaphore, #tpu.memory_space<semaphore_mem>>
    tpu.enqueue_dma source(%486 : memref<1x128xf32, #tpu.memory_space<any>>) target(%488 : memref<1x128xf32, #tpu.memory_space<vmem>>) target_semaphore(%490 : memref<!tpu.dma_semaphore, #tpu.memory_space<semaphore_mem>>)
    %c5_i32_361 = arith.constant 5 : i32
    %491 = arith.addi %0, %c5_i32_361 : i32
    %492 = arith.index_cast %491 : i32 to index
    %c7_362 = arith.constant 7 : index
    %493 = memref.load %arg1[%492, %c7_362] : memref<8x8xi32, #tpu.memory_space<smem>>
    %c0_i32_363 = arith.constant 0 : i32
    %c0_i32_364 = arith.constant 0 : i32
    %c0_i32_365 = arith.constant 0 : i32
    %494 = tpu.memref_slice %arg3[%493, %c0_i32_365] : memref<33x128xf32, #tpu.memory_space<any>> -> memref<1x128xf32, #tpu.memory_space<any>>
    %c61_i32 = arith.constant 61 : i32
    %c0_i32_366 = arith.constant 0 : i32
    %495 = tpu.memref_slice %arg5[%c0_i32_363, %c61_i32, %c0_i32_366] : memref<2x64x128xf32, #tpu.memory_space<vmem>> -> memref<1x1x128xf32, #tpu.memory_space<vmem>>
    %496 = tpu.memref_squeeze %495 : memref<1x1x128xf32, #tpu.memory_space<vmem>> -> memref<1x128xf32, #tpu.memory_space<vmem>>
    %497 = tpu.memref_slice %arg7[%c0_i32_364] : memref<2x!tpu.dma_semaphore, #tpu.memory_space<semaphore_mem>> -> memref<1x!tpu.dma_semaphore, #tpu.memory_space<semaphore_mem>>
    %498 = tpu.memref_squeeze %497 : memref<1x!tpu.dma_semaphore, #tpu.memory_space<semaphore_mem>> -> memref<!tpu.dma_semaphore, #tpu.memory_space<semaphore_mem>>
    tpu.enqueue_dma source(%494 : memref<1x128xf32, #tpu.memory_space<any>>) target(%496 : memref<1x128xf32, #tpu.memory_space<vmem>>) target_semaphore(%498 : memref<!tpu.dma_semaphore, #tpu.memory_space<semaphore_mem>>)
    %c6_i32_367 = arith.constant 6 : i32
    %499 = arith.addi %0, %c6_i32_367 : i32
    %500 = arith.index_cast %499 : i32 to index
    %c7_368 = arith.constant 7 : index
    %501 = memref.load %arg1[%500, %c7_368] : memref<8x8xi32, #tpu.memory_space<smem>>
    %c0_i32_369 = arith.constant 0 : i32
    %c0_i32_370 = arith.constant 0 : i32
    %c0_i32_371 = arith.constant 0 : i32
    %502 = tpu.memref_slice %arg3[%501, %c0_i32_371] : memref<33x128xf32, #tpu.memory_space<any>> -> memref<1x128xf32, #tpu.memory_space<any>>
    %c62_i32 = arith.constant 62 : i32
    %c0_i32_372 = arith.constant 0 : i32
    %503 = tpu.memref_slice %arg5[%c0_i32_369, %c62_i32, %c0_i32_372] : memref<2x64x128xf32, #tpu.memory_space<vmem>> -> memref<1x1x128xf32, #tpu.memory_space<vmem>>
    %504 = tpu.memref_squeeze %503 : memref<1x1x128xf32, #tpu.memory_space<vmem>> -> memref<1x128xf32, #tpu.memory_space<vmem>>
    %505 = tpu.memref_slice %arg7[%c0_i32_370] : memref<2x!tpu.dma_semaphore, #tpu.memory_space<semaphore_mem>> -> memref<1x!tpu.dma_semaphore, #tpu.memory_space<semaphore_mem>>
    %506 = tpu.memref_squeeze %505 : memref<1x!tpu.dma_semaphore, #tpu.memory_space<semaphore_mem>> -> memref<!tpu.dma_semaphore, #tpu.memory_space<semaphore_mem>>
    tpu.enqueue_dma source(%502 : memref<1x128xf32, #tpu.memory_space<any>>) target(%504 : memref<1x128xf32, #tpu.memory_space<vmem>>) target_semaphore(%506 : memref<!tpu.dma_semaphore, #tpu.memory_space<semaphore_mem>>)
    %c7_i32_373 = arith.constant 7 : i32
    %507 = arith.addi %0, %c7_i32_373 : i32
    %508 = arith.index_cast %507 : i32 to index
    %c7_374 = arith.constant 7 : index
    %509 = memref.load %arg1[%508, %c7_374] : memref<8x8xi32, #tpu.memory_space<smem>>
    %c0_i32_375 = arith.constant 0 : i32
    %c0_i32_376 = arith.constant 0 : i32
    %c0_i32_377 = arith.constant 0 : i32
    %510 = tpu.memref_slice %arg3[%509, %c0_i32_377] : memref<33x128xf32, #tpu.memory_space<any>> -> memref<1x128xf32, #tpu.memory_space<any>>
    %c63_i32 = arith.constant 63 : i32
    %c0_i32_378 = arith.constant 0 : i32
    %511 = tpu.memref_slice %arg5[%c0_i32_375, %c63_i32, %c0_i32_378] : memref<2x64x128xf32, #tpu.memory_space<vmem>> -> memref<1x1x128xf32, #tpu.memory_space<vmem>>
    %512 = tpu.memref_squeeze %511 : memref<1x1x128xf32, #tpu.memory_space<vmem>> -> memref<1x128xf32, #tpu.memory_space<vmem>>
    %513 = tpu.memref_slice %arg7[%c0_i32_376] : memref<2x!tpu.dma_semaphore, #tpu.memory_space<semaphore_mem>> -> memref<1x!tpu.dma_semaphore, #tpu.memory_space<semaphore_mem>>
    %514 = tpu.memref_squeeze %513 : memref<1x!tpu.dma_semaphore, #tpu.memory_space<semaphore_mem>> -> memref<!tpu.dma_semaphore, #tpu.memory_space<semaphore_mem>>
    tpu.enqueue_dma source(%510 : memref<1x128xf32, #tpu.memory_space<any>>) target(%512 : memref<1x128xf32, #tpu.memory_space<vmem>>) target_semaphore(%514 : memref<!tpu.dma_semaphore, #tpu.memory_space<semaphore_mem>>)
    %c0_i32_379 = arith.constant 0 : i32
    %c1_i32_380 = arith.constant 1 : i32
    %515 = arith.muli %c0_i32_379, %c1_i32_380 : i32
    %c0_i32_381 = arith.constant 0 : i32
    %516 = arith.addi %c0_i32_381, %515 : i32
    %c2_i32_382 = arith.constant 2 : i32
    %c0_i32_383 = arith.constant 0 : i32
    %517 = arith.cmpi eq, %c2_i32_382, %c0_i32_383 : i32
    %c1_i32_384 = arith.constant 1 : i32
    %518 = arith.select %517, %c1_i32_384, %c2_i32_382 : i32
    %519 = arith.remsi %516, %518 : i32
    %c0_i32_385 = arith.constant 0 : i32
    %520 = arith.cmpi ne, %519, %c0_i32_385 : i32
    %c0_i32_386 = arith.constant 0 : i32
    %521 = arith.cmpi slt, %519, %c0_i32_386 : i32
    %c0_i32_387 = arith.constant 0 : i32
    %522 = arith.cmpi slt, %518, %c0_i32_387 : i32
    %523 = arith.xori %521, %522 : i1
    %524 = arith.andi %523, %520 : i1
    %525 = arith.addi %519, %518 : i32
    %526 = arith.select %524, %525, %519 : i32
    %c1_i32_388 = arith.constant 1 : i32
    %527 = arith.addi %516, %c1_i32_388 : i32
    %c1_i32_389 = arith.constant 1 : i32
    %528 = arith.cmpi slt, %527, %c1_i32_389 : i32
    %529 = arith.extui %528 : i1 to i32
    %c0_i32_390 = arith.constant 0 : i32
    %530 = arith.cmpi ne, %529, %c0_i32_390 : i32
    scf.if %530 {
      %c1_i32_662 = arith.constant 1 : i32
      %882 = arith.addi %516, %c1_i32_662 : i32
      %c1_i32_663 = arith.constant 1 : i32
      %883 = arith.subi %c1_i32_663, %526 : i32
      %c0_i32_664 = arith.constant 0 : i32
      %884 = arith.addi %0, %c0_i32_664 : i32
      %c8_i32_665 = arith.constant 8 : i32
      %885 = arith.muli %882, %c8_i32_665 : i32
      %c0_i32_666 = arith.constant 0 : i32
      %886 = arith.addi %885, %c0_i32_666 : i32
      %887 = arith.index_cast %884 : i32 to index
      %888 = arith.index_cast %886 : i32 to index
      %889 = memref.load %arg1[%887, %888] : memref<8x8xi32, #tpu.memory_space<smem>>
      %c0_i32_667 = arith.constant 0 : i32
      %890 = tpu.memref_slice %arg3[%889, %c0_i32_667] : memref<33x128xf32, #tpu.memory_space<any>> -> memref<1x128xf32, #tpu.memory_space<any>>
      %c0_i32_668 = arith.constant 0 : i32
      %c0_i32_669 = arith.constant 0 : i32
      %891 = tpu.memref_slice %arg5[%883, %c0_i32_668, %c0_i32_669] : memref<2x64x128xf32, #tpu.memory_space<vmem>> -> memref<1x1x128xf32, #tpu.memory_space<vmem>>
      %892 = tpu.memref_squeeze %891 : memref<1x1x128xf32, #tpu.memory_space<vmem>> -> memref<1x128xf32, #tpu.memory_space<vmem>>
      %893 = tpu.memref_slice %arg7[%883] : memref<2x!tpu.dma_semaphore, #tpu.memory_space<semaphore_mem>> -> memref<1x!tpu.dma_semaphore, #tpu.memory_space<semaphore_mem>>
      %894 = tpu.memref_squeeze %893 : memref<1x!tpu.dma_semaphore, #tpu.memory_space<semaphore_mem>> -> memref<!tpu.dma_semaphore, #tpu.memory_space<semaphore_mem>>
      tpu.enqueue_dma source(%890 : memref<1x128xf32, #tpu.memory_space<any>>) target(%892 : memref<1x128xf32, #tpu.memory_space<vmem>>) target_semaphore(%894 : memref<!tpu.dma_semaphore, #tpu.memory_space<semaphore_mem>>)
      %c1_i32_670 = arith.constant 1 : i32
      %895 = arith.addi %0, %c1_i32_670 : i32
      %c8_i32_671 = arith.constant 8 : i32
      %896 = arith.muli %882, %c8_i32_671 : i32
      %c0_i32_672 = arith.constant 0 : i32
      %897 = arith.addi %896, %c0_i32_672 : i32
      %898 = arith.index_cast %895 : i32 to index
      %899 = arith.index_cast %897 : i32 to index
      %900 = memref.load %arg1[%898, %899] : memref<8x8xi32, #tpu.memory_space<smem>>
      %c0_i32_673 = arith.constant 0 : i32
      %901 = tpu.memref_slice %arg3[%900, %c0_i32_673] : memref<33x128xf32, #tpu.memory_space<any>> -> memref<1x128xf32, #tpu.memory_space<any>>
      %c1_i32_674 = arith.constant 1 : i32
      %c0_i32_675 = arith.constant 0 : i32
      %902 = tpu.memref_slice %arg5[%883, %c1_i32_674, %c0_i32_675] : memref<2x64x128xf32, #tpu.memory_space<vmem>> -> memref<1x1x128xf32, #tpu.memory_space<vmem>>
      %903 = tpu.memref_squeeze %902 : memref<1x1x128xf32, #tpu.memory_space<vmem>> -> memref<1x128xf32, #tpu.memory_space<vmem>>
      %904 = tpu.memref_slice %arg7[%883] : memref<2x!tpu.dma_semaphore, #tpu.memory_space<semaphore_mem>> -> memref<1x!tpu.dma_semaphore, #tpu.memory_space<semaphore_mem>>
      %905 = tpu.memref_squeeze %904 : memref<1x!tpu.dma_semaphore, #tpu.memory_space<semaphore_mem>> -> memref<!tpu.dma_semaphore, #tpu.memory_space<semaphore_mem>>
      tpu.enqueue_dma source(%901 : memref<1x128xf32, #tpu.memory_space<any>>) target(%903 : memref<1x128xf32, #tpu.memory_space<vmem>>) target_semaphore(%905 : memref<!tpu.dma_semaphore, #tpu.memory_space<semaphore_mem>>)
      %c2_i32_676 = arith.constant 2 : i32
      %906 = arith.addi %0, %c2_i32_676 : i32
      %c8_i32_677 = arith.constant 8 : i32
      %907 = arith.muli %882, %c8_i32_677 : i32
      %c0_i32_678 = arith.constant 0 : i32
      %908 = arith.addi %907, %c0_i32_678 : i32
      %909 = arith.index_cast %906 : i32 to index
      %910 = arith.index_cast %908 : i32 to index
      %911 = memref.load %arg1[%909, %910] : memref<8x8xi32, #tpu.memory_space<smem>>
      %c0_i32_679 = arith.constant 0 : i32
      %912 = tpu.memref_slice %arg3[%911, %c0_i32_679] : memref<33x128xf32, #tpu.memory_space<any>> -> memref<1x128xf32, #tpu.memory_space<any>>
      %c2_i32_680 = arith.constant 2 : i32
      %c0_i32_681 = arith.constant 0 : i32
      %913 = tpu.memref_slice %arg5[%883, %c2_i32_680, %c0_i32_681] : memref<2x64x128xf32, #tpu.memory_space<vmem>> -> memref<1x1x128xf32, #tpu.memory_space<vmem>>
      %914 = tpu.memref_squeeze %913 : memref<1x1x128xf32, #tpu.memory_space<vmem>> -> memref<1x128xf32, #tpu.memory_space<vmem>>
      %915 = tpu.memref_slice %arg7[%883] : memref<2x!tpu.dma_semaphore, #tpu.memory_space<semaphore_mem>> -> memref<1x!tpu.dma_semaphore, #tpu.memory_space<semaphore_mem>>
      %916 = tpu.memref_squeeze %915 : memref<1x!tpu.dma_semaphore, #tpu.memory_space<semaphore_mem>> -> memref<!tpu.dma_semaphore, #tpu.memory_space<semaphore_mem>>
      tpu.enqueue_dma source(%912 : memref<1x128xf32, #tpu.memory_space<any>>) target(%914 : memref<1x128xf32, #tpu.memory_space<vmem>>) target_semaphore(%916 : memref<!tpu.dma_semaphore, #tpu.memory_space<semaphore_mem>>)
      %c3_i32_682 = arith.constant 3 : i32
      %917 = arith.addi %0, %c3_i32_682 : i32
      %c8_i32_683 = arith.constant 8 : i32
      %918 = arith.muli %882, %c8_i32_683 : i32
      %c0_i32_684 = arith.constant 0 : i32
      %919 = arith.addi %918, %c0_i32_684 : i32
      %920 = arith.index_cast %917 : i32 to index
      %921 = arith.index_cast %919 : i32 to index
      %922 = memref.load %arg1[%920, %921] : memref<8x8xi32, #tpu.memory_space<smem>>
      %c0_i32_685 = arith.constant 0 : i32
      %923 = tpu.memref_slice %arg3[%922, %c0_i32_685] : memref<33x128xf32, #tpu.memory_space<any>> -> memref<1x128xf32, #tpu.memory_space<any>>
      %c3_i32_686 = arith.constant 3 : i32
      %c0_i32_687 = arith.constant 0 : i32
      %924 = tpu.memref_slice %arg5[%883, %c3_i32_686, %c0_i32_687] : memref<2x64x128xf32, #tpu.memory_space<vmem>> -> memref<1x1x128xf32, #tpu.memory_space<vmem>>
      %925 = tpu.memref_squeeze %924 : memref<1x1x128xf32, #tpu.memory_space<vmem>> -> memref<1x128xf32, #tpu.memory_space<vmem>>
      %926 = tpu.memref_slice %arg7[%883] : memref<2x!tpu.dma_semaphore, #tpu.memory_space<semaphore_mem>> -> memref<1x!tpu.dma_semaphore, #tpu.memory_space<semaphore_mem>>
      %927 = tpu.memref_squeeze %926 : memref<1x!tpu.dma_semaphore, #tpu.memory_space<semaphore_mem>> -> memref<!tpu.dma_semaphore, #tpu.memory_space<semaphore_mem>>
      tpu.enqueue_dma source(%923 : memref<1x128xf32, #tpu.memory_space<any>>) target(%925 : memref<1x128xf32, #tpu.memory_space<vmem>>) target_semaphore(%927 : memref<!tpu.dma_semaphore, #tpu.memory_space<semaphore_mem>>)
      %c4_i32_688 = arith.constant 4 : i32
      %928 = arith.addi %0, %c4_i32_688 : i32
      %c8_i32_689 = arith.constant 8 : i32
      %929 = arith.muli %882, %c8_i32_689 : i32
      %c0_i32_690 = arith.constant 0 : i32
      %930 = arith.addi %929, %c0_i32_690 : i32
      %931 = arith.index_cast %928 : i32 to index
      %932 = arith.index_cast %930 : i32 to index
      %933 = memref.load %arg1[%931, %932] : memref<8x8xi32, #tpu.memory_space<smem>>
      %c0_i32_691 = arith.constant 0 : i32
      %934 = tpu.memref_slice %arg3[%933, %c0_i32_691] : memref<33x128xf32, #tpu.memory_space<any>> -> memref<1x128xf32, #tpu.memory_space<any>>
      %c4_i32_692 = arith.constant 4 : i32
      %c0_i32_693 = arith.constant 0 : i32
      %935 = tpu.memref_slice %arg5[%883, %c4_i32_692, %c0_i32_693] : memref<2x64x128xf32, #tpu.memory_space<vmem>> -> memref<1x1x128xf32, #tpu.memory_space<vmem>>
      %936 = tpu.memref_squeeze %935 : memref<1x1x128xf32, #tpu.memory_space<vmem>> -> memref<1x128xf32, #tpu.memory_space<vmem>>
      %937 = tpu.memref_slice %arg7[%883] : memref<2x!tpu.dma_semaphore, #tpu.memory_space<semaphore_mem>> -> memref<1x!tpu.dma_semaphore, #tpu.memory_space<semaphore_mem>>
      %938 = tpu.memref_squeeze %937 : memref<1x!tpu.dma_semaphore, #tpu.memory_space<semaphore_mem>> -> memref<!tpu.dma_semaphore, #tpu.memory_space<semaphore_mem>>
      tpu.enqueue_dma source(%934 : memref<1x128xf32, #tpu.memory_space<any>>) target(%936 : memref<1x128xf32, #tpu.memory_space<vmem>>) target_semaphore(%938 : memref<!tpu.dma_semaphore, #tpu.memory_space<semaphore_mem>>)
      %c5_i32_694 = arith.constant 5 : i32
      %939 = arith.addi %0, %c5_i32_694 : i32
      %c8_i32_695 = arith.constant 8 : i32
      %940 = arith.muli %882, %c8_i32_695 : i32
      %c0_i32_696 = arith.constant 0 : i32
      %941 = arith.addi %940, %c0_i32_696 : i32
      %942 = arith.index_cast %939 : i32 to index
      %943 = arith.index_cast %941 : i32 to index
      %944 = memref.load %arg1[%942, %943] : memref<8x8xi32, #tpu.memory_space<smem>>
      %c0_i32_697 = arith.constant 0 : i32
      %945 = tpu.memref_slice %arg3[%944, %c0_i32_697] : memref<33x128xf32, #tpu.memory_space<any>> -> memref<1x128xf32, #tpu.memory_space<any>>
      %c5_i32_698 = arith.constant 5 : i32
      %c0_i32_699 = arith.constant 0 : i32
      %946 = tpu.memref_slice %arg5[%883, %c5_i32_698, %c0_i32_699] : memref<2x64x128xf32, #tpu.memory_space<vmem>> -> memref<1x1x128xf32, #tpu.memory_space<vmem>>
      %947 = tpu.memref_squeeze %946 : memref<1x1x128xf32, #tpu.memory_space<vmem>> -> memref<1x128xf32, #tpu.memory_space<vmem>>
      %948 = tpu.memref_slice %arg7[%883] : memref<2x!tpu.dma_semaphore, #tpu.memory_space<semaphore_mem>> -> memref<1x!tpu.dma_semaphore, #tpu.memory_space<semaphore_mem>>
      %949 = tpu.memref_squeeze %948 : memref<1x!tpu.dma_semaphore, #tpu.memory_space<semaphore_mem>> -> memref<!tpu.dma_semaphore, #tpu.memory_space<semaphore_mem>>
      tpu.enqueue_dma source(%945 : memref<1x128xf32, #tpu.memory_space<any>>) target(%947 : memref<1x128xf32, #tpu.memory_space<vmem>>) target_semaphore(%949 : memref<!tpu.dma_semaphore, #tpu.memory_space<semaphore_mem>>)
      %c6_i32_700 = arith.constant 6 : i32
      %950 = arith.addi %0, %c6_i32_700 : i32
      %c8_i32_701 = arith.constant 8 : i32
      %951 = arith.muli %882, %c8_i32_701 : i32
      %c0_i32_702 = arith.constant 0 : i32
      %952 = arith.addi %951, %c0_i32_702 : i32
      %953 = arith.index_cast %950 : i32 to index
      %954 = arith.index_cast %952 : i32 to index
      %955 = memref.load %arg1[%953, %954] : memref<8x8xi32, #tpu.memory_space<smem>>
      %c0_i32_703 = arith.constant 0 : i32
      %956 = tpu.memref_slice %arg3[%955, %c0_i32_703] : memref<33x128xf32, #tpu.memory_space<any>> -> memref<1x128xf32, #tpu.memory_space<any>>
      %c6_i32_704 = arith.constant 6 : i32
      %c0_i32_705 = arith.constant 0 : i32
      %957 = tpu.memref_slice %arg5[%883, %c6_i32_704, %c0_i32_705] : memref<2x64x128xf32, #tpu.memory_space<vmem>> -> memref<1x1x128xf32, #tpu.memory_space<vmem>>
      %958 = tpu.memref_squeeze %957 : memref<1x1x128xf32, #tpu.memory_space<vmem>> -> memref<1x128xf32, #tpu.memory_space<vmem>>
      %959 = tpu.memref_slice %arg7[%883] : memref<2x!tpu.dma_semaphore, #tpu.memory_space<semaphore_mem>> -> memref<1x!tpu.dma_semaphore, #tpu.memory_space<semaphore_mem>>
      %960 = tpu.memref_squeeze %959 : memref<1x!tpu.dma_semaphore, #tpu.memory_space<semaphore_mem>> -> memref<!tpu.dma_semaphore, #tpu.memory_space<semaphore_mem>>
      tpu.enqueue_dma source(%956 : memref<1x128xf32, #tpu.memory_space<any>>) target(%958 : memref<1x128xf32, #tpu.memory_space<vmem>>) target_semaphore(%960 : memref<!tpu.dma_semaphore, #tpu.memory_space<semaphore_mem>>)
      %c7_i32_706 = arith.constant 7 : i32
      %961 = arith.addi %0, %c7_i32_706 : i32
      %c8_i32_707 = arith.constant 8 : i32
      %962 = arith.muli %882, %c8_i32_707 : i32
      %c0_i32_708 = arith.constant 0 : i32
      %963 = arith.addi %962, %c0_i32_708 : i32
      %964 = arith.index_cast %961 : i32 to index
      %965 = arith.index_cast %963 : i32 to index
      %966 = memref.load %arg1[%964, %965] : memref<8x8xi32, #tpu.memory_space<smem>>
      %c0_i32_709 = arith.constant 0 : i32
      %967 = tpu.memref_slice %arg3[%966, %c0_i32_709] : memref<33x128xf32, #tpu.memory_space<any>> -> memref<1x128xf32, #tpu.memory_space<any>>
      %c7_i32_710 = arith.constant 7 : i32
      %c0_i32_711 = arith.constant 0 : i32
      %968 = tpu.memref_slice %arg5[%883, %c7_i32_710, %c0_i32_711] : memref<2x64x128xf32, #tpu.memory_space<vmem>> -> memref<1x1x128xf32, #tpu.memory_space<vmem>>
      %969 = tpu.memref_squeeze %968 : memref<1x1x128xf32, #tpu.memory_space<vmem>> -> memref<1x128xf32, #tpu.memory_space<vmem>>
      %970 = tpu.memref_slice %arg7[%883] : memref<2x!tpu.dma_semaphore, #tpu.memory_space<semaphore_mem>> -> memref<1x!tpu.dma_semaphore, #tpu.memory_space<semaphore_mem>>
      %971 = tpu.memref_squeeze %970 : memref<1x!tpu.dma_semaphore, #tpu.memory_space<semaphore_mem>> -> memref<!tpu.dma_semaphore, #tpu.memory_space<semaphore_mem>>
      tpu.enqueue_dma source(%967 : memref<1x128xf32, #tpu.memory_space<any>>) target(%969 : memref<1x128xf32, #tpu.memory_space<vmem>>) target_semaphore(%971 : memref<!tpu.dma_semaphore, #tpu.memory_space<semaphore_mem>>)
      %c0_i32_712 = arith.constant 0 : i32
      %972 = arith.addi %0, %c0_i32_712 : i32
      %c8_i32_713 = arith.constant 8 : i32
      %973 = arith.muli %882, %c8_i32_713 : i32
      %c1_i32_714 = arith.constant 1 : i32
      %974 = arith.addi %973, %c1_i32_714 : i32
      %975 = arith.index_cast %972 : i32 to index
      %976 = arith.index_cast %974 : i32 to index
      %977 = memref.load %arg1[%975, %976] : memref<8x8xi32, #tpu.memory_space<smem>>
      %c0_i32_715 = arith.constant 0 : i32
      %978 = tpu.memref_slice %arg3[%977, %c0_i32_715] : memref<33x128xf32, #tpu.memory_space<any>> -> memref<1x128xf32, #tpu.memory_space<any>>
      %c8_i32_716 = arith.constant 8 : i32
      %c0_i32_717 = arith.constant 0 : i32
      %979 = tpu.memref_slice %arg5[%883, %c8_i32_716, %c0_i32_717] : memref<2x64x128xf32, #tpu.memory_space<vmem>> -> memref<1x1x128xf32, #tpu.memory_space<vmem>>
      %980 = tpu.memref_squeeze %979 : memref<1x1x128xf32, #tpu.memory_space<vmem>> -> memref<1x128xf32, #tpu.memory_space<vmem>>
      %981 = tpu.memref_slice %arg7[%883] : memref<2x!tpu.dma_semaphore, #tpu.memory_space<semaphore_mem>> -> memref<1x!tpu.dma_semaphore, #tpu.memory_space<semaphore_mem>>
      %982 = tpu.memref_squeeze %981 : memref<1x!tpu.dma_semaphore, #tpu.memory_space<semaphore_mem>> -> memref<!tpu.dma_semaphore, #tpu.memory_space<semaphore_mem>>
      tpu.enqueue_dma source(%978 : memref<1x128xf32, #tpu.memory_space<any>>) target(%980 : memref<1x128xf32, #tpu.memory_space<vmem>>) target_semaphore(%982 : memref<!tpu.dma_semaphore, #tpu.memory_space<semaphore_mem>>)
      %c1_i32_718 = arith.constant 1 : i32
      %983 = arith.addi %0, %c1_i32_718 : i32
      %c8_i32_719 = arith.constant 8 : i32
      %984 = arith.muli %882, %c8_i32_719 : i32
      %c1_i32_720 = arith.constant 1 : i32
      %985 = arith.addi %984, %c1_i32_720 : i32
      %986 = arith.index_cast %983 : i32 to index
      %987 = arith.index_cast %985 : i32 to index
      %988 = memref.load %arg1[%986, %987] : memref<8x8xi32, #tpu.memory_space<smem>>
      %c0_i32_721 = arith.constant 0 : i32
      %989 = tpu.memref_slice %arg3[%988, %c0_i32_721] : memref<33x128xf32, #tpu.memory_space<any>> -> memref<1x128xf32, #tpu.memory_space<any>>
      %c9_i32_722 = arith.constant 9 : i32
      %c0_i32_723 = arith.constant 0 : i32
      %990 = tpu.memref_slice %arg5[%883, %c9_i32_722, %c0_i32_723] : memref<2x64x128xf32, #tpu.memory_space<vmem>> -> memref<1x1x128xf32, #tpu.memory_space<vmem>>
      %991 = tpu.memref_squeeze %990 : memref<1x1x128xf32, #tpu.memory_space<vmem>> -> memref<1x128xf32, #tpu.memory_space<vmem>>
      %992 = tpu.memref_slice %arg7[%883] : memref<2x!tpu.dma_semaphore, #tpu.memory_space<semaphore_mem>> -> memref<1x!tpu.dma_semaphore, #tpu.memory_space<semaphore_mem>>
      %993 = tpu.memref_squeeze %992 : memref<1x!tpu.dma_semaphore, #tpu.memory_space<semaphore_mem>> -> memref<!tpu.dma_semaphore, #tpu.memory_space<semaphore_mem>>
      tpu.enqueue_dma source(%989 : memref<1x128xf32, #tpu.memory_space<any>>) target(%991 : memref<1x128xf32, #tpu.memory_space<vmem>>) target_semaphore(%993 : memref<!tpu.dma_semaphore, #tpu.memory_space<semaphore_mem>>)
      %c2_i32_724 = arith.constant 2 : i32
      %994 = arith.addi %0, %c2_i32_724 : i32
      %c8_i32_725 = arith.constant 8 : i32
      %995 = arith.muli %882, %c8_i32_725 : i32
      %c1_i32_726 = arith.constant 1 : i32
      %996 = arith.addi %995, %c1_i32_726 : i32
      %997 = arith.index_cast %994 : i32 to index
      %998 = arith.index_cast %996 : i32 to index
      %999 = memref.load %arg1[%997, %998] : memref<8x8xi32, #tpu.memory_space<smem>>
      %c0_i32_727 = arith.constant 0 : i32
      %1000 = tpu.memref_slice %arg3[%999, %c0_i32_727] : memref<33x128xf32, #tpu.memory_space<any>> -> memref<1x128xf32, #tpu.memory_space<any>>
      %c10_i32_728 = arith.constant 10 : i32
      %c0_i32_729 = arith.constant 0 : i32
      %1001 = tpu.memref_slice %arg5[%883, %c10_i32_728, %c0_i32_729] : memref<2x64x128xf32, #tpu.memory_space<vmem>> -> memref<1x1x128xf32, #tpu.memory_space<vmem>>
      %1002 = tpu.memref_squeeze %1001 : memref<1x1x128xf32, #tpu.memory_space<vmem>> -> memref<1x128xf32, #tpu.memory_space<vmem>>
      %1003 = tpu.memref_slice %arg7[%883] : memref<2x!tpu.dma_semaphore, #tpu.memory_space<semaphore_mem>> -> memref<1x!tpu.dma_semaphore, #tpu.memory_space<semaphore_mem>>
      %1004 = tpu.memref_squeeze %1003 : memref<1x!tpu.dma_semaphore, #tpu.memory_space<semaphore_mem>> -> memref<!tpu.dma_semaphore, #tpu.memory_space<semaphore_mem>>
      tpu.enqueue_dma source(%1000 : memref<1x128xf32, #tpu.memory_space<any>>) target(%1002 : memref<1x128xf32, #tpu.memory_space<vmem>>) target_semaphore(%1004 : memref<!tpu.dma_semaphore, #tpu.memory_space<semaphore_mem>>)
      %c3_i32_730 = arith.constant 3 : i32
      %1005 = arith.addi %0, %c3_i32_730 : i32
      %c8_i32_731 = arith.constant 8 : i32
      %1006 = arith.muli %882, %c8_i32_731 : i32
      %c1_i32_732 = arith.constant 1 : i32
      %1007 = arith.addi %1006, %c1_i32_732 : i32
      %1008 = arith.index_cast %1005 : i32 to index
      %1009 = arith.index_cast %1007 : i32 to index
      %1010 = memref.load %arg1[%1008, %1009] : memref<8x8xi32, #tpu.memory_space<smem>>
      %c0_i32_733 = arith.constant 0 : i32
      %1011 = tpu.memref_slice %arg3[%1010, %c0_i32_733] : memref<33x128xf32, #tpu.memory_space<any>> -> memref<1x128xf32, #tpu.memory_space<any>>
      %c11_i32_734 = arith.constant 11 : i32
      %c0_i32_735 = arith.constant 0 : i32
      %1012 = tpu.memref_slice %arg5[%883, %c11_i32_734, %c0_i32_735] : memref<2x64x128xf32, #tpu.memory_space<vmem>> -> memref<1x1x128xf32, #tpu.memory_space<vmem>>
      %1013 = tpu.memref_squeeze %1012 : memref<1x1x128xf32, #tpu.memory_space<vmem>> -> memref<1x128xf32, #tpu.memory_space<vmem>>
      %1014 = tpu.memref_slice %arg7[%883] : memref<2x!tpu.dma_semaphore, #tpu.memory_space<semaphore_mem>> -> memref<1x!tpu.dma_semaphore, #tpu.memory_space<semaphore_mem>>
      %1015 = tpu.memref_squeeze %1014 : memref<1x!tpu.dma_semaphore, #tpu.memory_space<semaphore_mem>> -> memref<!tpu.dma_semaphore, #tpu.memory_space<semaphore_mem>>
      tpu.enqueue_dma source(%1011 : memref<1x128xf32, #tpu.memory_space<any>>) target(%1013 : memref<1x128xf32, #tpu.memory_space<vmem>>) target_semaphore(%1015 : memref<!tpu.dma_semaphore, #tpu.memory_space<semaphore_mem>>)
      %c4_i32_736 = arith.constant 4 : i32
      %1016 = arith.addi %0, %c4_i32_736 : i32
      %c8_i32_737 = arith.constant 8 : i32
      %1017 = arith.muli %882, %c8_i32_737 : i32
      %c1_i32_738 = arith.constant 1 : i32
      %1018 = arith.addi %1017, %c1_i32_738 : i32
      %1019 = arith.index_cast %1016 : i32 to index
      %1020 = arith.index_cast %1018 : i32 to index
      %1021 = memref.load %arg1[%1019, %1020] : memref<8x8xi32, #tpu.memory_space<smem>>
      %c0_i32_739 = arith.constant 0 : i32
      %1022 = tpu.memref_slice %arg3[%1021, %c0_i32_739] : memref<33x128xf32, #tpu.memory_space<any>> -> memref<1x128xf32, #tpu.memory_space<any>>
      %c12_i32_740 = arith.constant 12 : i32
      %c0_i32_741 = arith.constant 0 : i32
      %1023 = tpu.memref_slice %arg5[%883, %c12_i32_740, %c0_i32_741] : memref<2x64x128xf32, #tpu.memory_space<vmem>> -> memref<1x1x128xf32, #tpu.memory_space<vmem>>
      %1024 = tpu.memref_squeeze %1023 : memref<1x1x128xf32, #tpu.memory_space<vmem>> -> memref<1x128xf32, #tpu.memory_space<vmem>>
      %1025 = tpu.memref_slice %arg7[%883] : memref<2x!tpu.dma_semaphore, #tpu.memory_space<semaphore_mem>> -> memref<1x!tpu.dma_semaphore, #tpu.memory_space<semaphore_mem>>
      %1026 = tpu.memref_squeeze %1025 : memref<1x!tpu.dma_semaphore, #tpu.memory_space<semaphore_mem>> -> memref<!tpu.dma_semaphore, #tpu.memory_space<semaphore_mem>>
      tpu.enqueue_dma source(%1022 : memref<1x128xf32, #tpu.memory_space<any>>) target(%1024 : memref<1x128xf32, #tpu.memory_space<vmem>>) target_semaphore(%1026 : memref<!tpu.dma_semaphore, #tpu.memory_space<semaphore_mem>>)
      %c5_i32_742 = arith.constant 5 : i32
      %1027 = arith.addi %0, %c5_i32_742 : i32
      %c8_i32_743 = arith.constant 8 : i32
      %1028 = arith.muli %882, %c8_i32_743 : i32
      %c1_i32_744 = arith.constant 1 : i32
      %1029 = arith.addi %1028, %c1_i32_744 : i32
      %1030 = arith.index_cast %1027 : i32 to index
      %1031 = arith.index_cast %1029 : i32 to index
      %1032 = memref.load %arg1[%1030, %1031] : memref<8x8xi32, #tpu.memory_space<smem>>
      %c0_i32_745 = arith.constant 0 : i32
      %1033 = tpu.memref_slice %arg3[%1032, %c0_i32_745] : memref<33x128xf32, #tpu.memory_space<any>> -> memref<1x128xf32, #tpu.memory_space<any>>
      %c13_i32_746 = arith.constant 13 : i32
      %c0_i32_747 = arith.constant 0 : i32
      %1034 = tpu.memref_slice %arg5[%883, %c13_i32_746, %c0_i32_747] : memref<2x64x128xf32, #tpu.memory_space<vmem>> -> memref<1x1x128xf32, #tpu.memory_space<vmem>>
      %1035 = tpu.memref_squeeze %1034 : memref<1x1x128xf32, #tpu.memory_space<vmem>> -> memref<1x128xf32, #tpu.memory_space<vmem>>
      %1036 = tpu.memref_slice %arg7[%883] : memref<2x!tpu.dma_semaphore, #tpu.memory_space<semaphore_mem>> -> memref<1x!tpu.dma_semaphore, #tpu.memory_space<semaphore_mem>>
      %1037 = tpu.memref_squeeze %1036 : memref<1x!tpu.dma_semaphore, #tpu.memory_space<semaphore_mem>> -> memref<!tpu.dma_semaphore, #tpu.memory_space<semaphore_mem>>
      tpu.enqueue_dma source(%1033 : memref<1x128xf32, #tpu.memory_space<any>>) target(%1035 : memref<1x128xf32, #tpu.memory_space<vmem>>) target_semaphore(%1037 : memref<!tpu.dma_semaphore, #tpu.memory_space<semaphore_mem>>)
      %c6_i32_748 = arith.constant 6 : i32
      %1038 = arith.addi %0, %c6_i32_748 : i32
      %c8_i32_749 = arith.constant 8 : i32
      %1039 = arith.muli %882, %c8_i32_749 : i32
      %c1_i32_750 = arith.constant 1 : i32
      %1040 = arith.addi %1039, %c1_i32_750 : i32
      %1041 = arith.index_cast %1038 : i32 to index
      %1042 = arith.index_cast %1040 : i32 to index
      %1043 = memref.load %arg1[%1041, %1042] : memref<8x8xi32, #tpu.memory_space<smem>>
      %c0_i32_751 = arith.constant 0 : i32
      %1044 = tpu.memref_slice %arg3[%1043, %c0_i32_751] : memref<33x128xf32, #tpu.memory_space<any>> -> memref<1x128xf32, #tpu.memory_space<any>>
      %c14_i32_752 = arith.constant 14 : i32
      %c0_i32_753 = arith.constant 0 : i32
      %1045 = tpu.memref_slice %arg5[%883, %c14_i32_752, %c0_i32_753] : memref<2x64x128xf32, #tpu.memory_space<vmem>> -> memref<1x1x128xf32, #tpu.memory_space<vmem>>
      %1046 = tpu.memref_squeeze %1045 : memref<1x1x128xf32, #tpu.memory_space<vmem>> -> memref<1x128xf32, #tpu.memory_space<vmem>>
      %1047 = tpu.memref_slice %arg7[%883] : memref<2x!tpu.dma_semaphore, #tpu.memory_space<semaphore_mem>> -> memref<1x!tpu.dma_semaphore, #tpu.memory_space<semaphore_mem>>
      %1048 = tpu.memref_squeeze %1047 : memref<1x!tpu.dma_semaphore, #tpu.memory_space<semaphore_mem>> -> memref<!tpu.dma_semaphore, #tpu.memory_space<semaphore_mem>>
      tpu.enqueue_dma source(%1044 : memref<1x128xf32, #tpu.memory_space<any>>) target(%1046 : memref<1x128xf32, #tpu.memory_space<vmem>>) target_semaphore(%1048 : memref<!tpu.dma_semaphore, #tpu.memory_space<semaphore_mem>>)
      %c7_i32_754 = arith.constant 7 : i32
      %1049 = arith.addi %0, %c7_i32_754 : i32
      %c8_i32_755 = arith.constant 8 : i32
      %1050 = arith.muli %882, %c8_i32_755 : i32
      %c1_i32_756 = arith.constant 1 : i32
      %1051 = arith.addi %1050, %c1_i32_756 : i32
      %1052 = arith.index_cast %1049 : i32 to index
      %1053 = arith.index_cast %1051 : i32 to index
      %1054 = memref.load %arg1[%1052, %1053] : memref<8x8xi32, #tpu.memory_space<smem>>
      %c0_i32_757 = arith.constant 0 : i32
      %1055 = tpu.memref_slice %arg3[%1054, %c0_i32_757] : memref<33x128xf32, #tpu.memory_space<any>> -> memref<1x128xf32, #tpu.memory_space<any>>
      %c15_i32_758 = arith.constant 15 : i32
      %c0_i32_759 = arith.constant 0 : i32
      %1056 = tpu.memref_slice %arg5[%883, %c15_i32_758, %c0_i32_759] : memref<2x64x128xf32, #tpu.memory_space<vmem>> -> memref<1x1x128xf32, #tpu.memory_space<vmem>>
      %1057 = tpu.memref_squeeze %1056 : memref<1x1x128xf32, #tpu.memory_space<vmem>> -> memref<1x128xf32, #tpu.memory_space<vmem>>
      %1058 = tpu.memref_slice %arg7[%883] : memref<2x!tpu.dma_semaphore, #tpu.memory_space<semaphore_mem>> -> memref<1x!tpu.dma_semaphore, #tpu.memory_space<semaphore_mem>>
      %1059 = tpu.memref_squeeze %1058 : memref<1x!tpu.dma_semaphore, #tpu.memory_space<semaphore_mem>> -> memref<!tpu.dma_semaphore, #tpu.memory_space<semaphore_mem>>
      tpu.enqueue_dma source(%1055 : memref<1x128xf32, #tpu.memory_space<any>>) target(%1057 : memref<1x128xf32, #tpu.memory_space<vmem>>) target_semaphore(%1059 : memref<!tpu.dma_semaphore, #tpu.memory_space<semaphore_mem>>)
      %c0_i32_760 = arith.constant 0 : i32
      %1060 = arith.addi %0, %c0_i32_760 : i32
      %c8_i32_761 = arith.constant 8 : i32
      %1061 = arith.muli %882, %c8_i32_761 : i32
      %c2_i32_762 = arith.constant 2 : i32
      %1062 = arith.addi %1061, %c2_i32_762 : i32
      %1063 = arith.index_cast %1060 : i32 to index
      %1064 = arith.index_cast %1062 : i32 to index
      %1065 = memref.load %arg1[%1063, %1064] : memref<8x8xi32, #tpu.memory_space<smem>>
      %c0_i32_763 = arith.constant 0 : i32
      %1066 = tpu.memref_slice %arg3[%1065, %c0_i32_763] : memref<33x128xf32, #tpu.memory_space<any>> -> memref<1x128xf32, #tpu.memory_space<any>>
      %c16_i32_764 = arith.constant 16 : i32
      %c0_i32_765 = arith.constant 0 : i32
      %1067 = tpu.memref_slice %arg5[%883, %c16_i32_764, %c0_i32_765] : memref<2x64x128xf32, #tpu.memory_space<vmem>> -> memref<1x1x128xf32, #tpu.memory_space<vmem>>
      %1068 = tpu.memref_squeeze %1067 : memref<1x1x128xf32, #tpu.memory_space<vmem>> -> memref<1x128xf32, #tpu.memory_space<vmem>>
      %1069 = tpu.memref_slice %arg7[%883] : memref<2x!tpu.dma_semaphore, #tpu.memory_space<semaphore_mem>> -> memref<1x!tpu.dma_semaphore, #tpu.memory_space<semaphore_mem>>
      %1070 = tpu.memref_squeeze %1069 : memref<1x!tpu.dma_semaphore, #tpu.memory_space<semaphore_mem>> -> memref<!tpu.dma_semaphore, #tpu.memory_space<semaphore_mem>>
      tpu.enqueue_dma source(%1066 : memref<1x128xf32, #tpu.memory_space<any>>) target(%1068 : memref<1x128xf32, #tpu.memory_space<vmem>>) target_semaphore(%1070 : memref<!tpu.dma_semaphore, #tpu.memory_space<semaphore_mem>>)
      %c1_i32_766 = arith.constant 1 : i32
      %1071 = arith.addi %0, %c1_i32_766 : i32
      %c8_i32_767 = arith.constant 8 : i32
      %1072 = arith.muli %882, %c8_i32_767 : i32
      %c2_i32_768 = arith.constant 2 : i32
      %1073 = arith.addi %1072, %c2_i32_768 : i32
      %1074 = arith.index_cast %1071 : i32 to index
      %1075 = arith.index_cast %1073 : i32 to index
      %1076 = memref.load %arg1[%1074, %1075] : memref<8x8xi32, #tpu.memory_space<smem>>
      %c0_i32_769 = arith.constant 0 : i32
      %1077 = tpu.memref_slice %arg3[%1076, %c0_i32_769] : memref<33x128xf32, #tpu.memory_space<any>> -> memref<1x128xf32, #tpu.memory_space<any>>
      %c17_i32_770 = arith.constant 17 : i32
      %c0_i32_771 = arith.constant 0 : i32
      %1078 = tpu.memref_slice %arg5[%883, %c17_i32_770, %c0_i32_771] : memref<2x64x128xf32, #tpu.memory_space<vmem>> -> memref<1x1x128xf32, #tpu.memory_space<vmem>>
      %1079 = tpu.memref_squeeze %1078 : memref<1x1x128xf32, #tpu.memory_space<vmem>> -> memref<1x128xf32, #tpu.memory_space<vmem>>
      %1080 = tpu.memref_slice %arg7[%883] : memref<2x!tpu.dma_semaphore, #tpu.memory_space<semaphore_mem>> -> memref<1x!tpu.dma_semaphore, #tpu.memory_space<semaphore_mem>>
      %1081 = tpu.memref_squeeze %1080 : memref<1x!tpu.dma_semaphore, #tpu.memory_space<semaphore_mem>> -> memref<!tpu.dma_semaphore, #tpu.memory_space<semaphore_mem>>
      tpu.enqueue_dma source(%1077 : memref<1x128xf32, #tpu.memory_space<any>>) target(%1079 : memref<1x128xf32, #tpu.memory_space<vmem>>) target_semaphore(%1081 : memref<!tpu.dma_semaphore, #tpu.memory_space<semaphore_mem>>)
      %c2_i32_772 = arith.constant 2 : i32
      %1082 = arith.addi %0, %c2_i32_772 : i32
      %c8_i32_773 = arith.constant 8 : i32
      %1083 = arith.muli %882, %c8_i32_773 : i32
      %c2_i32_774 = arith.constant 2 : i32
      %1084 = arith.addi %1083, %c2_i32_774 : i32
      %1085 = arith.index_cast %1082 : i32 to index
      %1086 = arith.index_cast %1084 : i32 to index
      %1087 = memref.load %arg1[%1085, %1086] : memref<8x8xi32, #tpu.memory_space<smem>>
      %c0_i32_775 = arith.constant 0 : i32
      %1088 = tpu.memref_slice %arg3[%1087, %c0_i32_775] : memref<33x128xf32, #tpu.memory_space<any>> -> memref<1x128xf32, #tpu.memory_space<any>>
      %c18_i32_776 = arith.constant 18 : i32
      %c0_i32_777 = arith.constant 0 : i32
      %1089 = tpu.memref_slice %arg5[%883, %c18_i32_776, %c0_i32_777] : memref<2x64x128xf32, #tpu.memory_space<vmem>> -> memref<1x1x128xf32, #tpu.memory_space<vmem>>
      %1090 = tpu.memref_squeeze %1089 : memref<1x1x128xf32, #tpu.memory_space<vmem>> -> memref<1x128xf32, #tpu.memory_space<vmem>>
      %1091 = tpu.memref_slice %arg7[%883] : memref<2x!tpu.dma_semaphore, #tpu.memory_space<semaphore_mem>> -> memref<1x!tpu.dma_semaphore, #tpu.memory_space<semaphore_mem>>
      %1092 = tpu.memref_squeeze %1091 : memref<1x!tpu.dma_semaphore, #tpu.memory_space<semaphore_mem>> -> memref<!tpu.dma_semaphore, #tpu.memory_space<semaphore_mem>>
      tpu.enqueue_dma source(%1088 : memref<1x128xf32, #tpu.memory_space<any>>) target(%1090 : memref<1x128xf32, #tpu.memory_space<vmem>>) target_semaphore(%1092 : memref<!tpu.dma_semaphore, #tpu.memory_space<semaphore_mem>>)
      %c3_i32_778 = arith.constant 3 : i32
      %1093 = arith.addi %0, %c3_i32_778 : i32
      %c8_i32_779 = arith.constant 8 : i32
      %1094 = arith.muli %882, %c8_i32_779 : i32
      %c2_i32_780 = arith.constant 2 : i32
      %1095 = arith.addi %1094, %c2_i32_780 : i32
      %1096 = arith.index_cast %1093 : i32 to index
      %1097 = arith.index_cast %1095 : i32 to index
      %1098 = memref.load %arg1[%1096, %1097] : memref<8x8xi32, #tpu.memory_space<smem>>
      %c0_i32_781 = arith.constant 0 : i32
      %1099 = tpu.memref_slice %arg3[%1098, %c0_i32_781] : memref<33x128xf32, #tpu.memory_space<any>> -> memref<1x128xf32, #tpu.memory_space<any>>
      %c19_i32_782 = arith.constant 19 : i32
      %c0_i32_783 = arith.constant 0 : i32
      %1100 = tpu.memref_slice %arg5[%883, %c19_i32_782, %c0_i32_783] : memref<2x64x128xf32, #tpu.memory_space<vmem>> -> memref<1x1x128xf32, #tpu.memory_space<vmem>>
      %1101 = tpu.memref_squeeze %1100 : memref<1x1x128xf32, #tpu.memory_space<vmem>> -> memref<1x128xf32, #tpu.memory_space<vmem>>
      %1102 = tpu.memref_slice %arg7[%883] : memref<2x!tpu.dma_semaphore, #tpu.memory_space<semaphore_mem>> -> memref<1x!tpu.dma_semaphore, #tpu.memory_space<semaphore_mem>>
      %1103 = tpu.memref_squeeze %1102 : memref<1x!tpu.dma_semaphore, #tpu.memory_space<semaphore_mem>> -> memref<!tpu.dma_semaphore, #tpu.memory_space<semaphore_mem>>
      tpu.enqueue_dma source(%1099 : memref<1x128xf32, #tpu.memory_space<any>>) target(%1101 : memref<1x128xf32, #tpu.memory_space<vmem>>) target_semaphore(%1103 : memref<!tpu.dma_semaphore, #tpu.memory_space<semaphore_mem>>)
      %c4_i32_784 = arith.constant 4 : i32
      %1104 = arith.addi %0, %c4_i32_784 : i32
      %c8_i32_785 = arith.constant 8 : i32
      %1105 = arith.muli %882, %c8_i32_785 : i32
      %c2_i32_786 = arith.constant 2 : i32
      %1106 = arith.addi %1105, %c2_i32_786 : i32
      %1107 = arith.index_cast %1104 : i32 to index
      %1108 = arith.index_cast %1106 : i32 to index
      %1109 = memref.load %arg1[%1107, %1108] : memref<8x8xi32, #tpu.memory_space<smem>>
      %c0_i32_787 = arith.constant 0 : i32
      %1110 = tpu.memref_slice %arg3[%1109, %c0_i32_787] : memref<33x128xf32, #tpu.memory_space<any>> -> memref<1x128xf32, #tpu.memory_space<any>>
      %c20_i32_788 = arith.constant 20 : i32
      %c0_i32_789 = arith.constant 0 : i32
      %1111 = tpu.memref_slice %arg5[%883, %c20_i32_788, %c0_i32_789] : memref<2x64x128xf32, #tpu.memory_space<vmem>> -> memref<1x1x128xf32, #tpu.memory_space<vmem>>
      %1112 = tpu.memref_squeeze %1111 : memref<1x1x128xf32, #tpu.memory_space<vmem>> -> memref<1x128xf32, #tpu.memory_space<vmem>>
      %1113 = tpu.memref_slice %arg7[%883] : memref<2x!tpu.dma_semaphore, #tpu.memory_space<semaphore_mem>> -> memref<1x!tpu.dma_semaphore, #tpu.memory_space<semaphore_mem>>
      %1114 = tpu.memref_squeeze %1113 : memref<1x!tpu.dma_semaphore, #tpu.memory_space<semaphore_mem>> -> memref<!tpu.dma_semaphore, #tpu.memory_space<semaphore_mem>>
      tpu.enqueue_dma source(%1110 : memref<1x128xf32, #tpu.memory_space<any>>) target(%1112 : memref<1x128xf32, #tpu.memory_space<vmem>>) target_semaphore(%1114 : memref<!tpu.dma_semaphore, #tpu.memory_space<semaphore_mem>>)
      %c5_i32_790 = arith.constant 5 : i32
      %1115 = arith.addi %0, %c5_i32_790 : i32
      %c8_i32_791 = arith.constant 8 : i32
      %1116 = arith.muli %882, %c8_i32_791 : i32
      %c2_i32_792 = arith.constant 2 : i32
      %1117 = arith.addi %1116, %c2_i32_792 : i32
      %1118 = arith.index_cast %1115 : i32 to index
      %1119 = arith.index_cast %1117 : i32 to index
      %1120 = memref.load %arg1[%1118, %1119] : memref<8x8xi32, #tpu.memory_space<smem>>
      %c0_i32_793 = arith.constant 0 : i32
      %1121 = tpu.memref_slice %arg3[%1120, %c0_i32_793] : memref<33x128xf32, #tpu.memory_space<any>> -> memref<1x128xf32, #tpu.memory_space<any>>
      %c21_i32_794 = arith.constant 21 : i32
      %c0_i32_795 = arith.constant 0 : i32
      %1122 = tpu.memref_slice %arg5[%883, %c21_i32_794, %c0_i32_795] : memref<2x64x128xf32, #tpu.memory_space<vmem>> -> memref<1x1x128xf32, #tpu.memory_space<vmem>>
      %1123 = tpu.memref_squeeze %1122 : memref<1x1x128xf32, #tpu.memory_space<vmem>> -> memref<1x128xf32, #tpu.memory_space<vmem>>
      %1124 = tpu.memref_slice %arg7[%883] : memref<2x!tpu.dma_semaphore, #tpu.memory_space<semaphore_mem>> -> memref<1x!tpu.dma_semaphore, #tpu.memory_space<semaphore_mem>>
      %1125 = tpu.memref_squeeze %1124 : memref<1x!tpu.dma_semaphore, #tpu.memory_space<semaphore_mem>> -> memref<!tpu.dma_semaphore, #tpu.memory_space<semaphore_mem>>
      tpu.enqueue_dma source(%1121 : memref<1x128xf32, #tpu.memory_space<any>>) target(%1123 : memref<1x128xf32, #tpu.memory_space<vmem>>) target_semaphore(%1125 : memref<!tpu.dma_semaphore, #tpu.memory_space<semaphore_mem>>)
      %c6_i32_796 = arith.constant 6 : i32
      %1126 = arith.addi %0, %c6_i32_796 : i32
      %c8_i32_797 = arith.constant 8 : i32
      %1127 = arith.muli %882, %c8_i32_797 : i32
      %c2_i32_798 = arith.constant 2 : i32
      %1128 = arith.addi %1127, %c2_i32_798 : i32
      %1129 = arith.index_cast %1126 : i32 to index
      %1130 = arith.index_cast %1128 : i32 to index
      %1131 = memref.load %arg1[%1129, %1130] : memref<8x8xi32, #tpu.memory_space<smem>>
      %c0_i32_799 = arith.constant 0 : i32
      %1132 = tpu.memref_slice %arg3[%1131, %c0_i32_799] : memref<33x128xf32, #tpu.memory_space<any>> -> memref<1x128xf32, #tpu.memory_space<any>>
      %c22_i32_800 = arith.constant 22 : i32
      %c0_i32_801 = arith.constant 0 : i32
      %1133 = tpu.memref_slice %arg5[%883, %c22_i32_800, %c0_i32_801] : memref<2x64x128xf32, #tpu.memory_space<vmem>> -> memref<1x1x128xf32, #tpu.memory_space<vmem>>
      %1134 = tpu.memref_squeeze %1133 : memref<1x1x128xf32, #tpu.memory_space<vmem>> -> memref<1x128xf32, #tpu.memory_space<vmem>>
      %1135 = tpu.memref_slice %arg7[%883] : memref<2x!tpu.dma_semaphore, #tpu.memory_space<semaphore_mem>> -> memref<1x!tpu.dma_semaphore, #tpu.memory_space<semaphore_mem>>
      %1136 = tpu.memref_squeeze %1135 : memref<1x!tpu.dma_semaphore, #tpu.memory_space<semaphore_mem>> -> memref<!tpu.dma_semaphore, #tpu.memory_space<semaphore_mem>>
      tpu.enqueue_dma source(%1132 : memref<1x128xf32, #tpu.memory_space<any>>) target(%1134 : memref<1x128xf32, #tpu.memory_space<vmem>>) target_semaphore(%1136 : memref<!tpu.dma_semaphore, #tpu.memory_space<semaphore_mem>>)
      %c7_i32_802 = arith.constant 7 : i32
      %1137 = arith.addi %0, %c7_i32_802 : i32
      %c8_i32_803 = arith.constant 8 : i32
      %1138 = arith.muli %882, %c8_i32_803 : i32
      %c2_i32_804 = arith.constant 2 : i32
      %1139 = arith.addi %1138, %c2_i32_804 : i32
      %1140 = arith.index_cast %1137 : i32 to index
      %1141 = arith.index_cast %1139 : i32 to index
      %1142 = memref.load %arg1[%1140, %1141] : memref<8x8xi32, #tpu.memory_space<smem>>
      %c0_i32_805 = arith.constant 0 : i32
      %1143 = tpu.memref_slice %arg3[%1142, %c0_i32_805] : memref<33x128xf32, #tpu.memory_space<any>> -> memref<1x128xf32, #tpu.memory_space<any>>
      %c23_i32_806 = arith.constant 23 : i32
      %c0_i32_807 = arith.constant 0 : i32
      %1144 = tpu.memref_slice %arg5[%883, %c23_i32_806, %c0_i32_807] : memref<2x64x128xf32, #tpu.memory_space<vmem>> -> memref<1x1x128xf32, #tpu.memory_space<vmem>>
      %1145 = tpu.memref_squeeze %1144 : memref<1x1x128xf32, #tpu.memory_space<vmem>> -> memref<1x128xf32, #tpu.memory_space<vmem>>
      %1146 = tpu.memref_slice %arg7[%883] : memref<2x!tpu.dma_semaphore, #tpu.memory_space<semaphore_mem>> -> memref<1x!tpu.dma_semaphore, #tpu.memory_space<semaphore_mem>>
      %1147 = tpu.memref_squeeze %1146 : memref<1x!tpu.dma_semaphore, #tpu.memory_space<semaphore_mem>> -> memref<!tpu.dma_semaphore, #tpu.memory_space<semaphore_mem>>
      tpu.enqueue_dma source(%1143 : memref<1x128xf32, #tpu.memory_space<any>>) target(%1145 : memref<1x128xf32, #tpu.memory_space<vmem>>) target_semaphore(%1147 : memref<!tpu.dma_semaphore, #tpu.memory_space<semaphore_mem>>)
      %c0_i32_808 = arith.constant 0 : i32
      %1148 = arith.addi %0, %c0_i32_808 : i32
      %c8_i32_809 = arith.constant 8 : i32
      %1149 = arith.muli %882, %c8_i32_809 : i32
      %c3_i32_810 = arith.constant 3 : i32
      %1150 = arith.addi %1149, %c3_i32_810 : i32
      %1151 = arith.index_cast %1148 : i32 to index
      %1152 = arith.index_cast %1150 : i32 to index
      %1153 = memref.load %arg1[%1151, %1152] : memref<8x8xi32, #tpu.memory_space<smem>>
      %c0_i32_811 = arith.constant 0 : i32
      %1154 = tpu.memref_slice %arg3[%1153, %c0_i32_811] : memref<33x128xf32, #tpu.memory_space<any>> -> memref<1x128xf32, #tpu.memory_space<any>>
      %c24_i32_812 = arith.constant 24 : i32
      %c0_i32_813 = arith.constant 0 : i32
      %1155 = tpu.memref_slice %arg5[%883, %c24_i32_812, %c0_i32_813] : memref<2x64x128xf32, #tpu.memory_space<vmem>> -> memref<1x1x128xf32, #tpu.memory_space<vmem>>
      %1156 = tpu.memref_squeeze %1155 : memref<1x1x128xf32, #tpu.memory_space<vmem>> -> memref<1x128xf32, #tpu.memory_space<vmem>>
      %1157 = tpu.memref_slice %arg7[%883] : memref<2x!tpu.dma_semaphore, #tpu.memory_space<semaphore_mem>> -> memref<1x!tpu.dma_semaphore, #tpu.memory_space<semaphore_mem>>
      %1158 = tpu.memref_squeeze %1157 : memref<1x!tpu.dma_semaphore, #tpu.memory_space<semaphore_mem>> -> memref<!tpu.dma_semaphore, #tpu.memory_space<semaphore_mem>>
      tpu.enqueue_dma source(%1154 : memref<1x128xf32, #tpu.memory_space<any>>) target(%1156 : memref<1x128xf32, #tpu.memory_space<vmem>>) target_semaphore(%1158 : memref<!tpu.dma_semaphore, #tpu.memory_space<semaphore_mem>>)
      %c1_i32_814 = arith.constant 1 : i32
      %1159 = arith.addi %0, %c1_i32_814 : i32
      %c8_i32_815 = arith.constant 8 : i32
      %1160 = arith.muli %882, %c8_i32_815 : i32
      %c3_i32_816 = arith.constant 3 : i32
      %1161 = arith.addi %1160, %c3_i32_816 : i32
      %1162 = arith.index_cast %1159 : i32 to index
      %1163 = arith.index_cast %1161 : i32 to index
      %1164 = memref.load %arg1[%1162, %1163] : memref<8x8xi32, #tpu.memory_space<smem>>
      %c0_i32_817 = arith.constant 0 : i32
      %1165 = tpu.memref_slice %arg3[%1164, %c0_i32_817] : memref<33x128xf32, #tpu.memory_space<any>> -> memref<1x128xf32, #tpu.memory_space<any>>
      %c25_i32_818 = arith.constant 25 : i32
      %c0_i32_819 = arith.constant 0 : i32
      %1166 = tpu.memref_slice %arg5[%883, %c25_i32_818, %c0_i32_819] : memref<2x64x128xf32, #tpu.memory_space<vmem>> -> memref<1x1x128xf32, #tpu.memory_space<vmem>>
      %1167 = tpu.memref_squeeze %1166 : memref<1x1x128xf32, #tpu.memory_space<vmem>> -> memref<1x128xf32, #tpu.memory_space<vmem>>
      %1168 = tpu.memref_slice %arg7[%883] : memref<2x!tpu.dma_semaphore, #tpu.memory_space<semaphore_mem>> -> memref<1x!tpu.dma_semaphore, #tpu.memory_space<semaphore_mem>>
      %1169 = tpu.memref_squeeze %1168 : memref<1x!tpu.dma_semaphore, #tpu.memory_space<semaphore_mem>> -> memref<!tpu.dma_semaphore, #tpu.memory_space<semaphore_mem>>
      tpu.enqueue_dma source(%1165 : memref<1x128xf32, #tpu.memory_space<any>>) target(%1167 : memref<1x128xf32, #tpu.memory_space<vmem>>) target_semaphore(%1169 : memref<!tpu.dma_semaphore, #tpu.memory_space<semaphore_mem>>)
      %c2_i32_820 = arith.constant 2 : i32
      %1170 = arith.addi %0, %c2_i32_820 : i32
      %c8_i32_821 = arith.constant 8 : i32
      %1171 = arith.muli %882, %c8_i32_821 : i32
      %c3_i32_822 = arith.constant 3 : i32
      %1172 = arith.addi %1171, %c3_i32_822 : i32
      %1173 = arith.index_cast %1170 : i32 to index
      %1174 = arith.index_cast %1172 : i32 to index
      %1175 = memref.load %arg1[%1173, %1174] : memref<8x8xi32, #tpu.memory_space<smem>>
      %c0_i32_823 = arith.constant 0 : i32
      %1176 = tpu.memref_slice %arg3[%1175, %c0_i32_823] : memref<33x128xf32, #tpu.memory_space<any>> -> memref<1x128xf32, #tpu.memory_space<any>>
      %c26_i32_824 = arith.constant 26 : i32
      %c0_i32_825 = arith.constant 0 : i32
      %1177 = tpu.memref_slice %arg5[%883, %c26_i32_824, %c0_i32_825] : memref<2x64x128xf32, #tpu.memory_space<vmem>> -> memref<1x1x128xf32, #tpu.memory_space<vmem>>
      %1178 = tpu.memref_squeeze %1177 : memref<1x1x128xf32, #tpu.memory_space<vmem>> -> memref<1x128xf32, #tpu.memory_space<vmem>>
      %1179 = tpu.memref_slice %arg7[%883] : memref<2x!tpu.dma_semaphore, #tpu.memory_space<semaphore_mem>> -> memref<1x!tpu.dma_semaphore, #tpu.memory_space<semaphore_mem>>
      %1180 = tpu.memref_squeeze %1179 : memref<1x!tpu.dma_semaphore, #tpu.memory_space<semaphore_mem>> -> memref<!tpu.dma_semaphore, #tpu.memory_space<semaphore_mem>>
      tpu.enqueue_dma source(%1176 : memref<1x128xf32, #tpu.memory_space<any>>) target(%1178 : memref<1x128xf32, #tpu.memory_space<vmem>>) target_semaphore(%1180 : memref<!tpu.dma_semaphore, #tpu.memory_space<semaphore_mem>>)
      %c3_i32_826 = arith.constant 3 : i32
      %1181 = arith.addi %0, %c3_i32_826 : i32
      %c8_i32_827 = arith.constant 8 : i32
      %1182 = arith.muli %882, %c8_i32_827 : i32
      %c3_i32_828 = arith.constant 3 : i32
      %1183 = arith.addi %1182, %c3_i32_828 : i32
      %1184 = arith.index_cast %1181 : i32 to index
      %1185 = arith.index_cast %1183 : i32 to index
      %1186 = memref.load %arg1[%1184, %1185] : memref<8x8xi32, #tpu.memory_space<smem>>
      %c0_i32_829 = arith.constant 0 : i32
      %1187 = tpu.memref_slice %arg3[%1186, %c0_i32_829] : memref<33x128xf32, #tpu.memory_space<any>> -> memref<1x128xf32, #tpu.memory_space<any>>
      %c27_i32_830 = arith.constant 27 : i32
      %c0_i32_831 = arith.constant 0 : i32
      %1188 = tpu.memref_slice %arg5[%883, %c27_i32_830, %c0_i32_831] : memref<2x64x128xf32, #tpu.memory_space<vmem>> -> memref<1x1x128xf32, #tpu.memory_space<vmem>>
      %1189 = tpu.memref_squeeze %1188 : memref<1x1x128xf32, #tpu.memory_space<vmem>> -> memref<1x128xf32, #tpu.memory_space<vmem>>
      %1190 = tpu.memref_slice %arg7[%883] : memref<2x!tpu.dma_semaphore, #tpu.memory_space<semaphore_mem>> -> memref<1x!tpu.dma_semaphore, #tpu.memory_space<semaphore_mem>>
      %1191 = tpu.memref_squeeze %1190 : memref<1x!tpu.dma_semaphore, #tpu.memory_space<semaphore_mem>> -> memref<!tpu.dma_semaphore, #tpu.memory_space<semaphore_mem>>
      tpu.enqueue_dma source(%1187 : memref<1x128xf32, #tpu.memory_space<any>>) target(%1189 : memref<1x128xf32, #tpu.memory_space<vmem>>) target_semaphore(%1191 : memref<!tpu.dma_semaphore, #tpu.memory_space<semaphore_mem>>)
      %c4_i32_832 = arith.constant 4 : i32
      %1192 = arith.addi %0, %c4_i32_832 : i32
      %c8_i32_833 = arith.constant 8 : i32
      %1193 = arith.muli %882, %c8_i32_833 : i32
      %c3_i32_834 = arith.constant 3 : i32
      %1194 = arith.addi %1193, %c3_i32_834 : i32
      %1195 = arith.index_cast %1192 : i32 to index
      %1196 = arith.index_cast %1194 : i32 to index
      %1197 = memref.load %arg1[%1195, %1196] : memref<8x8xi32, #tpu.memory_space<smem>>
      %c0_i32_835 = arith.constant 0 : i32
      %1198 = tpu.memref_slice %arg3[%1197, %c0_i32_835] : memref<33x128xf32, #tpu.memory_space<any>> -> memref<1x128xf32, #tpu.memory_space<any>>
      %c28_i32_836 = arith.constant 28 : i32
      %c0_i32_837 = arith.constant 0 : i32
      %1199 = tpu.memref_slice %arg5[%883, %c28_i32_836, %c0_i32_837] : memref<2x64x128xf32, #tpu.memory_space<vmem>> -> memref<1x1x128xf32, #tpu.memory_space<vmem>>
      %1200 = tpu.memref_squeeze %1199 : memref<1x1x128xf32, #tpu.memory_space<vmem>> -> memref<1x128xf32, #tpu.memory_space<vmem>>
      %1201 = tpu.memref_slice %arg7[%883] : memref<2x!tpu.dma_semaphore, #tpu.memory_space<semaphore_mem>> -> memref<1x!tpu.dma_semaphore, #tpu.memory_space<semaphore_mem>>
      %1202 = tpu.memref_squeeze %1201 : memref<1x!tpu.dma_semaphore, #tpu.memory_space<semaphore_mem>> -> memref<!tpu.dma_semaphore, #tpu.memory_space<semaphore_mem>>
      tpu.enqueue_dma source(%1198 : memref<1x128xf32, #tpu.memory_space<any>>) target(%1200 : memref<1x128xf32, #tpu.memory_space<vmem>>) target_semaphore(%1202 : memref<!tpu.dma_semaphore, #tpu.memory_space<semaphore_mem>>)
      %c5_i32_838 = arith.constant 5 : i32
      %1203 = arith.addi %0, %c5_i32_838 : i32
      %c8_i32_839 = arith.constant 8 : i32
      %1204 = arith.muli %882, %c8_i32_839 : i32
      %c3_i32_840 = arith.constant 3 : i32
      %1205 = arith.addi %1204, %c3_i32_840 : i32
      %1206 = arith.index_cast %1203 : i32 to index
      %1207 = arith.index_cast %1205 : i32 to index
      %1208 = memref.load %arg1[%1206, %1207] : memref<8x8xi32, #tpu.memory_space<smem>>
      %c0_i32_841 = arith.constant 0 : i32
      %1209 = tpu.memref_slice %arg3[%1208, %c0_i32_841] : memref<33x128xf32, #tpu.memory_space<any>> -> memref<1x128xf32, #tpu.memory_space<any>>
      %c29_i32_842 = arith.constant 29 : i32
      %c0_i32_843 = arith.constant 0 : i32
      %1210 = tpu.memref_slice %arg5[%883, %c29_i32_842, %c0_i32_843] : memref<2x64x128xf32, #tpu.memory_space<vmem>> -> memref<1x1x128xf32, #tpu.memory_space<vmem>>
      %1211 = tpu.memref_squeeze %1210 : memref<1x1x128xf32, #tpu.memory_space<vmem>> -> memref<1x128xf32, #tpu.memory_space<vmem>>
      %1212 = tpu.memref_slice %arg7[%883] : memref<2x!tpu.dma_semaphore, #tpu.memory_space<semaphore_mem>> -> memref<1x!tpu.dma_semaphore, #tpu.memory_space<semaphore_mem>>
      %1213 = tpu.memref_squeeze %1212 : memref<1x!tpu.dma_semaphore, #tpu.memory_space<semaphore_mem>> -> memref<!tpu.dma_semaphore, #tpu.memory_space<semaphore_mem>>
      tpu.enqueue_dma source(%1209 : memref<1x128xf32, #tpu.memory_space<any>>) target(%1211 : memref<1x128xf32, #tpu.memory_space<vmem>>) target_semaphore(%1213 : memref<!tpu.dma_semaphore, #tpu.memory_space<semaphore_mem>>)
      %c6_i32_844 = arith.constant 6 : i32
      %1214 = arith.addi %0, %c6_i32_844 : i32
      %c8_i32_845 = arith.constant 8 : i32
      %1215 = arith.muli %882, %c8_i32_845 : i32
      %c3_i32_846 = arith.constant 3 : i32
      %1216 = arith.addi %1215, %c3_i32_846 : i32
      %1217 = arith.index_cast %1214 : i32 to index
      %1218 = arith.index_cast %1216 : i32 to index
      %1219 = memref.load %arg1[%1217, %1218] : memref<8x8xi32, #tpu.memory_space<smem>>
      %c0_i32_847 = arith.constant 0 : i32
      %1220 = tpu.memref_slice %arg3[%1219, %c0_i32_847] : memref<33x128xf32, #tpu.memory_space<any>> -> memref<1x128xf32, #tpu.memory_space<any>>
      %c30_i32_848 = arith.constant 30 : i32
      %c0_i32_849 = arith.constant 0 : i32
      %1221 = tpu.memref_slice %arg5[%883, %c30_i32_848, %c0_i32_849] : memref<2x64x128xf32, #tpu.memory_space<vmem>> -> memref<1x1x128xf32, #tpu.memory_space<vmem>>
      %1222 = tpu.memref_squeeze %1221 : memref<1x1x128xf32, #tpu.memory_space<vmem>> -> memref<1x128xf32, #tpu.memory_space<vmem>>
      %1223 = tpu.memref_slice %arg7[%883] : memref<2x!tpu.dma_semaphore, #tpu.memory_space<semaphore_mem>> -> memref<1x!tpu.dma_semaphore, #tpu.memory_space<semaphore_mem>>
      %1224 = tpu.memref_squeeze %1223 : memref<1x!tpu.dma_semaphore, #tpu.memory_space<semaphore_mem>> -> memref<!tpu.dma_semaphore, #tpu.memory_space<semaphore_mem>>
      tpu.enqueue_dma source(%1220 : memref<1x128xf32, #tpu.memory_space<any>>) target(%1222 : memref<1x128xf32, #tpu.memory_space<vmem>>) target_semaphore(%1224 : memref<!tpu.dma_semaphore, #tpu.memory_space<semaphore_mem>>)
      %c7_i32_850 = arith.constant 7 : i32
      %1225 = arith.addi %0, %c7_i32_850 : i32
      %c8_i32_851 = arith.constant 8 : i32
      %1226 = arith.muli %882, %c8_i32_851 : i32
      %c3_i32_852 = arith.constant 3 : i32
      %1227 = arith.addi %1226, %c3_i32_852 : i32
      %1228 = arith.index_cast %1225 : i32 to index
      %1229 = arith.index_cast %1227 : i32 to index
      %1230 = memref.load %arg1[%1228, %1229] : memref<8x8xi32, #tpu.memory_space<smem>>
      %c0_i32_853 = arith.constant 0 : i32
      %1231 = tpu.memref_slice %arg3[%1230, %c0_i32_853] : memref<33x128xf32, #tpu.memory_space<any>> -> memref<1x128xf32, #tpu.memory_space<any>>
      %c31_i32_854 = arith.constant 31 : i32
      %c0_i32_855 = arith.constant 0 : i32
      %1232 = tpu.memref_slice %arg5[%883, %c31_i32_854, %c0_i32_855] : memref<2x64x128xf32, #tpu.memory_space<vmem>> -> memref<1x1x128xf32, #tpu.memory_space<vmem>>
      %1233 = tpu.memref_squeeze %1232 : memref<1x1x128xf32, #tpu.memory_space<vmem>> -> memref<1x128xf32, #tpu.memory_space<vmem>>
      %1234 = tpu.memref_slice %arg7[%883] : memref<2x!tpu.dma_semaphore, #tpu.memory_space<semaphore_mem>> -> memref<1x!tpu.dma_semaphore, #tpu.memory_space<semaphore_mem>>
      %1235 = tpu.memref_squeeze %1234 : memref<1x!tpu.dma_semaphore, #tpu.memory_space<semaphore_mem>> -> memref<!tpu.dma_semaphore, #tpu.memory_space<semaphore_mem>>
      tpu.enqueue_dma source(%1231 : memref<1x128xf32, #tpu.memory_space<any>>) target(%1233 : memref<1x128xf32, #tpu.memory_space<vmem>>) target_semaphore(%1235 : memref<!tpu.dma_semaphore, #tpu.memory_space<semaphore_mem>>)
      %c0_i32_856 = arith.constant 0 : i32
      %1236 = arith.addi %0, %c0_i32_856 : i32
      %c8_i32_857 = arith.constant 8 : i32
      %1237 = arith.muli %882, %c8_i32_857 : i32
      %c4_i32_858 = arith.constant 4 : i32
      %1238 = arith.addi %1237, %c4_i32_858 : i32
      %1239 = arith.index_cast %1236 : i32 to index
      %1240 = arith.index_cast %1238 : i32 to index
      %1241 = memref.load %arg1[%1239, %1240] : memref<8x8xi32, #tpu.memory_space<smem>>
      %c0_i32_859 = arith.constant 0 : i32
      %1242 = tpu.memref_slice %arg3[%1241, %c0_i32_859] : memref<33x128xf32, #tpu.memory_space<any>> -> memref<1x128xf32, #tpu.memory_space<any>>
      %c32_i32_860 = arith.constant 32 : i32
      %c0_i32_861 = arith.constant 0 : i32
      %1243 = tpu.memref_slice %arg5[%883, %c32_i32_860, %c0_i32_861] : memref<2x64x128xf32, #tpu.memory_space<vmem>> -> memref<1x1x128xf32, #tpu.memory_space<vmem>>
      %1244 = tpu.memref_squeeze %1243 : memref<1x1x128xf32, #tpu.memory_space<vmem>> -> memref<1x128xf32, #tpu.memory_space<vmem>>
      %1245 = tpu.memref_slice %arg7[%883] : memref<2x!tpu.dma_semaphore, #tpu.memory_space<semaphore_mem>> -> memref<1x!tpu.dma_semaphore, #tpu.memory_space<semaphore_mem>>
      %1246 = tpu.memref_squeeze %1245 : memref<1x!tpu.dma_semaphore, #tpu.memory_space<semaphore_mem>> -> memref<!tpu.dma_semaphore, #tpu.memory_space<semaphore_mem>>
      tpu.enqueue_dma source(%1242 : memref<1x128xf32, #tpu.memory_space<any>>) target(%1244 : memref<1x128xf32, #tpu.memory_space<vmem>>) target_semaphore(%1246 : memref<!tpu.dma_semaphore, #tpu.memory_space<semaphore_mem>>)
      %c1_i32_862 = arith.constant 1 : i32
      %1247 = arith.addi %0, %c1_i32_862 : i32
      %c8_i32_863 = arith.constant 8 : i32
      %1248 = arith.muli %882, %c8_i32_863 : i32
      %c4_i32_864 = arith.constant 4 : i32
      %1249 = arith.addi %1248, %c4_i32_864 : i32
      %1250 = arith.index_cast %1247 : i32 to index
      %1251 = arith.index_cast %1249 : i32 to index
      %1252 = memref.load %arg1[%1250, %1251] : memref<8x8xi32, #tpu.memory_space<smem>>
      %c0_i32_865 = arith.constant 0 : i32
      %1253 = tpu.memref_slice %arg3[%1252, %c0_i32_865] : memref<33x128xf32, #tpu.memory_space<any>> -> memref<1x128xf32, #tpu.memory_space<any>>
      %c33_i32_866 = arith.constant 33 : i32
      %c0_i32_867 = arith.constant 0 : i32
      %1254 = tpu.memref_slice %arg5[%883, %c33_i32_866, %c0_i32_867] : memref<2x64x128xf32, #tpu.memory_space<vmem>> -> memref<1x1x128xf32, #tpu.memory_space<vmem>>
      %1255 = tpu.memref_squeeze %1254 : memref<1x1x128xf32, #tpu.memory_space<vmem>> -> memref<1x128xf32, #tpu.memory_space<vmem>>
      %1256 = tpu.memref_slice %arg7[%883] : memref<2x!tpu.dma_semaphore, #tpu.memory_space<semaphore_mem>> -> memref<1x!tpu.dma_semaphore, #tpu.memory_space<semaphore_mem>>
      %1257 = tpu.memref_squeeze %1256 : memref<1x!tpu.dma_semaphore, #tpu.memory_space<semaphore_mem>> -> memref<!tpu.dma_semaphore, #tpu.memory_space<semaphore_mem>>
      tpu.enqueue_dma source(%1253 : memref<1x128xf32, #tpu.memory_space<any>>) target(%1255 : memref<1x128xf32, #tpu.memory_space<vmem>>) target_semaphore(%1257 : memref<!tpu.dma_semaphore, #tpu.memory_space<semaphore_mem>>)
      %c2_i32_868 = arith.constant 2 : i32
      %1258 = arith.addi %0, %c2_i32_868 : i32
      %c8_i32_869 = arith.constant 8 : i32
      %1259 = arith.muli %882, %c8_i32_869 : i32
      %c4_i32_870 = arith.constant 4 : i32
      %1260 = arith.addi %1259, %c4_i32_870 : i32
      %1261 = arith.index_cast %1258 : i32 to index
      %1262 = arith.index_cast %1260 : i32 to index
      %1263 = memref.load %arg1[%1261, %1262] : memref<8x8xi32, #tpu.memory_space<smem>>
      %c0_i32_871 = arith.constant 0 : i32
      %1264 = tpu.memref_slice %arg3[%1263, %c0_i32_871] : memref<33x128xf32, #tpu.memory_space<any>> -> memref<1x128xf32, #tpu.memory_space<any>>
      %c34_i32_872 = arith.constant 34 : i32
      %c0_i32_873 = arith.constant 0 : i32
      %1265 = tpu.memref_slice %arg5[%883, %c34_i32_872, %c0_i32_873] : memref<2x64x128xf32, #tpu.memory_space<vmem>> -> memref<1x1x128xf32, #tpu.memory_space<vmem>>
      %1266 = tpu.memref_squeeze %1265 : memref<1x1x128xf32, #tpu.memory_space<vmem>> -> memref<1x128xf32, #tpu.memory_space<vmem>>
      %1267 = tpu.memref_slice %arg7[%883] : memref<2x!tpu.dma_semaphore, #tpu.memory_space<semaphore_mem>> -> memref<1x!tpu.dma_semaphore, #tpu.memory_space<semaphore_mem>>
      %1268 = tpu.memref_squeeze %1267 : memref<1x!tpu.dma_semaphore, #tpu.memory_space<semaphore_mem>> -> memref<!tpu.dma_semaphore, #tpu.memory_space<semaphore_mem>>
      tpu.enqueue_dma source(%1264 : memref<1x128xf32, #tpu.memory_space<any>>) target(%1266 : memref<1x128xf32, #tpu.memory_space<vmem>>) target_semaphore(%1268 : memref<!tpu.dma_semaphore, #tpu.memory_space<semaphore_mem>>)
      %c3_i32_874 = arith.constant 3 : i32
      %1269 = arith.addi %0, %c3_i32_874 : i32
      %c8_i32_875 = arith.constant 8 : i32
      %1270 = arith.muli %882, %c8_i32_875 : i32
      %c4_i32_876 = arith.constant 4 : i32
      %1271 = arith.addi %1270, %c4_i32_876 : i32
      %1272 = arith.index_cast %1269 : i32 to index
      %1273 = arith.index_cast %1271 : i32 to index
      %1274 = memref.load %arg1[%1272, %1273] : memref<8x8xi32, #tpu.memory_space<smem>>
      %c0_i32_877 = arith.constant 0 : i32
      %1275 = tpu.memref_slice %arg3[%1274, %c0_i32_877] : memref<33x128xf32, #tpu.memory_space<any>> -> memref<1x128xf32, #tpu.memory_space<any>>
      %c35_i32_878 = arith.constant 35 : i32
      %c0_i32_879 = arith.constant 0 : i32
      %1276 = tpu.memref_slice %arg5[%883, %c35_i32_878, %c0_i32_879] : memref<2x64x128xf32, #tpu.memory_space<vmem>> -> memref<1x1x128xf32, #tpu.memory_space<vmem>>
      %1277 = tpu.memref_squeeze %1276 : memref<1x1x128xf32, #tpu.memory_space<vmem>> -> memref<1x128xf32, #tpu.memory_space<vmem>>
      %1278 = tpu.memref_slice %arg7[%883] : memref<2x!tpu.dma_semaphore, #tpu.memory_space<semaphore_mem>> -> memref<1x!tpu.dma_semaphore, #tpu.memory_space<semaphore_mem>>
      %1279 = tpu.memref_squeeze %1278 : memref<1x!tpu.dma_semaphore, #tpu.memory_space<semaphore_mem>> -> memref<!tpu.dma_semaphore, #tpu.memory_space<semaphore_mem>>
      tpu.enqueue_dma source(%1275 : memref<1x128xf32, #tpu.memory_space<any>>) target(%1277 : memref<1x128xf32, #tpu.memory_space<vmem>>) target_semaphore(%1279 : memref<!tpu.dma_semaphore, #tpu.memory_space<semaphore_mem>>)
      %c4_i32_880 = arith.constant 4 : i32
      %1280 = arith.addi %0, %c4_i32_880 : i32
      %c8_i32_881 = arith.constant 8 : i32
      %1281 = arith.muli %882, %c8_i32_881 : i32
      %c4_i32_882 = arith.constant 4 : i32
      %1282 = arith.addi %1281, %c4_i32_882 : i32
      %1283 = arith.index_cast %1280 : i32 to index
      %1284 = arith.index_cast %1282 : i32 to index
      %1285 = memref.load %arg1[%1283, %1284] : memref<8x8xi32, #tpu.memory_space<smem>>
      %c0_i32_883 = arith.constant 0 : i32
      %1286 = tpu.memref_slice %arg3[%1285, %c0_i32_883] : memref<33x128xf32, #tpu.memory_space<any>> -> memref<1x128xf32, #tpu.memory_space<any>>
      %c36_i32_884 = arith.constant 36 : i32
      %c0_i32_885 = arith.constant 0 : i32
      %1287 = tpu.memref_slice %arg5[%883, %c36_i32_884, %c0_i32_885] : memref<2x64x128xf32, #tpu.memory_space<vmem>> -> memref<1x1x128xf32, #tpu.memory_space<vmem>>
      %1288 = tpu.memref_squeeze %1287 : memref<1x1x128xf32, #tpu.memory_space<vmem>> -> memref<1x128xf32, #tpu.memory_space<vmem>>
      %1289 = tpu.memref_slice %arg7[%883] : memref<2x!tpu.dma_semaphore, #tpu.memory_space<semaphore_mem>> -> memref<1x!tpu.dma_semaphore, #tpu.memory_space<semaphore_mem>>
      %1290 = tpu.memref_squeeze %1289 : memref<1x!tpu.dma_semaphore, #tpu.memory_space<semaphore_mem>> -> memref<!tpu.dma_semaphore, #tpu.memory_space<semaphore_mem>>
      tpu.enqueue_dma source(%1286 : memref<1x128xf32, #tpu.memory_space<any>>) target(%1288 : memref<1x128xf32, #tpu.memory_space<vmem>>) target_semaphore(%1290 : memref<!tpu.dma_semaphore, #tpu.memory_space<semaphore_mem>>)
      %c5_i32_886 = arith.constant 5 : i32
      %1291 = arith.addi %0, %c5_i32_886 : i32
      %c8_i32_887 = arith.constant 8 : i32
      %1292 = arith.muli %882, %c8_i32_887 : i32
      %c4_i32_888 = arith.constant 4 : i32
      %1293 = arith.addi %1292, %c4_i32_888 : i32
      %1294 = arith.index_cast %1291 : i32 to index
      %1295 = arith.index_cast %1293 : i32 to index
      %1296 = memref.load %arg1[%1294, %1295] : memref<8x8xi32, #tpu.memory_space<smem>>
      %c0_i32_889 = arith.constant 0 : i32
      %1297 = tpu.memref_slice %arg3[%1296, %c0_i32_889] : memref<33x128xf32, #tpu.memory_space<any>> -> memref<1x128xf32, #tpu.memory_space<any>>
      %c37_i32_890 = arith.constant 37 : i32
      %c0_i32_891 = arith.constant 0 : i32
      %1298 = tpu.memref_slice %arg5[%883, %c37_i32_890, %c0_i32_891] : memref<2x64x128xf32, #tpu.memory_space<vmem>> -> memref<1x1x128xf32, #tpu.memory_space<vmem>>
      %1299 = tpu.memref_squeeze %1298 : memref<1x1x128xf32, #tpu.memory_space<vmem>> -> memref<1x128xf32, #tpu.memory_space<vmem>>
      %1300 = tpu.memref_slice %arg7[%883] : memref<2x!tpu.dma_semaphore, #tpu.memory_space<semaphore_mem>> -> memref<1x!tpu.dma_semaphore, #tpu.memory_space<semaphore_mem>>
      %1301 = tpu.memref_squeeze %1300 : memref<1x!tpu.dma_semaphore, #tpu.memory_space<semaphore_mem>> -> memref<!tpu.dma_semaphore, #tpu.memory_space<semaphore_mem>>
      tpu.enqueue_dma source(%1297 : memref<1x128xf32, #tpu.memory_space<any>>) target(%1299 : memref<1x128xf32, #tpu.memory_space<vmem>>) target_semaphore(%1301 : memref<!tpu.dma_semaphore, #tpu.memory_space<semaphore_mem>>)
      %c6_i32_892 = arith.constant 6 : i32
      %1302 = arith.addi %0, %c6_i32_892 : i32
      %c8_i32_893 = arith.constant 8 : i32
      %1303 = arith.muli %882, %c8_i32_893 : i32
      %c4_i32_894 = arith.constant 4 : i32
      %1304 = arith.addi %1303, %c4_i32_894 : i32
      %1305 = arith.index_cast %1302 : i32 to index
      %1306 = arith.index_cast %1304 : i32 to index
      %1307 = memref.load %arg1[%1305, %1306] : memref<8x8xi32, #tpu.memory_space<smem>>
      %c0_i32_895 = arith.constant 0 : i32
      %1308 = tpu.memref_slice %arg3[%1307, %c0_i32_895] : memref<33x128xf32, #tpu.memory_space<any>> -> memref<1x128xf32, #tpu.memory_space<any>>
      %c38_i32_896 = arith.constant 38 : i32
      %c0_i32_897 = arith.constant 0 : i32
      %1309 = tpu.memref_slice %arg5[%883, %c38_i32_896, %c0_i32_897] : memref<2x64x128xf32, #tpu.memory_space<vmem>> -> memref<1x1x128xf32, #tpu.memory_space<vmem>>
      %1310 = tpu.memref_squeeze %1309 : memref<1x1x128xf32, #tpu.memory_space<vmem>> -> memref<1x128xf32, #tpu.memory_space<vmem>>
      %1311 = tpu.memref_slice %arg7[%883] : memref<2x!tpu.dma_semaphore, #tpu.memory_space<semaphore_mem>> -> memref<1x!tpu.dma_semaphore, #tpu.memory_space<semaphore_mem>>
      %1312 = tpu.memref_squeeze %1311 : memref<1x!tpu.dma_semaphore, #tpu.memory_space<semaphore_mem>> -> memref<!tpu.dma_semaphore, #tpu.memory_space<semaphore_mem>>
      tpu.enqueue_dma source(%1308 : memref<1x128xf32, #tpu.memory_space<any>>) target(%1310 : memref<1x128xf32, #tpu.memory_space<vmem>>) target_semaphore(%1312 : memref<!tpu.dma_semaphore, #tpu.memory_space<semaphore_mem>>)
      %c7_i32_898 = arith.constant 7 : i32
      %1313 = arith.addi %0, %c7_i32_898 : i32
      %c8_i32_899 = arith.constant 8 : i32
      %1314 = arith.muli %882, %c8_i32_899 : i32
      %c4_i32_900 = arith.constant 4 : i32
      %1315 = arith.addi %1314, %c4_i32_900 : i32
      %1316 = arith.index_cast %1313 : i32 to index
      %1317 = arith.index_cast %1315 : i32 to index
      %1318 = memref.load %arg1[%1316, %1317] : memref<8x8xi32, #tpu.memory_space<smem>>
      %c0_i32_901 = arith.constant 0 : i32
      %1319 = tpu.memref_slice %arg3[%1318, %c0_i32_901] : memref<33x128xf32, #tpu.memory_space<any>> -> memref<1x128xf32, #tpu.memory_space<any>>
      %c39_i32_902 = arith.constant 39 : i32
      %c0_i32_903 = arith.constant 0 : i32
      %1320 = tpu.memref_slice %arg5[%883, %c39_i32_902, %c0_i32_903] : memref<2x64x128xf32, #tpu.memory_space<vmem>> -> memref<1x1x128xf32, #tpu.memory_space<vmem>>
      %1321 = tpu.memref_squeeze %1320 : memref<1x1x128xf32, #tpu.memory_space<vmem>> -> memref<1x128xf32, #tpu.memory_space<vmem>>
      %1322 = tpu.memref_slice %arg7[%883] : memref<2x!tpu.dma_semaphore, #tpu.memory_space<semaphore_mem>> -> memref<1x!tpu.dma_semaphore, #tpu.memory_space<semaphore_mem>>
      %1323 = tpu.memref_squeeze %1322 : memref<1x!tpu.dma_semaphore, #tpu.memory_space<semaphore_mem>> -> memref<!tpu.dma_semaphore, #tpu.memory_space<semaphore_mem>>
      tpu.enqueue_dma source(%1319 : memref<1x128xf32, #tpu.memory_space<any>>) target(%1321 : memref<1x128xf32, #tpu.memory_space<vmem>>) target_semaphore(%1323 : memref<!tpu.dma_semaphore, #tpu.memory_space<semaphore_mem>>)
      %c0_i32_904 = arith.constant 0 : i32
      %1324 = arith.addi %0, %c0_i32_904 : i32
      %c8_i32_905 = arith.constant 8 : i32
      %1325 = arith.muli %882, %c8_i32_905 : i32
      %c5_i32_906 = arith.constant 5 : i32
      %1326 = arith.addi %1325, %c5_i32_906 : i32
      %1327 = arith.index_cast %1324 : i32 to index
      %1328 = arith.index_cast %1326 : i32 to index
      %1329 = memref.load %arg1[%1327, %1328] : memref<8x8xi32, #tpu.memory_space<smem>>
      %c0_i32_907 = arith.constant 0 : i32
      %1330 = tpu.memref_slice %arg3[%1329, %c0_i32_907] : memref<33x128xf32, #tpu.memory_space<any>> -> memref<1x128xf32, #tpu.memory_space<any>>
      %c40_i32_908 = arith.constant 40 : i32
      %c0_i32_909 = arith.constant 0 : i32
      %1331 = tpu.memref_slice %arg5[%883, %c40_i32_908, %c0_i32_909] : memref<2x64x128xf32, #tpu.memory_space<vmem>> -> memref<1x1x128xf32, #tpu.memory_space<vmem>>
      %1332 = tpu.memref_squeeze %1331 : memref<1x1x128xf32, #tpu.memory_space<vmem>> -> memref<1x128xf32, #tpu.memory_space<vmem>>
      %1333 = tpu.memref_slice %arg7[%883] : memref<2x!tpu.dma_semaphore, #tpu.memory_space<semaphore_mem>> -> memref<1x!tpu.dma_semaphore, #tpu.memory_space<semaphore_mem>>
      %1334 = tpu.memref_squeeze %1333 : memref<1x!tpu.dma_semaphore, #tpu.memory_space<semaphore_mem>> -> memref<!tpu.dma_semaphore, #tpu.memory_space<semaphore_mem>>
      tpu.enqueue_dma source(%1330 : memref<1x128xf32, #tpu.memory_space<any>>) target(%1332 : memref<1x128xf32, #tpu.memory_space<vmem>>) target_semaphore(%1334 : memref<!tpu.dma_semaphore, #tpu.memory_space<semaphore_mem>>)
      %c1_i32_910 = arith.constant 1 : i32
      %1335 = arith.addi %0, %c1_i32_910 : i32
      %c8_i32_911 = arith.constant 8 : i32
      %1336 = arith.muli %882, %c8_i32_911 : i32
      %c5_i32_912 = arith.constant 5 : i32
      %1337 = arith.addi %1336, %c5_i32_912 : i32
      %1338 = arith.index_cast %1335 : i32 to index
      %1339 = arith.index_cast %1337 : i32 to index
      %1340 = memref.load %arg1[%1338, %1339] : memref<8x8xi32, #tpu.memory_space<smem>>
      %c0_i32_913 = arith.constant 0 : i32
      %1341 = tpu.memref_slice %arg3[%1340, %c0_i32_913] : memref<33x128xf32, #tpu.memory_space<any>> -> memref<1x128xf32, #tpu.memory_space<any>>
      %c41_i32_914 = arith.constant 41 : i32
      %c0_i32_915 = arith.constant 0 : i32
      %1342 = tpu.memref_slice %arg5[%883, %c41_i32_914, %c0_i32_915] : memref<2x64x128xf32, #tpu.memory_space<vmem>> -> memref<1x1x128xf32, #tpu.memory_space<vmem>>
      %1343 = tpu.memref_squeeze %1342 : memref<1x1x128xf32, #tpu.memory_space<vmem>> -> memref<1x128xf32, #tpu.memory_space<vmem>>
      %1344 = tpu.memref_slice %arg7[%883] : memref<2x!tpu.dma_semaphore, #tpu.memory_space<semaphore_mem>> -> memref<1x!tpu.dma_semaphore, #tpu.memory_space<semaphore_mem>>
      %1345 = tpu.memref_squeeze %1344 : memref<1x!tpu.dma_semaphore, #tpu.memory_space<semaphore_mem>> -> memref<!tpu.dma_semaphore, #tpu.memory_space<semaphore_mem>>
      tpu.enqueue_dma source(%1341 : memref<1x128xf32, #tpu.memory_space<any>>) target(%1343 : memref<1x128xf32, #tpu.memory_space<vmem>>) target_semaphore(%1345 : memref<!tpu.dma_semaphore, #tpu.memory_space<semaphore_mem>>)
      %c2_i32_916 = arith.constant 2 : i32
      %1346 = arith.addi %0, %c2_i32_916 : i32
      %c8_i32_917 = arith.constant 8 : i32
      %1347 = arith.muli %882, %c8_i32_917 : i32
      %c5_i32_918 = arith.constant 5 : i32
      %1348 = arith.addi %1347, %c5_i32_918 : i32
      %1349 = arith.index_cast %1346 : i32 to index
      %1350 = arith.index_cast %1348 : i32 to index
      %1351 = memref.load %arg1[%1349, %1350] : memref<8x8xi32, #tpu.memory_space<smem>>
      %c0_i32_919 = arith.constant 0 : i32
      %1352 = tpu.memref_slice %arg3[%1351, %c0_i32_919] : memref<33x128xf32, #tpu.memory_space<any>> -> memref<1x128xf32, #tpu.memory_space<any>>
      %c42_i32_920 = arith.constant 42 : i32
      %c0_i32_921 = arith.constant 0 : i32
      %1353 = tpu.memref_slice %arg5[%883, %c42_i32_920, %c0_i32_921] : memref<2x64x128xf32, #tpu.memory_space<vmem>> -> memref<1x1x128xf32, #tpu.memory_space<vmem>>
      %1354 = tpu.memref_squeeze %1353 : memref<1x1x128xf32, #tpu.memory_space<vmem>> -> memref<1x128xf32, #tpu.memory_space<vmem>>
      %1355 = tpu.memref_slice %arg7[%883] : memref<2x!tpu.dma_semaphore, #tpu.memory_space<semaphore_mem>> -> memref<1x!tpu.dma_semaphore, #tpu.memory_space<semaphore_mem>>
      %1356 = tpu.memref_squeeze %1355 : memref<1x!tpu.dma_semaphore, #tpu.memory_space<semaphore_mem>> -> memref<!tpu.dma_semaphore, #tpu.memory_space<semaphore_mem>>
      tpu.enqueue_dma source(%1352 : memref<1x128xf32, #tpu.memory_space<any>>) target(%1354 : memref<1x128xf32, #tpu.memory_space<vmem>>) target_semaphore(%1356 : memref<!tpu.dma_semaphore, #tpu.memory_space<semaphore_mem>>)
      %c3_i32_922 = arith.constant 3 : i32
      %1357 = arith.addi %0, %c3_i32_922 : i32
      %c8_i32_923 = arith.constant 8 : i32
      %1358 = arith.muli %882, %c8_i32_923 : i32
      %c5_i32_924 = arith.constant 5 : i32
      %1359 = arith.addi %1358, %c5_i32_924 : i32
      %1360 = arith.index_cast %1357 : i32 to index
      %1361 = arith.index_cast %1359 : i32 to index
      %1362 = memref.load %arg1[%1360, %1361] : memref<8x8xi32, #tpu.memory_space<smem>>
      %c0_i32_925 = arith.constant 0 : i32
      %1363 = tpu.memref_slice %arg3[%1362, %c0_i32_925] : memref<33x128xf32, #tpu.memory_space<any>> -> memref<1x128xf32, #tpu.memory_space<any>>
      %c43_i32_926 = arith.constant 43 : i32
      %c0_i32_927 = arith.constant 0 : i32
      %1364 = tpu.memref_slice %arg5[%883, %c43_i32_926, %c0_i32_927] : memref<2x64x128xf32, #tpu.memory_space<vmem>> -> memref<1x1x128xf32, #tpu.memory_space<vmem>>
      %1365 = tpu.memref_squeeze %1364 : memref<1x1x128xf32, #tpu.memory_space<vmem>> -> memref<1x128xf32, #tpu.memory_space<vmem>>
      %1366 = tpu.memref_slice %arg7[%883] : memref<2x!tpu.dma_semaphore, #tpu.memory_space<semaphore_mem>> -> memref<1x!tpu.dma_semaphore, #tpu.memory_space<semaphore_mem>>
      %1367 = tpu.memref_squeeze %1366 : memref<1x!tpu.dma_semaphore, #tpu.memory_space<semaphore_mem>> -> memref<!tpu.dma_semaphore, #tpu.memory_space<semaphore_mem>>
      tpu.enqueue_dma source(%1363 : memref<1x128xf32, #tpu.memory_space<any>>) target(%1365 : memref<1x128xf32, #tpu.memory_space<vmem>>) target_semaphore(%1367 : memref<!tpu.dma_semaphore, #tpu.memory_space<semaphore_mem>>)
      %c4_i32_928 = arith.constant 4 : i32
      %1368 = arith.addi %0, %c4_i32_928 : i32
      %c8_i32_929 = arith.constant 8 : i32
      %1369 = arith.muli %882, %c8_i32_929 : i32
      %c5_i32_930 = arith.constant 5 : i32
      %1370 = arith.addi %1369, %c5_i32_930 : i32
      %1371 = arith.index_cast %1368 : i32 to index
      %1372 = arith.index_cast %1370 : i32 to index
      %1373 = memref.load %arg1[%1371, %1372] : memref<8x8xi32, #tpu.memory_space<smem>>
      %c0_i32_931 = arith.constant 0 : i32
      %1374 = tpu.memref_slice %arg3[%1373, %c0_i32_931] : memref<33x128xf32, #tpu.memory_space<any>> -> memref<1x128xf32, #tpu.memory_space<any>>
      %c44_i32_932 = arith.constant 44 : i32
      %c0_i32_933 = arith.constant 0 : i32
      %1375 = tpu.memref_slice %arg5[%883, %c44_i32_932, %c0_i32_933] : memref<2x64x128xf32, #tpu.memory_space<vmem>> -> memref<1x1x128xf32, #tpu.memory_space<vmem>>
      %1376 = tpu.memref_squeeze %1375 : memref<1x1x128xf32, #tpu.memory_space<vmem>> -> memref<1x128xf32, #tpu.memory_space<vmem>>
      %1377 = tpu.memref_slice %arg7[%883] : memref<2x!tpu.dma_semaphore, #tpu.memory_space<semaphore_mem>> -> memref<1x!tpu.dma_semaphore, #tpu.memory_space<semaphore_mem>>
      %1378 = tpu.memref_squeeze %1377 : memref<1x!tpu.dma_semaphore, #tpu.memory_space<semaphore_mem>> -> memref<!tpu.dma_semaphore, #tpu.memory_space<semaphore_mem>>
      tpu.enqueue_dma source(%1374 : memref<1x128xf32, #tpu.memory_space<any>>) target(%1376 : memref<1x128xf32, #tpu.memory_space<vmem>>) target_semaphore(%1378 : memref<!tpu.dma_semaphore, #tpu.memory_space<semaphore_mem>>)
      %c5_i32_934 = arith.constant 5 : i32
      %1379 = arith.addi %0, %c5_i32_934 : i32
      %c8_i32_935 = arith.constant 8 : i32
      %1380 = arith.muli %882, %c8_i32_935 : i32
      %c5_i32_936 = arith.constant 5 : i32
      %1381 = arith.addi %1380, %c5_i32_936 : i32
      %1382 = arith.index_cast %1379 : i32 to index
      %1383 = arith.index_cast %1381 : i32 to index
      %1384 = memref.load %arg1[%1382, %1383] : memref<8x8xi32, #tpu.memory_space<smem>>
      %c0_i32_937 = arith.constant 0 : i32
      %1385 = tpu.memref_slice %arg3[%1384, %c0_i32_937] : memref<33x128xf32, #tpu.memory_space<any>> -> memref<1x128xf32, #tpu.memory_space<any>>
      %c45_i32_938 = arith.constant 45 : i32
      %c0_i32_939 = arith.constant 0 : i32
      %1386 = tpu.memref_slice %arg5[%883, %c45_i32_938, %c0_i32_939] : memref<2x64x128xf32, #tpu.memory_space<vmem>> -> memref<1x1x128xf32, #tpu.memory_space<vmem>>
      %1387 = tpu.memref_squeeze %1386 : memref<1x1x128xf32, #tpu.memory_space<vmem>> -> memref<1x128xf32, #tpu.memory_space<vmem>>
      %1388 = tpu.memref_slice %arg7[%883] : memref<2x!tpu.dma_semaphore, #tpu.memory_space<semaphore_mem>> -> memref<1x!tpu.dma_semaphore, #tpu.memory_space<semaphore_mem>>
      %1389 = tpu.memref_squeeze %1388 : memref<1x!tpu.dma_semaphore, #tpu.memory_space<semaphore_mem>> -> memref<!tpu.dma_semaphore, #tpu.memory_space<semaphore_mem>>
      tpu.enqueue_dma source(%1385 : memref<1x128xf32, #tpu.memory_space<any>>) target(%1387 : memref<1x128xf32, #tpu.memory_space<vmem>>) target_semaphore(%1389 : memref<!tpu.dma_semaphore, #tpu.memory_space<semaphore_mem>>)
      %c6_i32_940 = arith.constant 6 : i32
      %1390 = arith.addi %0, %c6_i32_940 : i32
      %c8_i32_941 = arith.constant 8 : i32
      %1391 = arith.muli %882, %c8_i32_941 : i32
      %c5_i32_942 = arith.constant 5 : i32
      %1392 = arith.addi %1391, %c5_i32_942 : i32
      %1393 = arith.index_cast %1390 : i32 to index
      %1394 = arith.index_cast %1392 : i32 to index
      %1395 = memref.load %arg1[%1393, %1394] : memref<8x8xi32, #tpu.memory_space<smem>>
      %c0_i32_943 = arith.constant 0 : i32
      %1396 = tpu.memref_slice %arg3[%1395, %c0_i32_943] : memref<33x128xf32, #tpu.memory_space<any>> -> memref<1x128xf32, #tpu.memory_space<any>>
      %c46_i32_944 = arith.constant 46 : i32
      %c0_i32_945 = arith.constant 0 : i32
      %1397 = tpu.memref_slice %arg5[%883, %c46_i32_944, %c0_i32_945] : memref<2x64x128xf32, #tpu.memory_space<vmem>> -> memref<1x1x128xf32, #tpu.memory_space<vmem>>
      %1398 = tpu.memref_squeeze %1397 : memref<1x1x128xf32, #tpu.memory_space<vmem>> -> memref<1x128xf32, #tpu.memory_space<vmem>>
      %1399 = tpu.memref_slice %arg7[%883] : memref<2x!tpu.dma_semaphore, #tpu.memory_space<semaphore_mem>> -> memref<1x!tpu.dma_semaphore, #tpu.memory_space<semaphore_mem>>
      %1400 = tpu.memref_squeeze %1399 : memref<1x!tpu.dma_semaphore, #tpu.memory_space<semaphore_mem>> -> memref<!tpu.dma_semaphore, #tpu.memory_space<semaphore_mem>>
      tpu.enqueue_dma source(%1396 : memref<1x128xf32, #tpu.memory_space<any>>) target(%1398 : memref<1x128xf32, #tpu.memory_space<vmem>>) target_semaphore(%1400 : memref<!tpu.dma_semaphore, #tpu.memory_space<semaphore_mem>>)
      %c7_i32_946 = arith.constant 7 : i32
      %1401 = arith.addi %0, %c7_i32_946 : i32
      %c8_i32_947 = arith.constant 8 : i32
      %1402 = arith.muli %882, %c8_i32_947 : i32
      %c5_i32_948 = arith.constant 5 : i32
      %1403 = arith.addi %1402, %c5_i32_948 : i32
      %1404 = arith.index_cast %1401 : i32 to index
      %1405 = arith.index_cast %1403 : i32 to index
      %1406 = memref.load %arg1[%1404, %1405] : memref<8x8xi32, #tpu.memory_space<smem>>
      %c0_i32_949 = arith.constant 0 : i32
      %1407 = tpu.memref_slice %arg3[%1406, %c0_i32_949] : memref<33x128xf32, #tpu.memory_space<any>> -> memref<1x128xf32, #tpu.memory_space<any>>
      %c47_i32_950 = arith.constant 47 : i32
      %c0_i32_951 = arith.constant 0 : i32
      %1408 = tpu.memref_slice %arg5[%883, %c47_i32_950, %c0_i32_951] : memref<2x64x128xf32, #tpu.memory_space<vmem>> -> memref<1x1x128xf32, #tpu.memory_space<vmem>>
      %1409 = tpu.memref_squeeze %1408 : memref<1x1x128xf32, #tpu.memory_space<vmem>> -> memref<1x128xf32, #tpu.memory_space<vmem>>
      %1410 = tpu.memref_slice %arg7[%883] : memref<2x!tpu.dma_semaphore, #tpu.memory_space<semaphore_mem>> -> memref<1x!tpu.dma_semaphore, #tpu.memory_space<semaphore_mem>>
      %1411 = tpu.memref_squeeze %1410 : memref<1x!tpu.dma_semaphore, #tpu.memory_space<semaphore_mem>> -> memref<!tpu.dma_semaphore, #tpu.memory_space<semaphore_mem>>
      tpu.enqueue_dma source(%1407 : memref<1x128xf32, #tpu.memory_space<any>>) target(%1409 : memref<1x128xf32, #tpu.memory_space<vmem>>) target_semaphore(%1411 : memref<!tpu.dma_semaphore, #tpu.memory_space<semaphore_mem>>)
      %c0_i32_952 = arith.constant 0 : i32
      %1412 = arith.addi %0, %c0_i32_952 : i32
      %c8_i32_953 = arith.constant 8 : i32
      %1413 = arith.muli %882, %c8_i32_953 : i32
      %c6_i32_954 = arith.constant 6 : i32
      %1414 = arith.addi %1413, %c6_i32_954 : i32
      %1415 = arith.index_cast %1412 : i32 to index
      %1416 = arith.index_cast %1414 : i32 to index
      %1417 = memref.load %arg1[%1415, %1416] : memref<8x8xi32, #tpu.memory_space<smem>>
      %c0_i32_955 = arith.constant 0 : i32
      %1418 = tpu.memref_slice %arg3[%1417, %c0_i32_955] : memref<33x128xf32, #tpu.memory_space<any>> -> memref<1x128xf32, #tpu.memory_space<any>>
      %c48_i32_956 = arith.constant 48 : i32
      %c0_i32_957 = arith.constant 0 : i32
      %1419 = tpu.memref_slice %arg5[%883, %c48_i32_956, %c0_i32_957] : memref<2x64x128xf32, #tpu.memory_space<vmem>> -> memref<1x1x128xf32, #tpu.memory_space<vmem>>
      %1420 = tpu.memref_squeeze %1419 : memref<1x1x128xf32, #tpu.memory_space<vmem>> -> memref<1x128xf32, #tpu.memory_space<vmem>>
      %1421 = tpu.memref_slice %arg7[%883] : memref<2x!tpu.dma_semaphore, #tpu.memory_space<semaphore_mem>> -> memref<1x!tpu.dma_semaphore, #tpu.memory_space<semaphore_mem>>
      %1422 = tpu.memref_squeeze %1421 : memref<1x!tpu.dma_semaphore, #tpu.memory_space<semaphore_mem>> -> memref<!tpu.dma_semaphore, #tpu.memory_space<semaphore_mem>>
      tpu.enqueue_dma source(%1418 : memref<1x128xf32, #tpu.memory_space<any>>) target(%1420 : memref<1x128xf32, #tpu.memory_space<vmem>>) target_semaphore(%1422 : memref<!tpu.dma_semaphore, #tpu.memory_space<semaphore_mem>>)
      %c1_i32_958 = arith.constant 1 : i32
      %1423 = arith.addi %0, %c1_i32_958 : i32
      %c8_i32_959 = arith.constant 8 : i32
      %1424 = arith.muli %882, %c8_i32_959 : i32
      %c6_i32_960 = arith.constant 6 : i32
      %1425 = arith.addi %1424, %c6_i32_960 : i32
      %1426 = arith.index_cast %1423 : i32 to index
      %1427 = arith.index_cast %1425 : i32 to index
      %1428 = memref.load %arg1[%1426, %1427] : memref<8x8xi32, #tpu.memory_space<smem>>
      %c0_i32_961 = arith.constant 0 : i32
      %1429 = tpu.memref_slice %arg3[%1428, %c0_i32_961] : memref<33x128xf32, #tpu.memory_space<any>> -> memref<1x128xf32, #tpu.memory_space<any>>
      %c49_i32_962 = arith.constant 49 : i32
      %c0_i32_963 = arith.constant 0 : i32
      %1430 = tpu.memref_slice %arg5[%883, %c49_i32_962, %c0_i32_963] : memref<2x64x128xf32, #tpu.memory_space<vmem>> -> memref<1x1x128xf32, #tpu.memory_space<vmem>>
      %1431 = tpu.memref_squeeze %1430 : memref<1x1x128xf32, #tpu.memory_space<vmem>> -> memref<1x128xf32, #tpu.memory_space<vmem>>
      %1432 = tpu.memref_slice %arg7[%883] : memref<2x!tpu.dma_semaphore, #tpu.memory_space<semaphore_mem>> -> memref<1x!tpu.dma_semaphore, #tpu.memory_space<semaphore_mem>>
      %1433 = tpu.memref_squeeze %1432 : memref<1x!tpu.dma_semaphore, #tpu.memory_space<semaphore_mem>> -> memref<!tpu.dma_semaphore, #tpu.memory_space<semaphore_mem>>
      tpu.enqueue_dma source(%1429 : memref<1x128xf32, #tpu.memory_space<any>>) target(%1431 : memref<1x128xf32, #tpu.memory_space<vmem>>) target_semaphore(%1433 : memref<!tpu.dma_semaphore, #tpu.memory_space<semaphore_mem>>)
      %c2_i32_964 = arith.constant 2 : i32
      %1434 = arith.addi %0, %c2_i32_964 : i32
      %c8_i32_965 = arith.constant 8 : i32
      %1435 = arith.muli %882, %c8_i32_965 : i32
      %c6_i32_966 = arith.constant 6 : i32
      %1436 = arith.addi %1435, %c6_i32_966 : i32
      %1437 = arith.index_cast %1434 : i32 to index
      %1438 = arith.index_cast %1436 : i32 to index
      %1439 = memref.load %arg1[%1437, %1438] : memref<8x8xi32, #tpu.memory_space<smem>>
      %c0_i32_967 = arith.constant 0 : i32
      %1440 = tpu.memref_slice %arg3[%1439, %c0_i32_967] : memref<33x128xf32, #tpu.memory_space<any>> -> memref<1x128xf32, #tpu.memory_space<any>>
      %c50_i32_968 = arith.constant 50 : i32
      %c0_i32_969 = arith.constant 0 : i32
      %1441 = tpu.memref_slice %arg5[%883, %c50_i32_968, %c0_i32_969] : memref<2x64x128xf32, #tpu.memory_space<vmem>> -> memref<1x1x128xf32, #tpu.memory_space<vmem>>
      %1442 = tpu.memref_squeeze %1441 : memref<1x1x128xf32, #tpu.memory_space<vmem>> -> memref<1x128xf32, #tpu.memory_space<vmem>>
      %1443 = tpu.memref_slice %arg7[%883] : memref<2x!tpu.dma_semaphore, #tpu.memory_space<semaphore_mem>> -> memref<1x!tpu.dma_semaphore, #tpu.memory_space<semaphore_mem>>
      %1444 = tpu.memref_squeeze %1443 : memref<1x!tpu.dma_semaphore, #tpu.memory_space<semaphore_mem>> -> memref<!tpu.dma_semaphore, #tpu.memory_space<semaphore_mem>>
      tpu.enqueue_dma source(%1440 : memref<1x128xf32, #tpu.memory_space<any>>) target(%1442 : memref<1x128xf32, #tpu.memory_space<vmem>>) target_semaphore(%1444 : memref<!tpu.dma_semaphore, #tpu.memory_space<semaphore_mem>>)
      %c3_i32_970 = arith.constant 3 : i32
      %1445 = arith.addi %0, %c3_i32_970 : i32
      %c8_i32_971 = arith.constant 8 : i32
      %1446 = arith.muli %882, %c8_i32_971 : i32
      %c6_i32_972 = arith.constant 6 : i32
      %1447 = arith.addi %1446, %c6_i32_972 : i32
      %1448 = arith.index_cast %1445 : i32 to index
      %1449 = arith.index_cast %1447 : i32 to index
      %1450 = memref.load %arg1[%1448, %1449] : memref<8x8xi32, #tpu.memory_space<smem>>
      %c0_i32_973 = arith.constant 0 : i32
      %1451 = tpu.memref_slice %arg3[%1450, %c0_i32_973] : memref<33x128xf32, #tpu.memory_space<any>> -> memref<1x128xf32, #tpu.memory_space<any>>
      %c51_i32_974 = arith.constant 51 : i32
      %c0_i32_975 = arith.constant 0 : i32
      %1452 = tpu.memref_slice %arg5[%883, %c51_i32_974, %c0_i32_975] : memref<2x64x128xf32, #tpu.memory_space<vmem>> -> memref<1x1x128xf32, #tpu.memory_space<vmem>>
      %1453 = tpu.memref_squeeze %1452 : memref<1x1x128xf32, #tpu.memory_space<vmem>> -> memref<1x128xf32, #tpu.memory_space<vmem>>
      %1454 = tpu.memref_slice %arg7[%883] : memref<2x!tpu.dma_semaphore, #tpu.memory_space<semaphore_mem>> -> memref<1x!tpu.dma_semaphore, #tpu.memory_space<semaphore_mem>>
      %1455 = tpu.memref_squeeze %1454 : memref<1x!tpu.dma_semaphore, #tpu.memory_space<semaphore_mem>> -> memref<!tpu.dma_semaphore, #tpu.memory_space<semaphore_mem>>
      tpu.enqueue_dma source(%1451 : memref<1x128xf32, #tpu.memory_space<any>>) target(%1453 : memref<1x128xf32, #tpu.memory_space<vmem>>) target_semaphore(%1455 : memref<!tpu.dma_semaphore, #tpu.memory_space<semaphore_mem>>)
      %c4_i32_976 = arith.constant 4 : i32
      %1456 = arith.addi %0, %c4_i32_976 : i32
      %c8_i32_977 = arith.constant 8 : i32
      %1457 = arith.muli %882, %c8_i32_977 : i32
      %c6_i32_978 = arith.constant 6 : i32
      %1458 = arith.addi %1457, %c6_i32_978 : i32
      %1459 = arith.index_cast %1456 : i32 to index
      %1460 = arith.index_cast %1458 : i32 to index
      %1461 = memref.load %arg1[%1459, %1460] : memref<8x8xi32, #tpu.memory_space<smem>>
      %c0_i32_979 = arith.constant 0 : i32
      %1462 = tpu.memref_slice %arg3[%1461, %c0_i32_979] : memref<33x128xf32, #tpu.memory_space<any>> -> memref<1x128xf32, #tpu.memory_space<any>>
      %c52_i32_980 = arith.constant 52 : i32
      %c0_i32_981 = arith.constant 0 : i32
      %1463 = tpu.memref_slice %arg5[%883, %c52_i32_980, %c0_i32_981] : memref<2x64x128xf32, #tpu.memory_space<vmem>> -> memref<1x1x128xf32, #tpu.memory_space<vmem>>
      %1464 = tpu.memref_squeeze %1463 : memref<1x1x128xf32, #tpu.memory_space<vmem>> -> memref<1x128xf32, #tpu.memory_space<vmem>>
      %1465 = tpu.memref_slice %arg7[%883] : memref<2x!tpu.dma_semaphore, #tpu.memory_space<semaphore_mem>> -> memref<1x!tpu.dma_semaphore, #tpu.memory_space<semaphore_mem>>
      %1466 = tpu.memref_squeeze %1465 : memref<1x!tpu.dma_semaphore, #tpu.memory_space<semaphore_mem>> -> memref<!tpu.dma_semaphore, #tpu.memory_space<semaphore_mem>>
      tpu.enqueue_dma source(%1462 : memref<1x128xf32, #tpu.memory_space<any>>) target(%1464 : memref<1x128xf32, #tpu.memory_space<vmem>>) target_semaphore(%1466 : memref<!tpu.dma_semaphore, #tpu.memory_space<semaphore_mem>>)
      %c5_i32_982 = arith.constant 5 : i32
      %1467 = arith.addi %0, %c5_i32_982 : i32
      %c8_i32_983 = arith.constant 8 : i32
      %1468 = arith.muli %882, %c8_i32_983 : i32
      %c6_i32_984 = arith.constant 6 : i32
      %1469 = arith.addi %1468, %c6_i32_984 : i32
      %1470 = arith.index_cast %1467 : i32 to index
      %1471 = arith.index_cast %1469 : i32 to index
      %1472 = memref.load %arg1[%1470, %1471] : memref<8x8xi32, #tpu.memory_space<smem>>
      %c0_i32_985 = arith.constant 0 : i32
      %1473 = tpu.memref_slice %arg3[%1472, %c0_i32_985] : memref<33x128xf32, #tpu.memory_space<any>> -> memref<1x128xf32, #tpu.memory_space<any>>
      %c53_i32_986 = arith.constant 53 : i32
      %c0_i32_987 = arith.constant 0 : i32
      %1474 = tpu.memref_slice %arg5[%883, %c53_i32_986, %c0_i32_987] : memref<2x64x128xf32, #tpu.memory_space<vmem>> -> memref<1x1x128xf32, #tpu.memory_space<vmem>>
      %1475 = tpu.memref_squeeze %1474 : memref<1x1x128xf32, #tpu.memory_space<vmem>> -> memref<1x128xf32, #tpu.memory_space<vmem>>
      %1476 = tpu.memref_slice %arg7[%883] : memref<2x!tpu.dma_semaphore, #tpu.memory_space<semaphore_mem>> -> memref<1x!tpu.dma_semaphore, #tpu.memory_space<semaphore_mem>>
      %1477 = tpu.memref_squeeze %1476 : memref<1x!tpu.dma_semaphore, #tpu.memory_space<semaphore_mem>> -> memref<!tpu.dma_semaphore, #tpu.memory_space<semaphore_mem>>
      tpu.enqueue_dma source(%1473 : memref<1x128xf32, #tpu.memory_space<any>>) target(%1475 : memref<1x128xf32, #tpu.memory_space<vmem>>) target_semaphore(%1477 : memref<!tpu.dma_semaphore, #tpu.memory_space<semaphore_mem>>)
      %c6_i32_988 = arith.constant 6 : i32
      %1478 = arith.addi %0, %c6_i32_988 : i32
      %c8_i32_989 = arith.constant 8 : i32
      %1479 = arith.muli %882, %c8_i32_989 : i32
      %c6_i32_990 = arith.constant 6 : i32
      %1480 = arith.addi %1479, %c6_i32_990 : i32
      %1481 = arith.index_cast %1478 : i32 to index
      %1482 = arith.index_cast %1480 : i32 to index
      %1483 = memref.load %arg1[%1481, %1482] : memref<8x8xi32, #tpu.memory_space<smem>>
      %c0_i32_991 = arith.constant 0 : i32
      %1484 = tpu.memref_slice %arg3[%1483, %c0_i32_991] : memref<33x128xf32, #tpu.memory_space<any>> -> memref<1x128xf32, #tpu.memory_space<any>>
      %c54_i32_992 = arith.constant 54 : i32
      %c0_i32_993 = arith.constant 0 : i32
      %1485 = tpu.memref_slice %arg5[%883, %c54_i32_992, %c0_i32_993] : memref<2x64x128xf32, #tpu.memory_space<vmem>> -> memref<1x1x128xf32, #tpu.memory_space<vmem>>
      %1486 = tpu.memref_squeeze %1485 : memref<1x1x128xf32, #tpu.memory_space<vmem>> -> memref<1x128xf32, #tpu.memory_space<vmem>>
      %1487 = tpu.memref_slice %arg7[%883] : memref<2x!tpu.dma_semaphore, #tpu.memory_space<semaphore_mem>> -> memref<1x!tpu.dma_semaphore, #tpu.memory_space<semaphore_mem>>
      %1488 = tpu.memref_squeeze %1487 : memref<1x!tpu.dma_semaphore, #tpu.memory_space<semaphore_mem>> -> memref<!tpu.dma_semaphore, #tpu.memory_space<semaphore_mem>>
      tpu.enqueue_dma source(%1484 : memref<1x128xf32, #tpu.memory_space<any>>) target(%1486 : memref<1x128xf32, #tpu.memory_space<vmem>>) target_semaphore(%1488 : memref<!tpu.dma_semaphore, #tpu.memory_space<semaphore_mem>>)
      %c7_i32_994 = arith.constant 7 : i32
      %1489 = arith.addi %0, %c7_i32_994 : i32
      %c8_i32_995 = arith.constant 8 : i32
      %1490 = arith.muli %882, %c8_i32_995 : i32
      %c6_i32_996 = arith.constant 6 : i32
      %1491 = arith.addi %1490, %c6_i32_996 : i32
      %1492 = arith.index_cast %1489 : i32 to index
      %1493 = arith.index_cast %1491 : i32 to index
      %1494 = memref.load %arg1[%1492, %1493] : memref<8x8xi32, #tpu.memory_space<smem>>
      %c0_i32_997 = arith.constant 0 : i32
      %1495 = tpu.memref_slice %arg3[%1494, %c0_i32_997] : memref<33x128xf32, #tpu.memory_space<any>> -> memref<1x128xf32, #tpu.memory_space<any>>
      %c55_i32_998 = arith.constant 55 : i32
      %c0_i32_999 = arith.constant 0 : i32
      %1496 = tpu.memref_slice %arg5[%883, %c55_i32_998, %c0_i32_999] : memref<2x64x128xf32, #tpu.memory_space<vmem>> -> memref<1x1x128xf32, #tpu.memory_space<vmem>>
      %1497 = tpu.memref_squeeze %1496 : memref<1x1x128xf32, #tpu.memory_space<vmem>> -> memref<1x128xf32, #tpu.memory_space<vmem>>
      %1498 = tpu.memref_slice %arg7[%883] : memref<2x!tpu.dma_semaphore, #tpu.memory_space<semaphore_mem>> -> memref<1x!tpu.dma_semaphore, #tpu.memory_space<semaphore_mem>>
      %1499 = tpu.memref_squeeze %1498 : memref<1x!tpu.dma_semaphore, #tpu.memory_space<semaphore_mem>> -> memref<!tpu.dma_semaphore, #tpu.memory_space<semaphore_mem>>
      tpu.enqueue_dma source(%1495 : memref<1x128xf32, #tpu.memory_space<any>>) target(%1497 : memref<1x128xf32, #tpu.memory_space<vmem>>) target_semaphore(%1499 : memref<!tpu.dma_semaphore, #tpu.memory_space<semaphore_mem>>)
      %c0_i32_1000 = arith.constant 0 : i32
      %1500 = arith.addi %0, %c0_i32_1000 : i32
      %c8_i32_1001 = arith.constant 8 : i32
      %1501 = arith.muli %882, %c8_i32_1001 : i32
      %c7_i32_1002 = arith.constant 7 : i32
      %1502 = arith.addi %1501, %c7_i32_1002 : i32
      %1503 = arith.index_cast %1500 : i32 to index
      %1504 = arith.index_cast %1502 : i32 to index
      %1505 = memref.load %arg1[%1503, %1504] : memref<8x8xi32, #tpu.memory_space<smem>>
      %c0_i32_1003 = arith.constant 0 : i32
      %1506 = tpu.memref_slice %arg3[%1505, %c0_i32_1003] : memref<33x128xf32, #tpu.memory_space<any>> -> memref<1x128xf32, #tpu.memory_space<any>>
      %c56_i32_1004 = arith.constant 56 : i32
      %c0_i32_1005 = arith.constant 0 : i32
      %1507 = tpu.memref_slice %arg5[%883, %c56_i32_1004, %c0_i32_1005] : memref<2x64x128xf32, #tpu.memory_space<vmem>> -> memref<1x1x128xf32, #tpu.memory_space<vmem>>
      %1508 = tpu.memref_squeeze %1507 : memref<1x1x128xf32, #tpu.memory_space<vmem>> -> memref<1x128xf32, #tpu.memory_space<vmem>>
      %1509 = tpu.memref_slice %arg7[%883] : memref<2x!tpu.dma_semaphore, #tpu.memory_space<semaphore_mem>> -> memref<1x!tpu.dma_semaphore, #tpu.memory_space<semaphore_mem>>
      %1510 = tpu.memref_squeeze %1509 : memref<1x!tpu.dma_semaphore, #tpu.memory_space<semaphore_mem>> -> memref<!tpu.dma_semaphore, #tpu.memory_space<semaphore_mem>>
      tpu.enqueue_dma source(%1506 : memref<1x128xf32, #tpu.memory_space<any>>) target(%1508 : memref<1x128xf32, #tpu.memory_space<vmem>>) target_semaphore(%1510 : memref<!tpu.dma_semaphore, #tpu.memory_space<semaphore_mem>>)
      %c1_i32_1006 = arith.constant 1 : i32
      %1511 = arith.addi %0, %c1_i32_1006 : i32
      %c8_i32_1007 = arith.constant 8 : i32
      %1512 = arith.muli %882, %c8_i32_1007 : i32
      %c7_i32_1008 = arith.constant 7 : i32
      %1513 = arith.addi %1512, %c7_i32_1008 : i32
      %1514 = arith.index_cast %1511 : i32 to index
      %1515 = arith.index_cast %1513 : i32 to index
      %1516 = memref.load %arg1[%1514, %1515] : memref<8x8xi32, #tpu.memory_space<smem>>
      %c0_i32_1009 = arith.constant 0 : i32
      %1517 = tpu.memref_slice %arg3[%1516, %c0_i32_1009] : memref<33x128xf32, #tpu.memory_space<any>> -> memref<1x128xf32, #tpu.memory_space<any>>
      %c57_i32_1010 = arith.constant 57 : i32
      %c0_i32_1011 = arith.constant 0 : i32
      %1518 = tpu.memref_slice %arg5[%883, %c57_i32_1010, %c0_i32_1011] : memref<2x64x128xf32, #tpu.memory_space<vmem>> -> memref<1x1x128xf32, #tpu.memory_space<vmem>>
      %1519 = tpu.memref_squeeze %1518 : memref<1x1x128xf32, #tpu.memory_space<vmem>> -> memref<1x128xf32, #tpu.memory_space<vmem>>
      %1520 = tpu.memref_slice %arg7[%883] : memref<2x!tpu.dma_semaphore, #tpu.memory_space<semaphore_mem>> -> memref<1x!tpu.dma_semaphore, #tpu.memory_space<semaphore_mem>>
      %1521 = tpu.memref_squeeze %1520 : memref<1x!tpu.dma_semaphore, #tpu.memory_space<semaphore_mem>> -> memref<!tpu.dma_semaphore, #tpu.memory_space<semaphore_mem>>
      tpu.enqueue_dma source(%1517 : memref<1x128xf32, #tpu.memory_space<any>>) target(%1519 : memref<1x128xf32, #tpu.memory_space<vmem>>) target_semaphore(%1521 : memref<!tpu.dma_semaphore, #tpu.memory_space<semaphore_mem>>)
      %c2_i32_1012 = arith.constant 2 : i32
      %1522 = arith.addi %0, %c2_i32_1012 : i32
      %c8_i32_1013 = arith.constant 8 : i32
      %1523 = arith.muli %882, %c8_i32_1013 : i32
      %c7_i32_1014 = arith.constant 7 : i32
      %1524 = arith.addi %1523, %c7_i32_1014 : i32
      %1525 = arith.index_cast %1522 : i32 to index
      %1526 = arith.index_cast %1524 : i32 to index
      %1527 = memref.load %arg1[%1525, %1526] : memref<8x8xi32, #tpu.memory_space<smem>>
      %c0_i32_1015 = arith.constant 0 : i32
      %1528 = tpu.memref_slice %arg3[%1527, %c0_i32_1015] : memref<33x128xf32, #tpu.memory_space<any>> -> memref<1x128xf32, #tpu.memory_space<any>>
      %c58_i32_1016 = arith.constant 58 : i32
      %c0_i32_1017 = arith.constant 0 : i32
      %1529 = tpu.memref_slice %arg5[%883, %c58_i32_1016, %c0_i32_1017] : memref<2x64x128xf32, #tpu.memory_space<vmem>> -> memref<1x1x128xf32, #tpu.memory_space<vmem>>
      %1530 = tpu.memref_squeeze %1529 : memref<1x1x128xf32, #tpu.memory_space<vmem>> -> memref<1x128xf32, #tpu.memory_space<vmem>>
      %1531 = tpu.memref_slice %arg7[%883] : memref<2x!tpu.dma_semaphore, #tpu.memory_space<semaphore_mem>> -> memref<1x!tpu.dma_semaphore, #tpu.memory_space<semaphore_mem>>
      %1532 = tpu.memref_squeeze %1531 : memref<1x!tpu.dma_semaphore, #tpu.memory_space<semaphore_mem>> -> memref<!tpu.dma_semaphore, #tpu.memory_space<semaphore_mem>>
      tpu.enqueue_dma source(%1528 : memref<1x128xf32, #tpu.memory_space<any>>) target(%1530 : memref<1x128xf32, #tpu.memory_space<vmem>>) target_semaphore(%1532 : memref<!tpu.dma_semaphore, #tpu.memory_space<semaphore_mem>>)
      %c3_i32_1018 = arith.constant 3 : i32
      %1533 = arith.addi %0, %c3_i32_1018 : i32
      %c8_i32_1019 = arith.constant 8 : i32
      %1534 = arith.muli %882, %c8_i32_1019 : i32
      %c7_i32_1020 = arith.constant 7 : i32
      %1535 = arith.addi %1534, %c7_i32_1020 : i32
      %1536 = arith.index_cast %1533 : i32 to index
      %1537 = arith.index_cast %1535 : i32 to index
      %1538 = memref.load %arg1[%1536, %1537] : memref<8x8xi32, #tpu.memory_space<smem>>
      %c0_i32_1021 = arith.constant 0 : i32
      %1539 = tpu.memref_slice %arg3[%1538, %c0_i32_1021] : memref<33x128xf32, #tpu.memory_space<any>> -> memref<1x128xf32, #tpu.memory_space<any>>
      %c59_i32_1022 = arith.constant 59 : i32
      %c0_i32_1023 = arith.constant 0 : i32
      %1540 = tpu.memref_slice %arg5[%883, %c59_i32_1022, %c0_i32_1023] : memref<2x64x128xf32, #tpu.memory_space<vmem>> -> memref<1x1x128xf32, #tpu.memory_space<vmem>>
      %1541 = tpu.memref_squeeze %1540 : memref<1x1x128xf32, #tpu.memory_space<vmem>> -> memref<1x128xf32, #tpu.memory_space<vmem>>
      %1542 = tpu.memref_slice %arg7[%883] : memref<2x!tpu.dma_semaphore, #tpu.memory_space<semaphore_mem>> -> memref<1x!tpu.dma_semaphore, #tpu.memory_space<semaphore_mem>>
      %1543 = tpu.memref_squeeze %1542 : memref<1x!tpu.dma_semaphore, #tpu.memory_space<semaphore_mem>> -> memref<!tpu.dma_semaphore, #tpu.memory_space<semaphore_mem>>
      tpu.enqueue_dma source(%1539 : memref<1x128xf32, #tpu.memory_space<any>>) target(%1541 : memref<1x128xf32, #tpu.memory_space<vmem>>) target_semaphore(%1543 : memref<!tpu.dma_semaphore, #tpu.memory_space<semaphore_mem>>)
      %c4_i32_1024 = arith.constant 4 : i32
      %1544 = arith.addi %0, %c4_i32_1024 : i32
      %c8_i32_1025 = arith.constant 8 : i32
      %1545 = arith.muli %882, %c8_i32_1025 : i32
      %c7_i32_1026 = arith.constant 7 : i32
      %1546 = arith.addi %1545, %c7_i32_1026 : i32
      %1547 = arith.index_cast %1544 : i32 to index
      %1548 = arith.index_cast %1546 : i32 to index
      %1549 = memref.load %arg1[%1547, %1548] : memref<8x8xi32, #tpu.memory_space<smem>>
      %c0_i32_1027 = arith.constant 0 : i32
      %1550 = tpu.memref_slice %arg3[%1549, %c0_i32_1027] : memref<33x128xf32, #tpu.memory_space<any>> -> memref<1x128xf32, #tpu.memory_space<any>>
      %c60_i32_1028 = arith.constant 60 : i32
      %c0_i32_1029 = arith.constant 0 : i32
      %1551 = tpu.memref_slice %arg5[%883, %c60_i32_1028, %c0_i32_1029] : memref<2x64x128xf32, #tpu.memory_space<vmem>> -> memref<1x1x128xf32, #tpu.memory_space<vmem>>
      %1552 = tpu.memref_squeeze %1551 : memref<1x1x128xf32, #tpu.memory_space<vmem>> -> memref<1x128xf32, #tpu.memory_space<vmem>>
      %1553 = tpu.memref_slice %arg7[%883] : memref<2x!tpu.dma_semaphore, #tpu.memory_space<semaphore_mem>> -> memref<1x!tpu.dma_semaphore, #tpu.memory_space<semaphore_mem>>
      %1554 = tpu.memref_squeeze %1553 : memref<1x!tpu.dma_semaphore, #tpu.memory_space<semaphore_mem>> -> memref<!tpu.dma_semaphore, #tpu.memory_space<semaphore_mem>>
      tpu.enqueue_dma source(%1550 : memref<1x128xf32, #tpu.memory_space<any>>) target(%1552 : memref<1x128xf32, #tpu.memory_space<vmem>>) target_semaphore(%1554 : memref<!tpu.dma_semaphore, #tpu.memory_space<semaphore_mem>>)
      %c5_i32_1030 = arith.constant 5 : i32
      %1555 = arith.addi %0, %c5_i32_1030 : i32
      %c8_i32_1031 = arith.constant 8 : i32
      %1556 = arith.muli %882, %c8_i32_1031 : i32
      %c7_i32_1032 = arith.constant 7 : i32
      %1557 = arith.addi %1556, %c7_i32_1032 : i32
      %1558 = arith.index_cast %1555 : i32 to index
      %1559 = arith.index_cast %1557 : i32 to index
      %1560 = memref.load %arg1[%1558, %1559] : memref<8x8xi32, #tpu.memory_space<smem>>
      %c0_i32_1033 = arith.constant 0 : i32
      %1561 = tpu.memref_slice %arg3[%1560, %c0_i32_1033] : memref<33x128xf32, #tpu.memory_space<any>> -> memref<1x128xf32, #tpu.memory_space<any>>
      %c61_i32_1034 = arith.constant 61 : i32
      %c0_i32_1035 = arith.constant 0 : i32
      %1562 = tpu.memref_slice %arg5[%883, %c61_i32_1034, %c0_i32_1035] : memref<2x64x128xf32, #tpu.memory_space<vmem>> -> memref<1x1x128xf32, #tpu.memory_space<vmem>>
      %1563 = tpu.memref_squeeze %1562 : memref<1x1x128xf32, #tpu.memory_space<vmem>> -> memref<1x128xf32, #tpu.memory_space<vmem>>
      %1564 = tpu.memref_slice %arg7[%883] : memref<2x!tpu.dma_semaphore, #tpu.memory_space<semaphore_mem>> -> memref<1x!tpu.dma_semaphore, #tpu.memory_space<semaphore_mem>>
      %1565 = tpu.memref_squeeze %1564 : memref<1x!tpu.dma_semaphore, #tpu.memory_space<semaphore_mem>> -> memref<!tpu.dma_semaphore, #tpu.memory_space<semaphore_mem>>
      tpu.enqueue_dma source(%1561 : memref<1x128xf32, #tpu.memory_space<any>>) target(%1563 : memref<1x128xf32, #tpu.memory_space<vmem>>) target_semaphore(%1565 : memref<!tpu.dma_semaphore, #tpu.memory_space<semaphore_mem>>)
      %c6_i32_1036 = arith.constant 6 : i32
      %1566 = arith.addi %0, %c6_i32_1036 : i32
      %c8_i32_1037 = arith.constant 8 : i32
      %1567 = arith.muli %882, %c8_i32_1037 : i32
      %c7_i32_1038 = arith.constant 7 : i32
      %1568 = arith.addi %1567, %c7_i32_1038 : i32
      %1569 = arith.index_cast %1566 : i32 to index
      %1570 = arith.index_cast %1568 : i32 to index
      %1571 = memref.load %arg1[%1569, %1570] : memref<8x8xi32, #tpu.memory_space<smem>>
      %c0_i32_1039 = arith.constant 0 : i32
      %1572 = tpu.memref_slice %arg3[%1571, %c0_i32_1039] : memref<33x128xf32, #tpu.memory_space<any>> -> memref<1x128xf32, #tpu.memory_space<any>>
      %c62_i32_1040 = arith.constant 62 : i32
      %c0_i32_1041 = arith.constant 0 : i32
      %1573 = tpu.memref_slice %arg5[%883, %c62_i32_1040, %c0_i32_1041] : memref<2x64x128xf32, #tpu.memory_space<vmem>> -> memref<1x1x128xf32, #tpu.memory_space<vmem>>
      %1574 = tpu.memref_squeeze %1573 : memref<1x1x128xf32, #tpu.memory_space<vmem>> -> memref<1x128xf32, #tpu.memory_space<vmem>>
      %1575 = tpu.memref_slice %arg7[%883] : memref<2x!tpu.dma_semaphore, #tpu.memory_space<semaphore_mem>> -> memref<1x!tpu.dma_semaphore, #tpu.memory_space<semaphore_mem>>
      %1576 = tpu.memref_squeeze %1575 : memref<1x!tpu.dma_semaphore, #tpu.memory_space<semaphore_mem>> -> memref<!tpu.dma_semaphore, #tpu.memory_space<semaphore_mem>>
      tpu.enqueue_dma source(%1572 : memref<1x128xf32, #tpu.memory_space<any>>) target(%1574 : memref<1x128xf32, #tpu.memory_space<vmem>>) target_semaphore(%1576 : memref<!tpu.dma_semaphore, #tpu.memory_space<semaphore_mem>>)
      %c7_i32_1042 = arith.constant 7 : i32
      %1577 = arith.addi %0, %c7_i32_1042 : i32
      %c8_i32_1043 = arith.constant 8 : i32
      %1578 = arith.muli %882, %c8_i32_1043 : i32
      %c7_i32_1044 = arith.constant 7 : i32
      %1579 = arith.addi %1578, %c7_i32_1044 : i32
      %1580 = arith.index_cast %1577 : i32 to index
      %1581 = arith.index_cast %1579 : i32 to index
      %1582 = memref.load %arg1[%1580, %1581] : memref<8x8xi32, #tpu.memory_space<smem>>
      %c0_i32_1045 = arith.constant 0 : i32
      %1583 = tpu.memref_slice %arg3[%1582, %c0_i32_1045] : memref<33x128xf32, #tpu.memory_space<any>> -> memref<1x128xf32, #tpu.memory_space<any>>
      %c63_i32_1046 = arith.constant 63 : i32
      %c0_i32_1047 = arith.constant 0 : i32
      %1584 = tpu.memref_slice %arg5[%883, %c63_i32_1046, %c0_i32_1047] : memref<2x64x128xf32, #tpu.memory_space<vmem>> -> memref<1x1x128xf32, #tpu.memory_space<vmem>>
      %1585 = tpu.memref_squeeze %1584 : memref<1x1x128xf32, #tpu.memory_space<vmem>> -> memref<1x128xf32, #tpu.memory_space<vmem>>
      %1586 = tpu.memref_slice %arg7[%883] : memref<2x!tpu.dma_semaphore, #tpu.memory_space<semaphore_mem>> -> memref<1x!tpu.dma_semaphore, #tpu.memory_space<semaphore_mem>>
      %1587 = tpu.memref_squeeze %1586 : memref<1x!tpu.dma_semaphore, #tpu.memory_space<semaphore_mem>> -> memref<!tpu.dma_semaphore, #tpu.memory_space<semaphore_mem>>
      tpu.enqueue_dma source(%1583 : memref<1x128xf32, #tpu.memory_space<any>>) target(%1585 : memref<1x128xf32, #tpu.memory_space<vmem>>) target_semaphore(%1587 : memref<!tpu.dma_semaphore, #tpu.memory_space<semaphore_mem>>)
    } else {
    }
    %c0_i32_391 = arith.constant 0 : i32
    %c0_i32_392 = arith.constant 0 : i32
    %531 = tpu.memref_slice %arg3[%c0_i32_391, %c0_i32_392] : memref<33x128xf32, #tpu.memory_space<any>> -> memref<1x128xf32, #tpu.memory_space<any>>
    %c0_i32_393 = arith.constant 0 : i32
    %c0_i32_394 = arith.constant 0 : i32
    %532 = tpu.memref_slice %arg5[%526, %c0_i32_393, %c0_i32_394] : memref<2x64x128xf32, #tpu.memory_space<vmem>> -> memref<1x1x128xf32, #tpu.memory_space<vmem>>
    %533 = tpu.memref_squeeze %532 : memref<1x1x128xf32, #tpu.memory_space<vmem>> -> memref<1x128xf32, #tpu.memory_space<vmem>>
    %534 = tpu.memref_slice %arg7[%526] : memref<2x!tpu.dma_semaphore, #tpu.memory_space<semaphore_mem>> -> memref<1x!tpu.dma_semaphore, #tpu.memory_space<semaphore_mem>>
    %535 = tpu.memref_squeeze %534 : memref<1x!tpu.dma_semaphore, #tpu.memory_space<semaphore_mem>> -> memref<!tpu.dma_semaphore, #tpu.memory_space<semaphore_mem>>
    tpu.wait_dma2 semaphore(%535 : memref<!tpu.dma_semaphore, #tpu.memory_space<semaphore_mem>>) src(%531 : memref<1x128xf32, #tpu.memory_space<any>>) dst(%533 : memref<1x128xf32, #tpu.memory_space<vmem>>)
    %c0_i32_395 = arith.constant 0 : i32
    %c0_i32_396 = arith.constant 0 : i32
    %536 = tpu.memref_slice %arg3[%c0_i32_395, %c0_i32_396] : memref<33x128xf32, #tpu.memory_space<any>> -> memref<1x128xf32, #tpu.memory_space<any>>
    %c1_i32_397 = arith.constant 1 : i32
    %c0_i32_398 = arith.constant 0 : i32
    %537 = tpu.memref_slice %arg5[%526, %c1_i32_397, %c0_i32_398] : memref<2x64x128xf32, #tpu.memory_space<vmem>> -> memref<1x1x128xf32, #tpu.memory_space<vmem>>
    %538 = tpu.memref_squeeze %537 : memref<1x1x128xf32, #tpu.memory_space<vmem>> -> memref<1x128xf32, #tpu.memory_space<vmem>>
    %539 = tpu.memref_slice %arg7[%526] : memref<2x!tpu.dma_semaphore, #tpu.memory_space<semaphore_mem>> -> memref<1x!tpu.dma_semaphore, #tpu.memory_space<semaphore_mem>>
    %540 = tpu.memref_squeeze %539 : memref<1x!tpu.dma_semaphore, #tpu.memory_space<semaphore_mem>> -> memref<!tpu.dma_semaphore, #tpu.memory_space<semaphore_mem>>
    tpu.wait_dma2 semaphore(%540 : memref<!tpu.dma_semaphore, #tpu.memory_space<semaphore_mem>>) src(%536 : memref<1x128xf32, #tpu.memory_space<any>>) dst(%538 : memref<1x128xf32, #tpu.memory_space<vmem>>)
    %c0_i32_399 = arith.constant 0 : i32
    %c0_i32_400 = arith.constant 0 : i32
    %541 = tpu.memref_slice %arg3[%c0_i32_399, %c0_i32_400] : memref<33x128xf32, #tpu.memory_space<any>> -> memref<1x128xf32, #tpu.memory_space<any>>
    %c2_i32_401 = arith.constant 2 : i32
    %c0_i32_402 = arith.constant 0 : i32
    %542 = tpu.memref_slice %arg5[%526, %c2_i32_401, %c0_i32_402] : memref<2x64x128xf32, #tpu.memory_space<vmem>> -> memref<1x1x128xf32, #tpu.memory_space<vmem>>
    %543 = tpu.memref_squeeze %542 : memref<1x1x128xf32, #tpu.memory_space<vmem>> -> memref<1x128xf32, #tpu.memory_space<vmem>>
    %544 = tpu.memref_slice %arg7[%526] : memref<2x!tpu.dma_semaphore, #tpu.memory_space<semaphore_mem>> -> memref<1x!tpu.dma_semaphore, #tpu.memory_space<semaphore_mem>>
    %545 = tpu.memref_squeeze %544 : memref<1x!tpu.dma_semaphore, #tpu.memory_space<semaphore_mem>> -> memref<!tpu.dma_semaphore, #tpu.memory_space<semaphore_mem>>
    tpu.wait_dma2 semaphore(%545 : memref<!tpu.dma_semaphore, #tpu.memory_space<semaphore_mem>>) src(%541 : memref<1x128xf32, #tpu.memory_space<any>>) dst(%543 : memref<1x128xf32, #tpu.memory_space<vmem>>)
    %c0_i32_403 = arith.constant 0 : i32
    %c0_i32_404 = arith.constant 0 : i32
    %546 = tpu.memref_slice %arg3[%c0_i32_403, %c0_i32_404] : memref<33x128xf32, #tpu.memory_space<any>> -> memref<1x128xf32, #tpu.memory_space<any>>
    %c3_i32_405 = arith.constant 3 : i32
    %c0_i32_406 = arith.constant 0 : i32
    %547 = tpu.memref_slice %arg5[%526, %c3_i32_405, %c0_i32_406] : memref<2x64x128xf32, #tpu.memory_space<vmem>> -> memref<1x1x128xf32, #tpu.memory_space<vmem>>
    %548 = tpu.memref_squeeze %547 : memref<1x1x128xf32, #tpu.memory_space<vmem>> -> memref<1x128xf32, #tpu.memory_space<vmem>>
    %549 = tpu.memref_slice %arg7[%526] : memref<2x!tpu.dma_semaphore, #tpu.memory_space<semaphore_mem>> -> memref<1x!tpu.dma_semaphore, #tpu.memory_space<semaphore_mem>>
    %550 = tpu.memref_squeeze %549 : memref<1x!tpu.dma_semaphore, #tpu.memory_space<semaphore_mem>> -> memref<!tpu.dma_semaphore, #tpu.memory_space<semaphore_mem>>
    tpu.wait_dma2 semaphore(%550 : memref<!tpu.dma_semaphore, #tpu.memory_space<semaphore_mem>>) src(%546 : memref<1x128xf32, #tpu.memory_space<any>>) dst(%548 : memref<1x128xf32, #tpu.memory_space<vmem>>)
    %c0_i32_407 = arith.constant 0 : i32
    %c0_i32_408 = arith.constant 0 : i32
    %551 = tpu.memref_slice %arg3[%c0_i32_407, %c0_i32_408] : memref<33x128xf32, #tpu.memory_space<any>> -> memref<1x128xf32, #tpu.memory_space<any>>
    %c4_i32_409 = arith.constant 4 : i32
    %c0_i32_410 = arith.constant 0 : i32
    %552 = tpu.memref_slice %arg5[%526, %c4_i32_409, %c0_i32_410] : memref<2x64x128xf32, #tpu.memory_space<vmem>> -> memref<1x1x128xf32, #tpu.memory_space<vmem>>
    %553 = tpu.memref_squeeze %552 : memref<1x1x128xf32, #tpu.memory_space<vmem>> -> memref<1x128xf32, #tpu.memory_space<vmem>>
    %554 = tpu.memref_slice %arg7[%526] : memref<2x!tpu.dma_semaphore, #tpu.memory_space<semaphore_mem>> -> memref<1x!tpu.dma_semaphore, #tpu.memory_space<semaphore_mem>>
    %555 = tpu.memref_squeeze %554 : memref<1x!tpu.dma_semaphore, #tpu.memory_space<semaphore_mem>> -> memref<!tpu.dma_semaphore, #tpu.memory_space<semaphore_mem>>
    tpu.wait_dma2 semaphore(%555 : memref<!tpu.dma_semaphore, #tpu.memory_space<semaphore_mem>>) src(%551 : memref<1x128xf32, #tpu.memory_space<any>>) dst(%553 : memref<1x128xf32, #tpu.memory_space<vmem>>)
    %c0_i32_411 = arith.constant 0 : i32
    %c0_i32_412 = arith.constant 0 : i32
    %556 = tpu.memref_slice %arg3[%c0_i32_411, %c0_i32_412] : memref<33x128xf32, #tpu.memory_space<any>> -> memref<1x128xf32, #tpu.memory_space<any>>
    %c5_i32_413 = arith.constant 5 : i32
    %c0_i32_414 = arith.constant 0 : i32
    %557 = tpu.memref_slice %arg5[%526, %c5_i32_413, %c0_i32_414] : memref<2x64x128xf32, #tpu.memory_space<vmem>> -> memref<1x1x128xf32, #tpu.memory_space<vmem>>
    %558 = tpu.memref_squeeze %557 : memref<1x1x128xf32, #tpu.memory_space<vmem>> -> memref<1x128xf32, #tpu.memory_space<vmem>>
    %559 = tpu.memref_slice %arg7[%526] : memref<2x!tpu.dma_semaphore, #tpu.memory_space<semaphore_mem>> -> memref<1x!tpu.dma_semaphore, #tpu.memory_space<semaphore_mem>>
    %560 = tpu.memref_squeeze %559 : memref<1x!tpu.dma_semaphore, #tpu.memory_space<semaphore_mem>> -> memref<!tpu.dma_semaphore, #tpu.memory_space<semaphore_mem>>
    tpu.wait_dma2 semaphore(%560 : memref<!tpu.dma_semaphore, #tpu.memory_space<semaphore_mem>>) src(%556 : memref<1x128xf32, #tpu.memory_space<any>>) dst(%558 : memref<1x128xf32, #tpu.memory_space<vmem>>)
    %c0_i32_415 = arith.constant 0 : i32
    %c0_i32_416 = arith.constant 0 : i32
    %561 = tpu.memref_slice %arg3[%c0_i32_415, %c0_i32_416] : memref<33x128xf32, #tpu.memory_space<any>> -> memref<1x128xf32, #tpu.memory_space<any>>
    %c6_i32_417 = arith.constant 6 : i32
    %c0_i32_418 = arith.constant 0 : i32
    %562 = tpu.memref_slice %arg5[%526, %c6_i32_417, %c0_i32_418] : memref<2x64x128xf32, #tpu.memory_space<vmem>> -> memref<1x1x128xf32, #tpu.memory_space<vmem>>
    %563 = tpu.memref_squeeze %562 : memref<1x1x128xf32, #tpu.memory_space<vmem>> -> memref<1x128xf32, #tpu.memory_space<vmem>>
    %564 = tpu.memref_slice %arg7[%526] : memref<2x!tpu.dma_semaphore, #tpu.memory_space<semaphore_mem>> -> memref<1x!tpu.dma_semaphore, #tpu.memory_space<semaphore_mem>>
    %565 = tpu.memref_squeeze %564 : memref<1x!tpu.dma_semaphore, #tpu.memory_space<semaphore_mem>> -> memref<!tpu.dma_semaphore, #tpu.memory_space<semaphore_mem>>
    tpu.wait_dma2 semaphore(%565 : memref<!tpu.dma_semaphore, #tpu.memory_space<semaphore_mem>>) src(%561 : memref<1x128xf32, #tpu.memory_space<any>>) dst(%563 : memref<1x128xf32, #tpu.memory_space<vmem>>)
    %c0_i32_419 = arith.constant 0 : i32
    %c0_i32_420 = arith.constant 0 : i32
    %566 = tpu.memref_slice %arg3[%c0_i32_419, %c0_i32_420] : memref<33x128xf32, #tpu.memory_space<any>> -> memref<1x128xf32, #tpu.memory_space<any>>
    %c7_i32_421 = arith.constant 7 : i32
    %c0_i32_422 = arith.constant 0 : i32
    %567 = tpu.memref_slice %arg5[%526, %c7_i32_421, %c0_i32_422] : memref<2x64x128xf32, #tpu.memory_space<vmem>> -> memref<1x1x128xf32, #tpu.memory_space<vmem>>
    %568 = tpu.memref_squeeze %567 : memref<1x1x128xf32, #tpu.memory_space<vmem>> -> memref<1x128xf32, #tpu.memory_space<vmem>>
    %569 = tpu.memref_slice %arg7[%526] : memref<2x!tpu.dma_semaphore, #tpu.memory_space<semaphore_mem>> -> memref<1x!tpu.dma_semaphore, #tpu.memory_space<semaphore_mem>>
    %570 = tpu.memref_squeeze %569 : memref<1x!tpu.dma_semaphore, #tpu.memory_space<semaphore_mem>> -> memref<!tpu.dma_semaphore, #tpu.memory_space<semaphore_mem>>
    tpu.wait_dma2 semaphore(%570 : memref<!tpu.dma_semaphore, #tpu.memory_space<semaphore_mem>>) src(%566 : memref<1x128xf32, #tpu.memory_space<any>>) dst(%568 : memref<1x128xf32, #tpu.memory_space<vmem>>)
    %c0_i32_423 = arith.constant 0 : i32
    %c0_i32_424 = arith.constant 0 : i32
    %571 = tpu.memref_slice %arg3[%c0_i32_423, %c0_i32_424] : memref<33x128xf32, #tpu.memory_space<any>> -> memref<1x128xf32, #tpu.memory_space<any>>
    %c8_i32_425 = arith.constant 8 : i32
    %c0_i32_426 = arith.constant 0 : i32
    %572 = tpu.memref_slice %arg5[%526, %c8_i32_425, %c0_i32_426] : memref<2x64x128xf32, #tpu.memory_space<vmem>> -> memref<1x1x128xf32, #tpu.memory_space<vmem>>
    %573 = tpu.memref_squeeze %572 : memref<1x1x128xf32, #tpu.memory_space<vmem>> -> memref<1x128xf32, #tpu.memory_space<vmem>>
    %574 = tpu.memref_slice %arg7[%526] : memref<2x!tpu.dma_semaphore, #tpu.memory_space<semaphore_mem>> -> memref<1x!tpu.dma_semaphore, #tpu.memory_space<semaphore_mem>>
    %575 = tpu.memref_squeeze %574 : memref<1x!tpu.dma_semaphore, #tpu.memory_space<semaphore_mem>> -> memref<!tpu.dma_semaphore, #tpu.memory_space<semaphore_mem>>
    tpu.wait_dma2 semaphore(%575 : memref<!tpu.dma_semaphore, #tpu.memory_space<semaphore_mem>>) src(%571 : memref<1x128xf32, #tpu.memory_space<any>>) dst(%573 : memref<1x128xf32, #tpu.memory_space<vmem>>)
    %c0_i32_427 = arith.constant 0 : i32
    %c0_i32_428 = arith.constant 0 : i32
    %576 = tpu.memref_slice %arg3[%c0_i32_427, %c0_i32_428] : memref<33x128xf32, #tpu.memory_space<any>> -> memref<1x128xf32, #tpu.memory_space<any>>
    %c9_i32_429 = arith.constant 9 : i32
    %c0_i32_430 = arith.constant 0 : i32
    %577 = tpu.memref_slice %arg5[%526, %c9_i32_429, %c0_i32_430] : memref<2x64x128xf32, #tpu.memory_space<vmem>> -> memref<1x1x128xf32, #tpu.memory_space<vmem>>
    %578 = tpu.memref_squeeze %577 : memref<1x1x128xf32, #tpu.memory_space<vmem>> -> memref<1x128xf32, #tpu.memory_space<vmem>>
    %579 = tpu.memref_slice %arg7[%526] : memref<2x!tpu.dma_semaphore, #tpu.memory_space<semaphore_mem>> -> memref<1x!tpu.dma_semaphore, #tpu.memory_space<semaphore_mem>>
    %580 = tpu.memref_squeeze %579 : memref<1x!tpu.dma_semaphore, #tpu.memory_space<semaphore_mem>> -> memref<!tpu.dma_semaphore, #tpu.memory_space<semaphore_mem>>
    tpu.wait_dma2 semaphore(%580 : memref<!tpu.dma_semaphore, #tpu.memory_space<semaphore_mem>>) src(%576 : memref<1x128xf32, #tpu.memory_space<any>>) dst(%578 : memref<1x128xf32, #tpu.memory_space<vmem>>)
    %c0_i32_431 = arith.constant 0 : i32
    %c0_i32_432 = arith.constant 0 : i32
    %581 = tpu.memref_slice %arg3[%c0_i32_431, %c0_i32_432] : memref<33x128xf32, #tpu.memory_space<any>> -> memref<1x128xf32, #tpu.memory_space<any>>
    %c10_i32_433 = arith.constant 10 : i32
    %c0_i32_434 = arith.constant 0 : i32
    %582 = tpu.memref_slice %arg5[%526, %c10_i32_433, %c0_i32_434] : memref<2x64x128xf32, #tpu.memory_space<vmem>> -> memref<1x1x128xf32, #tpu.memory_space<vmem>>
    %583 = tpu.memref_squeeze %582 : memref<1x1x128xf32, #tpu.memory_space<vmem>> -> memref<1x128xf32, #tpu.memory_space<vmem>>
    %584 = tpu.memref_slice %arg7[%526] : memref<2x!tpu.dma_semaphore, #tpu.memory_space<semaphore_mem>> -> memref<1x!tpu.dma_semaphore, #tpu.memory_space<semaphore_mem>>
    %585 = tpu.memref_squeeze %584 : memref<1x!tpu.dma_semaphore, #tpu.memory_space<semaphore_mem>> -> memref<!tpu.dma_semaphore, #tpu.memory_space<semaphore_mem>>
    tpu.wait_dma2 semaphore(%585 : memref<!tpu.dma_semaphore, #tpu.memory_space<semaphore_mem>>) src(%581 : memref<1x128xf32, #tpu.memory_space<any>>) dst(%583 : memref<1x128xf32, #tpu.memory_space<vmem>>)
    %c0_i32_435 = arith.constant 0 : i32
    %c0_i32_436 = arith.constant 0 : i32
    %586 = tpu.memref_slice %arg3[%c0_i32_435, %c0_i32_436] : memref<33x128xf32, #tpu.memory_space<any>> -> memref<1x128xf32, #tpu.memory_space<any>>
    %c11_i32_437 = arith.constant 11 : i32
    %c0_i32_438 = arith.constant 0 : i32
    %587 = tpu.memref_slice %arg5[%526, %c11_i32_437, %c0_i32_438] : memref<2x64x128xf32, #tpu.memory_space<vmem>> -> memref<1x1x128xf32, #tpu.memory_space<vmem>>
    %588 = tpu.memref_squeeze %587 : memref<1x1x128xf32, #tpu.memory_space<vmem>> -> memref<1x128xf32, #tpu.memory_space<vmem>>
    %589 = tpu.memref_slice %arg7[%526] : memref<2x!tpu.dma_semaphore, #tpu.memory_space<semaphore_mem>> -> memref<1x!tpu.dma_semaphore, #tpu.memory_space<semaphore_mem>>
    %590 = tpu.memref_squeeze %589 : memref<1x!tpu.dma_semaphore, #tpu.memory_space<semaphore_mem>> -> memref<!tpu.dma_semaphore, #tpu.memory_space<semaphore_mem>>
    tpu.wait_dma2 semaphore(%590 : memref<!tpu.dma_semaphore, #tpu.memory_space<semaphore_mem>>) src(%586 : memref<1x128xf32, #tpu.memory_space<any>>) dst(%588 : memref<1x128xf32, #tpu.memory_space<vmem>>)
    %c0_i32_439 = arith.constant 0 : i32
    %c0_i32_440 = arith.constant 0 : i32
    %591 = tpu.memref_slice %arg3[%c0_i32_439, %c0_i32_440] : memref<33x128xf32, #tpu.memory_space<any>> -> memref<1x128xf32, #tpu.memory_space<any>>
    %c12_i32_441 = arith.constant 12 : i32
    %c0_i32_442 = arith.constant 0 : i32
    %592 = tpu.memref_slice %arg5[%526, %c12_i32_441, %c0_i32_442] : memref<2x64x128xf32, #tpu.memory_space<vmem>> -> memref<1x1x128xf32, #tpu.memory_space<vmem>>
    %593 = tpu.memref_squeeze %592 : memref<1x1x128xf32, #tpu.memory_space<vmem>> -> memref<1x128xf32, #tpu.memory_space<vmem>>
    %594 = tpu.memref_slice %arg7[%526] : memref<2x!tpu.dma_semaphore, #tpu.memory_space<semaphore_mem>> -> memref<1x!tpu.dma_semaphore, #tpu.memory_space<semaphore_mem>>
    %595 = tpu.memref_squeeze %594 : memref<1x!tpu.dma_semaphore, #tpu.memory_space<semaphore_mem>> -> memref<!tpu.dma_semaphore, #tpu.memory_space<semaphore_mem>>
    tpu.wait_dma2 semaphore(%595 : memref<!tpu.dma_semaphore, #tpu.memory_space<semaphore_mem>>) src(%591 : memref<1x128xf32, #tpu.memory_space<any>>) dst(%593 : memref<1x128xf32, #tpu.memory_space<vmem>>)
    %c0_i32_443 = arith.constant 0 : i32
    %c0_i32_444 = arith.constant 0 : i32
    %596 = tpu.memref_slice %arg3[%c0_i32_443, %c0_i32_444] : memref<33x128xf32, #tpu.memory_space<any>> -> memref<1x128xf32, #tpu.memory_space<any>>
    %c13_i32_445 = arith.constant 13 : i32
    %c0_i32_446 = arith.constant 0 : i32
    %597 = tpu.memref_slice %arg5[%526, %c13_i32_445, %c0_i32_446] : memref<2x64x128xf32, #tpu.memory_space<vmem>> -> memref<1x1x128xf32, #tpu.memory_space<vmem>>
    %598 = tpu.memref_squeeze %597 : memref<1x1x128xf32, #tpu.memory_space<vmem>> -> memref<1x128xf32, #tpu.memory_space<vmem>>
    %599 = tpu.memref_slice %arg7[%526] : memref<2x!tpu.dma_semaphore, #tpu.memory_space<semaphore_mem>> -> memref<1x!tpu.dma_semaphore, #tpu.memory_space<semaphore_mem>>
    %600 = tpu.memref_squeeze %599 : memref<1x!tpu.dma_semaphore, #tpu.memory_space<semaphore_mem>> -> memref<!tpu.dma_semaphore, #tpu.memory_space<semaphore_mem>>
    tpu.wait_dma2 semaphore(%600 : memref<!tpu.dma_semaphore, #tpu.memory_space<semaphore_mem>>) src(%596 : memref<1x128xf32, #tpu.memory_space<any>>) dst(%598 : memref<1x128xf32, #tpu.memory_space<vmem>>)
    %c0_i32_447 = arith.constant 0 : i32
    %c0_i32_448 = arith.constant 0 : i32
    %601 = tpu.memref_slice %arg3[%c0_i32_447, %c0_i32_448] : memref<33x128xf32, #tpu.memory_space<any>> -> memref<1x128xf32, #tpu.memory_space<any>>
    %c14_i32_449 = arith.constant 14 : i32
    %c0_i32_450 = arith.constant 0 : i32
    %602 = tpu.memref_slice %arg5[%526, %c14_i32_449, %c0_i32_450] : memref<2x64x128xf32, #tpu.memory_space<vmem>> -> memref<1x1x128xf32, #tpu.memory_space<vmem>>
    %603 = tpu.memref_squeeze %602 : memref<1x1x128xf32, #tpu.memory_space<vmem>> -> memref<1x128xf32, #tpu.memory_space<vmem>>
    %604 = tpu.memref_slice %arg7[%526] : memref<2x!tpu.dma_semaphore, #tpu.memory_space<semaphore_mem>> -> memref<1x!tpu.dma_semaphore, #tpu.memory_space<semaphore_mem>>
    %605 = tpu.memref_squeeze %604 : memref<1x!tpu.dma_semaphore, #tpu.memory_space<semaphore_mem>> -> memref<!tpu.dma_semaphore, #tpu.memory_space<semaphore_mem>>
    tpu.wait_dma2 semaphore(%605 : memref<!tpu.dma_semaphore, #tpu.memory_space<semaphore_mem>>) src(%601 : memref<1x128xf32, #tpu.memory_space<any>>) dst(%603 : memref<1x128xf32, #tpu.memory_space<vmem>>)
    %c0_i32_451 = arith.constant 0 : i32
    %c0_i32_452 = arith.constant 0 : i32
    %606 = tpu.memref_slice %arg3[%c0_i32_451, %c0_i32_452] : memref<33x128xf32, #tpu.memory_space<any>> -> memref<1x128xf32, #tpu.memory_space<any>>
    %c15_i32_453 = arith.constant 15 : i32
    %c0_i32_454 = arith.constant 0 : i32
    %607 = tpu.memref_slice %arg5[%526, %c15_i32_453, %c0_i32_454] : memref<2x64x128xf32, #tpu.memory_space<vmem>> -> memref<1x1x128xf32, #tpu.memory_space<vmem>>
    %608 = tpu.memref_squeeze %607 : memref<1x1x128xf32, #tpu.memory_space<vmem>> -> memref<1x128xf32, #tpu.memory_space<vmem>>
    %609 = tpu.memref_slice %arg7[%526] : memref<2x!tpu.dma_semaphore, #tpu.memory_space<semaphore_mem>> -> memref<1x!tpu.dma_semaphore, #tpu.memory_space<semaphore_mem>>
    %610 = tpu.memref_squeeze %609 : memref<1x!tpu.dma_semaphore, #tpu.memory_space<semaphore_mem>> -> memref<!tpu.dma_semaphore, #tpu.memory_space<semaphore_mem>>
    tpu.wait_dma2 semaphore(%610 : memref<!tpu.dma_semaphore, #tpu.memory_space<semaphore_mem>>) src(%606 : memref<1x128xf32, #tpu.memory_space<any>>) dst(%608 : memref<1x128xf32, #tpu.memory_space<vmem>>)
    %c0_i32_455 = arith.constant 0 : i32
    %c0_i32_456 = arith.constant 0 : i32
    %611 = tpu.memref_slice %arg3[%c0_i32_455, %c0_i32_456] : memref<33x128xf32, #tpu.memory_space<any>> -> memref<1x128xf32, #tpu.memory_space<any>>
    %c16_i32_457 = arith.constant 16 : i32
    %c0_i32_458 = arith.constant 0 : i32
    %612 = tpu.memref_slice %arg5[%526, %c16_i32_457, %c0_i32_458] : memref<2x64x128xf32, #tpu.memory_space<vmem>> -> memref<1x1x128xf32, #tpu.memory_space<vmem>>
    %613 = tpu.memref_squeeze %612 : memref<1x1x128xf32, #tpu.memory_space<vmem>> -> memref<1x128xf32, #tpu.memory_space<vmem>>
    %614 = tpu.memref_slice %arg7[%526] : memref<2x!tpu.dma_semaphore, #tpu.memory_space<semaphore_mem>> -> memref<1x!tpu.dma_semaphore, #tpu.memory_space<semaphore_mem>>
    %615 = tpu.memref_squeeze %614 : memref<1x!tpu.dma_semaphore, #tpu.memory_space<semaphore_mem>> -> memref<!tpu.dma_semaphore, #tpu.memory_space<semaphore_mem>>
    tpu.wait_dma2 semaphore(%615 : memref<!tpu.dma_semaphore, #tpu.memory_space<semaphore_mem>>) src(%611 : memref<1x128xf32, #tpu.memory_space<any>>) dst(%613 : memref<1x128xf32, #tpu.memory_space<vmem>>)
    %c0_i32_459 = arith.constant 0 : i32
    %c0_i32_460 = arith.constant 0 : i32
    %616 = tpu.memref_slice %arg3[%c0_i32_459, %c0_i32_460] : memref<33x128xf32, #tpu.memory_space<any>> -> memref<1x128xf32, #tpu.memory_space<any>>
    %c17_i32_461 = arith.constant 17 : i32
    %c0_i32_462 = arith.constant 0 : i32
    %617 = tpu.memref_slice %arg5[%526, %c17_i32_461, %c0_i32_462] : memref<2x64x128xf32, #tpu.memory_space<vmem>> -> memref<1x1x128xf32, #tpu.memory_space<vmem>>
    %618 = tpu.memref_squeeze %617 : memref<1x1x128xf32, #tpu.memory_space<vmem>> -> memref<1x128xf32, #tpu.memory_space<vmem>>
    %619 = tpu.memref_slice %arg7[%526] : memref<2x!tpu.dma_semaphore, #tpu.memory_space<semaphore_mem>> -> memref<1x!tpu.dma_semaphore, #tpu.memory_space<semaphore_mem>>
    %620 = tpu.memref_squeeze %619 : memref<1x!tpu.dma_semaphore, #tpu.memory_space<semaphore_mem>> -> memref<!tpu.dma_semaphore, #tpu.memory_space<semaphore_mem>>
    tpu.wait_dma2 semaphore(%620 : memref<!tpu.dma_semaphore, #tpu.memory_space<semaphore_mem>>) src(%616 : memref<1x128xf32, #tpu.memory_space<any>>) dst(%618 : memref<1x128xf32, #tpu.memory_space<vmem>>)
    %c0_i32_463 = arith.constant 0 : i32
    %c0_i32_464 = arith.constant 0 : i32
    %621 = tpu.memref_slice %arg3[%c0_i32_463, %c0_i32_464] : memref<33x128xf32, #tpu.memory_space<any>> -> memref<1x128xf32, #tpu.memory_space<any>>
    %c18_i32_465 = arith.constant 18 : i32
    %c0_i32_466 = arith.constant 0 : i32
    %622 = tpu.memref_slice %arg5[%526, %c18_i32_465, %c0_i32_466] : memref<2x64x128xf32, #tpu.memory_space<vmem>> -> memref<1x1x128xf32, #tpu.memory_space<vmem>>
    %623 = tpu.memref_squeeze %622 : memref<1x1x128xf32, #tpu.memory_space<vmem>> -> memref<1x128xf32, #tpu.memory_space<vmem>>
    %624 = tpu.memref_slice %arg7[%526] : memref<2x!tpu.dma_semaphore, #tpu.memory_space<semaphore_mem>> -> memref<1x!tpu.dma_semaphore, #tpu.memory_space<semaphore_mem>>
    %625 = tpu.memref_squeeze %624 : memref<1x!tpu.dma_semaphore, #tpu.memory_space<semaphore_mem>> -> memref<!tpu.dma_semaphore, #tpu.memory_space<semaphore_mem>>
    tpu.wait_dma2 semaphore(%625 : memref<!tpu.dma_semaphore, #tpu.memory_space<semaphore_mem>>) src(%621 : memref<1x128xf32, #tpu.memory_space<any>>) dst(%623 : memref<1x128xf32, #tpu.memory_space<vmem>>)
    %c0_i32_467 = arith.constant 0 : i32
    %c0_i32_468 = arith.constant 0 : i32
    %626 = tpu.memref_slice %arg3[%c0_i32_467, %c0_i32_468] : memref<33x128xf32, #tpu.memory_space<any>> -> memref<1x128xf32, #tpu.memory_space<any>>
    %c19_i32_469 = arith.constant 19 : i32
    %c0_i32_470 = arith.constant 0 : i32
    %627 = tpu.memref_slice %arg5[%526, %c19_i32_469, %c0_i32_470] : memref<2x64x128xf32, #tpu.memory_space<vmem>> -> memref<1x1x128xf32, #tpu.memory_space<vmem>>
    %628 = tpu.memref_squeeze %627 : memref<1x1x128xf32, #tpu.memory_space<vmem>> -> memref<1x128xf32, #tpu.memory_space<vmem>>
    %629 = tpu.memref_slice %arg7[%526] : memref<2x!tpu.dma_semaphore, #tpu.memory_space<semaphore_mem>> -> memref<1x!tpu.dma_semaphore, #tpu.memory_space<semaphore_mem>>
    %630 = tpu.memref_squeeze %629 : memref<1x!tpu.dma_semaphore, #tpu.memory_space<semaphore_mem>> -> memref<!tpu.dma_semaphore, #tpu.memory_space<semaphore_mem>>
    tpu.wait_dma2 semaphore(%630 : memref<!tpu.dma_semaphore, #tpu.memory_space<semaphore_mem>>) src(%626 : memref<1x128xf32, #tpu.memory_space<any>>) dst(%628 : memref<1x128xf32, #tpu.memory_space<vmem>>)
    %c0_i32_471 = arith.constant 0 : i32
    %c0_i32_472 = arith.constant 0 : i32
    %631 = tpu.memref_slice %arg3[%c0_i32_471, %c0_i32_472] : memref<33x128xf32, #tpu.memory_space<any>> -> memref<1x128xf32, #tpu.memory_space<any>>
    %c20_i32_473 = arith.constant 20 : i32
    %c0_i32_474 = arith.constant 0 : i32
    %632 = tpu.memref_slice %arg5[%526, %c20_i32_473, %c0_i32_474] : memref<2x64x128xf32, #tpu.memory_space<vmem>> -> memref<1x1x128xf32, #tpu.memory_space<vmem>>
    %633 = tpu.memref_squeeze %632 : memref<1x1x128xf32, #tpu.memory_space<vmem>> -> memref<1x128xf32, #tpu.memory_space<vmem>>
    %634 = tpu.memref_slice %arg7[%526] : memref<2x!tpu.dma_semaphore, #tpu.memory_space<semaphore_mem>> -> memref<1x!tpu.dma_semaphore, #tpu.memory_space<semaphore_mem>>
    %635 = tpu.memref_squeeze %634 : memref<1x!tpu.dma_semaphore, #tpu.memory_space<semaphore_mem>> -> memref<!tpu.dma_semaphore, #tpu.memory_space<semaphore_mem>>
    tpu.wait_dma2 semaphore(%635 : memref<!tpu.dma_semaphore, #tpu.memory_space<semaphore_mem>>) src(%631 : memref<1x128xf32, #tpu.memory_space<any>>) dst(%633 : memref<1x128xf32, #tpu.memory_space<vmem>>)
    %c0_i32_475 = arith.constant 0 : i32
    %c0_i32_476 = arith.constant 0 : i32
    %636 = tpu.memref_slice %arg3[%c0_i32_475, %c0_i32_476] : memref<33x128xf32, #tpu.memory_space<any>> -> memref<1x128xf32, #tpu.memory_space<any>>
    %c21_i32_477 = arith.constant 21 : i32
    %c0_i32_478 = arith.constant 0 : i32
    %637 = tpu.memref_slice %arg5[%526, %c21_i32_477, %c0_i32_478] : memref<2x64x128xf32, #tpu.memory_space<vmem>> -> memref<1x1x128xf32, #tpu.memory_space<vmem>>
    %638 = tpu.memref_squeeze %637 : memref<1x1x128xf32, #tpu.memory_space<vmem>> -> memref<1x128xf32, #tpu.memory_space<vmem>>
    %639 = tpu.memref_slice %arg7[%526] : memref<2x!tpu.dma_semaphore, #tpu.memory_space<semaphore_mem>> -> memref<1x!tpu.dma_semaphore, #tpu.memory_space<semaphore_mem>>
    %640 = tpu.memref_squeeze %639 : memref<1x!tpu.dma_semaphore, #tpu.memory_space<semaphore_mem>> -> memref<!tpu.dma_semaphore, #tpu.memory_space<semaphore_mem>>
    tpu.wait_dma2 semaphore(%640 : memref<!tpu.dma_semaphore, #tpu.memory_space<semaphore_mem>>) src(%636 : memref<1x128xf32, #tpu.memory_space<any>>) dst(%638 : memref<1x128xf32, #tpu.memory_space<vmem>>)
    %c0_i32_479 = arith.constant 0 : i32
    %c0_i32_480 = arith.constant 0 : i32
    %641 = tpu.memref_slice %arg3[%c0_i32_479, %c0_i32_480] : memref<33x128xf32, #tpu.memory_space<any>> -> memref<1x128xf32, #tpu.memory_space<any>>
    %c22_i32_481 = arith.constant 22 : i32
    %c0_i32_482 = arith.constant 0 : i32
    %642 = tpu.memref_slice %arg5[%526, %c22_i32_481, %c0_i32_482] : memref<2x64x128xf32, #tpu.memory_space<vmem>> -> memref<1x1x128xf32, #tpu.memory_space<vmem>>
    %643 = tpu.memref_squeeze %642 : memref<1x1x128xf32, #tpu.memory_space<vmem>> -> memref<1x128xf32, #tpu.memory_space<vmem>>
    %644 = tpu.memref_slice %arg7[%526] : memref<2x!tpu.dma_semaphore, #tpu.memory_space<semaphore_mem>> -> memref<1x!tpu.dma_semaphore, #tpu.memory_space<semaphore_mem>>
    %645 = tpu.memref_squeeze %644 : memref<1x!tpu.dma_semaphore, #tpu.memory_space<semaphore_mem>> -> memref<!tpu.dma_semaphore, #tpu.memory_space<semaphore_mem>>
    tpu.wait_dma2 semaphore(%645 : memref<!tpu.dma_semaphore, #tpu.memory_space<semaphore_mem>>) src(%641 : memref<1x128xf32, #tpu.memory_space<any>>) dst(%643 : memref<1x128xf32, #tpu.memory_space<vmem>>)
    %c0_i32_483 = arith.constant 0 : i32
    %c0_i32_484 = arith.constant 0 : i32
    %646 = tpu.memref_slice %arg3[%c0_i32_483, %c0_i32_484] : memref<33x128xf32, #tpu.memory_space<any>> -> memref<1x128xf32, #tpu.memory_space<any>>
    %c23_i32_485 = arith.constant 23 : i32
    %c0_i32_486 = arith.constant 0 : i32
    %647 = tpu.memref_slice %arg5[%526, %c23_i32_485, %c0_i32_486] : memref<2x64x128xf32, #tpu.memory_space<vmem>> -> memref<1x1x128xf32, #tpu.memory_space<vmem>>
    %648 = tpu.memref_squeeze %647 : memref<1x1x128xf32, #tpu.memory_space<vmem>> -> memref<1x128xf32, #tpu.memory_space<vmem>>
    %649 = tpu.memref_slice %arg7[%526] : memref<2x!tpu.dma_semaphore, #tpu.memory_space<semaphore_mem>> -> memref<1x!tpu.dma_semaphore, #tpu.memory_space<semaphore_mem>>
    %650 = tpu.memref_squeeze %649 : memref<1x!tpu.dma_semaphore, #tpu.memory_space<semaphore_mem>> -> memref<!tpu.dma_semaphore, #tpu.memory_space<semaphore_mem>>
    tpu.wait_dma2 semaphore(%650 : memref<!tpu.dma_semaphore, #tpu.memory_space<semaphore_mem>>) src(%646 : memref<1x128xf32, #tpu.memory_space<any>>) dst(%648 : memref<1x128xf32, #tpu.memory_space<vmem>>)
    %c0_i32_487 = arith.constant 0 : i32
    %c0_i32_488 = arith.constant 0 : i32
    %651 = tpu.memref_slice %arg3[%c0_i32_487, %c0_i32_488] : memref<33x128xf32, #tpu.memory_space<any>> -> memref<1x128xf32, #tpu.memory_space<any>>
    %c24_i32_489 = arith.constant 24 : i32
    %c0_i32_490 = arith.constant 0 : i32
    %652 = tpu.memref_slice %arg5[%526, %c24_i32_489, %c0_i32_490] : memref<2x64x128xf32, #tpu.memory_space<vmem>> -> memref<1x1x128xf32, #tpu.memory_space<vmem>>
    %653 = tpu.memref_squeeze %652 : memref<1x1x128xf32, #tpu.memory_space<vmem>> -> memref<1x128xf32, #tpu.memory_space<vmem>>
    %654 = tpu.memref_slice %arg7[%526] : memref<2x!tpu.dma_semaphore, #tpu.memory_space<semaphore_mem>> -> memref<1x!tpu.dma_semaphore, #tpu.memory_space<semaphore_mem>>
    %655 = tpu.memref_squeeze %654 : memref<1x!tpu.dma_semaphore, #tpu.memory_space<semaphore_mem>> -> memref<!tpu.dma_semaphore, #tpu.memory_space<semaphore_mem>>
    tpu.wait_dma2 semaphore(%655 : memref<!tpu.dma_semaphore, #tpu.memory_space<semaphore_mem>>) src(%651 : memref<1x128xf32, #tpu.memory_space<any>>) dst(%653 : memref<1x128xf32, #tpu.memory_space<vmem>>)
    %c0_i32_491 = arith.constant 0 : i32
    %c0_i32_492 = arith.constant 0 : i32
    %656 = tpu.memref_slice %arg3[%c0_i32_491, %c0_i32_492] : memref<33x128xf32, #tpu.memory_space<any>> -> memref<1x128xf32, #tpu.memory_space<any>>
    %c25_i32_493 = arith.constant 25 : i32
    %c0_i32_494 = arith.constant 0 : i32
    %657 = tpu.memref_slice %arg5[%526, %c25_i32_493, %c0_i32_494] : memref<2x64x128xf32, #tpu.memory_space<vmem>> -> memref<1x1x128xf32, #tpu.memory_space<vmem>>
    %658 = tpu.memref_squeeze %657 : memref<1x1x128xf32, #tpu.memory_space<vmem>> -> memref<1x128xf32, #tpu.memory_space<vmem>>
    %659 = tpu.memref_slice %arg7[%526] : memref<2x!tpu.dma_semaphore, #tpu.memory_space<semaphore_mem>> -> memref<1x!tpu.dma_semaphore, #tpu.memory_space<semaphore_mem>>
    %660 = tpu.memref_squeeze %659 : memref<1x!tpu.dma_semaphore, #tpu.memory_space<semaphore_mem>> -> memref<!tpu.dma_semaphore, #tpu.memory_space<semaphore_mem>>
    tpu.wait_dma2 semaphore(%660 : memref<!tpu.dma_semaphore, #tpu.memory_space<semaphore_mem>>) src(%656 : memref<1x128xf32, #tpu.memory_space<any>>) dst(%658 : memref<1x128xf32, #tpu.memory_space<vmem>>)
    %c0_i32_495 = arith.constant 0 : i32
    %c0_i32_496 = arith.constant 0 : i32
    %661 = tpu.memref_slice %arg3[%c0_i32_495, %c0_i32_496] : memref<33x128xf32, #tpu.memory_space<any>> -> memref<1x128xf32, #tpu.memory_space<any>>
    %c26_i32_497 = arith.constant 26 : i32
    %c0_i32_498 = arith.constant 0 : i32
    %662 = tpu.memref_slice %arg5[%526, %c26_i32_497, %c0_i32_498] : memref<2x64x128xf32, #tpu.memory_space<vmem>> -> memref<1x1x128xf32, #tpu.memory_space<vmem>>
    %663 = tpu.memref_squeeze %662 : memref<1x1x128xf32, #tpu.memory_space<vmem>> -> memref<1x128xf32, #tpu.memory_space<vmem>>
    %664 = tpu.memref_slice %arg7[%526] : memref<2x!tpu.dma_semaphore, #tpu.memory_space<semaphore_mem>> -> memref<1x!tpu.dma_semaphore, #tpu.memory_space<semaphore_mem>>
    %665 = tpu.memref_squeeze %664 : memref<1x!tpu.dma_semaphore, #tpu.memory_space<semaphore_mem>> -> memref<!tpu.dma_semaphore, #tpu.memory_space<semaphore_mem>>
    tpu.wait_dma2 semaphore(%665 : memref<!tpu.dma_semaphore, #tpu.memory_space<semaphore_mem>>) src(%661 : memref<1x128xf32, #tpu.memory_space<any>>) dst(%663 : memref<1x128xf32, #tpu.memory_space<vmem>>)
    %c0_i32_499 = arith.constant 0 : i32
    %c0_i32_500 = arith.constant 0 : i32
    %666 = tpu.memref_slice %arg3[%c0_i32_499, %c0_i32_500] : memref<33x128xf32, #tpu.memory_space<any>> -> memref<1x128xf32, #tpu.memory_space<any>>
    %c27_i32_501 = arith.constant 27 : i32
    %c0_i32_502 = arith.constant 0 : i32
    %667 = tpu.memref_slice %arg5[%526, %c27_i32_501, %c0_i32_502] : memref<2x64x128xf32, #tpu.memory_space<vmem>> -> memref<1x1x128xf32, #tpu.memory_space<vmem>>
    %668 = tpu.memref_squeeze %667 : memref<1x1x128xf32, #tpu.memory_space<vmem>> -> memref<1x128xf32, #tpu.memory_space<vmem>>
    %669 = tpu.memref_slice %arg7[%526] : memref<2x!tpu.dma_semaphore, #tpu.memory_space<semaphore_mem>> -> memref<1x!tpu.dma_semaphore, #tpu.memory_space<semaphore_mem>>
    %670 = tpu.memref_squeeze %669 : memref<1x!tpu.dma_semaphore, #tpu.memory_space<semaphore_mem>> -> memref<!tpu.dma_semaphore, #tpu.memory_space<semaphore_mem>>
    tpu.wait_dma2 semaphore(%670 : memref<!tpu.dma_semaphore, #tpu.memory_space<semaphore_mem>>) src(%666 : memref<1x128xf32, #tpu.memory_space<any>>) dst(%668 : memref<1x128xf32, #tpu.memory_space<vmem>>)
    %c0_i32_503 = arith.constant 0 : i32
    %c0_i32_504 = arith.constant 0 : i32
    %671 = tpu.memref_slice %arg3[%c0_i32_503, %c0_i32_504] : memref<33x128xf32, #tpu.memory_space<any>> -> memref<1x128xf32, #tpu.memory_space<any>>
    %c28_i32_505 = arith.constant 28 : i32
    %c0_i32_506 = arith.constant 0 : i32
    %672 = tpu.memref_slice %arg5[%526, %c28_i32_505, %c0_i32_506] : memref<2x64x128xf32, #tpu.memory_space<vmem>> -> memref<1x1x128xf32, #tpu.memory_space<vmem>>
    %673 = tpu.memref_squeeze %672 : memref<1x1x128xf32, #tpu.memory_space<vmem>> -> memref<1x128xf32, #tpu.memory_space<vmem>>
    %674 = tpu.memref_slice %arg7[%526] : memref<2x!tpu.dma_semaphore, #tpu.memory_space<semaphore_mem>> -> memref<1x!tpu.dma_semaphore, #tpu.memory_space<semaphore_mem>>
    %675 = tpu.memref_squeeze %674 : memref<1x!tpu.dma_semaphore, #tpu.memory_space<semaphore_mem>> -> memref<!tpu.dma_semaphore, #tpu.memory_space<semaphore_mem>>
    tpu.wait_dma2 semaphore(%675 : memref<!tpu.dma_semaphore, #tpu.memory_space<semaphore_mem>>) src(%671 : memref<1x128xf32, #tpu.memory_space<any>>) dst(%673 : memref<1x128xf32, #tpu.memory_space<vmem>>)
    %c0_i32_507 = arith.constant 0 : i32
    %c0_i32_508 = arith.constant 0 : i32
    %676 = tpu.memref_slice %arg3[%c0_i32_507, %c0_i32_508] : memref<33x128xf32, #tpu.memory_space<any>> -> memref<1x128xf32, #tpu.memory_space<any>>
    %c29_i32_509 = arith.constant 29 : i32
    %c0_i32_510 = arith.constant 0 : i32
    %677 = tpu.memref_slice %arg5[%526, %c29_i32_509, %c0_i32_510] : memref<2x64x128xf32, #tpu.memory_space<vmem>> -> memref<1x1x128xf32, #tpu.memory_space<vmem>>
    %678 = tpu.memref_squeeze %677 : memref<1x1x128xf32, #tpu.memory_space<vmem>> -> memref<1x128xf32, #tpu.memory_space<vmem>>
    %679 = tpu.memref_slice %arg7[%526] : memref<2x!tpu.dma_semaphore, #tpu.memory_space<semaphore_mem>> -> memref<1x!tpu.dma_semaphore, #tpu.memory_space<semaphore_mem>>
    %680 = tpu.memref_squeeze %679 : memref<1x!tpu.dma_semaphore, #tpu.memory_space<semaphore_mem>> -> memref<!tpu.dma_semaphore, #tpu.memory_space<semaphore_mem>>
    tpu.wait_dma2 semaphore(%680 : memref<!tpu.dma_semaphore, #tpu.memory_space<semaphore_mem>>) src(%676 : memref<1x128xf32, #tpu.memory_space<any>>) dst(%678 : memref<1x128xf32, #tpu.memory_space<vmem>>)
    %c0_i32_511 = arith.constant 0 : i32
    %c0_i32_512 = arith.constant 0 : i32
    %681 = tpu.memref_slice %arg3[%c0_i32_511, %c0_i32_512] : memref<33x128xf32, #tpu.memory_space<any>> -> memref<1x128xf32, #tpu.memory_space<any>>
    %c30_i32_513 = arith.constant 30 : i32
    %c0_i32_514 = arith.constant 0 : i32
    %682 = tpu.memref_slice %arg5[%526, %c30_i32_513, %c0_i32_514] : memref<2x64x128xf32, #tpu.memory_space<vmem>> -> memref<1x1x128xf32, #tpu.memory_space<vmem>>
    %683 = tpu.memref_squeeze %682 : memref<1x1x128xf32, #tpu.memory_space<vmem>> -> memref<1x128xf32, #tpu.memory_space<vmem>>
    %684 = tpu.memref_slice %arg7[%526] : memref<2x!tpu.dma_semaphore, #tpu.memory_space<semaphore_mem>> -> memref<1x!tpu.dma_semaphore, #tpu.memory_space<semaphore_mem>>
    %685 = tpu.memref_squeeze %684 : memref<1x!tpu.dma_semaphore, #tpu.memory_space<semaphore_mem>> -> memref<!tpu.dma_semaphore, #tpu.memory_space<semaphore_mem>>
    tpu.wait_dma2 semaphore(%685 : memref<!tpu.dma_semaphore, #tpu.memory_space<semaphore_mem>>) src(%681 : memref<1x128xf32, #tpu.memory_space<any>>) dst(%683 : memref<1x128xf32, #tpu.memory_space<vmem>>)
    %c0_i32_515 = arith.constant 0 : i32
    %c0_i32_516 = arith.constant 0 : i32
    %686 = tpu.memref_slice %arg3[%c0_i32_515, %c0_i32_516] : memref<33x128xf32, #tpu.memory_space<any>> -> memref<1x128xf32, #tpu.memory_space<any>>
    %c31_i32_517 = arith.constant 31 : i32
    %c0_i32_518 = arith.constant 0 : i32
    %687 = tpu.memref_slice %arg5[%526, %c31_i32_517, %c0_i32_518] : memref<2x64x128xf32, #tpu.memory_space<vmem>> -> memref<1x1x128xf32, #tpu.memory_space<vmem>>
    %688 = tpu.memref_squeeze %687 : memref<1x1x128xf32, #tpu.memory_space<vmem>> -> memref<1x128xf32, #tpu.memory_space<vmem>>
    %689 = tpu.memref_slice %arg7[%526] : memref<2x!tpu.dma_semaphore, #tpu.memory_space<semaphore_mem>> -> memref<1x!tpu.dma_semaphore, #tpu.memory_space<semaphore_mem>>
    %690 = tpu.memref_squeeze %689 : memref<1x!tpu.dma_semaphore, #tpu.memory_space<semaphore_mem>> -> memref<!tpu.dma_semaphore, #tpu.memory_space<semaphore_mem>>
    tpu.wait_dma2 semaphore(%690 : memref<!tpu.dma_semaphore, #tpu.memory_space<semaphore_mem>>) src(%686 : memref<1x128xf32, #tpu.memory_space<any>>) dst(%688 : memref<1x128xf32, #tpu.memory_space<vmem>>)
    %c0_i32_519 = arith.constant 0 : i32
    %c0_i32_520 = arith.constant 0 : i32
    %691 = tpu.memref_slice %arg3[%c0_i32_519, %c0_i32_520] : memref<33x128xf32, #tpu.memory_space<any>> -> memref<1x128xf32, #tpu.memory_space<any>>
    %c32_i32_521 = arith.constant 32 : i32
    %c0_i32_522 = arith.constant 0 : i32
    %692 = tpu.memref_slice %arg5[%526, %c32_i32_521, %c0_i32_522] : memref<2x64x128xf32, #tpu.memory_space<vmem>> -> memref<1x1x128xf32, #tpu.memory_space<vmem>>
    %693 = tpu.memref_squeeze %692 : memref<1x1x128xf32, #tpu.memory_space<vmem>> -> memref<1x128xf32, #tpu.memory_space<vmem>>
    %694 = tpu.memref_slice %arg7[%526] : memref<2x!tpu.dma_semaphore, #tpu.memory_space<semaphore_mem>> -> memref<1x!tpu.dma_semaphore, #tpu.memory_space<semaphore_mem>>
    %695 = tpu.memref_squeeze %694 : memref<1x!tpu.dma_semaphore, #tpu.memory_space<semaphore_mem>> -> memref<!tpu.dma_semaphore, #tpu.memory_space<semaphore_mem>>
    tpu.wait_dma2 semaphore(%695 : memref<!tpu.dma_semaphore, #tpu.memory_space<semaphore_mem>>) src(%691 : memref<1x128xf32, #tpu.memory_space<any>>) dst(%693 : memref<1x128xf32, #tpu.memory_space<vmem>>)
    %c0_i32_523 = arith.constant 0 : i32
    %c0_i32_524 = arith.constant 0 : i32
    %696 = tpu.memref_slice %arg3[%c0_i32_523, %c0_i32_524] : memref<33x128xf32, #tpu.memory_space<any>> -> memref<1x128xf32, #tpu.memory_space<any>>
    %c33_i32_525 = arith.constant 33 : i32
    %c0_i32_526 = arith.constant 0 : i32
    %697 = tpu.memref_slice %arg5[%526, %c33_i32_525, %c0_i32_526] : memref<2x64x128xf32, #tpu.memory_space<vmem>> -> memref<1x1x128xf32, #tpu.memory_space<vmem>>
    %698 = tpu.memref_squeeze %697 : memref<1x1x128xf32, #tpu.memory_space<vmem>> -> memref<1x128xf32, #tpu.memory_space<vmem>>
    %699 = tpu.memref_slice %arg7[%526] : memref<2x!tpu.dma_semaphore, #tpu.memory_space<semaphore_mem>> -> memref<1x!tpu.dma_semaphore, #tpu.memory_space<semaphore_mem>>
    %700 = tpu.memref_squeeze %699 : memref<1x!tpu.dma_semaphore, #tpu.memory_space<semaphore_mem>> -> memref<!tpu.dma_semaphore, #tpu.memory_space<semaphore_mem>>
    tpu.wait_dma2 semaphore(%700 : memref<!tpu.dma_semaphore, #tpu.memory_space<semaphore_mem>>) src(%696 : memref<1x128xf32, #tpu.memory_space<any>>) dst(%698 : memref<1x128xf32, #tpu.memory_space<vmem>>)
    %c0_i32_527 = arith.constant 0 : i32
    %c0_i32_528 = arith.constant 0 : i32
    %701 = tpu.memref_slice %arg3[%c0_i32_527, %c0_i32_528] : memref<33x128xf32, #tpu.memory_space<any>> -> memref<1x128xf32, #tpu.memory_space<any>>
    %c34_i32_529 = arith.constant 34 : i32
    %c0_i32_530 = arith.constant 0 : i32
    %702 = tpu.memref_slice %arg5[%526, %c34_i32_529, %c0_i32_530] : memref<2x64x128xf32, #tpu.memory_space<vmem>> -> memref<1x1x128xf32, #tpu.memory_space<vmem>>
    %703 = tpu.memref_squeeze %702 : memref<1x1x128xf32, #tpu.memory_space<vmem>> -> memref<1x128xf32, #tpu.memory_space<vmem>>
    %704 = tpu.memref_slice %arg7[%526] : memref<2x!tpu.dma_semaphore, #tpu.memory_space<semaphore_mem>> -> memref<1x!tpu.dma_semaphore, #tpu.memory_space<semaphore_mem>>
    %705 = tpu.memref_squeeze %704 : memref<1x!tpu.dma_semaphore, #tpu.memory_space<semaphore_mem>> -> memref<!tpu.dma_semaphore, #tpu.memory_space<semaphore_mem>>
    tpu.wait_dma2 semaphore(%705 : memref<!tpu.dma_semaphore, #tpu.memory_space<semaphore_mem>>) src(%701 : memref<1x128xf32, #tpu.memory_space<any>>) dst(%703 : memref<1x128xf32, #tpu.memory_space<vmem>>)
    %c0_i32_531 = arith.constant 0 : i32
    %c0_i32_532 = arith.constant 0 : i32
    %706 = tpu.memref_slice %arg3[%c0_i32_531, %c0_i32_532] : memref<33x128xf32, #tpu.memory_space<any>> -> memref<1x128xf32, #tpu.memory_space<any>>
    %c35_i32_533 = arith.constant 35 : i32
    %c0_i32_534 = arith.constant 0 : i32
    %707 = tpu.memref_slice %arg5[%526, %c35_i32_533, %c0_i32_534] : memref<2x64x128xf32, #tpu.memory_space<vmem>> -> memref<1x1x128xf32, #tpu.memory_space<vmem>>
    %708 = tpu.memref_squeeze %707 : memref<1x1x128xf32, #tpu.memory_space<vmem>> -> memref<1x128xf32, #tpu.memory_space<vmem>>
    %709 = tpu.memref_slice %arg7[%526] : memref<2x!tpu.dma_semaphore, #tpu.memory_space<semaphore_mem>> -> memref<1x!tpu.dma_semaphore, #tpu.memory_space<semaphore_mem>>
    %710 = tpu.memref_squeeze %709 : memref<1x!tpu.dma_semaphore, #tpu.memory_space<semaphore_mem>> -> memref<!tpu.dma_semaphore, #tpu.memory_space<semaphore_mem>>
    tpu.wait_dma2 semaphore(%710 : memref<!tpu.dma_semaphore, #tpu.memory_space<semaphore_mem>>) src(%706 : memref<1x128xf32, #tpu.memory_space<any>>) dst(%708 : memref<1x128xf32, #tpu.memory_space<vmem>>)
    %c0_i32_535 = arith.constant 0 : i32
    %c0_i32_536 = arith.constant 0 : i32
    %711 = tpu.memref_slice %arg3[%c0_i32_535, %c0_i32_536] : memref<33x128xf32, #tpu.memory_space<any>> -> memref<1x128xf32, #tpu.memory_space<any>>
    %c36_i32_537 = arith.constant 36 : i32
    %c0_i32_538 = arith.constant 0 : i32
    %712 = tpu.memref_slice %arg5[%526, %c36_i32_537, %c0_i32_538] : memref<2x64x128xf32, #tpu.memory_space<vmem>> -> memref<1x1x128xf32, #tpu.memory_space<vmem>>
    %713 = tpu.memref_squeeze %712 : memref<1x1x128xf32, #tpu.memory_space<vmem>> -> memref<1x128xf32, #tpu.memory_space<vmem>>
    %714 = tpu.memref_slice %arg7[%526] : memref<2x!tpu.dma_semaphore, #tpu.memory_space<semaphore_mem>> -> memref<1x!tpu.dma_semaphore, #tpu.memory_space<semaphore_mem>>
    %715 = tpu.memref_squeeze %714 : memref<1x!tpu.dma_semaphore, #tpu.memory_space<semaphore_mem>> -> memref<!tpu.dma_semaphore, #tpu.memory_space<semaphore_mem>>
    tpu.wait_dma2 semaphore(%715 : memref<!tpu.dma_semaphore, #tpu.memory_space<semaphore_mem>>) src(%711 : memref<1x128xf32, #tpu.memory_space<any>>) dst(%713 : memref<1x128xf32, #tpu.memory_space<vmem>>)
    %c0_i32_539 = arith.constant 0 : i32
    %c0_i32_540 = arith.constant 0 : i32
    %716 = tpu.memref_slice %arg3[%c0_i32_539, %c0_i32_540] : memref<33x128xf32, #tpu.memory_space<any>> -> memref<1x128xf32, #tpu.memory_space<any>>
    %c37_i32_541 = arith.constant 37 : i32
    %c0_i32_542 = arith.constant 0 : i32
    %717 = tpu.memref_slice %arg5[%526, %c37_i32_541, %c0_i32_542] : memref<2x64x128xf32, #tpu.memory_space<vmem>> -> memref<1x1x128xf32, #tpu.memory_space<vmem>>
    %718 = tpu.memref_squeeze %717 : memref<1x1x128xf32, #tpu.memory_space<vmem>> -> memref<1x128xf32, #tpu.memory_space<vmem>>
    %719 = tpu.memref_slice %arg7[%526] : memref<2x!tpu.dma_semaphore, #tpu.memory_space<semaphore_mem>> -> memref<1x!tpu.dma_semaphore, #tpu.memory_space<semaphore_mem>>
    %720 = tpu.memref_squeeze %719 : memref<1x!tpu.dma_semaphore, #tpu.memory_space<semaphore_mem>> -> memref<!tpu.dma_semaphore, #tpu.memory_space<semaphore_mem>>
    tpu.wait_dma2 semaphore(%720 : memref<!tpu.dma_semaphore, #tpu.memory_space<semaphore_mem>>) src(%716 : memref<1x128xf32, #tpu.memory_space<any>>) dst(%718 : memref<1x128xf32, #tpu.memory_space<vmem>>)
    %c0_i32_543 = arith.constant 0 : i32
    %c0_i32_544 = arith.constant 0 : i32
    %721 = tpu.memref_slice %arg3[%c0_i32_543, %c0_i32_544] : memref<33x128xf32, #tpu.memory_space<any>> -> memref<1x128xf32, #tpu.memory_space<any>>
    %c38_i32_545 = arith.constant 38 : i32
    %c0_i32_546 = arith.constant 0 : i32
    %722 = tpu.memref_slice %arg5[%526, %c38_i32_545, %c0_i32_546] : memref<2x64x128xf32, #tpu.memory_space<vmem>> -> memref<1x1x128xf32, #tpu.memory_space<vmem>>
    %723 = tpu.memref_squeeze %722 : memref<1x1x128xf32, #tpu.memory_space<vmem>> -> memref<1x128xf32, #tpu.memory_space<vmem>>
    %724 = tpu.memref_slice %arg7[%526] : memref<2x!tpu.dma_semaphore, #tpu.memory_space<semaphore_mem>> -> memref<1x!tpu.dma_semaphore, #tpu.memory_space<semaphore_mem>>
    %725 = tpu.memref_squeeze %724 : memref<1x!tpu.dma_semaphore, #tpu.memory_space<semaphore_mem>> -> memref<!tpu.dma_semaphore, #tpu.memory_space<semaphore_mem>>
    tpu.wait_dma2 semaphore(%725 : memref<!tpu.dma_semaphore, #tpu.memory_space<semaphore_mem>>) src(%721 : memref<1x128xf32, #tpu.memory_space<any>>) dst(%723 : memref<1x128xf32, #tpu.memory_space<vmem>>)
    %c0_i32_547 = arith.constant 0 : i32
    %c0_i32_548 = arith.constant 0 : i32
    %726 = tpu.memref_slice %arg3[%c0_i32_547, %c0_i32_548] : memref<33x128xf32, #tpu.memory_space<any>> -> memref<1x128xf32, #tpu.memory_space<any>>
    %c39_i32_549 = arith.constant 39 : i32
    %c0_i32_550 = arith.constant 0 : i32
    %727 = tpu.memref_slice %arg5[%526, %c39_i32_549, %c0_i32_550] : memref<2x64x128xf32, #tpu.memory_space<vmem>> -> memref<1x1x128xf32, #tpu.memory_space<vmem>>
    %728 = tpu.memref_squeeze %727 : memref<1x1x128xf32, #tpu.memory_space<vmem>> -> memref<1x128xf32, #tpu.memory_space<vmem>>
    %729 = tpu.memref_slice %arg7[%526] : memref<2x!tpu.dma_semaphore, #tpu.memory_space<semaphore_mem>> -> memref<1x!tpu.dma_semaphore, #tpu.memory_space<semaphore_mem>>
    %730 = tpu.memref_squeeze %729 : memref<1x!tpu.dma_semaphore, #tpu.memory_space<semaphore_mem>> -> memref<!tpu.dma_semaphore, #tpu.memory_space<semaphore_mem>>
    tpu.wait_dma2 semaphore(%730 : memref<!tpu.dma_semaphore, #tpu.memory_space<semaphore_mem>>) src(%726 : memref<1x128xf32, #tpu.memory_space<any>>) dst(%728 : memref<1x128xf32, #tpu.memory_space<vmem>>)
    %c0_i32_551 = arith.constant 0 : i32
    %c0_i32_552 = arith.constant 0 : i32
    %731 = tpu.memref_slice %arg3[%c0_i32_551, %c0_i32_552] : memref<33x128xf32, #tpu.memory_space<any>> -> memref<1x128xf32, #tpu.memory_space<any>>
    %c40_i32_553 = arith.constant 40 : i32
    %c0_i32_554 = arith.constant 0 : i32
    %732 = tpu.memref_slice %arg5[%526, %c40_i32_553, %c0_i32_554] : memref<2x64x128xf32, #tpu.memory_space<vmem>> -> memref<1x1x128xf32, #tpu.memory_space<vmem>>
    %733 = tpu.memref_squeeze %732 : memref<1x1x128xf32, #tpu.memory_space<vmem>> -> memref<1x128xf32, #tpu.memory_space<vmem>>
    %734 = tpu.memref_slice %arg7[%526] : memref<2x!tpu.dma_semaphore, #tpu.memory_space<semaphore_mem>> -> memref<1x!tpu.dma_semaphore, #tpu.memory_space<semaphore_mem>>
    %735 = tpu.memref_squeeze %734 : memref<1x!tpu.dma_semaphore, #tpu.memory_space<semaphore_mem>> -> memref<!tpu.dma_semaphore, #tpu.memory_space<semaphore_mem>>
    tpu.wait_dma2 semaphore(%735 : memref<!tpu.dma_semaphore, #tpu.memory_space<semaphore_mem>>) src(%731 : memref<1x128xf32, #tpu.memory_space<any>>) dst(%733 : memref<1x128xf32, #tpu.memory_space<vmem>>)
    %c0_i32_555 = arith.constant 0 : i32
    %c0_i32_556 = arith.constant 0 : i32
    %736 = tpu.memref_slice %arg3[%c0_i32_555, %c0_i32_556] : memref<33x128xf32, #tpu.memory_space<any>> -> memref<1x128xf32, #tpu.memory_space<any>>
    %c41_i32_557 = arith.constant 41 : i32
    %c0_i32_558 = arith.constant 0 : i32
    %737 = tpu.memref_slice %arg5[%526, %c41_i32_557, %c0_i32_558] : memref<2x64x128xf32, #tpu.memory_space<vmem>> -> memref<1x1x128xf32, #tpu.memory_space<vmem>>
    %738 = tpu.memref_squeeze %737 : memref<1x1x128xf32, #tpu.memory_space<vmem>> -> memref<1x128xf32, #tpu.memory_space<vmem>>
    %739 = tpu.memref_slice %arg7[%526] : memref<2x!tpu.dma_semaphore, #tpu.memory_space<semaphore_mem>> -> memref<1x!tpu.dma_semaphore, #tpu.memory_space<semaphore_mem>>
    %740 = tpu.memref_squeeze %739 : memref<1x!tpu.dma_semaphore, #tpu.memory_space<semaphore_mem>> -> memref<!tpu.dma_semaphore, #tpu.memory_space<semaphore_mem>>
    tpu.wait_dma2 semaphore(%740 : memref<!tpu.dma_semaphore, #tpu.memory_space<semaphore_mem>>) src(%736 : memref<1x128xf32, #tpu.memory_space<any>>) dst(%738 : memref<1x128xf32, #tpu.memory_space<vmem>>)
    %c0_i32_559 = arith.constant 0 : i32
    %c0_i32_560 = arith.constant 0 : i32
    %741 = tpu.memref_slice %arg3[%c0_i32_559, %c0_i32_560] : memref<33x128xf32, #tpu.memory_space<any>> -> memref<1x128xf32, #tpu.memory_space<any>>
    %c42_i32_561 = arith.constant 42 : i32
    %c0_i32_562 = arith.constant 0 : i32
    %742 = tpu.memref_slice %arg5[%526, %c42_i32_561, %c0_i32_562] : memref<2x64x128xf32, #tpu.memory_space<vmem>> -> memref<1x1x128xf32, #tpu.memory_space<vmem>>
    %743 = tpu.memref_squeeze %742 : memref<1x1x128xf32, #tpu.memory_space<vmem>> -> memref<1x128xf32, #tpu.memory_space<vmem>>
    %744 = tpu.memref_slice %arg7[%526] : memref<2x!tpu.dma_semaphore, #tpu.memory_space<semaphore_mem>> -> memref<1x!tpu.dma_semaphore, #tpu.memory_space<semaphore_mem>>
    %745 = tpu.memref_squeeze %744 : memref<1x!tpu.dma_semaphore, #tpu.memory_space<semaphore_mem>> -> memref<!tpu.dma_semaphore, #tpu.memory_space<semaphore_mem>>
    tpu.wait_dma2 semaphore(%745 : memref<!tpu.dma_semaphore, #tpu.memory_space<semaphore_mem>>) src(%741 : memref<1x128xf32, #tpu.memory_space<any>>) dst(%743 : memref<1x128xf32, #tpu.memory_space<vmem>>)
    %c0_i32_563 = arith.constant 0 : i32
    %c0_i32_564 = arith.constant 0 : i32
    %746 = tpu.memref_slice %arg3[%c0_i32_563, %c0_i32_564] : memref<33x128xf32, #tpu.memory_space<any>> -> memref<1x128xf32, #tpu.memory_space<any>>
    %c43_i32_565 = arith.constant 43 : i32
    %c0_i32_566 = arith.constant 0 : i32
    %747 = tpu.memref_slice %arg5[%526, %c43_i32_565, %c0_i32_566] : memref<2x64x128xf32, #tpu.memory_space<vmem>> -> memref<1x1x128xf32, #tpu.memory_space<vmem>>
    %748 = tpu.memref_squeeze %747 : memref<1x1x128xf32, #tpu.memory_space<vmem>> -> memref<1x128xf32, #tpu.memory_space<vmem>>
    %749 = tpu.memref_slice %arg7[%526] : memref<2x!tpu.dma_semaphore, #tpu.memory_space<semaphore_mem>> -> memref<1x!tpu.dma_semaphore, #tpu.memory_space<semaphore_mem>>
    %750 = tpu.memref_squeeze %749 : memref<1x!tpu.dma_semaphore, #tpu.memory_space<semaphore_mem>> -> memref<!tpu.dma_semaphore, #tpu.memory_space<semaphore_mem>>
    tpu.wait_dma2 semaphore(%750 : memref<!tpu.dma_semaphore, #tpu.memory_space<semaphore_mem>>) src(%746 : memref<1x128xf32, #tpu.memory_space<any>>) dst(%748 : memref<1x128xf32, #tpu.memory_space<vmem>>)
    %c0_i32_567 = arith.constant 0 : i32
    %c0_i32_568 = arith.constant 0 : i32
    %751 = tpu.memref_slice %arg3[%c0_i32_567, %c0_i32_568] : memref<33x128xf32, #tpu.memory_space<any>> -> memref<1x128xf32, #tpu.memory_space<any>>
    %c44_i32_569 = arith.constant 44 : i32
    %c0_i32_570 = arith.constant 0 : i32
    %752 = tpu.memref_slice %arg5[%526, %c44_i32_569, %c0_i32_570] : memref<2x64x128xf32, #tpu.memory_space<vmem>> -> memref<1x1x128xf32, #tpu.memory_space<vmem>>
    %753 = tpu.memref_squeeze %752 : memref<1x1x128xf32, #tpu.memory_space<vmem>> -> memref<1x128xf32, #tpu.memory_space<vmem>>
    %754 = tpu.memref_slice %arg7[%526] : memref<2x!tpu.dma_semaphore, #tpu.memory_space<semaphore_mem>> -> memref<1x!tpu.dma_semaphore, #tpu.memory_space<semaphore_mem>>
    %755 = tpu.memref_squeeze %754 : memref<1x!tpu.dma_semaphore, #tpu.memory_space<semaphore_mem>> -> memref<!tpu.dma_semaphore, #tpu.memory_space<semaphore_mem>>
    tpu.wait_dma2 semaphore(%755 : memref<!tpu.dma_semaphore, #tpu.memory_space<semaphore_mem>>) src(%751 : memref<1x128xf32, #tpu.memory_space<any>>) dst(%753 : memref<1x128xf32, #tpu.memory_space<vmem>>)
    %c0_i32_571 = arith.constant 0 : i32
    %c0_i32_572 = arith.constant 0 : i32
    %756 = tpu.memref_slice %arg3[%c0_i32_571, %c0_i32_572] : memref<33x128xf32, #tpu.memory_space<any>> -> memref<1x128xf32, #tpu.memory_space<any>>
    %c45_i32_573 = arith.constant 45 : i32
    %c0_i32_574 = arith.constant 0 : i32
    %757 = tpu.memref_slice %arg5[%526, %c45_i32_573, %c0_i32_574] : memref<2x64x128xf32, #tpu.memory_space<vmem>> -> memref<1x1x128xf32, #tpu.memory_space<vmem>>
    %758 = tpu.memref_squeeze %757 : memref<1x1x128xf32, #tpu.memory_space<vmem>> -> memref<1x128xf32, #tpu.memory_space<vmem>>
    %759 = tpu.memref_slice %arg7[%526] : memref<2x!tpu.dma_semaphore, #tpu.memory_space<semaphore_mem>> -> memref<1x!tpu.dma_semaphore, #tpu.memory_space<semaphore_mem>>
    %760 = tpu.memref_squeeze %759 : memref<1x!tpu.dma_semaphore, #tpu.memory_space<semaphore_mem>> -> memref<!tpu.dma_semaphore, #tpu.memory_space<semaphore_mem>>
    tpu.wait_dma2 semaphore(%760 : memref<!tpu.dma_semaphore, #tpu.memory_space<semaphore_mem>>) src(%756 : memref<1x128xf32, #tpu.memory_space<any>>) dst(%758 : memref<1x128xf32, #tpu.memory_space<vmem>>)
    %c0_i32_575 = arith.constant 0 : i32
    %c0_i32_576 = arith.constant 0 : i32
    %761 = tpu.memref_slice %arg3[%c0_i32_575, %c0_i32_576] : memref<33x128xf32, #tpu.memory_space<any>> -> memref<1x128xf32, #tpu.memory_space<any>>
    %c46_i32_577 = arith.constant 46 : i32
    %c0_i32_578 = arith.constant 0 : i32
    %762 = tpu.memref_slice %arg5[%526, %c46_i32_577, %c0_i32_578] : memref<2x64x128xf32, #tpu.memory_space<vmem>> -> memref<1x1x128xf32, #tpu.memory_space<vmem>>
    %763 = tpu.memref_squeeze %762 : memref<1x1x128xf32, #tpu.memory_space<vmem>> -> memref<1x128xf32, #tpu.memory_space<vmem>>
    %764 = tpu.memref_slice %arg7[%526] : memref<2x!tpu.dma_semaphore, #tpu.memory_space<semaphore_mem>> -> memref<1x!tpu.dma_semaphore, #tpu.memory_space<semaphore_mem>>
    %765 = tpu.memref_squeeze %764 : memref<1x!tpu.dma_semaphore, #tpu.memory_space<semaphore_mem>> -> memref<!tpu.dma_semaphore, #tpu.memory_space<semaphore_mem>>
    tpu.wait_dma2 semaphore(%765 : memref<!tpu.dma_semaphore, #tpu.memory_space<semaphore_mem>>) src(%761 : memref<1x128xf32, #tpu.memory_space<any>>) dst(%763 : memref<1x128xf32, #tpu.memory_space<vmem>>)
    %c0_i32_579 = arith.constant 0 : i32
    %c0_i32_580 = arith.constant 0 : i32
    %766 = tpu.memref_slice %arg3[%c0_i32_579, %c0_i32_580] : memref<33x128xf32, #tpu.memory_space<any>> -> memref<1x128xf32, #tpu.memory_space<any>>
    %c47_i32_581 = arith.constant 47 : i32
    %c0_i32_582 = arith.constant 0 : i32
    %767 = tpu.memref_slice %arg5[%526, %c47_i32_581, %c0_i32_582] : memref<2x64x128xf32, #tpu.memory_space<vmem>> -> memref<1x1x128xf32, #tpu.memory_space<vmem>>
    %768 = tpu.memref_squeeze %767 : memref<1x1x128xf32, #tpu.memory_space<vmem>> -> memref<1x128xf32, #tpu.memory_space<vmem>>
    %769 = tpu.memref_slice %arg7[%526] : memref<2x!tpu.dma_semaphore, #tpu.memory_space<semaphore_mem>> -> memref<1x!tpu.dma_semaphore, #tpu.memory_space<semaphore_mem>>
    %770 = tpu.memref_squeeze %769 : memref<1x!tpu.dma_semaphore, #tpu.memory_space<semaphore_mem>> -> memref<!tpu.dma_semaphore, #tpu.memory_space<semaphore_mem>>
    tpu.wait_dma2 semaphore(%770 : memref<!tpu.dma_semaphore, #tpu.memory_space<semaphore_mem>>) src(%766 : memref<1x128xf32, #tpu.memory_space<any>>) dst(%768 : memref<1x128xf32, #tpu.memory_space<vmem>>)
    %c0_i32_583 = arith.constant 0 : i32
    %c0_i32_584 = arith.constant 0 : i32
    %771 = tpu.memref_slice %arg3[%c0_i32_583, %c0_i32_584] : memref<33x128xf32, #tpu.memory_space<any>> -> memref<1x128xf32, #tpu.memory_space<any>>
    %c48_i32_585 = arith.constant 48 : i32
    %c0_i32_586 = arith.constant 0 : i32
    %772 = tpu.memref_slice %arg5[%526, %c48_i32_585, %c0_i32_586] : memref<2x64x128xf32, #tpu.memory_space<vmem>> -> memref<1x1x128xf32, #tpu.memory_space<vmem>>
    %773 = tpu.memref_squeeze %772 : memref<1x1x128xf32, #tpu.memory_space<vmem>> -> memref<1x128xf32, #tpu.memory_space<vmem>>
    %774 = tpu.memref_slice %arg7[%526] : memref<2x!tpu.dma_semaphore, #tpu.memory_space<semaphore_mem>> -> memref<1x!tpu.dma_semaphore, #tpu.memory_space<semaphore_mem>>
    %775 = tpu.memref_squeeze %774 : memref<1x!tpu.dma_semaphore, #tpu.memory_space<semaphore_mem>> -> memref<!tpu.dma_semaphore, #tpu.memory_space<semaphore_mem>>
    tpu.wait_dma2 semaphore(%775 : memref<!tpu.dma_semaphore, #tpu.memory_space<semaphore_mem>>) src(%771 : memref<1x128xf32, #tpu.memory_space<any>>) dst(%773 : memref<1x128xf32, #tpu.memory_space<vmem>>)
    %c0_i32_587 = arith.constant 0 : i32
    %c0_i32_588 = arith.constant 0 : i32
    %776 = tpu.memref_slice %arg3[%c0_i32_587, %c0_i32_588] : memref<33x128xf32, #tpu.memory_space<any>> -> memref<1x128xf32, #tpu.memory_space<any>>
    %c49_i32_589 = arith.constant 49 : i32
    %c0_i32_590 = arith.constant 0 : i32
    %777 = tpu.memref_slice %arg5[%526, %c49_i32_589, %c0_i32_590] : memref<2x64x128xf32, #tpu.memory_space<vmem>> -> memref<1x1x128xf32, #tpu.memory_space<vmem>>
    %778 = tpu.memref_squeeze %777 : memref<1x1x128xf32, #tpu.memory_space<vmem>> -> memref<1x128xf32, #tpu.memory_space<vmem>>
    %779 = tpu.memref_slice %arg7[%526] : memref<2x!tpu.dma_semaphore, #tpu.memory_space<semaphore_mem>> -> memref<1x!tpu.dma_semaphore, #tpu.memory_space<semaphore_mem>>
    %780 = tpu.memref_squeeze %779 : memref<1x!tpu.dma_semaphore, #tpu.memory_space<semaphore_mem>> -> memref<!tpu.dma_semaphore, #tpu.memory_space<semaphore_mem>>
    tpu.wait_dma2 semaphore(%780 : memref<!tpu.dma_semaphore, #tpu.memory_space<semaphore_mem>>) src(%776 : memref<1x128xf32, #tpu.memory_space<any>>) dst(%778 : memref<1x128xf32, #tpu.memory_space<vmem>>)
    %c0_i32_591 = arith.constant 0 : i32
    %c0_i32_592 = arith.constant 0 : i32
    %781 = tpu.memref_slice %arg3[%c0_i32_591, %c0_i32_592] : memref<33x128xf32, #tpu.memory_space<any>> -> memref<1x128xf32, #tpu.memory_space<any>>
    %c50_i32_593 = arith.constant 50 : i32
    %c0_i32_594 = arith.constant 0 : i32
    %782 = tpu.memref_slice %arg5[%526, %c50_i32_593, %c0_i32_594] : memref<2x64x128xf32, #tpu.memory_space<vmem>> -> memref<1x1x128xf32, #tpu.memory_space<vmem>>
    %783 = tpu.memref_squeeze %782 : memref<1x1x128xf32, #tpu.memory_space<vmem>> -> memref<1x128xf32, #tpu.memory_space<vmem>>
    %784 = tpu.memref_slice %arg7[%526] : memref<2x!tpu.dma_semaphore, #tpu.memory_space<semaphore_mem>> -> memref<1x!tpu.dma_semaphore, #tpu.memory_space<semaphore_mem>>
    %785 = tpu.memref_squeeze %784 : memref<1x!tpu.dma_semaphore, #tpu.memory_space<semaphore_mem>> -> memref<!tpu.dma_semaphore, #tpu.memory_space<semaphore_mem>>
    tpu.wait_dma2 semaphore(%785 : memref<!tpu.dma_semaphore, #tpu.memory_space<semaphore_mem>>) src(%781 : memref<1x128xf32, #tpu.memory_space<any>>) dst(%783 : memref<1x128xf32, #tpu.memory_space<vmem>>)
    %c0_i32_595 = arith.constant 0 : i32
    %c0_i32_596 = arith.constant 0 : i32
    %786 = tpu.memref_slice %arg3[%c0_i32_595, %c0_i32_596] : memref<33x128xf32, #tpu.memory_space<any>> -> memref<1x128xf32, #tpu.memory_space<any>>
    %c51_i32_597 = arith.constant 51 : i32
    %c0_i32_598 = arith.constant 0 : i32
    %787 = tpu.memref_slice %arg5[%526, %c51_i32_597, %c0_i32_598] : memref<2x64x128xf32, #tpu.memory_space<vmem>> -> memref<1x1x128xf32, #tpu.memory_space<vmem>>
    %788 = tpu.memref_squeeze %787 : memref<1x1x128xf32, #tpu.memory_space<vmem>> -> memref<1x128xf32, #tpu.memory_space<vmem>>
    %789 = tpu.memref_slice %arg7[%526] : memref<2x!tpu.dma_semaphore, #tpu.memory_space<semaphore_mem>> -> memref<1x!tpu.dma_semaphore, #tpu.memory_space<semaphore_mem>>
    %790 = tpu.memref_squeeze %789 : memref<1x!tpu.dma_semaphore, #tpu.memory_space<semaphore_mem>> -> memref<!tpu.dma_semaphore, #tpu.memory_space<semaphore_mem>>
    tpu.wait_dma2 semaphore(%790 : memref<!tpu.dma_semaphore, #tpu.memory_space<semaphore_mem>>) src(%786 : memref<1x128xf32, #tpu.memory_space<any>>) dst(%788 : memref<1x128xf32, #tpu.memory_space<vmem>>)
    %c0_i32_599 = arith.constant 0 : i32
    %c0_i32_600 = arith.constant 0 : i32
    %791 = tpu.memref_slice %arg3[%c0_i32_599, %c0_i32_600] : memref<33x128xf32, #tpu.memory_space<any>> -> memref<1x128xf32, #tpu.memory_space<any>>
    %c52_i32_601 = arith.constant 52 : i32
    %c0_i32_602 = arith.constant 0 : i32
    %792 = tpu.memref_slice %arg5[%526, %c52_i32_601, %c0_i32_602] : memref<2x64x128xf32, #tpu.memory_space<vmem>> -> memref<1x1x128xf32, #tpu.memory_space<vmem>>
    %793 = tpu.memref_squeeze %792 : memref<1x1x128xf32, #tpu.memory_space<vmem>> -> memref<1x128xf32, #tpu.memory_space<vmem>>
    %794 = tpu.memref_slice %arg7[%526] : memref<2x!tpu.dma_semaphore, #tpu.memory_space<semaphore_mem>> -> memref<1x!tpu.dma_semaphore, #tpu.memory_space<semaphore_mem>>
    %795 = tpu.memref_squeeze %794 : memref<1x!tpu.dma_semaphore, #tpu.memory_space<semaphore_mem>> -> memref<!tpu.dma_semaphore, #tpu.memory_space<semaphore_mem>>
    tpu.wait_dma2 semaphore(%795 : memref<!tpu.dma_semaphore, #tpu.memory_space<semaphore_mem>>) src(%791 : memref<1x128xf32, #tpu.memory_space<any>>) dst(%793 : memref<1x128xf32, #tpu.memory_space<vmem>>)
    %c0_i32_603 = arith.constant 0 : i32
    %c0_i32_604 = arith.constant 0 : i32
    %796 = tpu.memref_slice %arg3[%c0_i32_603, %c0_i32_604] : memref<33x128xf32, #tpu.memory_space<any>> -> memref<1x128xf32, #tpu.memory_space<any>>
    %c53_i32_605 = arith.constant 53 : i32
    %c0_i32_606 = arith.constant 0 : i32
    %797 = tpu.memref_slice %arg5[%526, %c53_i32_605, %c0_i32_606] : memref<2x64x128xf32, #tpu.memory_space<vmem>> -> memref<1x1x128xf32, #tpu.memory_space<vmem>>
    %798 = tpu.memref_squeeze %797 : memref<1x1x128xf32, #tpu.memory_space<vmem>> -> memref<1x128xf32, #tpu.memory_space<vmem>>
    %799 = tpu.memref_slice %arg7[%526] : memref<2x!tpu.dma_semaphore, #tpu.memory_space<semaphore_mem>> -> memref<1x!tpu.dma_semaphore, #tpu.memory_space<semaphore_mem>>
    %800 = tpu.memref_squeeze %799 : memref<1x!tpu.dma_semaphore, #tpu.memory_space<semaphore_mem>> -> memref<!tpu.dma_semaphore, #tpu.memory_space<semaphore_mem>>
    tpu.wait_dma2 semaphore(%800 : memref<!tpu.dma_semaphore, #tpu.memory_space<semaphore_mem>>) src(%796 : memref<1x128xf32, #tpu.memory_space<any>>) dst(%798 : memref<1x128xf32, #tpu.memory_space<vmem>>)
    %c0_i32_607 = arith.constant 0 : i32
    %c0_i32_608 = arith.constant 0 : i32
    %801 = tpu.memref_slice %arg3[%c0_i32_607, %c0_i32_608] : memref<33x128xf32, #tpu.memory_space<any>> -> memref<1x128xf32, #tpu.memory_space<any>>
    %c54_i32_609 = arith.constant 54 : i32
    %c0_i32_610 = arith.constant 0 : i32
    %802 = tpu.memref_slice %arg5[%526, %c54_i32_609, %c0_i32_610] : memref<2x64x128xf32, #tpu.memory_space<vmem>> -> memref<1x1x128xf32, #tpu.memory_space<vmem>>
    %803 = tpu.memref_squeeze %802 : memref<1x1x128xf32, #tpu.memory_space<vmem>> -> memref<1x128xf32, #tpu.memory_space<vmem>>
    %804 = tpu.memref_slice %arg7[%526] : memref<2x!tpu.dma_semaphore, #tpu.memory_space<semaphore_mem>> -> memref<1x!tpu.dma_semaphore, #tpu.memory_space<semaphore_mem>>
    %805 = tpu.memref_squeeze %804 : memref<1x!tpu.dma_semaphore, #tpu.memory_space<semaphore_mem>> -> memref<!tpu.dma_semaphore, #tpu.memory_space<semaphore_mem>>
    tpu.wait_dma2 semaphore(%805 : memref<!tpu.dma_semaphore, #tpu.memory_space<semaphore_mem>>) src(%801 : memref<1x128xf32, #tpu.memory_space<any>>) dst(%803 : memref<1x128xf32, #tpu.memory_space<vmem>>)
    %c0_i32_611 = arith.constant 0 : i32
    %c0_i32_612 = arith.constant 0 : i32
    %806 = tpu.memref_slice %arg3[%c0_i32_611, %c0_i32_612] : memref<33x128xf32, #tpu.memory_space<any>> -> memref<1x128xf32, #tpu.memory_space<any>>
    %c55_i32_613 = arith.constant 55 : i32
    %c0_i32_614 = arith.constant 0 : i32
    %807 = tpu.memref_slice %arg5[%526, %c55_i32_613, %c0_i32_614] : memref<2x64x128xf32, #tpu.memory_space<vmem>> -> memref<1x1x128xf32, #tpu.memory_space<vmem>>
    %808 = tpu.memref_squeeze %807 : memref<1x1x128xf32, #tpu.memory_space<vmem>> -> memref<1x128xf32, #tpu.memory_space<vmem>>
    %809 = tpu.memref_slice %arg7[%526] : memref<2x!tpu.dma_semaphore, #tpu.memory_space<semaphore_mem>> -> memref<1x!tpu.dma_semaphore, #tpu.memory_space<semaphore_mem>>
    %810 = tpu.memref_squeeze %809 : memref<1x!tpu.dma_semaphore, #tpu.memory_space<semaphore_mem>> -> memref<!tpu.dma_semaphore, #tpu.memory_space<semaphore_mem>>
    tpu.wait_dma2 semaphore(%810 : memref<!tpu.dma_semaphore, #tpu.memory_space<semaphore_mem>>) src(%806 : memref<1x128xf32, #tpu.memory_space<any>>) dst(%808 : memref<1x128xf32, #tpu.memory_space<vmem>>)
    %c0_i32_615 = arith.constant 0 : i32
    %c0_i32_616 = arith.constant 0 : i32
    %811 = tpu.memref_slice %arg3[%c0_i32_615, %c0_i32_616] : memref<33x128xf32, #tpu.memory_space<any>> -> memref<1x128xf32, #tpu.memory_space<any>>
    %c56_i32_617 = arith.constant 56 : i32
    %c0_i32_618 = arith.constant 0 : i32
    %812 = tpu.memref_slice %arg5[%526, %c56_i32_617, %c0_i32_618] : memref<2x64x128xf32, #tpu.memory_space<vmem>> -> memref<1x1x128xf32, #tpu.memory_space<vmem>>
    %813 = tpu.memref_squeeze %812 : memref<1x1x128xf32, #tpu.memory_space<vmem>> -> memref<1x128xf32, #tpu.memory_space<vmem>>
    %814 = tpu.memref_slice %arg7[%526] : memref<2x!tpu.dma_semaphore, #tpu.memory_space<semaphore_mem>> -> memref<1x!tpu.dma_semaphore, #tpu.memory_space<semaphore_mem>>
    %815 = tpu.memref_squeeze %814 : memref<1x!tpu.dma_semaphore, #tpu.memory_space<semaphore_mem>> -> memref<!tpu.dma_semaphore, #tpu.memory_space<semaphore_mem>>
    tpu.wait_dma2 semaphore(%815 : memref<!tpu.dma_semaphore, #tpu.memory_space<semaphore_mem>>) src(%811 : memref<1x128xf32, #tpu.memory_space<any>>) dst(%813 : memref<1x128xf32, #tpu.memory_space<vmem>>)
    %c0_i32_619 = arith.constant 0 : i32
    %c0_i32_620 = arith.constant 0 : i32
    %816 = tpu.memref_slice %arg3[%c0_i32_619, %c0_i32_620] : memref<33x128xf32, #tpu.memory_space<any>> -> memref<1x128xf32, #tpu.memory_space<any>>
    %c57_i32_621 = arith.constant 57 : i32
    %c0_i32_622 = arith.constant 0 : i32
    %817 = tpu.memref_slice %arg5[%526, %c57_i32_621, %c0_i32_622] : memref<2x64x128xf32, #tpu.memory_space<vmem>> -> memref<1x1x128xf32, #tpu.memory_space<vmem>>
    %818 = tpu.memref_squeeze %817 : memref<1x1x128xf32, #tpu.memory_space<vmem>> -> memref<1x128xf32, #tpu.memory_space<vmem>>
    %819 = tpu.memref_slice %arg7[%526] : memref<2x!tpu.dma_semaphore, #tpu.memory_space<semaphore_mem>> -> memref<1x!tpu.dma_semaphore, #tpu.memory_space<semaphore_mem>>
    %820 = tpu.memref_squeeze %819 : memref<1x!tpu.dma_semaphore, #tpu.memory_space<semaphore_mem>> -> memref<!tpu.dma_semaphore, #tpu.memory_space<semaphore_mem>>
    tpu.wait_dma2 semaphore(%820 : memref<!tpu.dma_semaphore, #tpu.memory_space<semaphore_mem>>) src(%816 : memref<1x128xf32, #tpu.memory_space<any>>) dst(%818 : memref<1x128xf32, #tpu.memory_space<vmem>>)
    %c0_i32_623 = arith.constant 0 : i32
    %c0_i32_624 = arith.constant 0 : i32
    %821 = tpu.memref_slice %arg3[%c0_i32_623, %c0_i32_624] : memref<33x128xf32, #tpu.memory_space<any>> -> memref<1x128xf32, #tpu.memory_space<any>>
    %c58_i32_625 = arith.constant 58 : i32
    %c0_i32_626 = arith.constant 0 : i32
    %822 = tpu.memref_slice %arg5[%526, %c58_i32_625, %c0_i32_626] : memref<2x64x128xf32, #tpu.memory_space<vmem>> -> memref<1x1x128xf32, #tpu.memory_space<vmem>>
    %823 = tpu.memref_squeeze %822 : memref<1x1x128xf32, #tpu.memory_space<vmem>> -> memref<1x128xf32, #tpu.memory_space<vmem>>
    %824 = tpu.memref_slice %arg7[%526] : memref<2x!tpu.dma_semaphore, #tpu.memory_space<semaphore_mem>> -> memref<1x!tpu.dma_semaphore, #tpu.memory_space<semaphore_mem>>
    %825 = tpu.memref_squeeze %824 : memref<1x!tpu.dma_semaphore, #tpu.memory_space<semaphore_mem>> -> memref<!tpu.dma_semaphore, #tpu.memory_space<semaphore_mem>>
    tpu.wait_dma2 semaphore(%825 : memref<!tpu.dma_semaphore, #tpu.memory_space<semaphore_mem>>) src(%821 : memref<1x128xf32, #tpu.memory_space<any>>) dst(%823 : memref<1x128xf32, #tpu.memory_space<vmem>>)
    %c0_i32_627 = arith.constant 0 : i32
    %c0_i32_628 = arith.constant 0 : i32
    %826 = tpu.memref_slice %arg3[%c0_i32_627, %c0_i32_628] : memref<33x128xf32, #tpu.memory_space<any>> -> memref<1x128xf32, #tpu.memory_space<any>>
    %c59_i32_629 = arith.constant 59 : i32
    %c0_i32_630 = arith.constant 0 : i32
    %827 = tpu.memref_slice %arg5[%526, %c59_i32_629, %c0_i32_630] : memref<2x64x128xf32, #tpu.memory_space<vmem>> -> memref<1x1x128xf32, #tpu.memory_space<vmem>>
    %828 = tpu.memref_squeeze %827 : memref<1x1x128xf32, #tpu.memory_space<vmem>> -> memref<1x128xf32, #tpu.memory_space<vmem>>
    %829 = tpu.memref_slice %arg7[%526] : memref<2x!tpu.dma_semaphore, #tpu.memory_space<semaphore_mem>> -> memref<1x!tpu.dma_semaphore, #tpu.memory_space<semaphore_mem>>
    %830 = tpu.memref_squeeze %829 : memref<1x!tpu.dma_semaphore, #tpu.memory_space<semaphore_mem>> -> memref<!tpu.dma_semaphore, #tpu.memory_space<semaphore_mem>>
    tpu.wait_dma2 semaphore(%830 : memref<!tpu.dma_semaphore, #tpu.memory_space<semaphore_mem>>) src(%826 : memref<1x128xf32, #tpu.memory_space<any>>) dst(%828 : memref<1x128xf32, #tpu.memory_space<vmem>>)
    %c0_i32_631 = arith.constant 0 : i32
    %c0_i32_632 = arith.constant 0 : i32
    %831 = tpu.memref_slice %arg3[%c0_i32_631, %c0_i32_632] : memref<33x128xf32, #tpu.memory_space<any>> -> memref<1x128xf32, #tpu.memory_space<any>>
    %c60_i32_633 = arith.constant 60 : i32
    %c0_i32_634 = arith.constant 0 : i32
    %832 = tpu.memref_slice %arg5[%526, %c60_i32_633, %c0_i32_634] : memref<2x64x128xf32, #tpu.memory_space<vmem>> -> memref<1x1x128xf32, #tpu.memory_space<vmem>>
    %833 = tpu.memref_squeeze %832 : memref<1x1x128xf32, #tpu.memory_space<vmem>> -> memref<1x128xf32, #tpu.memory_space<vmem>>
    %834 = tpu.memref_slice %arg7[%526] : memref<2x!tpu.dma_semaphore, #tpu.memory_space<semaphore_mem>> -> memref<1x!tpu.dma_semaphore, #tpu.memory_space<semaphore_mem>>
    %835 = tpu.memref_squeeze %834 : memref<1x!tpu.dma_semaphore, #tpu.memory_space<semaphore_mem>> -> memref<!tpu.dma_semaphore, #tpu.memory_space<semaphore_mem>>
    tpu.wait_dma2 semaphore(%835 : memref<!tpu.dma_semaphore, #tpu.memory_space<semaphore_mem>>) src(%831 : memref<1x128xf32, #tpu.memory_space<any>>) dst(%833 : memref<1x128xf32, #tpu.memory_space<vmem>>)
    %c0_i32_635 = arith.constant 0 : i32
    %c0_i32_636 = arith.constant 0 : i32
    %836 = tpu.memref_slice %arg3[%c0_i32_635, %c0_i32_636] : memref<33x128xf32, #tpu.memory_space<any>> -> memref<1x128xf32, #tpu.memory_space<any>>
    %c61_i32_637 = arith.constant 61 : i32
    %c0_i32_638 = arith.constant 0 : i32
    %837 = tpu.memref_slice %arg5[%526, %c61_i32_637, %c0_i32_638] : memref<2x64x128xf32, #tpu.memory_space<vmem>> -> memref<1x1x128xf32, #tpu.memory_space<vmem>>
    %838 = tpu.memref_squeeze %837 : memref<1x1x128xf32, #tpu.memory_space<vmem>> -> memref<1x128xf32, #tpu.memory_space<vmem>>
    %839 = tpu.memref_slice %arg7[%526] : memref<2x!tpu.dma_semaphore, #tpu.memory_space<semaphore_mem>> -> memref<1x!tpu.dma_semaphore, #tpu.memory_space<semaphore_mem>>
    %840 = tpu.memref_squeeze %839 : memref<1x!tpu.dma_semaphore, #tpu.memory_space<semaphore_mem>> -> memref<!tpu.dma_semaphore, #tpu.memory_space<semaphore_mem>>
    tpu.wait_dma2 semaphore(%840 : memref<!tpu.dma_semaphore, #tpu.memory_space<semaphore_mem>>) src(%836 : memref<1x128xf32, #tpu.memory_space<any>>) dst(%838 : memref<1x128xf32, #tpu.memory_space<vmem>>)
    %c0_i32_639 = arith.constant 0 : i32
    %c0_i32_640 = arith.constant 0 : i32
    %841 = tpu.memref_slice %arg3[%c0_i32_639, %c0_i32_640] : memref<33x128xf32, #tpu.memory_space<any>> -> memref<1x128xf32, #tpu.memory_space<any>>
    %c62_i32_641 = arith.constant 62 : i32
    %c0_i32_642 = arith.constant 0 : i32
    %842 = tpu.memref_slice %arg5[%526, %c62_i32_641, %c0_i32_642] : memref<2x64x128xf32, #tpu.memory_space<vmem>> -> memref<1x1x128xf32, #tpu.memory_space<vmem>>
    %843 = tpu.memref_squeeze %842 : memref<1x1x128xf32, #tpu.memory_space<vmem>> -> memref<1x128xf32, #tpu.memory_space<vmem>>
    %844 = tpu.memref_slice %arg7[%526] : memref<2x!tpu.dma_semaphore, #tpu.memory_space<semaphore_mem>> -> memref<1x!tpu.dma_semaphore, #tpu.memory_space<semaphore_mem>>
    %845 = tpu.memref_squeeze %844 : memref<1x!tpu.dma_semaphore, #tpu.memory_space<semaphore_mem>> -> memref<!tpu.dma_semaphore, #tpu.memory_space<semaphore_mem>>
    tpu.wait_dma2 semaphore(%845 : memref<!tpu.dma_semaphore, #tpu.memory_space<semaphore_mem>>) src(%841 : memref<1x128xf32, #tpu.memory_space<any>>) dst(%843 : memref<1x128xf32, #tpu.memory_space<vmem>>)
    %c0_i32_643 = arith.constant 0 : i32
    %c0_i32_644 = arith.constant 0 : i32
    %846 = tpu.memref_slice %arg3[%c0_i32_643, %c0_i32_644] : memref<33x128xf32, #tpu.memory_space<any>> -> memref<1x128xf32, #tpu.memory_space<any>>
    %c63_i32_645 = arith.constant 63 : i32
    %c0_i32_646 = arith.constant 0 : i32
    %847 = tpu.memref_slice %arg5[%526, %c63_i32_645, %c0_i32_646] : memref<2x64x128xf32, #tpu.memory_space<vmem>> -> memref<1x1x128xf32, #tpu.memory_space<vmem>>
    %848 = tpu.memref_squeeze %847 : memref<1x1x128xf32, #tpu.memory_space<vmem>> -> memref<1x128xf32, #tpu.memory_space<vmem>>
    %849 = tpu.memref_slice %arg7[%526] : memref<2x!tpu.dma_semaphore, #tpu.memory_space<semaphore_mem>> -> memref<1x!tpu.dma_semaphore, #tpu.memory_space<semaphore_mem>>
    %850 = tpu.memref_squeeze %849 : memref<1x!tpu.dma_semaphore, #tpu.memory_space<semaphore_mem>> -> memref<!tpu.dma_semaphore, #tpu.memory_space<semaphore_mem>>
    tpu.wait_dma2 semaphore(%850 : memref<!tpu.dma_semaphore, #tpu.memory_space<semaphore_mem>>) src(%846 : memref<1x128xf32, #tpu.memory_space<any>>) dst(%848 : memref<1x128xf32, #tpu.memory_space<vmem>>)
    %851 = arith.index_cast %526 : i32 to index
    %c0_647 = arith.constant 0 : index
    %c0_648 = arith.constant 0 : index
    %852 = vector.load %arg5[%851, %c0_647, %c0_648] : memref<2x64x128xf32, #tpu.memory_space<vmem>>, vector<1x64x128xf32>
    %853 = vector.shape_cast %852 : vector<1x64x128xf32> to vector<64x128xf32>
    %854 = vector.extract_strided_slice %853 {offsets = [0, 0], sizes = [8, 128], strides = [1, 1]} : vector<64x128xf32> to vector<8x128xf32>
    %855 = vector.extract_strided_slice %853 {offsets = [8, 0], sizes = [8, 128], strides = [1, 1]} : vector<64x128xf32> to vector<8x128xf32>
    %856 = arith.addf %854, %855 : vector<8x128xf32>
    %857 = vector.extract_strided_slice %853 {offsets = [16, 0], sizes = [8, 128], strides = [1, 1]} : vector<64x128xf32> to vector<8x128xf32>
    %858 = arith.addf %856, %857 : vector<8x128xf32>
    %859 = vector.extract_strided_slice %853 {offsets = [24, 0], sizes = [8, 128], strides = [1, 1]} : vector<64x128xf32> to vector<8x128xf32>
    %860 = arith.addf %858, %859 : vector<8x128xf32>
    %861 = vector.extract_strided_slice %853 {offsets = [32, 0], sizes = [8, 128], strides = [1, 1]} : vector<64x128xf32> to vector<8x128xf32>
    %862 = arith.addf %860, %861 : vector<8x128xf32>
    %863 = vector.extract_strided_slice %853 {offsets = [40, 0], sizes = [8, 128], strides = [1, 1]} : vector<64x128xf32> to vector<8x128xf32>
    %864 = arith.addf %862, %863 : vector<8x128xf32>
    %865 = vector.extract_strided_slice %853 {offsets = [48, 0], sizes = [8, 128], strides = [1, 1]} : vector<64x128xf32> to vector<8x128xf32>
    %866 = arith.addf %864, %865 : vector<8x128xf32>
    %867 = vector.extract_strided_slice %853 {offsets = [56, 0], sizes = [8, 128], strides = [1, 1]} : vector<64x128xf32> to vector<8x128xf32>
    %868 = arith.addf %866, %867 : vector<8x128xf32>
    %c0_649 = arith.constant 0 : index
    %c0_650 = arith.constant 0 : index
    %869 = vector.load %arg6[%c0_649, %c0_650] : memref<8x128xf32, #tpu.memory_space<vmem>>, vector<8x128xf32>
    %870 = arith.addf %869, %868 : vector<8x128xf32>
    %c0_651 = arith.constant 0 : index
    %c0_652 = arith.constant 0 : index
    %871 = vector.load %arg6[%c0_651, %c0_652] : memref<8x128xf32, #tpu.memory_space<vmem>>, vector<8x128xf32>
    tpu.vector_store %arg6[%c0_651, %c0_652], %870 {strides = array<i32>} : memref<8x128xf32, #tpu.memory_space<vmem>>, vector<8x128xf32>,
    %c1_i32_653 = arith.constant 1 : i32
    %c0_654 = arith.constant 0 : index
    %c0_655 = arith.constant 0 : index
    %872 = vector.load %arg2[%c0_654, %c0_655] : memref<8x8xf32, #tpu.memory_space<vmem>>, vector<8x8xf32>
    %cst_656 = arith.constant dense<0.000000e+00> : vector<8xf32>
    %873 = vector.multi_reduction <add>, %872, %cst_656 [1] : vector<8x8xf32> to vector<8xf32>
    %874 = vector.shape_cast %873 : vector<8xf32> to vector<8x1xf32>
    %cst_657 = arith.constant 9.99999968E-21 : f32
    %875 = vector.broadcast %cst_657 : f32 to vector<8x1xf32>
    %876 = arith.addf %874, %875 : vector<8x1xf32>
    %877 = tpu.reciprocal %876 : vector<8x1xf32> -> vector<8x1xf32>
    %c0_658 = arith.constant 0 : index
    %c0_659 = arith.constant 0 : index
    %878 = vector.load %arg6[%c0_658, %c0_659] : memref<8x128xf32, #tpu.memory_space<vmem>>, vector<8x128xf32>
    %879 = vector.broadcast %877 : vector<8x1xf32> to vector<8x128xf32>
    %880 = arith.mulf %878, %879 : vector<8x128xf32>
    %c0_660 = arith.constant 0 : index
    %c0_661 = arith.constant 0 : index
    %881 = vector.load %arg4[%c0_660, %c0_661] : memref<8x128xf32, #tpu.memory_space<vmem>>, vector<8x128xf32>
    tpu.vector_store %arg4[%c0_660, %c0_661], %880 {strides = array<i32>} : memref<8x128xf32, #tpu.memory_space<vmem>>, vector<8x128xf32>,
    return
  }
  func.func @transform_0(%arg0: i32, %arg1: memref<8x8xi32, #tpu.memory_space<smem>>) -> (i32, i32) {
    %c0_i32 = arith.constant 0 : i32
    %c0_i32_0 = arith.constant 0 : i32
    return %arg0, %c0_i32 : i32, i32
  }
  func.func @transform_2(%arg0: i32, %arg1: memref<8x8xi32, #tpu.memory_space<smem>>) -> (i32, i32) {
    %c0_i32 = arith.constant 0 : i32
    %c0_i32_0 = arith.constant 0 : i32
    return %arg0, %c0_i32 : i32, i32
  }
}

</mosaic_0001>

<llo_original>
// kernel: tpu_custom_call.1
$region0: #{tpu_custom_call.1}
  #allocation0 [shape = 'u32[]', space=smem, size = 0x4, offset = 0x4, fixed_abs, tag = 'smem constant byte address 0x4 - core index']
  #allocation1 [shape = 'u32[144,128]{1,0:T(1,128)}', space=vmem, size = 0x12000, scoped, tag = 'internal scratch']
  #allocation2 [shape = 'f32[2,64,128]{2,1,0:T(8,128)}', space=vmem, size = 0x10000, scoped, tag = 'scratch operand']
  #allocation3 [shape = 'f32[8,128]{1,0:T(8,128)}', space=vmem, size = 0x1000, scoped, tag = 'scratch operand']
  #allocation4 [shape = 's32[2]{0}', space=sflag, size = 0x8, scoped, tag = 'scratch operand']
  #allocation5 [shape = 's32[1]{0}', space=sflag, size = 0x4, scoped, tag = 'scoped memory for tpu_custom_call.1']
  #allocation6 [shape = 'u8[4096]{0}', space=smem, size = 0x1000, scoped, tag = 'prefetched SMEM operand 0']
  #allocation11 [shape = 's32[]', space=sflag, size = 0x4, offset = 0, fixed_abs, tag = 'sflag constant byte address 0x0 - dummy sync flag']
  #allocation12 [shape = 's32[]', space=sflag, size = 0x4, offset = 0, fixed_abs, tag = 'sflag constant byte address 0x0 - dummy sync flag']
  #allocation13 [shape = 'u32[]', space=smem, size = 0x4, offset = 0x44, fixed_abs, tag = 'smem constant byte address 0x44 - assertion arg 0']
  #allocation14 [shape = 'u32[]', space=smem, size = 0x4, offset = 0x48, fixed_abs, tag = 'smem constant byte address 0x48 - assertion arg 1']
  #allocation15 [shape = 's32[]', space=sflag, size = 0x4, offset = 0, fixed_abs, tag = 'sflag constant byte address 0x0 - dummy sync flag']
  #allocation16 [shape = 's32[]', space=sflag, size = 0x4, offset = 0, fixed_abs, tag = 'sflag constant byte address 0x0 - dummy sync flag']
  #allocation17 [shape = 's32[]', space=sflag, size = 0x4, offset = 0, fixed_abs, tag = 'sflag constant byte address 0x0 - dummy sync flag']
  #allocation18 [shape = 's32[]', space=sflag, size = 0x4, offset = 0, fixed_abs, tag = 'sflag constant byte address 0x0 - dummy sync flag']
  #allocation19 [shape = 's32[]', space=sflag, size = 0x4, offset = 0, fixed_abs, tag = 'sflag constant byte address 0x0 - dummy sync flag']
  #allocation20 [shape = 's32[]', space=sflag, size = 0x4, offset = 0, fixed_abs, tag = 'sflag constant byte address 0x0 - dummy sync flag']
  #allocation21 [shape = 's32[]', space=sflag, size = 0x4, offset = 0, fixed_abs, tag = 'sflag constant byte address 0x0 - dummy sync flag']
  #allocation22 [shape = 's32[]', space=sflag, size = 0x4, offset = 0, fixed_abs, tag = 'sflag constant byte address 0x0 - dummy sync flag']
  #allocation23 [shape = 's32[]', space=sflag, size = 0x4, offset = 0, fixed_abs, tag = 'sflag constant byte address 0x0 - dummy sync flag']
  #allocation24 [shape = 's32[]', space=sflag, size = 0x4, offset = 0, fixed_abs, tag = 'sflag constant byte address 0x0 - dummy sync flag']
  #allocation25 [shape = 's32[]', space=sflag, size = 0x4, offset = 0, fixed_abs, tag = 'sflag constant byte address 0x0 - dummy sync flag']
  #allocation26 [shape = 's32[]', space=sflag, size = 0x4, offset = 0, fixed_abs, tag = 'sflag constant byte address 0x0 - dummy sync flag']
  #allocation27 [shape = 's32[]', space=sflag, size = 0x4, offset = 0, fixed_abs, tag = 'sflag constant byte address 0x0 - dummy sync flag']
  #allocation28 [shape = 's32[]', space=sflag, size = 0x4, offset = 0, fixed_abs, tag = 'sflag constant byte address 0x0 - dummy sync flag']
  #allocation29 [shape = 's32[]', space=sflag, size = 0x4, offset = 0, fixed_abs, tag = 'sflag constant byte address 0x0 - dummy sync flag']
  #allocation30 [shape = 's32[]', space=sflag, size = 0x4, offset = 0, fixed_abs, tag = 'sflag constant byte address 0x0 - dummy sync flag']
  #allocation31 [shape = 's32[]', space=sflag, size = 0x4, offset = 0, fixed_abs, tag = 'sflag constant byte address 0x0 - dummy sync flag']
  #allocation32 [shape = 's32[]', space=sflag, size = 0x4, offset = 0, fixed_abs, tag = 'sflag constant byte address 0x0 - dummy sync flag']
  #allocation33 [shape = 's32[]', space=sflag, size = 0x4, offset = 0, fixed_abs, tag = 'sflag constant byte address 0x0 - dummy sync flag']
  #allocation34 [shape = 's32[]', space=sflag, size = 0x4, offset = 0, fixed_abs, tag = 'sflag constant byte address 0x0 - dummy sync flag']
  #allocation35 [shape = 's32[]', space=sflag, size = 0x4, offset = 0, fixed_abs, tag = 'sflag constant byte address 0x0 - dummy sync flag']
  #allocation36 [shape = 's32[]', space=sflag, size = 0x4, offset = 0, fixed_abs, tag = 'sflag constant byte address 0x0 - dummy sync flag']
  #allocation37 [shape = 's32[]', space=sflag, size = 0x4, offset = 0, fixed_abs, tag = 'sflag constant byte address 0x0 - dummy sync flag']
  #allocation38 [shape = 's32[]', space=sflag, size = 0x4, offset = 0, fixed_abs, tag = 'sflag constant byte address 0x0 - dummy sync flag']
  #allocation39 [shape = 's32[]', space=sflag, size = 0x4, offset = 0, fixed_abs, tag = 'sflag constant byte address 0x0 - dummy sync flag']
  #allocation40 [shape = 's32[]', space=sflag, size = 0x4, offset = 0, fixed_abs, tag = 'sflag constant byte address 0x0 - dummy sync flag']
  #allocation41 [shape = 's32[]', space=sflag, size = 0x4, offset = 0, fixed_abs, tag = 'sflag constant byte address 0x0 - dummy sync flag']
  #allocation42 [shape = 's32[]', space=sflag, size = 0x4, offset = 0, fixed_abs, tag = 'sflag constant byte address 0x0 - dummy sync flag']
  #allocation43 [shape = 's32[]', space=sflag, size = 0x4, offset = 0, fixed_abs, tag = 'sflag constant byte address 0x0 - dummy sync flag']
  #allocation44 [shape = 's32[]', space=sflag, size = 0x4, offset = 0, fixed_abs, tag = 'sflag constant byte address 0x0 - dummy sync flag']
  #allocation45 [shape = 's32[]', space=sflag, size = 0x4, offset = 0, fixed_abs, tag = 'sflag constant byte address 0x0 - dummy sync flag']
  #allocation46 [shape = 's32[]', space=sflag, size = 0x4, offset = 0, fixed_abs, tag = 'sflag constant byte address 0x0 - dummy sync flag']
  #allocation47 [shape = 's32[]', space=sflag, size = 0x4, offset = 0, fixed_abs, tag = 'sflag constant byte address 0x0 - dummy sync flag']
  #allocation48 [shape = 's32[]', space=sflag, size = 0x4, offset = 0, fixed_abs, tag = 'sflag constant byte address 0x0 - dummy sync flag']
  #allocation49 [shape = 's32[]', space=sflag, size = 0x4, offset = 0, fixed_abs, tag = 'sflag constant byte address 0x0 - dummy sync flag']
  #allocation50 [shape = 's32[]', space=sflag, size = 0x4, offset = 0, fixed_abs, tag = 'sflag constant byte address 0x0 - dummy sync flag']
  #allocation51 [shape = 's32[]', space=sflag, size = 0x4, offset = 0, fixed_abs, tag = 'sflag constant byte address 0x0 - dummy sync flag']
  #allocation52 [shape = 's32[]', space=sflag, size = 0x4, offset = 0, fixed_abs, tag = 'sflag constant byte address 0x0 - dummy sync flag']
  #allocation53 [shape = 's32[]', space=sflag, size = 0x4, offset = 0, fixed_abs, tag = 'sflag constant byte address 0x0 - dummy sync flag']
  #allocation54 [shape = 's32[]', space=sflag, size = 0x4, offset = 0, fixed_abs, tag = 'sflag constant byte address 0x0 - dummy sync flag']
  #allocation55 [shape = 's32[]', space=sflag, size = 0x4, offset = 0, fixed_abs, tag = 'sflag constant byte address 0x0 - dummy sync flag']
  #allocation56 [shape = 's32[]', space=sflag, size = 0x4, offset = 0, fixed_abs, tag = 'sflag constant byte address 0x0 - dummy sync flag']
  #allocation57 [shape = 's32[]', space=sflag, size = 0x4, offset = 0, fixed_abs, tag = 'sflag constant byte address 0x0 - dummy sync flag']
  #allocation58 [shape = 's32[]', space=sflag, size = 0x4, offset = 0, fixed_abs, tag = 'sflag constant byte address 0x0 - dummy sync flag']
  #allocation59 [shape = 's32[]', space=sflag, size = 0x4, offset = 0, fixed_abs, tag = 'sflag constant byte address 0x0 - dummy sync flag']
  #allocation60 [shape = 's32[]', space=sflag, size = 0x4, offset = 0, fixed_abs, tag = 'sflag constant byte address 0x0 - dummy sync flag']
  #allocation61 [shape = 's32[]', space=sflag, size = 0x4, offset = 0, fixed_abs, tag = 'sflag constant byte address 0x0 - dummy sync flag']
  #allocation62 [shape = 's32[]', space=sflag, size = 0x4, offset = 0, fixed_abs, tag = 'sflag constant byte address 0x0 - dummy sync flag']
  #allocation63 [shape = 's32[]', space=sflag, size = 0x4, offset = 0, fixed_abs, tag = 'sflag constant byte address 0x0 - dummy sync flag']
  #allocation64 [shape = 's32[]', space=sflag, size = 0x4, offset = 0, fixed_abs, tag = 'sflag constant byte address 0x0 - dummy sync flag']
  #allocation65 [shape = 's32[]', space=sflag, size = 0x4, offset = 0, fixed_abs, tag = 'sflag constant byte address 0x0 - dummy sync flag']
  #allocation66 [shape = 's32[]', space=sflag, size = 0x4, offset = 0, fixed_abs, tag = 'sflag constant byte address 0x0 - dummy sync flag']
  #allocation67 [shape = 's32[]', space=sflag, size = 0x4, offset = 0, fixed_abs, tag = 'sflag constant byte address 0x0 - dummy sync flag']
  #allocation68 [shape = 's32[]', space=sflag, size = 0x4, offset = 0, fixed_abs, tag = 'sflag constant byte address 0x0 - dummy sync flag']
  #allocation69 [shape = 's32[]', space=sflag, size = 0x4, offset = 0, fixed_abs, tag = 'sflag constant byte address 0x0 - dummy sync flag']
  #allocation70 [shape = 's32[]', space=sflag, size = 0x4, offset = 0, fixed_abs, tag = 'sflag constant byte address 0x0 - dummy sync flag']
  #allocation71 [shape = 's32[]', space=sflag, size = 0x4, offset = 0, fixed_abs, tag = 'sflag constant byte address 0x0 - dummy sync flag']
  #allocation72 [shape = 's32[]', space=sflag, size = 0x4, offset = 0, fixed_abs, tag = 'sflag constant byte address 0x0 - dummy sync flag']
  #allocation73 [shape = 's32[]', space=sflag, size = 0x4, offset = 0, fixed_abs, tag = 'sflag constant byte address 0x0 - dummy sync flag']
  #allocation74 [shape = 's32[]', space=sflag, size = 0x4, offset = 0, fixed_abs, tag = 'sflag constant byte address 0x0 - dummy sync flag']
  #allocation75 [shape = 's32[]', space=sflag, size = 0x4, offset = 0, fixed_abs, tag = 'sflag constant byte address 0x0 - dummy sync flag']
  #allocation76 [shape = 's32[]', space=sflag, size = 0x4, offset = 0, fixed_abs, tag = 'sflag constant byte address 0x0 - dummy sync flag']
  #allocation77 [shape = 's32[]', space=sflag, size = 0x4, offset = 0, fixed_abs, tag = 'sflag constant byte address 0x0 - dummy sync flag']
  #allocation78 [shape = 's32[]', space=sflag, size = 0x4, offset = 0, fixed_abs, tag = 'sflag constant byte address 0x0 - dummy sync flag']
  #allocation79 [shape = 's32[]', space=sflag, size = 0x4, offset = 0, fixed_abs, tag = 'sflag constant byte address 0x0 - dummy sync flag']
  #allocation80 [shape = 's32[]', space=sflag, size = 0x4, offset = 0, fixed_abs, tag = 'sflag constant byte address 0x0 - dummy sync flag']
  #allocation81 [shape = 's32[]', space=sflag, size = 0x4, offset = 0, fixed_abs, tag = 'sflag constant byte address 0x0 - dummy sync flag']
  #allocation82 [shape = 's32[]', space=sflag, size = 0x4, offset = 0, fixed_abs, tag = 'sflag constant byte address 0x0 - dummy sync flag']
  #allocation83 [shape = 's32[]', space=sflag, size = 0x4, offset = 0, fixed_abs, tag = 'sflag constant byte address 0x0 - dummy sync flag']
  #allocation84 [shape = 's32[]', space=sflag, size = 0x4, offset = 0, fixed_abs, tag = 'sflag constant byte address 0x0 - dummy sync flag']
  #allocation85 [shape = 's32[]', space=sflag, size = 0x4, offset = 0, fixed_abs, tag = 'sflag constant byte address 0x0 - dummy sync flag']
  #allocation86 [shape = 's32[]', space=sflag, size = 0x4, offset = 0, fixed_abs, tag = 'sflag constant byte address 0x0 - dummy sync flag']
  #allocation87 [shape = 's32[]', space=sflag, size = 0x4, offset = 0, fixed_abs, tag = 'sflag constant byte address 0x0 - dummy sync flag']
  #allocation88 [shape = 's32[]', space=sflag, size = 0x4, offset = 0, fixed_abs, tag = 'sflag constant byte address 0x0 - dummy sync flag']
  #allocation89 [shape = 's32[]', space=sflag, size = 0x4, offset = 0, fixed_abs, tag = 'sflag constant byte address 0x0 - dummy sync flag']
  #allocation90 [shape = 's32[]', space=sflag, size = 0x4, offset = 0, fixed_abs, tag = 'sflag constant byte address 0x0 - dummy sync flag']
  #allocation91 [shape = 's32[]', space=sflag, size = 0x4, offset = 0, fixed_abs, tag = 'sflag constant byte address 0x0 - dummy sync flag']
  #allocation92 [shape = 's32[]', space=sflag, size = 0x4, offset = 0, fixed_abs, tag = 'sflag constant byte address 0x0 - dummy sync flag']
  #allocation93 [shape = 's32[]', space=sflag, size = 0x4, offset = 0, fixed_abs, tag = 'sflag constant byte address 0x0 - dummy sync flag']
  #allocation94 [shape = 's32[]', space=sflag, size = 0x4, offset = 0, fixed_abs, tag = 'sflag constant byte address 0x0 - dummy sync flag']
  #allocation95 [shape = 's32[]', space=sflag, size = 0x4, offset = 0, fixed_abs, tag = 'sflag constant byte address 0x0 - dummy sync flag']
  #allocation96 [shape = 's32[]', space=sflag, size = 0x4, offset = 0, fixed_abs, tag = 'sflag constant byte address 0x0 - dummy sync flag']
  #allocation97 [shape = 's32[]', space=sflag, size = 0x4, offset = 0, fixed_abs, tag = 'sflag constant byte address 0x0 - dummy sync flag']
  #allocation98 [shape = 's32[]', space=sflag, size = 0x4, offset = 0, fixed_abs, tag = 'sflag constant byte address 0x0 - dummy sync flag']
  #allocation99 [shape = 's32[]', space=sflag, size = 0x4, offset = 0, fixed_abs, tag = 'sflag constant byte address 0x0 - dummy sync flag']
  #allocation100 [shape = 's32[]', space=sflag, size = 0x4, offset = 0, fixed_abs, tag = 'sflag constant byte address 0x0 - dummy sync flag']
  #allocation101 [shape = 's32[]', space=sflag, size = 0x4, offset = 0, fixed_abs, tag = 'sflag constant byte address 0x0 - dummy sync flag']
  #allocation102 [shape = 's32[]', space=sflag, size = 0x4, offset = 0, fixed_abs, tag = 'sflag constant byte address 0x0 - dummy sync flag']
  #allocation103 [shape = 's32[]', space=sflag, size = 0x4, offset = 0, fixed_abs, tag = 'sflag constant byte address 0x0 - dummy sync flag']
  #allocation104 [shape = 's32[]', space=sflag, size = 0x4, offset = 0, fixed_abs, tag = 'sflag constant byte address 0x0 - dummy sync flag']
  #allocation105 [shape = 's32[]', space=sflag, size = 0x4, offset = 0, fixed_abs, tag = 'sflag constant byte address 0x0 - dummy sync flag']
  #allocation106 [shape = 's32[]', space=sflag, size = 0x4, offset = 0, fixed_abs, tag = 'sflag constant byte address 0x0 - dummy sync flag']
  #allocation107 [shape = 's32[]', space=sflag, size = 0x4, offset = 0, fixed_abs, tag = 'sflag constant byte address 0x0 - dummy sync flag']
  #allocation108 [shape = 's32[]', space=sflag, size = 0x4, offset = 0, fixed_abs, tag = 'sflag constant byte address 0x0 - dummy sync flag']
  #allocation109 [shape = 's32[]', space=sflag, size = 0x4, offset = 0, fixed_abs, tag = 'sflag constant byte address 0x0 - dummy sync flag']
  #allocation110 [shape = 's32[]', space=sflag, size = 0x4, offset = 0, fixed_abs, tag = 'sflag constant byte address 0x0 - dummy sync flag']
  #allocation111 [shape = 's32[]', space=sflag, size = 0x4, offset = 0, fixed_abs, tag = 'sflag constant byte address 0x0 - dummy sync flag']
  #allocation112 [shape = 's32[]', space=sflag, size = 0x4, offset = 0, fixed_abs, tag = 'sflag constant byte address 0x0 - dummy sync flag']
  #allocation113 [shape = 's32[]', space=sflag, size = 0x4, offset = 0, fixed_abs, tag = 'sflag constant byte address 0x0 - dummy sync flag']
  #allocation114 [shape = 's32[]', space=sflag, size = 0x4, offset = 0, fixed_abs, tag = 'sflag constant byte address 0x0 - dummy sync flag']
  #allocation115 [shape = 's32[]', space=sflag, size = 0x4, offset = 0, fixed_abs, tag = 'sflag constant byte address 0x0 - dummy sync flag']
  #allocation116 [shape = 's32[]', space=sflag, size = 0x4, offset = 0, fixed_abs, tag = 'sflag constant byte address 0x0 - dummy sync flag']
  #allocation117 [shape = 's32[]', space=sflag, size = 0x4, offset = 0, fixed_abs, tag = 'sflag constant byte address 0x0 - dummy sync flag']
  #allocation118 [shape = 's32[]', space=sflag, size = 0x4, offset = 0, fixed_abs, tag = 'sflag constant byte address 0x0 - dummy sync flag']
  #allocation119 [shape = 's32[]', space=sflag, size = 0x4, offset = 0, fixed_abs, tag = 'sflag constant byte address 0x0 - dummy sync flag']
  #allocation120 [shape = 's32[]', space=sflag, size = 0x4, offset = 0, fixed_abs, tag = 'sflag constant byte address 0x0 - dummy sync flag']
  #allocation121 [shape = 's32[]', space=sflag, size = 0x4, offset = 0, fixed_abs, tag = 'sflag constant byte address 0x0 - dummy sync flag']
  #allocation122 [shape = 's32[]', space=sflag, size = 0x4, offset = 0, fixed_abs, tag = 'sflag constant byte address 0x0 - dummy sync flag']
  #allocation123 [shape = 's32[]', space=sflag, size = 0x4, offset = 0, fixed_abs, tag = 'sflag constant byte address 0x0 - dummy sync flag']
  #allocation124 [shape = 's32[]', space=sflag, size = 0x4, offset = 0, fixed_abs, tag = 'sflag constant byte address 0x0 - dummy sync flag']
  #allocation125 [shape = 's32[]', space=sflag, size = 0x4, offset = 0, fixed_abs, tag = 'sflag constant byte address 0x0 - dummy sync flag']
  #allocation126 [shape = 's32[]', space=sflag, size = 0x4, offset = 0, fixed_abs, tag = 'sflag constant byte address 0x0 - dummy sync flag']
  #allocation127 [shape = 's32[]', space=sflag, size = 0x4, offset = 0, fixed_abs, tag = 'sflag constant byte address 0x0 - dummy sync flag']
  #allocation128 [shape = 's32[]', space=sflag, size = 0x4, offset = 0, fixed_abs, tag = 'sflag constant byte address 0x0 - dummy sync flag']
  #allocation129 [shape = 's32[]', space=sflag, size = 0x4, offset = 0, fixed_abs, tag = 'sflag constant byte address 0x0 - dummy sync flag']
  #allocation130 [shape = 's32[]', space=sflag, size = 0x4, offset = 0, fixed_abs, tag = 'sflag constant byte address 0x0 - dummy sync flag']
  #allocation131 [shape = 's32[]', space=sflag, size = 0x4, offset = 0, fixed_abs, tag = 'sflag constant byte address 0x0 - dummy sync flag']
  #allocation132 [shape = 's32[]', space=sflag, size = 0x4, offset = 0, fixed_abs, tag = 'sflag constant byte address 0x0 - dummy sync flag']
  #allocation133 [shape = 's32[]', space=sflag, size = 0x4, offset = 0, fixed_abs, tag = 'sflag constant byte address 0x0 - dummy sync flag']
  #allocation134 [shape = 's32[]', space=sflag, size = 0x4, offset = 0, fixed_abs, tag = 'sflag constant byte address 0x0 - dummy sync flag']
  #allocation135 [shape = 's32[]', space=sflag, size = 0x4, offset = 0, fixed_abs, tag = 'sflag constant byte address 0x0 - dummy sync flag']
  #allocation136 [shape = 's32[]', space=sflag, size = 0x4, offset = 0, fixed_abs, tag = 'sflag constant byte address 0x0 - dummy sync flag']
  #allocation137 [shape = 's32[]', space=sflag, size = 0x4, offset = 0, fixed_abs, tag = 'sflag constant byte address 0x0 - dummy sync flag']
  #allocation138 [shape = 's32[]', space=sflag, size = 0x4, offset = 0, fixed_abs, tag = 'sflag constant byte address 0x0 - dummy sync flag']
  #allocation139 [shape = 's32[]', space=sflag, size = 0x4, offset = 0, fixed_abs, tag = 'sflag constant byte address 0x0 - dummy sync flag']
  #allocation140 [shape = 's32[]', space=sflag, size = 0x4, offset = 0, fixed_abs, tag = 'sflag constant byte address 0x0 - dummy sync flag']
  %s0 = inlined_call_operand.hbm [shape: s32[8,8], index: 0, kind: input, shape index: {}]
  %s1 = inlined_call_operand.hbm [shape: f32[8,8], index: 1, kind: input, shape index: {}]
  %s2 = inlined_call_operand.hbm [shape: f32[33,128], index: 2, kind: input, shape index: {}]
  %s3 = inlined_call_operand.hbm [shape: f32[8,128], index: 3, kind: output, shape index: {}]
  %s4 = sld [smem:[#allocation0]]
  $region274: #{tpu_custom_call.1} parent=0
    _
  %s6 = ssub.s32 1, %s4
  %s7 = scalar_select 0, %s6, %s4
  %9 = dma.hbm_to_smem %s0, 128, [#allocation6], [#allocation5]
  %10 = dma.done [#allocation5], 128
  %11 = sfence
  $region1: #{tpu_custom_call.1} parent=0
    #allocation7 [shape = 'u8[4096]{0}', space=vmem, size = 0x1000, scoped, tag = 'input window, operand 1, single buffered']
    #allocation8 [shape = 's32[1]{0}', space=sflag, size = 0x4, scoped, tag = 'scoped memory for tpu_custom_call.1']
    #allocation9 [shape = 's32[1]{0}', space=sflag, size = 0x4, scoped, tag = 'scoped memory for tpu_custom_call.1']
    #allocation10 [shape = 'u8[4096]{0}', space=vmem, size = 0x1000, scoped, tag = 'output window, operand 0, single buffered']
    %12 = vsyncpa [#allocation8], 0
    %13 = vsyncpa [#allocation9], 0
    // Predicated region
    $region2: #{tpu_custom_call.1} parent=1 // pred_check
      _
    $region3: #{tpu_custom_call.1} parent=1 // pred_check_branch
      %15 = sbr.rel (0) target = $region5
    $region4: #{tpu_custom_call.1} parent=1 // pred_region
      %s17 = ssub.s32 128, 128
      %18 = vsyncadd [#allocation8], %s17
      %s20 = sshll.u32 [#allocation7], 4
      %s21 = int_to_ptr.vmem [resolvable:$true] %s20
      %23 = dma.hbm_to_vmem [thread:$0]  %s1, 128, %s21, [#allocation8]
    $region5: #{tpu_custom_call.1} parent=1 // pred_fallthru
      _
    // Predicated region
    $region6: #{tpu_custom_call.1} parent=1 // pred_check
      _
    $region7: #{tpu_custom_call.1} parent=1 // pred_check_branch
      %25 = sbr.rel (0) target = $region9
    $region8: #{tpu_custom_call.1} parent=1 // pred_region
      %26 = dma.done [#allocation8], 128
    $region9: #{tpu_custom_call.1} parent=1 // pred_fallthru
      _
    %s27 = smul.u32 0, 8
    %28 = vst [vmem:[#allocation3] sm:$0xff] 0.0
    %s29 = smul.u32 %s27, 128
    %s30 = sld [smem:[#allocation6 + %s29]]
    %s31 = smul.addr %s30, 16
    %s32 = scalar_lea.hbm %s2, %s31
    // Predicated region
    $region10: #{tpu_custom_call.1} parent=1 // pred_check
      _
    $region11: #{tpu_custom_call.1} parent=1 // pred_check_branch
      %34 = sbr.rel target = $region13
    $region12: #{tpu_custom_call.1} parent=1 // pred_region
      %35 = sst [smem:[#allocation13]] [#allocation12]
      %36 = sst [smem:[#allocation14]] [#allocation11]
    $region13: #{tpu_custom_call.1} parent=1 // pred_fallthru
      _
    %38 = shalt.err (0)
    %s40 = sshll.u32 [#allocation2], 4
    %s41 = int_to_ptr.vmem [resolvable:$true] %s40
    %43 = dma.hbm_to_vmem [thread:$0]  %s32, 16, %s41, [#allocation4]
    %s44 = sadd.s32 %s27, 1
    %s45 = smul.u32 %s44, 128
    %s46 = sld [smem:[#allocation6 + %s45]]
    %s47 = smul.addr %s46, 16
    %s48 = scalar_lea.hbm %s2, %s47
    %s49 = scalar_lea.vmem [#allocation2], 1
    // Predicated region
    $region14: #{tpu_custom_call.1} parent=1 // pred_check
      _
    $region15: #{tpu_custom_call.1} parent=1 // pred_check_branch
      %51 = sbr.rel target = $region17
    $region16: #{tpu_custom_call.1} parent=1 // pred_region
      %52 = sst [smem:[#allocation13]] [#allocation16]
      %53 = sst [smem:[#allocation14]] [#allocation15]
    $region17: #{tpu_custom_call.1} parent=1 // pred_fallthru
      _
    %55 = shalt.err (0)
    %s57 = sshll.u32 %s49, 4
    %s58 = int_to_ptr.vmem [resolvable:$true] %s57
    %60 = dma.hbm_to_vmem [thread:$0]  %s48, 16, %s58, [#allocation4]
    %s61 = sadd.s32 %s27, 2
    %s62 = smul.u32 %s61, 128
    %s63 = sld [smem:[#allocation6 + %s62]]
    %s64 = smul.addr %s63, 16
    %s65 = scalar_lea.hbm %s2, %s64
    %s66 = scalar_lea.vmem [#allocation2], 2
    // Predicated region
    $region18: #{tpu_custom_call.1} parent=1 // pred_check
      _
    $region19: #{tpu_custom_call.1} parent=1 // pred_check_branch
      %68 = sbr.rel target = $region21
    $region20: #{tpu_custom_call.1} parent=1 // pred_region
      %69 = sst [smem:[#allocation13]] [#allocation18]
      %70 = sst [smem:[#allocation14]] [#allocation17]
    $region21: #{tpu_custom_call.1} parent=1 // pred_fallthru
      _
    %72 = shalt.err (0)
    %s74 = sshll.u32 %s66, 4
    %s75 = int_to_ptr.vmem [resolvable:$true] %s74
    %77 = dma.hbm_to_vmem [thread:$0]  %s65, 16, %s75, [#allocation4]
    %s78 = sadd.s32 %s27, 3
    %s79 = smul.u32 %s78, 128
    %s80 = sld [smem:[#allocation6 + %s79]]
    %s81 = smul.addr %s80, 16
    %s82 = scalar_lea.hbm %s2, %s81
    %s83 = scalar_lea.vmem [#allocation2], 3
    // Predicated region
    $region22: #{tpu_custom_call.1} parent=1 // pred_check
      _
    $region23: #{tpu_custom_call.1} parent=1 // pred_check_branch
      %85 = sbr.rel target = $region25
    $region24: #{tpu_custom_call.1} parent=1 // pred_region
      %86 = sst [smem:[#allocation13]] [#allocation20]
      %87 = sst [smem:[#allocation14]] [#allocation19]
    $region25: #{tpu_custom_call.1} parent=1 // pred_fallthru
      _
    %89 = shalt.err (0)
    %s91 = sshll.u32 %s83, 4
    %s92 = int_to_ptr.vmem [resolvable:$true] %s91
    %94 = dma.hbm_to_vmem [thread:$0]  %s82, 16, %s92, [#allocation4]
    %s95 = sadd.s32 %s27, 4
    %s96 = smul.u32 %s95, 128
    %s97 = sld [smem:[#allocation6 + %s96]]
    %s98 = smul.addr %s97, 16
    %s99 = scalar_lea.hbm %s2, %s98
    %s100 = scalar_lea.vmem [#allocation2], 4
    // Predicated region
    $region26: #{tpu_custom_call.1} parent=1 // pred_check
      _
    $region27: #{tpu_custom_call.1} parent=1 // pred_check_branch
      %102 = sbr.rel target = $region29
    $region28: #{tpu_custom_call.1} parent=1 // pred_region
      %103 = sst [smem:[#allocation13]] [#allocation22]
      %104 = sst [smem:[#allocation14]] [#allocation21]
    $region29: #{tpu_custom_call.1} parent=1 // pred_fallthru
      _
    %106 = shalt.err (0)
    %s108 = sshll.u32 %s100, 4
    %s109 = int_to_ptr.vmem [resolvable:$true] %s108
    %111 = dma.hbm_to_vmem [thread:$0]  %s99, 16, %s109, [#allocation4]
    %s112 = sadd.s32 %s27, 5
    %s113 = smul.u32 %s112, 128
    %s114 = sld [smem:[#allocation6 + %s113]]
    %s115 = smul.addr %s114, 16
    %s116 = scalar_lea.hbm %s2, %s115
    %s117 = scalar_lea.vmem [#allocation2], 5
    // Predicated region
    $region30: #{tpu_custom_call.1} parent=1 // pred_check
      _
    $region31: #{tpu_custom_call.1} parent=1 // pred_check_branch
      %119 = sbr.rel target = $region33
    $region32: #{tpu_custom_call.1} parent=1 // pred_region
      %120 = sst [smem:[#allocation13]] [#allocation24]
      %121 = sst [smem:[#allocation14]] [#allocation23]
    $region33: #{tpu_custom_call.1} parent=1 // pred_fallthru
      _
    %123 = shalt.err (0)
    %s125 = sshll.u32 %s117, 4
    %s126 = int_to_ptr.vmem [resolvable:$true] %s125
    %128 = dma.hbm_to_vmem [thread:$0]  %s116, 16, %s126, [#allocation4]
    %s129 = sadd.s32 %s27, 6
    %s130 = smul.u32 %s129, 128
    %s131 = sld [smem:[#allocation6 + %s130]]
    %s132 = smul.addr %s131, 16
    %s133 = scalar_lea.hbm %s2, %s132
    %s134 = scalar_lea.vmem [#allocation2], 6
    // Predicated region
    $region34: #{tpu_custom_call.1} parent=1 // pred_check
      _
    $region35: #{tpu_custom_call.1} parent=1 // pred_check_branch
      %136 = sbr.rel target = $region37
    $region36: #{tpu_custom_call.1} parent=1 // pred_region
      %137 = sst [smem:[#allocation13]] [#allocation26]
      %138 = sst [smem:[#allocation14]] [#allocation25]
    $region37: #{tpu_custom_call.1} parent=1 // pred_fallthru
      _
    %140 = shalt.err (0)
    %s142 = sshll.u32 %s134, 4
    %s143 = int_to_ptr.vmem [resolvable:$true] %s142
    %145 = dma.hbm_to_vmem [thread:$0]  %s133, 16, %s143, [#allocation4]
    %s146 = sadd.s32 %s27, 7
    %s147 = smul.u32 %s146, 128
    %s148 = sld [smem:[#allocation6 + %s147]]
    %s149 = smul.addr %s148, 16
    %s150 = scalar_lea.hbm %s2, %s149
    %s151 = scalar_lea.vmem [#allocation2], 7
    // Predicated region
    $region38: #{tpu_custom_call.1} parent=1 // pred_check
      _
    $region39: #{tpu_custom_call.1} parent=1 // pred_check_branch
      %153 = sbr.rel target = $region41
    $region40: #{tpu_custom_call.1} parent=1 // pred_region
      %154 = sst [smem:[#allocation13]] [#allocation28]
      %155 = sst [smem:[#allocation14]] [#allocation27]
    $region41: #{tpu_custom_call.1} parent=1 // pred_fallthru
      _
    %157 = shalt.err (0)
    %s159 = sshll.u32 %s151, 4
    %s160 = int_to_ptr.vmem [resolvable:$true] %s159
    %162 = dma.hbm_to_vmem [thread:$0]  %s150, 16, %s160, [#allocation4]
    %s163 = sadd.s32 %s29, 1
    %s164 = sld [smem:[#allocation6 + %s163]]
    %s165 = smul.addr %s164, 16
    %s166 = scalar_lea.hbm %s2, %s165
    %s167 = scalar_lea.vmem [#allocation2], 8
    // Predicated region
    $region42: #{tpu_custom_call.1} parent=1 // pred_check
      _
    $region43: #{tpu_custom_call.1} parent=1 // pred_check_branch
      %169 = sbr.rel target = $region45
    $region44: #{tpu_custom_call.1} parent=1 // pred_region
      %170 = sst [smem:[#allocation13]] [#allocation30]
      %171 = sst [smem:[#allocation14]] [#allocation29]
    $region45: #{tpu_custom_call.1} parent=1 // pred_fallthru
      _
    %173 = shalt.err (0)
    %s175 = sshll.u32 %s167, 4
    %s176 = int_to_ptr.vmem [resolvable:$true] %s175
    %178 = dma.hbm_to_vmem [thread:$0]  %s166, 16, %s176, [#allocation4]
    %s179 = sadd.s32 %s45, 1
    %s180 = sld [smem:[#allocation6 + %s179]]
    %s181 = smul.addr %s180, 16
    %s182 = scalar_lea.hbm %s2, %s181
    %s183 = scalar_lea.vmem [#allocation2], 9
    // Predicated region
    $region46: #{tpu_custom_call.1} parent=1 // pred_check
      _
    $region47: #{tpu_custom_call.1} parent=1 // pred_check_branch
      %185 = sbr.rel target = $region49
    $region48: #{tpu_custom_call.1} parent=1 // pred_region
      %186 = sst [smem:[#allocation13]] [#allocation32]
      %187 = sst [smem:[#allocation14]] [#allocation31]
    $region49: #{tpu_custom_call.1} parent=1 // pred_fallthru
      _
    %189 = shalt.err (0)
    %s191 = sshll.u32 %s183, 4
    %s192 = int_to_ptr.vmem [resolvable:$true] %s191
    %194 = dma.hbm_to_vmem [thread:$0]  %s182, 16, %s192, [#allocation4]
    %s195 = sadd.s32 %s62, 1
    %s196 = sld [smem:[#allocation6 + %s195]]
    %s197 = smul.addr %s196, 16
    %s198 = scalar_lea.hbm %s2, %s197
    %s199 = scalar_lea.vmem [#allocation2], 10
    // Predicated region
    $region50: #{tpu_custom_call.1} parent=1 // pred_check
      _
    $region51: #{tpu_custom_call.1} parent=1 // pred_check_branch
      %201 = sbr.rel target = $region53
    $region52: #{tpu_custom_call.1} parent=1 // pred_region
      %202 = sst [smem:[#allocation13]] [#allocation34]
      %203 = sst [smem:[#allocation14]] [#allocation33]
    $region53: #{tpu_custom_call.1} parent=1 // pred_fallthru
      _
    %205 = shalt.err (0)
    %s207 = sshll.u32 %s199, 4
    %s208 = int_to_ptr.vmem [resolvable:$true] %s207
    %210 = dma.hbm_to_vmem [thread:$0]  %s198, 16, %s208, [#allocation4]
    %s211 = sadd.s32 %s79, 1
    %s212 = sld [smem:[#allocation6 + %s211]]
    %s213 = smul.addr %s212, 16
    %s214 = scalar_lea.hbm %s2, %s213
    %s215 = scalar_lea.vmem [#allocation2], 11
    // Predicated region
    $region54: #{tpu_custom_call.1} parent=1 // pred_check
      _
    $region55: #{tpu_custom_call.1} parent=1 // pred_check_branch
      %217 = sbr.rel target = $region57
    $region56: #{tpu_custom_call.1} parent=1 // pred_region
      %218 = sst [smem:[#allocation13]] [#allocation36]
      %219 = sst [smem:[#allocation14]] [#allocation35]
    $region57: #{tpu_custom_call.1} parent=1 // pred_fallthru
      _
    %221 = shalt.err (0)
    %s223 = sshll.u32 %s215, 4
    %s224 = int_to_ptr.vmem [resolvable:$true] %s223
    %226 = dma.hbm_to_vmem [thread:$0]  %s214, 16, %s224, [#allocation4]
    %s227 = sadd.s32 %s96, 1
    %s228 = sld [smem:[#allocation6 + %s227]]
    %s229 = smul.addr %s228, 16
    %s230 = scalar_lea.hbm %s2, %s229
    %s231 = scalar_lea.vmem [#allocation2], 12
    // Predicated region
    $region58: #{tpu_custom_call.1} parent=1 // pred_check
      _
    $region59: #{tpu_custom_call.1} parent=1 // pred_check_branch
      %233 = sbr.rel target = $region61
    $region60: #{tpu_custom_call.1} parent=1 // pred_region
      %234 = sst [smem:[#allocation13]] [#allocation38]
      %235 = sst [smem:[#allocation14]] [#allocation37]
    $region61: #{tpu_custom_call.1} parent=1 // pred_fallthru
      _
    %237 = shalt.err (0)
    %s239 = sshll.u32 %s231, 4
    %s240 = int_to_ptr.vmem [resolvable:$true] %s239
    %242 = dma.hbm_to_vmem [thread:$0]  %s230, 16, %s240, [#allocation4]
    %s243 = sadd.s32 %s113, 1
    %s244 = sld [smem:[#allocation6 + %s243]]
    %s245 = smul.addr %s244, 16
    %s246 = scalar_lea.hbm %s2, %s245
    %s247 = scalar_lea.vmem [#allocation2], 13
    // Predicated region
    $region62: #{tpu_custom_call.1} parent=1 // pred_check
      _
    $region63: #{tpu_custom_call.1} parent=1 // pred_check_branch
      %249 = sbr.rel target = $region65
    $region64: #{tpu_custom_call.1} parent=1 // pred_region
      %250 = sst [smem:[#allocation13]] [#allocation40]
      %251 = sst [smem:[#allocation14]] [#allocation39]
    $region65: #{tpu_custom_call.1} parent=1 // pred_fallthru
      _
    %253 = shalt.err (0)
    %s255 = sshll.u32 %s247, 4
    %s256 = int_to_ptr.vmem [resolvable:$true] %s255
    %258 = dma.hbm_to_vmem [thread:$0]  %s246, 16, %s256, [#allocation4]
    %s259 = sadd.s32 %s130, 1
    %s260 = sld [smem:[#allocation6 + %s259]]
    %s261 = smul.addr %s260, 16
    %s262 = scalar_lea.hbm %s2, %s261
    %s263 = scalar_lea.vmem [#allocation2], 14
    // Predicated region
    $region66: #{tpu_custom_call.1} parent=1 // pred_check
      _
    $region67: #{tpu_custom_call.1} parent=1 // pred_check_branch
      %265 = sbr.rel target = $region69
    $region68: #{tpu_custom_call.1} parent=1 // pred_region
      %266 = sst [smem:[#allocation13]] [#allocation42]
      %267 = sst [smem:[#allocation14]] [#allocation41]
    $region69: #{tpu_custom_call.1} parent=1 // pred_fallthru
      _
    %269 = shalt.err (0)
    %s271 = sshll.u32 %s263, 4
    %s272 = int_to_ptr.vmem [resolvable:$true] %s271
    %274 = dma.hbm_to_vmem [thread:$0]  %s262, 16, %s272, [#allocation4]
    %s275 = sadd.s32 %s147, 1
    %s276 = sld [smem:[#allocation6 + %s275]]
    %s277 = smul.addr %s276, 16
    %s278 = scalar_lea.hbm %s2, %s277
    %s279 = scalar_lea.vmem [#allocation2], 15
    // Predicated region
    $region70: #{tpu_custom_call.1} parent=1 // pred_check
      _
    $region71: #{tpu_custom_call.1} parent=1 // pred_check_branch
      %281 = sbr.rel target = $region73
    $region72: #{tpu_custom_call.1} parent=1 // pred_region
      %282 = sst [smem:[#allocation13]] [#allocation44]
      %283 = sst [smem:[#allocation14]] [#allocation43]
    $region73: #{tpu_custom_call.1} parent=1 // pred_fallthru
      _
    %285 = shalt.err (0)
    %s287 = sshll.u32 %s279, 4
    %s288 = int_to_ptr.vmem [resolvable:$true] %s287
    %290 = dma.hbm_to_vmem [thread:$0]  %s278, 16, %s288, [#allocation4]
    %s291 = sadd.s32 %s29, 2
    %s292 = sld [smem:[#allocation6 + %s291]]
    %s293 = smul.addr %s292, 16
    %s294 = scalar_lea.hbm %s2, %s293
    %s295 = scalar_lea.vmem [#allocation2], 16
    // Predicated region
    $region74: #{tpu_custom_call.1} parent=1 // pred_check
      _
    $region75: #{tpu_custom_call.1} parent=1 // pred_check_branch
      %297 = sbr.rel target = $region77
    $region76: #{tpu_custom_call.1} parent=1 // pred_region
      %298 = sst [smem:[#allocation13]] [#allocation46]
      %299 = sst [smem:[#allocation14]] [#allocation45]
    $region77: #{tpu_custom_call.1} parent=1 // pred_fallthru
      _
    %301 = shalt.err (0)
    %s303 = sshll.u32 %s295, 4
    %s304 = int_to_ptr.vmem [resolvable:$true] %s303
    %306 = dma.hbm_to_vmem [thread:$0]  %s294, 16, %s304, [#allocation4]
    %s307 = sadd.s32 %s45, 2
    %s308 = sld [smem:[#allocation6 + %s307]]
    %s309 = smul.addr %s308, 16
    %s310 = scalar_lea.hbm %s2, %s309
    %s311 = scalar_lea.vmem [#allocation2], 17
    // Predicated region
    $region78: #{tpu_custom_call.1} parent=1 // pred_check
      _
    $region79: #{tpu_custom_call.1} parent=1 // pred_check_branch
      %313 = sbr.rel target = $region81
    $region80: #{tpu_custom_call.1} parent=1 // pred_region
      %314 = sst [smem:[#allocation13]] [#allocation48]
      %315 = sst [smem:[#allocation14]] [#allocation47]
    $region81: #{tpu_custom_call.1} parent=1 // pred_fallthru
      _
    %317 = shalt.err (0)
    %s319 = sshll.u32 %s311, 4
    %s320 = int_to_ptr.vmem [resolvable:$true] %s319
    %322 = dma.hbm_to_vmem [thread:$0]  %s310, 16, %s320, [#allocation4]
    %s323 = sadd.s32 %s62, 2
    %s324 = sld [smem:[#allocation6 + %s323]]
    %s325 = smul.addr %s324, 16
    %s326 = scalar_lea.hbm %s2, %s325
    %s327 = scalar_lea.vmem [#allocation2], 18
    // Predicated region
    $region82: #{tpu_custom_call.1} parent=1 // pred_check
      _
    $region83: #{tpu_custom_call.1} parent=1 // pred_check_branch
      %329 = sbr.rel target = $region85
    $region84: #{tpu_custom_call.1} parent=1 // pred_region
      %330 = sst [smem:[#allocation13]] [#allocation50]
      %331 = sst [smem:[#allocation14]] [#allocation49]
    $region85: #{tpu_custom_call.1} parent=1 // pred_fallthru
      _
    %333 = shalt.err (0)
    %s335 = sshll.u32 %s327, 4
    %s336 = int_to_ptr.vmem [resolvable:$true] %s335
    %338 = dma.hbm_to_vmem [thread:$0]  %s326, 16, %s336, [#allocation4]
    %s339 = sadd.s32 %s79, 2
    %s340 = sld [smem:[#allocation6 + %s339]]
    %s341 = smul.addr %s340, 16
    %s342 = scalar_lea.hbm %s2, %s341
    %s343 = scalar_lea.vmem [#allocation2], 19
    // Predicated region
    $region86: #{tpu_custom_call.1} parent=1 // pred_check
      _
    $region87: #{tpu_custom_call.1} parent=1 // pred_check_branch
      %345 = sbr.rel target = $region89
    $region88: #{tpu_custom_call.1} parent=1 // pred_region
      %346 = sst [smem:[#allocation13]] [#allocation52]
      %347 = sst [smem:[#allocation14]] [#allocation51]
    $region89: #{tpu_custom_call.1} parent=1 // pred_fallthru
      _
    %349 = shalt.err (0)
    %s351 = sshll.u32 %s343, 4
    %s352 = int_to_ptr.vmem [resolvable:$true] %s351
    %354 = dma.hbm_to_vmem [thread:$0]  %s342, 16, %s352, [#allocation4]
    %s355 = sadd.s32 %s96, 2
    %s356 = sld [smem:[#allocation6 + %s355]]
    %s357 = smul.addr %s356, 16
    %s358 = scalar_lea.hbm %s2, %s357
    %s359 = scalar_lea.vmem [#allocation2], 20
    // Predicated region
    $region90: #{tpu_custom_call.1} parent=1 // pred_check
      _
    $region91: #{tpu_custom_call.1} parent=1 // pred_check_branch
      %361 = sbr.rel target = $region93
    $region92: #{tpu_custom_call.1} parent=1 // pred_region
      %362 = sst [smem:[#allocation13]] [#allocation54]
      %363 = sst [smem:[#allocation14]] [#allocation53]
    $region93: #{tpu_custom_call.1} parent=1 // pred_fallthru
      _
    %365 = shalt.err (0)
    %s367 = sshll.u32 %s359, 4
    %s368 = int_to_ptr.vmem [resolvable:$true] %s367
    %370 = dma.hbm_to_vmem [thread:$0]  %s358, 16, %s368, [#allocation4]
    %s371 = sadd.s32 %s113, 2
    %s372 = sld [smem:[#allocation6 + %s371]]
    %s373 = smul.addr %s372, 16
    %s374 = scalar_lea.hbm %s2, %s373
    %s375 = scalar_lea.vmem [#allocation2], 21
    // Predicated region
    $region94: #{tpu_custom_call.1} parent=1 // pred_check
      _
    $region95: #{tpu_custom_call.1} parent=1 // pred_check_branch
      %377 = sbr.rel target = $region97
    $region96: #{tpu_custom_call.1} parent=1 // pred_region
      %378 = sst [smem:[#allocation13]] [#allocation56]
      %379 = sst [smem:[#allocation14]] [#allocation55]
    $region97: #{tpu_custom_call.1} parent=1 // pred_fallthru
      _
    %381 = shalt.err (0)
    %s383 = sshll.u32 %s375, 4
    %s384 = int_to_ptr.vmem [resolvable:$true] %s383
    %386 = dma.hbm_to_vmem [thread:$0]  %s374, 16, %s384, [#allocation4]
    %s387 = sadd.s32 %s130, 2
    %s388 = sld [smem:[#allocation6 + %s387]]
    %s389 = smul.addr %s388, 16
    %s390 = scalar_lea.hbm %s2, %s389
    %s391 = scalar_lea.vmem [#allocation2], 22
    // Predicated region
    $region98: #{tpu_custom_call.1} parent=1 // pred_check
      _
    $region99: #{tpu_custom_call.1} parent=1 // pred_check_branch
      %393 = sbr.rel target = $region101
    $region100: #{tpu_custom_call.1} parent=1 // pred_region
      %394 = sst [smem:[#allocation13]] [#allocation58]
      %395 = sst [smem:[#allocation14]] [#allocation57]
    $region101: #{tpu_custom_call.1} parent=1 // pred_fallthru
      _
    %397 = shalt.err (0)
    %s399 = sshll.u32 %s391, 4
    %s400 = int_to_ptr.vmem [resolvable:$true] %s399
    %402 = dma.hbm_to_vmem [thread:$0]  %s390, 16, %s400, [#allocation4]
    %s403 = sadd.s32 %s147, 2
    %s404 = sld [smem:[#allocation6 + %s403]]
    %s405 = smul.addr %s404, 16
    %s406 = scalar_lea.hbm %s2, %s405
    %s407 = scalar_lea.vmem [#allocation2], 23
    // Predicated region
    $region102: #{tpu_custom_call.1} parent=1 // pred_check
      _
    $region103: #{tpu_custom_call.1} parent=1 // pred_check_branch
      %409 = sbr.rel target = $region105
    $region104: #{tpu_custom_call.1} parent=1 // pred_region
      %410 = sst [smem:[#allocation13]] [#allocation60]
      %411 = sst [smem:[#allocation14]] [#allocation59]
    $region105: #{tpu_custom_call.1} parent=1 // pred_fallthru
      _
    %413 = shalt.err (0)
    %s415 = sshll.u32 %s407, 4
    %s416 = int_to_ptr.vmem [resolvable:$true] %s415
    %418 = dma.hbm_to_vmem [thread:$0]  %s406, 16, %s416, [#allocation4]
    %s419 = sadd.s32 %s29, 3
    %s420 = sld [smem:[#allocation6 + %s419]]
    %s421 = smul.addr %s420, 16
    %s422 = scalar_lea.hbm %s2, %s421
    %s423 = scalar_lea.vmem [#allocation2], 24
    // Predicated region
    $region106: #{tpu_custom_call.1} parent=1 // pred_check
      _
    $region107: #{tpu_custom_call.1} parent=1 // pred_check_branch
      %425 = sbr.rel target = $region109
    $region108: #{tpu_custom_call.1} parent=1 // pred_region
      %426 = sst [smem:[#allocation13]] [#allocation62]
      %427 = sst [smem:[#allocation14]] [#allocation61]
    $region109: #{tpu_custom_call.1} parent=1 // pred_fallthru
      _
    %429 = shalt.err (0)
    %s431 = sshll.u32 %s423, 4
    %s432 = int_to_ptr.vmem [resolvable:$true] %s431
    %434 = dma.hbm_to_vmem [thread:$0]  %s422, 16, %s432, [#allocation4]
    %s435 = sadd.s32 %s45, 3
    %s436 = sld [smem:[#allocation6 + %s435]]
    %s437 = smul.addr %s436, 16
    %s438 = scalar_lea.hbm %s2, %s437
    %s439 = scalar_lea.vmem [#allocation2], 25
    // Predicated region
    $region110: #{tpu_custom_call.1} parent=1 // pred_check
      _
    $region111: #{tpu_custom_call.1} parent=1 // pred_check_branch
      %441 = sbr.rel target = $region113
    $region112: #{tpu_custom_call.1} parent=1 // pred_region
      %442 = sst [smem:[#allocation13]] [#allocation64]
      %443 = sst [smem:[#allocation14]] [#allocation63]
    $region113: #{tpu_custom_call.1} parent=1 // pred_fallthru
      _
    %445 = shalt.err (0)
    %s447 = sshll.u32 %s439, 4
    %s448 = int_to_ptr.vmem [resolvable:$true] %s447
    %450 = dma.hbm_to_vmem [thread:$0]  %s438, 16, %s448, [#allocation4]
    %s451 = sadd.s32 %s62, 3
    %s452 = sld [smem:[#allocation6 + %s451]]
    %s453 = smul.addr %s452, 16
    %s454 = scalar_lea.hbm %s2, %s453
    %s455 = scalar_lea.vmem [#allocation2], 26
    // Predicated region
    $region114: #{tpu_custom_call.1} parent=1 // pred_check
      _
    $region115: #{tpu_custom_call.1} parent=1 // pred_check_branch
      %457 = sbr.rel target = $region117
    $region116: #{tpu_custom_call.1} parent=1 // pred_region
      %458 = sst [smem:[#allocation13]] [#allocation66]
      %459 = sst [smem:[#allocation14]] [#allocation65]
    $region117: #{tpu_custom_call.1} parent=1 // pred_fallthru
      _
    %461 = shalt.err (0)
    %s463 = sshll.u32 %s455, 4
    %s464 = int_to_ptr.vmem [resolvable:$true] %s463
    %466 = dma.hbm_to_vmem [thread:$0]  %s454, 16, %s464, [#allocation4]
    %s467 = sadd.s32 %s79, 3
    %s468 = sld [smem:[#allocation6 + %s467]]
    %s469 = smul.addr %s468, 16
    %s470 = scalar_lea.hbm %s2, %s469
    %s471 = scalar_lea.vmem [#allocation2], 27
    // Predicated region
    $region118: #{tpu_custom_call.1} parent=1 // pred_check
      _
    $region119: #{tpu_custom_call.1} parent=1 // pred_check_branch
      %473 = sbr.rel target = $region121
    $region120: #{tpu_custom_call.1} parent=1 // pred_region
      %474 = sst [smem:[#allocation13]] [#allocation68]
      %475 = sst [smem:[#allocation14]] [#allocation67]
    $region121: #{tpu_custom_call.1} parent=1 // pred_fallthru
      _
    %477 = shalt.err (0)
    %s479 = sshll.u32 %s471, 4
    %s480 = int_to_ptr.vmem [resolvable:$true] %s479
    %482 = dma.hbm_to_vmem [thread:$0]  %s470, 16, %s480, [#allocation4]
    %s483 = sadd.s32 %s96, 3
    %s484 = sld [smem:[#allocation6 + %s483]]
    %s485 = smul.addr %s484, 16
    %s486 = scalar_lea.hbm %s2, %s485
    %s487 = scalar_lea.vmem [#allocation2], 28
    // Predicated region
    $region122: #{tpu_custom_call.1} parent=1 // pred_check
      _
    $region123: #{tpu_custom_call.1} parent=1 // pred_check_branch
      %489 = sbr.rel target = $region125
    $region124: #{tpu_custom_call.1} parent=1 // pred_region
      %490 = sst [smem:[#allocation13]] [#allocation70]
      %491 = sst [smem:[#allocation14]] [#allocation69]
    $region125: #{tpu_custom_call.1} parent=1 // pred_fallthru
      _
    %493 = shalt.err (0)
    %s495 = sshll.u32 %s487, 4
    %s496 = int_to_ptr.vmem [resolvable:$true] %s495
    %498 = dma.hbm_to_vmem [thread:$0]  %s486, 16, %s496, [#allocation4]
    %s499 = sadd.s32 %s113, 3
    %s500 = sld [smem:[#allocation6 + %s499]]
    %s501 = smul.addr %s500, 16
    %s502 = scalar_lea.hbm %s2, %s501
    %s503 = scalar_lea.vmem [#allocation2], 29
    // Predicated region
    $region126: #{tpu_custom_call.1} parent=1 // pred_check
      _
    $region127: #{tpu_custom_call.1} parent=1 // pred_check_branch
      %505 = sbr.rel target = $region129
    $region128: #{tpu_custom_call.1} parent=1 // pred_region
      %506 = sst [smem:[#allocation13]] [#allocation72]
      %507 = sst [smem:[#allocation14]] [#allocation71]
    $region129: #{tpu_custom_call.1} parent=1 // pred_fallthru
      _
    %509 = shalt.err (0)
    %s511 = sshll.u32 %s503, 4
    %s512 = int_to_ptr.vmem [resolvable:$true] %s511
    %514 = dma.hbm_to_vmem [thread:$0]  %s502, 16, %s512, [#allocation4]
    %s515 = sadd.s32 %s130, 3
    %s516 = sld [smem:[#allocation6 + %s515]]
    %s517 = smul.addr %s516, 16
    %s518 = scalar_lea.hbm %s2, %s517
    %s519 = scalar_lea.vmem [#allocation2], 30
    // Predicated region
    $region130: #{tpu_custom_call.1} parent=1 // pred_check
      _
    $region131: #{tpu_custom_call.1} parent=1 // pred_check_branch
      %521 = sbr.rel target = $region133
    $region132: #{tpu_custom_call.1} parent=1 // pred_region
      %522 = sst [smem:[#allocation13]] [#allocation74]
      %523 = sst [smem:[#allocation14]] [#allocation73]
    $region133: #{tpu_custom_call.1} parent=1 // pred_fallthru
      _
    %525 = shalt.err (0)
    %s527 = sshll.u32 %s519, 4
    %s528 = int_to_ptr.vmem [resolvable:$true] %s527
    %530 = dma.hbm_to_vmem [thread:$0]  %s518, 16, %s528, [#allocation4]
    %s531 = sadd.s32 %s147, 3
    %s532 = sld [smem:[#allocation6 + %s531]]
    %s533 = smul.addr %s532, 16
    %s534 = scalar_lea.hbm %s2, %s533
    %s535 = scalar_lea.vmem [#allocation2], 31
    // Predicated region
    $region134: #{tpu_custom_call.1} parent=1 // pred_check
      _
    $region135: #{tpu_custom_call.1} parent=1 // pred_check_branch
      %537 = sbr.rel target = $region137
    $region136: #{tpu_custom_call.1} parent=1 // pred_region
      %538 = sst [smem:[#allocation13]] [#allocation76]
      %539 = sst [smem:[#allocation14]] [#allocation75]
    $region137: #{tpu_custom_call.1} parent=1 // pred_fallthru
      _
    %541 = shalt.err (0)
    %s543 = sshll.u32 %s535, 4
    %s544 = int_to_ptr.vmem [resolvable:$true] %s543
    %546 = dma.hbm_to_vmem [thread:$0]  %s534, 16, %s544, [#allocation4]
    %s547 = sadd.s32 %s29, 4
    %s548 = sld [smem:[#allocation6 + %s547]]
    %s549 = smul.addr %s548, 16
    %s550 = scalar_lea.hbm %s2, %s549
    %s551 = scalar_lea.vmem [#allocation2], 32
    // Predicated region
    $region138: #{tpu_custom_call.1} parent=1 // pred_check
      _
    $region139: #{tpu_custom_call.1} parent=1 // pred_check_branch
      %553 = sbr.rel target = $region141
    $region140: #{tpu_custom_call.1} parent=1 // pred_region
      %554 = sst [smem:[#allocation13]] [#allocation78]
      %555 = sst [smem:[#allocation14]] [#allocation77]
    $region141: #{tpu_custom_call.1} parent=1 // pred_fallthru
      _
    %557 = shalt.err (0)
    %s559 = sshll.u32 %s551, 4
    %s560 = int_to_ptr.vmem [resolvable:$true] %s559
    %562 = dma.hbm_to_vmem [thread:$0]  %s550, 16, %s560, [#allocation4]
    %s563 = sadd.s32 %s45, 4
    %s564 = sld [smem:[#allocation6 + %s563]]
    %s565 = smul.addr %s564, 16
    %s566 = scalar_lea.hbm %s2, %s565
    %s567 = scalar_lea.vmem [#allocation2], 33
    // Predicated region
    $region142: #{tpu_custom_call.1} parent=1 // pred_check
      _
    $region143: #{tpu_custom_call.1} parent=1 // pred_check_branch
      %569 = sbr.rel target = $region145
    $region144: #{tpu_custom_call.1} parent=1 // pred_region
      %570 = sst [smem:[#allocation13]] [#allocation80]
      %571 = sst [smem:[#allocation14]] [#allocation79]
    $region145: #{tpu_custom_call.1} parent=1 // pred_fallthru
      _
    %573 = shalt.err (0)
    %s575 = sshll.u32 %s567, 4
    %s576 = int_to_ptr.vmem [resolvable:$true] %s575
    %578 = dma.hbm_to_vmem [thread:$0]  %s566, 16, %s576, [#allocation4]
    %s579 = sadd.s32 %s62, 4
    %s580 = sld [smem:[#allocation6 + %s579]]
    %s581 = smul.addr %s580, 16
    %s582 = scalar_lea.hbm %s2, %s581
    %s583 = scalar_lea.vmem [#allocation2], 34
    // Predicated region
    $region146: #{tpu_custom_call.1} parent=1 // pred_check
      _
    $region147: #{tpu_custom_call.1} parent=1 // pred_check_branch
      %585 = sbr.rel target = $region149
    $region148: #{tpu_custom_call.1} parent=1 // pred_region
      %586 = sst [smem:[#allocation13]] [#allocation82]
      %587 = sst [smem:[#allocation14]] [#allocation81]
    $region149: #{tpu_custom_call.1} parent=1 // pred_fallthru
      _
    %589 = shalt.err (0)
    %s591 = sshll.u32 %s583, 4
    %s592 = int_to_ptr.vmem [resolvable:$true] %s591
    %594 = dma.hbm_to_vmem [thread:$0]  %s582, 16, %s592, [#allocation4]
    %s595 = sadd.s32 %s79, 4
    %s596 = sld [smem:[#allocation6 + %s595]]
    %s597 = smul.addr %s596, 16
    %s598 = scalar_lea.hbm %s2, %s597
    %s599 = scalar_lea.vmem [#allocation2], 35
    // Predicated region
    $region150: #{tpu_custom_call.1} parent=1 // pred_check
      _
    $region151: #{tpu_custom_call.1} parent=1 // pred_check_branch
      %601 = sbr.rel target = $region153
    $region152: #{tpu_custom_call.1} parent=1 // pred_region
      %602 = sst [smem:[#allocation13]] [#allocation84]
      %603 = sst [smem:[#allocation14]] [#allocation83]
    $region153: #{tpu_custom_call.1} parent=1 // pred_fallthru
      _
    %605 = shalt.err (0)
    %s607 = sshll.u32 %s599, 4
    %s608 = int_to_ptr.vmem [resolvable:$true] %s607
    %610 = dma.hbm_to_vmem [thread:$0]  %s598, 16, %s608, [#allocation4]
    %s611 = sadd.s32 %s96, 4
    %s612 = sld [smem:[#allocation6 + %s611]]
    %s613 = smul.addr %s612, 16
    %s614 = scalar_lea.hbm %s2, %s613
    %s615 = scalar_lea.vmem [#allocation2], 36
    // Predicated region
    $region154: #{tpu_custom_call.1} parent=1 // pred_check
      _
    $region155: #{tpu_custom_call.1} parent=1 // pred_check_branch
      %617 = sbr.rel target = $region157
    $region156: #{tpu_custom_call.1} parent=1 // pred_region
      %618 = sst [smem:[#allocation13]] [#allocation86]
      %619 = sst [smem:[#allocation14]] [#allocation85]
    $region157: #{tpu_custom_call.1} parent=1 // pred_fallthru
      _
    %621 = shalt.err (0)
    %s623 = sshll.u32 %s615, 4
    %s624 = int_to_ptr.vmem [resolvable:$true] %s623
    %626 = dma.hbm_to_vmem [thread:$0]  %s614, 16, %s624, [#allocation4]
    %s627 = sadd.s32 %s113, 4
    %s628 = sld [smem:[#allocation6 + %s627]]
    %s629 = smul.addr %s628, 16
    %s630 = scalar_lea.hbm %s2, %s629
    %s631 = scalar_lea.vmem [#allocation2], 37
    // Predicated region
    $region158: #{tpu_custom_call.1} parent=1 // pred_check
      _
    $region159: #{tpu_custom_call.1} parent=1 // pred_check_branch
      %633 = sbr.rel target = $region161
    $region160: #{tpu_custom_call.1} parent=1 // pred_region
      %634 = sst [smem:[#allocation13]] [#allocation88]
      %635 = sst [smem:[#allocation14]] [#allocation87]
    $region161: #{tpu_custom_call.1} parent=1 // pred_fallthru
      _
    %637 = shalt.err (0)
    %s639 = sshll.u32 %s631, 4
    %s640 = int_to_ptr.vmem [resolvable:$true] %s639
    %642 = dma.hbm_to_vmem [thread:$0]  %s630, 16, %s640, [#allocation4]
    %s643 = sadd.s32 %s130, 4
    %s644 = sld [smem:[#allocation6 + %s643]]
    %s645 = smul.addr %s644, 16
    %s646 = scalar_lea.hbm %s2, %s645
    %s647 = scalar_lea.vmem [#allocation2], 38
    // Predicated region
    $region162: #{tpu_custom_call.1} parent=1 // pred_check
      _
    $region163: #{tpu_custom_call.1} parent=1 // pred_check_branch
      %649 = sbr.rel target = $region165
    $region164: #{tpu_custom_call.1} parent=1 // pred_region
      %650 = sst [smem:[#allocation13]] [#allocation90]
      %651 = sst [smem:[#allocation14]] [#allocation89]
    $region165: #{tpu_custom_call.1} parent=1 // pred_fallthru
      _
    %653 = shalt.err (0)
    %s655 = sshll.u32 %s647, 4
    %s656 = int_to_ptr.vmem [resolvable:$true] %s655
    %658 = dma.hbm_to_vmem [thread:$0]  %s646, 16, %s656, [#allocation4]
    %s659 = sadd.s32 %s147, 4
    %s660 = sld [smem:[#allocation6 + %s659]]
    %s661 = smul.addr %s660, 16
    %s662 = scalar_lea.hbm %s2, %s661
    %s663 = scalar_lea.vmem [#allocation2], 39
    // Predicated region
    $region166: #{tpu_custom_call.1} parent=1 // pred_check
      _
    $region167: #{tpu_custom_call.1} parent=1 // pred_check_branch
      %665 = sbr.rel target = $region169
    $region168: #{tpu_custom_call.1} parent=1 // pred_region
      %666 = sst [smem:[#allocation13]] [#allocation92]
      %667 = sst [smem:[#allocation14]] [#allocation91]
    $region169: #{tpu_custom_call.1} parent=1 // pred_fallthru
      _
    %669 = shalt.err (0)
    %s671 = sshll.u32 %s663, 4
    %s672 = int_to_ptr.vmem [resolvable:$true] %s671
    %674 = dma.hbm_to_vmem [thread:$0]  %s662, 16, %s672, [#allocation4]
    %s675 = sadd.s32 %s29, 5
    %s676 = sld [smem:[#allocation6 + %s675]]
    %s677 = smul.addr %s676, 16
    %s678 = scalar_lea.hbm %s2, %s677
    %s679 = scalar_lea.vmem [#allocation2], 40
    // Predicated region
    $region170: #{tpu_custom_call.1} parent=1 // pred_check
      _
    $region171: #{tpu_custom_call.1} parent=1 // pred_check_branch
      %681 = sbr.rel target = $region173
    $region172: #{tpu_custom_call.1} parent=1 // pred_region
      %682 = sst [smem:[#allocation13]] [#allocation94]
      %683 = sst [smem:[#allocation14]] [#allocation93]
    $region173: #{tpu_custom_call.1} parent=1 // pred_fallthru
      _
    %685 = shalt.err (0)
    %s687 = sshll.u32 %s679, 4
    %s688 = int_to_ptr.vmem [resolvable:$true] %s687
    %690 = dma.hbm_to_vmem [thread:$0]  %s678, 16, %s688, [#allocation4]
    %s691 = sadd.s32 %s45, 5
    %s692 = sld [smem:[#allocation6 + %s691]]
    %s693 = smul.addr %s692, 16
    %s694 = scalar_lea.hbm %s2, %s693
    %s695 = scalar_lea.vmem [#allocation2], 41
    // Predicated region
    $region174: #{tpu_custom_call.1} parent=1 // pred_check
      _
    $region175: #{tpu_custom_call.1} parent=1 // pred_check_branch
      %697 = sbr.rel target = $region177
    $region176: #{tpu_custom_call.1} parent=1 // pred_region
      %698 = sst [smem:[#allocation13]] [#allocation96]
      %699 = sst [smem:[#allocation14]] [#allocation95]
    $region177: #{tpu_custom_call.1} parent=1 // pred_fallthru
      _
    %701 = shalt.err (0)
    %s703 = sshll.u32 %s695, 4
    %s704 = int_to_ptr.vmem [resolvable:$true] %s703
    %706 = dma.hbm_to_vmem [thread:$0]  %s694, 16, %s704, [#allocation4]
    %s707 = sadd.s32 %s62, 5
    %s708 = sld [smem:[#allocation6 + %s707]]
    %s709 = smul.addr %s708, 16
    %s710 = scalar_lea.hbm %s2, %s709
    %s711 = scalar_lea.vmem [#allocation2], 42
    // Predicated region
    $region178: #{tpu_custom_call.1} parent=1 // pred_check
      _
    $region179: #{tpu_custom_call.1} parent=1 // pred_check_branch
      %713 = sbr.rel target = $region181
    $region180: #{tpu_custom_call.1} parent=1 // pred_region
      %714 = sst [smem:[#allocation13]] [#allocation98]
      %715 = sst [smem:[#allocation14]] [#allocation97]
    $region181: #{tpu_custom_call.1} parent=1 // pred_fallthru
      _
    %717 = shalt.err (0)
    %s719 = sshll.u32 %s711, 4
    %s720 = int_to_ptr.vmem [resolvable:$true] %s719
    %722 = dma.hbm_to_vmem [thread:$0]  %s710, 16, %s720, [#allocation4]
    %s723 = sadd.s32 %s79, 5
    %s724 = sld [smem:[#allocation6 + %s723]]
    %s725 = smul.addr %s724, 16
    %s726 = scalar_lea.hbm %s2, %s725
    %s727 = scalar_lea.vmem [#allocation2], 43
    // Predicated region
    $region182: #{tpu_custom_call.1} parent=1 // pred_check
      _
    $region183: #{tpu_custom_call.1} parent=1 // pred_check_branch
      %729 = sbr.rel target = $region185
    $region184: #{tpu_custom_call.1} parent=1 // pred_region
      %730 = sst [smem:[#allocation13]] [#allocation100]
      %731 = sst [smem:[#allocation14]] [#allocation99]
    $region185: #{tpu_custom_call.1} parent=1 // pred_fallthru
      _
    %733 = shalt.err (0)
    %s735 = sshll.u32 %s727, 4
    %s736 = int_to_ptr.vmem [resolvable:$true] %s735
    %738 = dma.hbm_to_vmem [thread:$0]  %s726, 16, %s736, [#allocation4]
    %s739 = sadd.s32 %s96, 5
    %s740 = sld [smem:[#allocation6 + %s739]]
    %s741 = smul.addr %s740, 16
    %s742 = scalar_lea.hbm %s2, %s741
    %s743 = scalar_lea.vmem [#allocation2], 44
    // Predicated region
    $region186: #{tpu_custom_call.1} parent=1 // pred_check
      _
    $region187: #{tpu_custom_call.1} parent=1 // pred_check_branch
      %745 = sbr.rel target = $region189
    $region188: #{tpu_custom_call.1} parent=1 // pred_region
      %746 = sst [smem:[#allocation13]] [#allocation102]
      %747 = sst [smem:[#allocation14]] [#allocation101]
    $region189: #{tpu_custom_call.1} parent=1 // pred_fallthru
      _
    %749 = shalt.err (0)
    %s751 = sshll.u32 %s743, 4
    %s752 = int_to_ptr.vmem [resolvable:$true] %s751
    %754 = dma.hbm_to_vmem [thread:$0]  %s742, 16, %s752, [#allocation4]
    %s755 = sadd.s32 %s113, 5
    %s756 = sld [smem:[#allocation6 + %s755]]
    %s757 = smul.addr %s756, 16
    %s758 = scalar_lea.hbm %s2, %s757
    %s759 = scalar_lea.vmem [#allocation2], 45
    // Predicated region
    $region190: #{tpu_custom_call.1} parent=1 // pred_check
      _
    $region191: #{tpu_custom_call.1} parent=1 // pred_check_branch
      %761 = sbr.rel target = $region193
    $region192: #{tpu_custom_call.1} parent=1 // pred_region
      %762 = sst [smem:[#allocation13]] [#allocation104]
      %763 = sst [smem:[#allocation14]] [#allocation103]
    $region193: #{tpu_custom_call.1} parent=1 // pred_fallthru
      _
    %765 = shalt.err (0)
    %s767 = sshll.u32 %s759, 4
    %s768 = int_to_ptr.vmem [resolvable:$true] %s767
    %770 = dma.hbm_to_vmem [thread:$0]  %s758, 16, %s768, [#allocation4]
    %s771 = sadd.s32 %s130, 5
    %s772 = sld [smem:[#allocation6 + %s771]]
    %s773 = smul.addr %s772, 16
    %s774 = scalar_lea.hbm %s2, %s773
    %s775 = scalar_lea.vmem [#allocation2], 46
    // Predicated region
    $region194: #{tpu_custom_call.1} parent=1 // pred_check
      _
    $region195: #{tpu_custom_call.1} parent=1 // pred_check_branch
      %777 = sbr.rel target = $region197
    $region196: #{tpu_custom_call.1} parent=1 // pred_region
      %778 = sst [smem:[#allocation13]] [#allocation106]
      %779 = sst [smem:[#allocation14]] [#allocation105]
    $region197: #{tpu_custom_call.1} parent=1 // pred_fallthru
      _
    %781 = shalt.err (0)
    %s783 = sshll.u32 %s775, 4
    %s784 = int_to_ptr.vmem [resolvable:$true] %s783
    %786 = dma.hbm_to_vmem [thread:$0]  %s774, 16, %s784, [#allocation4]
    %s787 = sadd.s32 %s147, 5
    %s788 = sld [smem:[#allocation6 + %s787]]
    %s789 = smul.addr %s788, 16
    %s790 = scalar_lea.hbm %s2, %s789
    %s791 = scalar_lea.vmem [#allocation2], 47
    // Predicated region
    $region198: #{tpu_custom_call.1} parent=1 // pred_check
      _
    $region199: #{tpu_custom_call.1} parent=1 // pred_check_branch
      %793 = sbr.rel target = $region201
    $region200: #{tpu_custom_call.1} parent=1 // pred_region
      %794 = sst [smem:[#allocation13]] [#allocation108]
      %795 = sst [smem:[#allocation14]] [#allocation107]
    $region201: #{tpu_custom_call.1} parent=1 // pred_fallthru
      _
    %797 = shalt.err (0)
    %s799 = sshll.u32 %s791, 4
    %s800 = int_to_ptr.vmem [resolvable:$true] %s799
    %802 = dma.hbm_to_vmem [thread:$0]  %s790, 16, %s800, [#allocation4]
    %s803 = sadd.s32 %s29, 6
    %s804 = sld [smem:[#allocation6 + %s803]]
    %s805 = smul.addr %s804, 16
    %s806 = scalar_lea.hbm %s2, %s805
    %s807 = scalar_lea.vmem [#allocation2], 48
    // Predicated region
    $region202: #{tpu_custom_call.1} parent=1 // pred_check
      _
    $region203: #{tpu_custom_call.1} parent=1 // pred_check_branch
      %809 = sbr.rel target = $region205
    $region204: #{tpu_custom_call.1} parent=1 // pred_region
      %810 = sst [smem:[#allocation13]] [#allocation110]
      %811 = sst [smem:[#allocation14]] [#allocation109]
    $region205: #{tpu_custom_call.1} parent=1 // pred_fallthru
      _
    %813 = shalt.err (0)
    %s815 = sshll.u32 %s807, 4
    %s816 = int_to_ptr.vmem [resolvable:$true] %s815
    %818 = dma.hbm_to_vmem [thread:$0]  %s806, 16, %s816, [#allocation4]
    %s819 = sadd.s32 %s45, 6
    %s820 = sld [smem:[#allocation6 + %s819]]
    %s821 = smul.addr %s820, 16
    %s822 = scalar_lea.hbm %s2, %s821
    %s823 = scalar_lea.vmem [#allocation2], 49
    // Predicated region
    $region206: #{tpu_custom_call.1} parent=1 // pred_check
      _
    $region207: #{tpu_custom_call.1} parent=1 // pred_check_branch
      %825 = sbr.rel target = $region209
    $region208: #{tpu_custom_call.1} parent=1 // pred_region
      %826 = sst [smem:[#allocation13]] [#allocation112]
      %827 = sst [smem:[#allocation14]] [#allocation111]
    $region209: #{tpu_custom_call.1} parent=1 // pred_fallthru
      _
    %829 = shalt.err (0)
    %s831 = sshll.u32 %s823, 4
    %s832 = int_to_ptr.vmem [resolvable:$true] %s831
    %834 = dma.hbm_to_vmem [thread:$0]  %s822, 16, %s832, [#allocation4]
    %s835 = sadd.s32 %s62, 6
    %s836 = sld [smem:[#allocation6 + %s835]]
    %s837 = smul.addr %s836, 16
    %s838 = scalar_lea.hbm %s2, %s837
    %s839 = scalar_lea.vmem [#allocation2], 50
    // Predicated region
    $region210: #{tpu_custom_call.1} parent=1 // pred_check
      _
    $region211: #{tpu_custom_call.1} parent=1 // pred_check_branch
      %841 = sbr.rel target = $region213
    $region212: #{tpu_custom_call.1} parent=1 // pred_region
      %842 = sst [smem:[#allocation13]] [#allocation114]
      %843 = sst [smem:[#allocation14]] [#allocation113]
    $region213: #{tpu_custom_call.1} parent=1 // pred_fallthru
      _
    %845 = shalt.err (0)
    %s847 = sshll.u32 %s839, 4
    %s848 = int_to_ptr.vmem [resolvable:$true] %s847
    %850 = dma.hbm_to_vmem [thread:$0]  %s838, 16, %s848, [#allocation4]
    %s851 = sadd.s32 %s79, 6
    %s852 = sld [smem:[#allocation6 + %s851]]
    %s853 = smul.addr %s852, 16
    %s854 = scalar_lea.hbm %s2, %s853
    %s855 = scalar_lea.vmem [#allocation2], 51
    // Predicated region
    $region214: #{tpu_custom_call.1} parent=1 // pred_check
      _
    $region215: #{tpu_custom_call.1} parent=1 // pred_check_branch
      %857 = sbr.rel target = $region217
    $region216: #{tpu_custom_call.1} parent=1 // pred_region
      %858 = sst [smem:[#allocation13]] [#allocation116]
      %859 = sst [smem:[#allocation14]] [#allocation115]
    $region217: #{tpu_custom_call.1} parent=1 // pred_fallthru
      _
    %861 = shalt.err (0)
    %s863 = sshll.u32 %s855, 4
    %s864 = int_to_ptr.vmem [resolvable:$true] %s863
    %866 = dma.hbm_to_vmem [thread:$0]  %s854, 16, %s864, [#allocation4]
    %s867 = sadd.s32 %s96, 6
    %s868 = sld [smem:[#allocation6 + %s867]]
    %s869 = smul.addr %s868, 16
    %s870 = scalar_lea.hbm %s2, %s869
    %s871 = scalar_lea.vmem [#allocation2], 52
    // Predicated region
    $region218: #{tpu_custom_call.1} parent=1 // pred_check
      _
    $region219: #{tpu_custom_call.1} parent=1 // pred_check_branch
      %873 = sbr.rel target = $region221
    $region220: #{tpu_custom_call.1} parent=1 // pred_region
      %874 = sst [smem:[#allocation13]] [#allocation118]
      %875 = sst [smem:[#allocation14]] [#allocation117]
    $region221: #{tpu_custom_call.1} parent=1 // pred_fallthru
      _
    %877 = shalt.err (0)
    %s879 = sshll.u32 %s871, 4
    %s880 = int_to_ptr.vmem [resolvable:$true] %s879
    %882 = dma.hbm_to_vmem [thread:$0]  %s870, 16, %s880, [#allocation4]
    %s883 = sadd.s32 %s113, 6
    %s884 = sld [smem:[#allocation6 + %s883]]
    %s885 = smul.addr %s884, 16
    %s886 = scalar_lea.hbm %s2, %s885
    %s887 = scalar_lea.vmem [#allocation2], 53
    // Predicated region
    $region222: #{tpu_custom_call.1} parent=1 // pred_check
      _
    $region223: #{tpu_custom_call.1} parent=1 // pred_check_branch
      %889 = sbr.rel target = $region225
    $region224: #{tpu_custom_call.1} parent=1 // pred_region
      %890 = sst [smem:[#allocation13]] [#allocation120]
      %891 = sst [smem:[#allocation14]] [#allocation119]
    $region225: #{tpu_custom_call.1} parent=1 // pred_fallthru
      _
    %893 = shalt.err (0)
    %s895 = sshll.u32 %s887, 4
    %s896 = int_to_ptr.vmem [resolvable:$true] %s895
    %898 = dma.hbm_to_vmem [thread:$0]  %s886, 16, %s896, [#allocation4]
    %s899 = sadd.s32 %s130, 6
    %s900 = sld [smem:[#allocation6 + %s899]]
    %s901 = smul.addr %s900, 16
    %s902 = scalar_lea.hbm %s2, %s901
    %s903 = scalar_lea.vmem [#allocation2], 54
    // Predicated region
    $region226: #{tpu_custom_call.1} parent=1 // pred_check
      _
    $region227: #{tpu_custom_call.1} parent=1 // pred_check_branch
      %905 = sbr.rel target = $region229
    $region228: #{tpu_custom_call.1} parent=1 // pred_region
      %906 = sst [smem:[#allocation13]] [#allocation122]
      %907 = sst [smem:[#allocation14]] [#allocation121]
    $region229: #{tpu_custom_call.1} parent=1 // pred_fallthru
      _
    %909 = shalt.err (0)
    %s911 = sshll.u32 %s903, 4
    %s912 = int_to_ptr.vmem [resolvable:$true] %s911
    %914 = dma.hbm_to_vmem [thread:$0]  %s902, 16, %s912, [#allocation4]
    %s915 = sadd.s32 %s147, 6
    %s916 = sld [smem:[#allocation6 + %s915]]
    %s917 = smul.addr %s916, 16
    %s918 = scalar_lea.hbm %s2, %s917
    %s919 = scalar_lea.vmem [#allocation2], 55
    // Predicated region
    $region230: #{tpu_custom_call.1} parent=1 // pred_check
      _
    $region231: #{tpu_custom_call.1} parent=1 // pred_check_branch
      %921 = sbr.rel target = $region233
    $region232: #{tpu_custom_call.1} parent=1 // pred_region
      %922 = sst [smem:[#allocation13]] [#allocation124]
      %923 = sst [smem:[#allocation14]] [#allocation123]
    $region233: #{tpu_custom_call.1} parent=1 // pred_fallthru
      _
    %925 = shalt.err (0)
    %s927 = sshll.u32 %s919, 4
    %s928 = int_to_ptr.vmem [resolvable:$true] %s927
    %930 = dma.hbm_to_vmem [thread:$0]  %s918, 16, %s928, [#allocation4]
    %s931 = sadd.s32 %s29, 7
    %s932 = sld [smem:[#allocation6 + %s931]]
    %s933 = smul.addr %s932, 16
    %s934 = scalar_lea.hbm %s2, %s933
    %s935 = scalar_lea.vmem [#allocation2], 56
    // Predicated region
    $region234: #{tpu_custom_call.1} parent=1 // pred_check
      _
    $region235: #{tpu_custom_call.1} parent=1 // pred_check_branch
      %937 = sbr.rel target = $region237
    $region236: #{tpu_custom_call.1} parent=1 // pred_region
      %938 = sst [smem:[#allocation13]] [#allocation126]
      %939 = sst [smem:[#allocation14]] [#allocation125]
    $region237: #{tpu_custom_call.1} parent=1 // pred_fallthru
      _
    %941 = shalt.err (0)
    %s943 = sshll.u32 %s935, 4
    %s944 = int_to_ptr.vmem [resolvable:$true] %s943
    %946 = dma.hbm_to_vmem [thread:$0]  %s934, 16, %s944, [#allocation4]
    %s947 = sadd.s32 %s45, 7
    %s948 = sld [smem:[#allocation6 + %s947]]
    %s949 = smul.addr %s948, 16
    %s950 = scalar_lea.hbm %s2, %s949
    %s951 = scalar_lea.vmem [#allocation2], 57
    // Predicated region
    $region238: #{tpu_custom_call.1} parent=1 // pred_check
      _
    $region239: #{tpu_custom_call.1} parent=1 // pred_check_branch
      %953 = sbr.rel target = $region241
    $region240: #{tpu_custom_call.1} parent=1 // pred_region
      %954 = sst [smem:[#allocation13]] [#allocation128]
      %955 = sst [smem:[#allocation14]] [#allocation127]
    $region241: #{tpu_custom_call.1} parent=1 // pred_fallthru
      _
    %957 = shalt.err (0)
    %s959 = sshll.u32 %s951, 4
    %s960 = int_to_ptr.vmem [resolvable:$true] %s959
    %962 = dma.hbm_to_vmem [thread:$0]  %s950, 16, %s960, [#allocation4]
    %s963 = sadd.s32 %s62, 7
    %s964 = sld [smem:[#allocation6 + %s963]]
    %s965 = smul.addr %s964, 16
    %s966 = scalar_lea.hbm %s2, %s965
    %s967 = scalar_lea.vmem [#allocation2], 58
    // Predicated region
    $region242: #{tpu_custom_call.1} parent=1 // pred_check
      _
    $region243: #{tpu_custom_call.1} parent=1 // pred_check_branch
      %969 = sbr.rel target = $region245
    $region244: #{tpu_custom_call.1} parent=1 // pred_region
      %970 = sst [smem:[#allocation13]] [#allocation130]
      %971 = sst [smem:[#allocation14]] [#allocation129]
    $region245: #{tpu_custom_call.1} parent=1 // pred_fallthru
      _
    %973 = shalt.err (0)
    %s975 = sshll.u32 %s967, 4
    %s976 = int_to_ptr.vmem [resolvable:$true] %s975
    %978 = dma.hbm_to_vmem [thread:$0]  %s966, 16, %s976, [#allocation4]
    %s979 = sadd.s32 %s79, 7
    %s980 = sld [smem:[#allocation6 + %s979]]
    %s981 = smul.addr %s980, 16
    %s982 = scalar_lea.hbm %s2, %s981
    %s983 = scalar_lea.vmem [#allocation2], 59
    // Predicated region
    $region246: #{tpu_custom_call.1} parent=1 // pred_check
      _
    $region247: #{tpu_custom_call.1} parent=1 // pred_check_branch
      %985 = sbr.rel target = $region249
    $region248: #{tpu_custom_call.1} parent=1 // pred_region
      %986 = sst [smem:[#allocation13]] [#allocation132]
      %987 = sst [smem:[#allocation14]] [#allocation131]
    $region249: #{tpu_custom_call.1} parent=1 // pred_fallthru
      _
    %989 = shalt.err (0)
    %s991 = sshll.u32 %s983, 4
    %s992 = int_to_ptr.vmem [resolvable:$true] %s991
    %994 = dma.hbm_to_vmem [thread:$0]  %s982, 16, %s992, [#allocation4]
    %s995 = sadd.s32 %s96, 7
    %s996 = sld [smem:[#allocation6 + %s995]]
    %s997 = smul.addr %s996, 16
    %s998 = scalar_lea.hbm %s2, %s997
    %s999 = scalar_lea.vmem [#allocation2], 60
    // Predicated region
    $region250: #{tpu_custom_call.1} parent=1 // pred_check
      _
    $region251: #{tpu_custom_call.1} parent=1 // pred_check_branch
      %1001 = sbr.rel target = $region253
    $region252: #{tpu_custom_call.1} parent=1 // pred_region
      %1002 = sst [smem:[#allocation13]] [#allocation134]
      %1003 = sst [smem:[#allocation14]] [#allocation133]
    $region253: #{tpu_custom_call.1} parent=1 // pred_fallthru
      _
    %1005 = shalt.err (0)
    %s1007 = sshll.u32 %s999, 4
    %s1008 = int_to_ptr.vmem [resolvable:$true] %s1007
    %1010 = dma.hbm_to_vmem [thread:$0]  %s998, 16, %s1008, [#allocation4]
    %s1011 = sadd.s32 %s113, 7
    %s1012 = sld [smem:[#allocation6 + %s1011]]
    %s1013 = smul.addr %s1012, 16
    %s1014 = scalar_lea.hbm %s2, %s1013
    %s1015 = scalar_lea.vmem [#allocation2], 61
    // Predicated region
    $region254: #{tpu_custom_call.1} parent=1 // pred_check
      _
    $region255: #{tpu_custom_call.1} parent=1 // pred_check_branch
      %1017 = sbr.rel target = $region257
    $region256: #{tpu_custom_call.1} parent=1 // pred_region
      %1018 = sst [smem:[#allocation13]] [#allocation136]
      %1019 = sst [smem:[#allocation14]] [#allocation135]
    $region257: #{tpu_custom_call.1} parent=1 // pred_fallthru
      _
    %1021 = shalt.err (0)
    %s1023 = sshll.u32 %s1015, 4
    %s1024 = int_to_ptr.vmem [resolvable:$true] %s1023
    %1026 = dma.hbm_to_vmem [thread:$0]  %s1014, 16, %s1024, [#allocation4]
    %s1027 = sadd.s32 %s130, 7
    %s1028 = sld [smem:[#allocation6 + %s1027]]
    %s1029 = smul.addr %s1028, 16
    %s1030 = scalar_lea.hbm %s2, %s1029
    %s1031 = scalar_lea.vmem [#allocation2], 62
    // Predicated region
    $region258: #{tpu_custom_call.1} parent=1 // pred_check
      _
    $region259: #{tpu_custom_call.1} parent=1 // pred_check_branch
      %1033 = sbr.rel target = $region261
    $region260: #{tpu_custom_call.1} parent=1 // pred_region
      %1034 = sst [smem:[#allocation13]] [#allocation138]
      %1035 = sst [smem:[#allocation14]] [#allocation137]
    $region261: #{tpu_custom_call.1} parent=1 // pred_fallthru
      _
    %1037 = shalt.err (0)
    %s1039 = sshll.u32 %s1031, 4
    %s1040 = int_to_ptr.vmem [resolvable:$true] %s1039
    %1042 = dma.hbm_to_vmem [thread:$0]  %s1030, 16, %s1040, [#allocation4]
    %s1043 = sadd.s32 %s147, 7
    %s1044 = sld [smem:[#allocation6 + %s1043]]
    %s1045 = smul.addr %s1044, 16
    %s1046 = scalar_lea.hbm %s2, %s1045
    %s1047 = scalar_lea.vmem [#allocation2], 63
    // Predicated region
    $region262: #{tpu_custom_call.1} parent=1 // pred_check
      _
    $region263: #{tpu_custom_call.1} parent=1 // pred_check_branch
      %1049 = sbr.rel target = $region265
    $region264: #{tpu_custom_call.1} parent=1 // pred_region
      %1050 = sst [smem:[#allocation13]] [#allocation140]
      %1051 = sst [smem:[#allocation14]] [#allocation139]
    $region265: #{tpu_custom_call.1} parent=1 // pred_fallthru
      _
    %1053 = shalt.err (0)
    %s1055 = sshll.u32 %s1047, 4
    %s1056 = int_to_ptr.vmem [resolvable:$true] %s1055
    %1058 = dma.hbm_to_vmem [thread:$0]  %s1046, 16, %s1056, [#allocation4]
    %s1059 = smul.u32 1, 1
    %s1060 = sshll.u32 %s1059, 4
    %1061 = dma.done [#allocation4], %s1060
    %s1062 = sshll.u32 %s1059, 4
    %1063 = dma.done [#allocation4], %s1062
    %s1064 = sshll.u32 %s1059, 4
    %1065 = dma.done [#allocation4], %s1064
    %s1066 = sshll.u32 %s1059, 4
    %1067 = dma.done [#allocation4], %s1066
    %s1068 = sshll.u32 %s1059, 4
    %1069 = dma.done [#allocation4], %s1068
    %s1070 = sshll.u32 %s1059, 4
    %1071 = dma.done [#allocation4], %s1070
    %s1072 = sshll.u32 %s1059, 4
    %1073 = dma.done [#allocation4], %s1072
    %s1074 = sshll.u32 %s1059, 4
    %1075 = dma.done [#allocation4], %s1074
    %s1076 = sshll.u32 %s1059, 4
    %1077 = dma.done [#allocation4], %s1076
    %s1078 = sshll.u32 %s1059, 4
    %1079 = dma.done [#allocation4], %s1078
    %s1080 = sshll.u32 %s1059, 4
    %1081 = dma.done [#allocation4], %s1080
    %s1082 = sshll.u32 %s1059, 4
    %1083 = dma.done [#allocation4], %s1082
    %s1084 = sshll.u32 %s1059, 4
    %1085 = dma.done [#allocation4], %s1084
    %s1086 = sshll.u32 %s1059, 4
    %1087 = dma.done [#allocation4], %s1086
    %s1088 = sshll.u32 %s1059, 4
    %1089 = dma.done [#allocation4], %s1088
    %s1090 = sshll.u32 %s1059, 4
    %1091 = dma.done [#allocation4], %s1090
    %s1092 = sshll.u32 %s1059, 4
    %1093 = dma.done [#allocation4], %s1092
    %s1094 = sshll.u32 %s1059, 4
    %1095 = dma.done [#allocation4], %s1094
    %s1096 = sshll.u32 %s1059, 4
    %1097 = dma.done [#allocation4], %s1096
    %s1098 = sshll.u32 %s1059, 4
    %1099 = dma.done [#allocation4], %s1098
    %s1100 = sshll.u32 %s1059, 4
    %1101 = dma.done [#allocation4], %s1100
    %s1102 = sshll.u32 %s1059, 4
    %1103 = dma.done [#allocation4], %s1102
    %s1104 = sshll.u32 %s1059, 4
    %1105 = dma.done [#allocation4], %s1104
    %s1106 = sshll.u32 %s1059, 4
    %1107 = dma.done [#allocation4], %s1106
    %s1108 = sshll.u32 %s1059, 4
    %1109 = dma.done [#allocation4], %s1108
    %s1110 = sshll.u32 %s1059, 4
    %1111 = dma.done [#allocation4], %s1110
    %s1112 = sshll.u32 %s1059, 4
    %1113 = dma.done [#allocation4], %s1112
    %s1114 = sshll.u32 %s1059, 4
    %1115 = dma.done [#allocation4], %s1114
    %s1116 = sshll.u32 %s1059, 4
    %1117 = dma.done [#allocation4], %s1116
    %s1118 = sshll.u32 %s1059, 4
    %1119 = dma.done [#allocation4], %s1118
    %s1120 = sshll.u32 %s1059, 4
    %1121 = dma.done [#allocation4], %s1120
    %s1122 = sshll.u32 %s1059, 4
    %1123 = dma.done [#allocation4], %s1122
    %s1124 = sshll.u32 %s1059, 4
    %1125 = dma.done [#allocation4], %s1124
    %s1126 = sshll.u32 %s1059, 4
    %1127 = dma.done [#allocation4], %s1126
    %s1128 = sshll.u32 %s1059, 4
    %1129 = dma.done [#allocation4], %s1128
    %s1130 = sshll.u32 %s1059, 4
    %1131 = dma.done [#allocation4], %s1130
    %s1132 = sshll.u32 %s1059, 4
    %1133 = dma.done [#allocation4], %s1132
    %s1134 = sshll.u32 %s1059, 4
    %1135 = dma.done [#allocation4], %s1134
    %s1136 = sshll.u32 %s1059, 4
    %1137 = dma.done [#allocation4], %s1136
    %s1138 = sshll.u32 %s1059, 4
    %1139 = dma.done [#allocation4], %s1138
    %s1140 = sshll.u32 %s1059, 4
    %1141 = dma.done [#allocation4], %s1140
    %s1142 = sshll.u32 %s1059, 4
    %1143 = dma.done [#allocation4], %s1142
    %s1144 = sshll.u32 %s1059, 4
    %1145 = dma.done [#allocation4], %s1144
    %s1146 = sshll.u32 %s1059, 4
    %1147 = dma.done [#allocation4], %s1146
    %s1148 = sshll.u32 %s1059, 4
    %1149 = dma.done [#allocation4], %s1148
    %s1150 = sshll.u32 %s1059, 4
    %1151 = dma.done [#allocation4], %s1150
    %s1152 = sshll.u32 %s1059, 4
    %1153 = dma.done [#allocation4], %s1152
    %s1154 = sshll.u32 %s1059, 4
    %1155 = dma.done [#allocation4], %s1154
    %s1156 = sshll.u32 %s1059, 4
    %1157 = dma.done [#allocation4], %s1156
    %s1158 = sshll.u32 %s1059, 4
    %1159 = dma.done [#allocation4], %s1158
    %s1160 = sshll.u32 %s1059, 4
    %1161 = dma.done [#allocation4], %s1160
    %s1162 = sshll.u32 %s1059, 4
    %1163 = dma.done [#allocation4], %s1162
    %s1164 = sshll.u32 %s1059, 4
    %1165 = dma.done [#allocation4], %s1164
    %s1166 = sshll.u32 %s1059, 4
    %1167 = dma.done [#allocation4], %s1166
    %s1168 = sshll.u32 %s1059, 4
    %1169 = dma.done [#allocation4], %s1168
    %s1170 = sshll.u32 %s1059, 4
    %1171 = dma.done [#allocation4], %s1170
    %s1172 = sshll.u32 %s1059, 4
    %1173 = dma.done [#allocation4], %s1172
    %s1174 = sshll.u32 %s1059, 4
    %1175 = dma.done [#allocation4], %s1174
    %s1176 = sshll.u32 %s1059, 4
    %1177 = dma.done [#allocation4], %s1176
    %s1178 = sshll.u32 %s1059, 4
    %1179 = dma.done [#allocation4], %s1178
    %s1180 = sshll.u32 %s1059, 4
    %1181 = dma.done [#allocation4], %s1180
    %s1182 = sshll.u32 %s1059, 4
    %1183 = dma.done [#allocation4], %s1182
    %s1184 = sshll.u32 %s1059, 4
    %1185 = dma.done [#allocation4], %s1184
    %s1186 = sshll.u32 %s1059, 4
    %1187 = dma.done [#allocation4], %s1186
    %v1188 = vld [vmem:[#allocation2] sm:$0xff]
    %v1189 = vld [vmem:[#allocation2 + $0x8] sm:$0xff]
    %v1190 = vld [vmem:[#allocation2 + $0x10] sm:$0xff]
    %v1191 = vld [vmem:[#allocation2 + $0x18] sm:$0xff]
    %v1192 = vld [vmem:[#allocation2 + $0x20] sm:$0xff]
    %v1193 = vld [vmem:[#allocation2 + $0x28] sm:$0xff]
    %v1194 = vld [vmem:[#allocation2 + $0x30] sm:$0xff]
    %v1195 = vld [vmem:[#allocation2 + $0x38] sm:$0xff]
    %v1196 = vadd.f32 %v1188, %v1189
    %v1197 = vadd.f32 %v1196, %v1190
    %v1198 = vadd.f32 %v1197, %v1191
    %v1199 = vadd.f32 %v1198, %v1192
    %v1200 = vadd.f32 %v1199, %v1193
    %v1201 = vadd.f32 %v1200, %v1194
    %v1202 = vadd.f32 %v1201, %v1195
    %v1203 = vld [vmem:[#allocation3] sm:$0xff]
    %v1204 = vadd.f32 %v1203, %v1202
    %1205 = vst [vmem:[#allocation3] sm:$0xff] %v1204
    %v1206 = vld [vmem:[#allocation7] sm:$0xff]
    %vm1207 = vcmask 64512
    %v1208 = vsel %vm1207, %v1206, 0.0
    %1209 = vadd.xlane.f32.xlu0 %v1208
    %v1210 = vpop.xlane.xlu0 %1209
    %v1211 = vadd.f32 %v1210, 1e-20
    %v1212 = vrcp.pop %v1211
    %v1213 = vld [vmem:[#allocation3] sm:$0xff]
    %v1214 = vmul.f32 %v1213, %v1212
    %1215 = vst [vmem:[#allocation10] sm:$0xff] %v1214
    // Predicated region
    $region266: #{tpu_custom_call.1} parent=1 // pred_check
      _
    $region267: #{tpu_custom_call.1} parent=1 // pred_check_branch
      %1217 = sbr.rel (0) target = $region269
    $region268: #{tpu_custom_call.1} parent=1 // pred_region
      %s1219 = ssub.s32 128, 128
      %1220 = vsyncadd [#allocation9], %s1219
      %s1222 = sshll.u32 [#allocation10], 4
      %s1223 = int_to_ptr.vmem [resolvable:$true] %s1222
      %1225 = dma.vmem_to_hbm [thread:$0]  %s1223, 128, %s3, [#allocation9]
    $region269: #{tpu_custom_call.1} parent=1 // pred_fallthru
      _
    // Predicated region
    $region270: #{tpu_custom_call.1} parent=1 // pred_check
      _
    $region271: #{tpu_custom_call.1} parent=1 // pred_check_branch
      %1227 = sbr.rel (0) target = $region273
    $region272: #{tpu_custom_call.1} parent=1 // pred_region
      %1228 = dma.done [#allocation9], 128
    $region273: #{tpu_custom_call.1} parent=1 // pred_fallthru
      _
    %1229 = vsyncpa [#allocation8], 1
    %1230 = vsyncpa [#allocation9], 1
  %1231 = vsyncmov [#allocation4]
  %s1232 = vpop.sfrf %1231
  %p1233 = scmp.eq.s32.totalorder %s1232, 0
  %p1234 = pneg %p1233
  %1236 = shalt.err (%p1234)
  %s1237 = scalar_lea.sflag [#allocation4], 1
  %1238 = vsyncmov %s1237
  %s1239 = vpop.sfrf %1238
  %p1240 = scmp.eq.s32.totalorder %s1239, 0
  %p1241 = pneg %p1240
  %1243 = shalt.err (%p1241)

</llo_original>
